<compile_context>
chip_gen: v6e
topology: v6e:2x2x1
jax: 0.10.0
libtpu: 0.0.40
codegen_flags: <defaults>
</compile_context>

<pallas_src>
import functools

import jax
import jax.numpy as jnp
from jax import lax
from jax.experimental import pallas as pl
from jax.experimental.pallas import tpu as pltpu


_BN_EPS = 1e-5
_VMEM_TILE_BUDGET = 8 * 1024 * 1024   # double-buffered tile budget, safe for v7x's 64 MiB VMEM


def _round_up(n, m):
    return (n + m - 1) // m * m


def _pick_tile(total, cap):
    """Largest tile <= cap that divides `total`; prefers multiples of 128 (lane width)."""
    if total <= cap:
        return total
    d = (cap // 128) * 128
    while d >= 128:
        if total % d == 0:
            return d
        d -= 128
    return total   # pathological fallback: one full-width tile


# ----------------------------------------------------------------------------
# Pallas kernel 1: fused [folded-BN + ReLU of previous layer] -> 1x1-conv matmul
#                  -> per-channel sum / sum-of-squares for this layer's BN stats
# ----------------------------------------------------------------------------
def _mlp_layer_kernel(x_ref, ss_ref, w_ref, y_ref, sum_ref, sq_ref, *, apply_act):
    if apply_act:
        # normalize previous layer's pre-BN output with folded scale/shift, then ReLU
        x = x_ref[...].astype(jnp.float32)               # [Cin_pad, tile_m]
        scale = ss_ref[:, 0:1]                           # [Cin_pad, 1]
        shift = ss_ref[:, 1:2]
        h = jnp.maximum(x * scale + shift, 0.0).astype(jnp.bfloat16)
    else:
        h = x_ref[...]                                   # first layer: raw bf16 input

    # 1x1 Conv2d == channel matmul on the MXU (bf16 operands, f32 accumulation).
    # No bias: it cancels exactly under training-mode BatchNorm.
    y = jnp.dot(w_ref[...], h, preferred_element_type=jnp.float32)   # [Cout_pad, tile_m]
    y_ref[...] = y.astype(y_ref.dtype)

    # single-pass BatchNorm statistics (f32): accumulate sum and sum-of-squares per channel
    @pl.when(pl.program_id(1) == 0)
    def _init():
        sum_ref[...] = jnp.zeros_like(sum_ref)
        sq_ref[...] = jnp.zeros_like(sq_ref)

    sum_ref[...] += jnp.sum(y, axis=1, keepdims=True)[None]          # [1, Cout_pad, 1]
    sq_ref[...] += jnp.sum(y * y, axis=1, keepdims=True)[None]


def _layer_pass(x, ss, w, *, apply_act, tile_m_cap=2048):
    """One fused MLP layer pass.

    x  : [Cin_pad, M]   bf16  (first layer: grouped features; later: previous pre-BN y)
    ss : [Cin_pad, 2]   f32   folded (scale, shift) of the previous layer, or None
    w  : [Cout_pad, Cin_pad]  bf16
    returns y [Cout_pad, M] bf16 (pre-BN), partial stats [P, Cout_pad, 1] f32 (sum, sumsq).
    """
    cin_p, m_total = x.shape
    cout_p = w.shape[0]

    # keep (input + output) double-buffered tiles well under v7x's 64 MiB VMEM
    bytes_per_col = (cin_p + cout_p) * 2 * 2            # bf16, x2 double buffering
    cap = min(tile_m_cap, max(128, (_VMEM_TILE_BUDGET // bytes_per_col) // 128 * 128))
    tile_m = _pick_tile(m_total, cap)
    n_tiles = m_total // tile_m
    n_par = 2 if n_tiles % 2 == 0 else 1                # 'parallel' axis -> 2 TCs on v7x
    n_m = n_tiles // n_par

    if ss is None:
        ss = jnp.zeros((cin_p, 2), jnp.float32)         # unused when apply_act=False

    kernel = functools.partial(_mlp_layer_kernel, apply_act=apply_act)
    y, ysum, ysq = pl.pallas_call(
        kernel,
        out_shape=(
            jax.ShapeDtypeStruct((cout_p, m_total), jnp.bfloat16),
            jax.ShapeDtypeStruct((n_par, cout_p, 1), jnp.float32),
            jax.ShapeDtypeStruct((n_par, cout_p, 1), jnp.float32),
        ),
        grid=(n_par, n_m),
        in_specs=[
            pl.BlockSpec((cin_p, tile_m), lambda p, m: (0, p * n_m + m)),
            pl.BlockSpec((cin_p, 2), lambda p, m: (0, 0)),
            pl.BlockSpec((cout_p, cin_p), lambda p, m: (0, 0)),
        ],
        out_specs=(
            pl.BlockSpec((cout_p, tile_m), lambda p, m: (0, p * n_m + m)),
            pl.BlockSpec((1, cout_p, 1), lambda p, m: (p, 0, 0)),
            pl.BlockSpec((1, cout_p, 1), lambda p, m: (p, 0, 0)),
        ),
        compiler_params=pltpu.CompilerParams(
            dimension_semantics=("parallel", "arbitrary"),
            vmem_limit_bytes=32 * 1024 * 1024),
    )(x, ss, w)
    return y, ysum, ysq


def _fold_bn(ysum, ysq, count, gamma, beta):
    """Fold training-mode BatchNorm (biased batch stats) + affine into per-channel
    scale/shift so that bn(y) = y * scale + shift."""
    s = jnp.sum(ysum, axis=0)[:, 0]                     # [C_pad]
    sq = jnp.sum(ysq, axis=0)[:, 0]
    mean = s / count
    var = jnp.maximum(sq / count - mean * mean, 0.0)    # clamp E[y^2]-mean^2 cancellation
    scale = gamma * lax.rsqrt(var + _BN_EPS)
    shift = beta - mean * scale
    return jnp.stack([scale, shift], axis=1).astype(jnp.float32)   # [C_pad, 2]


# ----------------------------------------------------------------------------
# Pallas kernel 2: final folded-BN + ReLU + max over the nsample (K) axis,
#                  written directly in [B, C, S] output layout.
# ----------------------------------------------------------------------------
def _bn_relu_maxk_kernel(y_ref, ss_ref, o_ref):
    ss = ss_ref[...]                                    # [C_pad, 2]
    scale = ss[:, 0:1][:, :, None]                      # [C_pad, 1, 1]
    shift = ss[:, 1:2][:, :, None]
    h = jnp.maximum(y_ref[...].astype(jnp.float32) * scale + shift, 0.0)  # [C_pad, K, tile_s]
    o_ref[...] = jnp.max(h, axis=1)[None].astype(o_ref.dtype)             # [1, C_pad, tile_s]


def _final_maxpool_pass(y3, ss, *, nsample, tile_s_cap=512):
    c_pad, bk, s_total = y3.shape
    bsz = bk // nsample
    bytes_per_col = c_pad * nsample * 2 * 2
    cap = min(tile_s_cap, max(128, (_VMEM_TILE_BUDGET // bytes_per_col) // 128 * 128))
    tile_s = _pick_tile(s_total, cap)
    n_s = s_total // tile_s
    return pl.pallas_call(
        _bn_relu_maxk_kernel,
        out_shape=jax.ShapeDtypeStruct((bsz, c_pad, s_total), jnp.float32),
        grid=(bsz, n_s),
        in_specs=[
            pl.BlockSpec((c_pad, nsample, tile_s), lambda bi, si: (0, bi, si)),
            pl.BlockSpec((c_pad, 2), lambda bi, si: (0, 0)),
        ],
        out_specs=pl.BlockSpec((1, c_pad, tile_s), lambda bi, si: (bi, 0, si)),
        compiler_params=pltpu.CompilerParams(
            dimension_semantics=("parallel", "parallel"),
            vmem_limit_bytes=32 * 1024 * 1024),
    )(y3, ss)


def _mlp_branch_forward(grouped, layer_params, mlp, *, tile_m_cap):
    """grouped: [B, S, K, C_in]  ->  branch output [B, mlp[-1], S]."""
    bsz, s, k, c0 = grouped.shape
    m_total = bsz * k * s
    c0_pad = layer_params[0][0].shape[1]                # padded input channels of layer 0

    # single layout transform of the (small-channel) gather output: [B,S,K,C] -> [C, B*K*S]
    x = jnp.transpose(grouped, (3, 0, 2, 1)).reshape(c0, m_total)
    if c0_pad > c0:
        x = jnp.pad(x, ((0, c0_pad - c0), (0, 0)))
    cur = x.astype(jnp.bfloat16)

    ss = None
    for li, (w_pad, gamma, beta) in enumerate(layer_params):
        cur, ysum, ysq = _layer_pass(cur, ss, w_pad, apply_act=(li > 0),
                                     tile_m_cap=tile_m_cap)
        ss = _fold_bn(ysum, ysq, float(m_total), gamma, beta)

    c_last_pad = cur.shape[0]
    if k % 16 == 0:
        out_pad = _final_maxpool_pass(cur.reshape(c_last_pad, bsz * k, s), ss, nsample=k)
    else:
        # TODO(synk): K not a multiple of 16 (bf16 sublane tile) — final BN+ReLU+max over K
        # falls back to XLA on the (already small) last slab.
        h = jnp.maximum(cur.astype(jnp.float32) * ss[:, 0:1] + ss[:, 1:2], 0.0)
        h = jnp.max(h.reshape(c_last_pad, bsz, k, s), axis=2)      # [C_pad, B, S]
        out_pad = jnp.transpose(h, (1, 0, 2))                      # [B, C_pad, S]
    return out_pad[:, : mlp[-1], :]


# ----------------------------------------------------------------------------
# Plain-JAX glue: FPS / ball query / gathers (data-dependent indexing)
# ----------------------------------------------------------------------------
def square_distance(src, dst):
    dist = -2.0 * jnp.einsum("bnc,bmc->bnm", src, dst)
    dist = dist + jnp.sum(src ** 2, -1)[:, :, None]
    dist = dist + jnp.sum(dst ** 2, -1)[:, None, :]
    return dist


def index_points(points, idx):
    return jax.vmap(lambda p, i: p[i])(points, idx)


def farthest_point_sample(xyz, npoint):
    # TODO(synk): PyTorch seeds FPS with torch.randint; here the start index is fixed to 0.
    bsz, n, _ = xyz.shape

    def body(i, carry):
        centroids, distance, farthest = carry
        centroids = centroids.at[:, i].set(farthest)
        centroid = jnp.take_along_axis(xyz, farthest[:, None, None], axis=1)   # [B,1,3]
        dist = jnp.sum((xyz - centroid) ** 2, -1)
        distance = jnp.minimum(distance, dist)
        farthest = jnp.argmax(distance, axis=-1).astype(jnp.int32)
        return centroids, distance, farthest

    init = (jnp.zeros((bsz, npoint), jnp.int32),
            jnp.full((bsz, n), 1e10, jnp.float32),
            jnp.zeros((bsz,), jnp.int32))
    centroids, _, _ = lax.fori_loop(0, npoint, body, init)
    return centroids


def query_ball_point(radius, nsample, xyz, new_xyz):
    bsz, n, _ = xyz.shape
    s = new_xyz.shape[1]
    sqrdists = square_distance(new_xyz, xyz)                        # [B,S,N]
    group_idx = jnp.broadcast_to(jnp.arange(n, dtype=jnp.int32), (bsz, s, n))
    group_idx = jnp.where(sqrdists > radius ** 2, n, group_idx)
    group_idx = jnp.sort(group_idx, axis=-1)[:, :, :nsample]
    group_first = jnp.broadcast_to(group_idx[:, :, :1], (bsz, s, nsample))
    group_idx = jnp.where(group_idx == n, group_first, group_idx)
    return group_idx


# ----------------------------------------------------------------------------
# PointNetSetAbstractionMsg forward
# ----------------------------------------------------------------------------
def pointnet_set_abstraction_msg(xyz, points, params, *, npoint, radius_list,
                                 nsample_list, mlp_list, tile_m_cap=2048):
    """
    xyz:    [B, 3, N]  channels-first, like the PyTorch module input
    points: [B, D, N]  or None
    returns new_xyz [B, 3, npoint], new_points [B, sum(mlp[-1] for mlp in mlp_list), npoint]
    """
    xyz_t = jnp.transpose(xyz, (0, 2, 1))                           # [B,N,3]
    points_t = jnp.transpose(points, (0, 2, 1)) if points is not None else None

    fps_idx = farthest_point_sample(xyz_t, npoint)                  # [B,S]
    new_xyz = index_points(xyz_t, fps_idx)                          # [B,S,3]

    outs = []
    for i, radius in enumerate(radius_list):
        k = nsample_list[i]
        group_idx = query_ball_point(radius, k, xyz_t, new_xyz)     # [B,S,K]
        grouped_xyz = index_points(xyz_t, group_idx)                # [B,S,K,3]
        grouped_xyz = grouped_xyz - new_xyz[:, :, None, :]
        if points_t is not None:
            grouped_points = index_points(points_t, group_idx)      # [B,S,K,D]
            grouped = jnp.concatenate([grouped_points, grouped_xyz], axis=-1)
        else:
            grouped = grouped_xyz
        outs.append(_mlp_branch_forward(grouped, params[i], mlp_list[i],
                                        tile_m_cap=tile_m_cap))     # [B, mlp[-1], S]

    new_points = jnp.concatenate(outs, axis=1)                      # [B, sum(mlp[-1]), S]
    new_xyz_out = jnp.transpose(new_xyz, (0, 2, 1))                 # [B, 3, S]
    return new_xyz_out, new_points


def init_msg_params(key, in_channel, mlp_list):
    """Conv weights ~ N(0, 0.1); no conv bias (it cancels exactly under training-mode
    BatchNorm); BN gamma=1, beta=0 (PyTorch defaults).  Weights are zero-padded to
    multiples of 16 channels (bf16 sublane tile); BN params are identity in the pad region."""
    params = []
    for mlp in mlp_list:
        layers = []
        last = in_channel + 3
        for out_c in mlp:
            key, kw = jax.random.split(key)
            cin_p, cout_p = _round_up(last, 16), _round_up(out_c, 16)
            w = 0.1 * jax.random.normal(kw, (out_c, last), dtype=jnp.float32)
            w_pad = jnp.zeros((cout_p, cin_p), jnp.float32).at[:out_c, :last].set(w)
            layers.append((w_pad.astype(jnp.bfloat16),
                           jnp.ones((cout_p,), jnp.float32),
                           jnp.zeros((cout_p,), jnp.float32)))
            last = out_c
        params.append(layers)
    return params


if __name__ == "__main__":
    key = jax.random.PRNGKey(0)
    B, N, D = 2, 64, 4
    npoint = 16
    radius_list = [0.2, 0.4]
    nsample_list = [8, 16]       # K=8 exercises the XLA max fallback, K=16 the Pallas final pass
    mlp_list = [[16, 32], [32, 64]]

    k_xyz, k_pts, k_par = jax.random.split(key, 3)
    xyz = jax.random.uniform(k_xyz, (B, 3, N), dtype=jnp.float32)
    points = jax.random.normal(k_pts, (B, D, N), dtype=jnp.float32)
    params = init_msg_params(k_par, D, mlp_list)

    fwd = jax.jit(functools.partial(
        pointnet_set_abstraction_msg,
        npoint=npoint, radius_list=radius_list, nsample_list=nsample_list,
        mlp_list=mlp_list,
        tile_m_cap=128))         # small cap so the toy shapes still exercise multi-tile grids

    new_xyz, new_points = fwd(xyz, points, params)
    jax.block_until_ready((new_xyz, new_points))

    assert new_xyz.shape == (B, 3, npoint)
    assert new_points.shape == (B, sum(m[-1] for m in mlp_list), npoint)
    assert bool(jnp.all(jnp.isfinite(new_points)))
    assert bool(jnp.all(jnp.isfinite(new_xyz)))
    print("KERNEL_OK")
</pallas_src>

<mosaic_0001>
module attributes {stable_mosaic.version = 11 : i64} {
  func.func @_mlp_layer_kernel(%arg0: i32, %arg1: i32, %arg2: memref<16x128xbf16, #tpu.memory_space<vmem>>, %arg3: memref<16x2xf32, #tpu.memory_space<vmem>>, %arg4: memref<16x16xbf16, #tpu.memory_space<vmem>>, %arg5: memref<16x128xbf16, #tpu.memory_space<vmem>>, %arg6: memref<1x16x1xf32, #tpu.memory_space<vmem>>, %arg7: memref<1x16x1xf32, #tpu.memory_space<vmem>>) attributes {dimension_semantics = [#tpu.dimension_semantics<parallel>, #tpu.dimension_semantics<arbitrary>], iteration_bounds = array<i64: 2, 1>, scalar_prefetch = 0 : i64, scratch_operands = 0 : i64, tpu.core_type = #tpu.core_type<tc>, window_params = [{transform_indices = @transform_0, window_bounds = array<i64: 16, 128>}, {pipeline_mode = #tpu.pipeline_mode<synchronous>, transform_indices = @transform_1, window_bounds = array<i64: 16, 2>}, {pipeline_mode = #tpu.pipeline_mode<synchronous>, transform_indices = @transform_2, window_bounds = array<i64: 16, 16>}, {transform_indices = @transform_3, window_bounds = array<i64: 16, 128>}, {transform_indices = @transform_4, window_bounds = array<i64: 1, 16, 1>}, {transform_indices = @transform_5, window_bounds = array<i64: 1, 16, 1>}]} {
    %c0 = arith.constant 0 : index
    %c0_0 = arith.constant 0 : index
    %0 = vector.load %arg2[%c0, %c0_0] : memref<16x128xbf16, #tpu.memory_space<vmem>>, vector<16x128xbf16>
    %c0_1 = arith.constant 0 : index
    %c0_2 = arith.constant 0 : index
    %1 = vector.load %arg4[%c0_1, %c0_2] : memref<16x16xbf16, #tpu.memory_space<vmem>>, vector<16x16xbf16>
    %cst = arith.constant dense<0.000000e+00> : vector<16x128xf32>
    %2 = tpu.matmul %1, %0, %cst {dimension_numbers = #tpu.dot_dimension_numbers<[1], [0], [0], [1], [0, 0, 1, 1], [], []>} : vector<16x16xbf16>, vector<16x128xbf16>, vector<16x128xf32> -> vector<16x128xf32>
    %3 = arith.truncf %2 : vector<16x128xf32> to vector<16x128xbf16>
    %c0_3 = arith.constant 0 : index
    %c0_4 = arith.constant 0 : index
    %4 = vector.load %arg5[%c0_3, %c0_4] : memref<16x128xbf16, #tpu.memory_space<vmem>>, vector<16x128xbf16>
    tpu.vector_store %arg5[%c0_3, %c0_4], %3 {strides = array<i32>} : memref<16x128xbf16, #tpu.memory_space<vmem>>, vector<16x128xbf16>,
    %c0_i32 = arith.constant 0 : i32
    %5 = arith.cmpi eq, %arg1, %c0_i32 : i32
    %6 = arith.extui %5 : i1 to i32
    %c0_i32_5 = arith.constant 0 : i32
    %7 = arith.cmpi ne, %6, %c0_i32_5 : i32
    scf.if %7 {
      %cst_20 = arith.constant 0.000000e+00 : f32
      %21 = vector.broadcast %cst_20 : f32 to vector<1x16x1xf32>
      %c0_21 = arith.constant 0 : index
      %c0_22 = arith.constant 0 : index
      %c0_23 = arith.constant 0 : index
      %22 = vector.load %arg6[%c0_21, %c0_22, %c0_23] : memref<1x16x1xf32, #tpu.memory_space<vmem>>, vector<1x16x1xf32>
      tpu.vector_store %arg6[%c0_21, %c0_22, %c0_23], %21 {strides = array<i32>} : memref<1x16x1xf32, #tpu.memory_space<vmem>>, vector<1x16x1xf32>,
      %cst_24 = arith.constant 0.000000e+00 : f32
      %23 = vector.broadcast %cst_24 : f32 to vector<1x16x1xf32>
      %c0_25 = arith.constant 0 : index
      %c0_26 = arith.constant 0 : index
      %c0_27 = arith.constant 0 : index
      %24 = vector.load %arg7[%c0_25, %c0_26, %c0_27] : memref<1x16x1xf32, #tpu.memory_space<vmem>>, vector<1x16x1xf32>
      tpu.vector_store %arg7[%c0_25, %c0_26, %c0_27], %23 {strides = array<i32>} : memref<1x16x1xf32, #tpu.memory_space<vmem>>, vector<1x16x1xf32>,
    } else {
    }
    %c0_6 = arith.constant 0 : index
    %c0_7 = arith.constant 0 : index
    %c0_8 = arith.constant 0 : index
    %8 = vector.load %arg6[%c0_6, %c0_7, %c0_8] : memref<1x16x1xf32, #tpu.memory_space<vmem>>, vector<1x16x1xf32>
    %cst_9 = arith.constant dense<0.000000e+00> : vector<16xf32>
    %9 = vector.multi_reduction <add>, %2, %cst_9 [1] : vector<16x128xf32> to vector<16xf32>
    %10 = vector.shape_cast %9 : vector<16xf32> to vector<16x1xf32>
    %11 = vector.shape_cast %10 : vector<16x1xf32> to vector<1x16x1xf32>
    %12 = arith.addf %8, %11 : vector<1x16x1xf32>
    %c0_10 = arith.constant 0 : index
    %c0_11 = arith.constant 0 : index
    %c0_12 = arith.constant 0 : index
    %13 = vector.load %arg6[%c0_10, %c0_11, %c0_12] : memref<1x16x1xf32, #tpu.memory_space<vmem>>, vector<1x16x1xf32>
    tpu.vector_store %arg6[%c0_10, %c0_11, %c0_12], %12 {strides = array<i32>} : memref<1x16x1xf32, #tpu.memory_space<vmem>>, vector<1x16x1xf32>,
    %c0_13 = arith.constant 0 : index
    %c0_14 = arith.constant 0 : index
    %c0_15 = arith.constant 0 : index
    %14 = vector.load %arg7[%c0_13, %c0_14, %c0_15] : memref<1x16x1xf32, #tpu.memory_space<vmem>>, vector<1x16x1xf32>
    %15 = arith.mulf %2, %2 : vector<16x128xf32>
    %cst_16 = arith.constant dense<0.000000e+00> : vector<16xf32>
    %16 = vector.multi_reduction <add>, %15, %cst_16 [1] : vector<16x128xf32> to vector<16xf32>
    %17 = vector.shape_cast %16 : vector<16xf32> to vector<16x1xf32>
    %18 = vector.shape_cast %17 : vector<16x1xf32> to vector<1x16x1xf32>
    %19 = arith.addf %14, %18 : vector<1x16x1xf32>
    %c0_17 = arith.constant 0 : index
    %c0_18 = arith.constant 0 : index
    %c0_19 = arith.constant 0 : index
    %20 = vector.load %arg7[%c0_17, %c0_18, %c0_19] : memref<1x16x1xf32, #tpu.memory_space<vmem>>, vector<1x16x1xf32>
    tpu.vector_store %arg7[%c0_17, %c0_18, %c0_19], %19 {strides = array<i32>} : memref<1x16x1xf32, #tpu.memory_space<vmem>>, vector<1x16x1xf32>,
    return
  }
  func.func @transform_0(%arg0: i32, %arg1: i32) -> (i32, i32) {
    %c1_i32 = arith.constant 1 : i32
    %0 = arith.muli %arg0, %c1_i32 : i32
    %1 = arith.addi %0, %arg1 : i32
    %c0_i32 = arith.constant 0 : i32
    %c0_i32_0 = arith.constant 0 : i32
    return %c0_i32, %1 : i32, i32
  }
  func.func @transform_1(%arg0: i32, %arg1: i32) -> (i32, i32) {
    %c0_i32 = arith.constant 0 : i32
    %c0_i32_0 = arith.constant 0 : i32
    %c0_i32_1 = arith.constant 0 : i32
    return %c0_i32, %c0_i32_0 : i32, i32
  }
  func.func @transform_2(%arg0: i32, %arg1: i32) -> (i32, i32) {
    %c0_i32 = arith.constant 0 : i32
    %c0_i32_0 = arith.constant 0 : i32
    %c0_i32_1 = arith.constant 0 : i32
    return %c0_i32, %c0_i32_0 : i32, i32
  }
  func.func @transform_3(%arg0: i32, %arg1: i32) -> (i32, i32) {
    %c1_i32 = arith.constant 1 : i32
    %0 = arith.muli %arg0, %c1_i32 : i32
    %1 = arith.addi %0, %arg1 : i32
    %c0_i32 = arith.constant 0 : i32
    %c0_i32_0 = arith.constant 0 : i32
    return %c0_i32, %1 : i32, i32
  }
  func.func @transform_4(%arg0: i32, %arg1: i32) -> (i32, i32, i32) {
    %c0_i32 = arith.constant 0 : i32
    %c0_i32_0 = arith.constant 0 : i32
    %c0_i32_1 = arith.constant 0 : i32
    return %arg0, %c0_i32, %c0_i32_0 : i32, i32, i32
  }
  func.func @transform_5(%arg0: i32, %arg1: i32) -> (i32, i32, i32) {
    %c0_i32 = arith.constant 0 : i32
    %c0_i32_0 = arith.constant 0 : i32
    %c0_i32_1 = arith.constant 0 : i32
    return %arg0, %c0_i32, %c0_i32_0 : i32, i32, i32
  }
}

module attributes {stable_mosaic.version = 11 : i64} {
  func.func @_mlp_layer_kernel(%arg0: i32, %arg1: i32, %arg2: memref<16x128xbf16, #tpu.memory_space<vmem>>, %arg3: memref<16x2xf32, #tpu.memory_space<vmem>>, %arg4: memref<32x16xbf16, #tpu.memory_space<vmem>>, %arg5: memref<32x128xbf16, #tpu.memory_space<vmem>>, %arg6: memref<1x32x1xf32, #tpu.memory_space<vmem>>, %arg7: memref<1x32x1xf32, #tpu.memory_space<vmem>>) attributes {dimension_semantics = [#tpu.dimension_semantics<parallel>, #tpu.dimension_semantics<arbitrary>], iteration_bounds = array<i64: 2, 1>, scalar_prefetch = 0 : i64, scratch_operands = 0 : i64, tpu.core_type = #tpu.core_type<tc>, window_params = [{transform_indices = @transform_0, window_bounds = array<i64: 16, 128>}, {pipeline_mode = #tpu.pipeline_mode<synchronous>, transform_indices = @transform_1, window_bounds = array<i64: 16, 2>}, {pipeline_mode = #tpu.pipeline_mode<synchronous>, transform_indices = @transform_2, window_bounds = array<i64: 32, 16>}, {transform_indices = @transform_3, window_bounds = array<i64: 32, 128>}, {transform_indices = @transform_4, window_bounds = array<i64: 1, 32, 1>}, {transform_indices = @transform_5, window_bounds = array<i64: 1, 32, 1>}]} {
    %c0 = arith.constant 0 : index
    %c0_0 = arith.constant 0 : index
    %0 = vector.load %arg2[%c0, %c0_0] : memref<16x128xbf16, #tpu.memory_space<vmem>>, vector<16x128xbf16>
    %1 = arith.extf %0 : vector<16x128xbf16> to vector<16x128xf32>
    %c0_1 = arith.constant 0 : index
    %c0_2 = arith.constant 0 : index
    %2 = vector.load %arg3[%c0_1, %c0_2] : memref<16x2xf32, #tpu.memory_space<vmem>>, vector<16x1xf32>
    %c0_3 = arith.constant 0 : index
    %c1 = arith.constant 1 : index
    %3 = vector.load %arg3[%c0_3, %c1] : memref<16x2xf32, #tpu.memory_space<vmem>>, vector<16x1xf32>
    %4 = vector.broadcast %2 : vector<16x1xf32> to vector<16x128xf32>
    %5 = arith.mulf %1, %4 : vector<16x128xf32>
    %6 = vector.broadcast %3 : vector<16x1xf32> to vector<16x128xf32>
    %7 = arith.addf %5, %6 : vector<16x128xf32>
    %cst = arith.constant 0.000000e+00 : f32
    %8 = vector.broadcast %cst : f32 to vector<16x128xf32>
    %9 = arith.maximumf %7, %8 : vector<16x128xf32>
    %10 = arith.truncf %9 : vector<16x128xf32> to vector<16x128xbf16>
    %c0_4 = arith.constant 0 : index
    %c0_5 = arith.constant 0 : index
    %11 = vector.load %arg4[%c0_4, %c0_5] : memref<32x16xbf16, #tpu.memory_space<vmem>>, vector<32x16xbf16>
    %cst_6 = arith.constant dense<0.000000e+00> : vector<32x128xf32>
    %12 = tpu.matmul %11, %10, %cst_6 {dimension_numbers = #tpu.dot_dimension_numbers<[1], [0], [0], [1], [0, 0, 1, 1], [], []>} : vector<32x16xbf16>, vector<16x128xbf16>, vector<32x128xf32> -> vector<32x128xf32>
    %13 = arith.truncf %12 : vector<32x128xf32> to vector<32x128xbf16>
    %c0_7 = arith.constant 0 : index
    %c0_8 = arith.constant 0 : index
    %14 = vector.load %arg5[%c0_7, %c0_8] : memref<32x128xbf16, #tpu.memory_space<vmem>>, vector<32x128xbf16>
    tpu.vector_store %arg5[%c0_7, %c0_8], %13 {strides = array<i32>} : memref<32x128xbf16, #tpu.memory_space<vmem>>, vector<32x128xbf16>,
    %c0_i32 = arith.constant 0 : i32
    %15 = arith.cmpi eq, %arg1, %c0_i32 : i32
    %16 = arith.extui %15 : i1 to i32
    %c0_i32_9 = arith.constant 0 : i32
    %17 = arith.cmpi ne, %16, %c0_i32_9 : i32
    scf.if %17 {
      %cst_24 = arith.constant 0.000000e+00 : f32
      %31 = vector.broadcast %cst_24 : f32 to vector<1x32x1xf32>
      %c0_25 = arith.constant 0 : index
      %c0_26 = arith.constant 0 : index
      %c0_27 = arith.constant 0 : index
      %32 = vector.load %arg6[%c0_25, %c0_26, %c0_27] : memref<1x32x1xf32, #tpu.memory_space<vmem>>, vector<1x32x1xf32>
      tpu.vector_store %arg6[%c0_25, %c0_26, %c0_27], %31 {strides = array<i32>} : memref<1x32x1xf32, #tpu.memory_space<vmem>>, vector<1x32x1xf32>,
      %cst_28 = arith.constant 0.000000e+00 : f32
      %33 = vector.broadcast %cst_28 : f32 to vector<1x32x1xf32>
      %c0_29 = arith.constant 0 : index
      %c0_30 = arith.constant 0 : index
      %c0_31 = arith.constant 0 : index
      %34 = vector.load %arg7[%c0_29, %c0_30, %c0_31] : memref<1x32x1xf32, #tpu.memory_space<vmem>>, vector<1x32x1xf32>
      tpu.vector_store %arg7[%c0_29, %c0_30, %c0_31], %33 {strides = array<i32>} : memref<1x32x1xf32, #tpu.memory_space<vmem>>, vector<1x32x1xf32>,
    } else {
    }
    %c0_10 = arith.constant 0 : index
    %c0_11 = arith.constant 0 : index
    %c0_12 = arith.constant 0 : index
    %18 = vector.load %arg6[%c0_10, %c0_11, %c0_12] : memref<1x32x1xf32, #tpu.memory_space<vmem>>, vector<1x32x1xf32>
    %cst_13 = arith.constant dense<0.000000e+00> : vector<32xf32>
    %19 = vector.multi_reduction <add>, %12, %cst_13 [1] : vector<32x128xf32> to vector<32xf32>
    %20 = vector.shape_cast %19 : vector<32xf32> to vector<32x1xf32>
    %21 = vector.shape_cast %20 : vector<32x1xf32> to vector<1x32x1xf32>
    %22 = arith.addf %18, %21 : vector<1x32x1xf32>
    %c0_14 = arith.constant 0 : index
    %c0_15 = arith.constant 0 : index
    %c0_16 = arith.constant 0 : index
    %23 = vector.load %arg6[%c0_14, %c0_15, %c0_16] : memref<1x32x1xf32, #tpu.memory_space<vmem>>, vector<1x32x1xf32>
    tpu.vector_store %arg6[%c0_14, %c0_15, %c0_16], %22 {strides = array<i32>} : memref<1x32x1xf32, #tpu.memory_space<vmem>>, vector<1x32x1xf32>,
    %c0_17 = arith.constant 0 : index
    %c0_18 = arith.constant 0 : index
    %c0_19 = arith.constant 0 : index
    %24 = vector.load %arg7[%c0_17, %c0_18, %c0_19] : memref<1x32x1xf32, #tpu.memory_space<vmem>>, vector<1x32x1xf32>
    %25 = arith.mulf %12, %12 : vector<32x128xf32>
    %cst_20 = arith.constant dense<0.000000e+00> : vector<32xf32>
    %26 = vector.multi_reduction <add>, %25, %cst_20 [1] : vector<32x128xf32> to vector<32xf32>
    %27 = vector.shape_cast %26 : vector<32xf32> to vector<32x1xf32>
    %28 = vector.shape_cast %27 : vector<32x1xf32> to vector<1x32x1xf32>
    %29 = arith.addf %24, %28 : vector<1x32x1xf32>
    %c0_21 = arith.constant 0 : index
    %c0_22 = arith.constant 0 : index
    %c0_23 = arith.constant 0 : index
    %30 = vector.load %arg7[%c0_21, %c0_22, %c0_23] : memref<1x32x1xf32, #tpu.memory_space<vmem>>, vector<1x32x1xf32>
    tpu.vector_store %arg7[%c0_21, %c0_22, %c0_23], %29 {strides = array<i32>} : memref<1x32x1xf32, #tpu.memory_space<vmem>>, vector<1x32x1xf32>,
    return
  }
  func.func @transform_0(%arg0: i32, %arg1: i32) -> (i32, i32) {
    %c1_i32 = arith.constant 1 : i32
    %0 = arith.muli %arg0, %c1_i32 : i32
    %1 = arith.addi %0, %arg1 : i32
    %c0_i32 = arith.constant 0 : i32
    %c0_i32_0 = arith.constant 0 : i32
    return %c0_i32, %1 : i32, i32
  }
  func.func @transform_1(%arg0: i32, %arg1: i32) -> (i32, i32) {
    %c0_i32 = arith.constant 0 : i32
    %c0_i32_0 = arith.constant 0 : i32
    %c0_i32_1 = arith.constant 0 : i32
    return %c0_i32, %c0_i32_0 : i32, i32
  }
  func.func @transform_2(%arg0: i32, %arg1: i32) -> (i32, i32) {
    %c0_i32 = arith.constant 0 : i32
    %c0_i32_0 = arith.constant 0 : i32
    %c0_i32_1 = arith.constant 0 : i32
    return %c0_i32, %c0_i32_0 : i32, i32
  }
  func.func @transform_3(%arg0: i32, %arg1: i32) -> (i32, i32) {
    %c1_i32 = arith.constant 1 : i32
    %0 = arith.muli %arg0, %c1_i32 : i32
    %1 = arith.addi %0, %arg1 : i32
    %c0_i32 = arith.constant 0 : i32
    %c0_i32_0 = arith.constant 0 : i32
    return %c0_i32, %1 : i32, i32
  }
  func.func @transform_4(%arg0: i32, %arg1: i32) -> (i32, i32, i32) {
    %c0_i32 = arith.constant 0 : i32
    %c0_i32_0 = arith.constant 0 : i32
    %c0_i32_1 = arith.constant 0 : i32
    return %arg0, %c0_i32, %c0_i32_0 : i32, i32, i32
  }
  func.func @transform_5(%arg0: i32, %arg1: i32) -> (i32, i32, i32) {
    %c0_i32 = arith.constant 0 : i32
    %c0_i32_0 = arith.constant 0 : i32
    %c0_i32_1 = arith.constant 0 : i32
    return %arg0, %c0_i32, %c0_i32_0 : i32, i32, i32
  }
}

module attributes {stable_mosaic.version = 11 : i64} {
  func.func @_mlp_layer_kernel(%arg0: i32, %arg1: i32, %arg2: memref<16x128xbf16, #tpu.memory_space<vmem>>, %arg3: memref<16x2xf32, #tpu.memory_space<vmem>>, %arg4: memref<32x16xbf16, #tpu.memory_space<vmem>>, %arg5: memref<32x128xbf16, #tpu.memory_space<vmem>>, %arg6: memref<1x32x1xf32, #tpu.memory_space<vmem>>, %arg7: memref<1x32x1xf32, #tpu.memory_space<vmem>>) attributes {dimension_semantics = [#tpu.dimension_semantics<parallel>, #tpu.dimension_semantics<arbitrary>], iteration_bounds = array<i64: 2, 2>, scalar_prefetch = 0 : i64, scratch_operands = 0 : i64, tpu.core_type = #tpu.core_type<tc>, window_params = [{transform_indices = @transform_0, window_bounds = array<i64: 16, 128>}, {pipeline_mode = #tpu.pipeline_mode<synchronous>, transform_indices = @transform_1, window_bounds = array<i64: 16, 2>}, {pipeline_mode = #tpu.pipeline_mode<synchronous>, transform_indices = @transform_2, window_bounds = array<i64: 32, 16>}, {transform_indices = @transform_3, window_bounds = array<i64: 32, 128>}, {transform_indices = @transform_4, window_bounds = array<i64: 1, 32, 1>}, {transform_indices = @transform_5, window_bounds = array<i64: 1, 32, 1>}]} {
    %c0 = arith.constant 0 : index
    %c0_0 = arith.constant 0 : index
    %0 = vector.load %arg2[%c0, %c0_0] : memref<16x128xbf16, #tpu.memory_space<vmem>>, vector<16x128xbf16>
    %c0_1 = arith.constant 0 : index
    %c0_2 = arith.constant 0 : index
    %1 = vector.load %arg4[%c0_1, %c0_2] : memref<32x16xbf16, #tpu.memory_space<vmem>>, vector<32x16xbf16>
    %cst = arith.constant dense<0.000000e+00> : vector<32x128xf32>
    %2 = tpu.matmul %1, %0, %cst {dimension_numbers = #tpu.dot_dimension_numbers<[1], [0], [0], [1], [0, 0, 1, 1], [], []>} : vector<32x16xbf16>, vector<16x128xbf16>, vector<32x128xf32> -> vector<32x128xf32>
    %3 = arith.truncf %2 : vector<32x128xf32> to vector<32x128xbf16>
    %c0_3 = arith.constant 0 : index
    %c0_4 = arith.constant 0 : index
    %4 = vector.load %arg5[%c0_3, %c0_4] : memref<32x128xbf16, #tpu.memory_space<vmem>>, vector<32x128xbf16>
    tpu.vector_store %arg5[%c0_3, %c0_4], %3 {strides = array<i32>} : memref<32x128xbf16, #tpu.memory_space<vmem>>, vector<32x128xbf16>,
    %c0_i32 = arith.constant 0 : i32
    %5 = arith.cmpi eq, %arg1, %c0_i32 : i32
    %6 = arith.extui %5 : i1 to i32
    %c0_i32_5 = arith.constant 0 : i32
    %7 = arith.cmpi ne, %6, %c0_i32_5 : i32
    scf.if %7 {
      %cst_20 = arith.constant 0.000000e+00 : f32
      %21 = vector.broadcast %cst_20 : f32 to vector<1x32x1xf32>
      %c0_21 = arith.constant 0 : index
      %c0_22 = arith.constant 0 : index
      %c0_23 = arith.constant 0 : index
      %22 = vector.load %arg6[%c0_21, %c0_22, %c0_23] : memref<1x32x1xf32, #tpu.memory_space<vmem>>, vector<1x32x1xf32>
      tpu.vector_store %arg6[%c0_21, %c0_22, %c0_23], %21 {strides = array<i32>} : memref<1x32x1xf32, #tpu.memory_space<vmem>>, vector<1x32x1xf32>,
      %cst_24 = arith.constant 0.000000e+00 : f32
      %23 = vector.broadcast %cst_24 : f32 to vector<1x32x1xf32>
      %c0_25 = arith.constant 0 : index
      %c0_26 = arith.constant 0 : index
      %c0_27 = arith.constant 0 : index
      %24 = vector.load %arg7[%c0_25, %c0_26, %c0_27] : memref<1x32x1xf32, #tpu.memory_space<vmem>>, vector<1x32x1xf32>
      tpu.vector_store %arg7[%c0_25, %c0_26, %c0_27], %23 {strides = array<i32>} : memref<1x32x1xf32, #tpu.memory_space<vmem>>, vector<1x32x1xf32>,
    } else {
    }
    %c0_6 = arith.constant 0 : index
    %c0_7 = arith.constant 0 : index
    %c0_8 = arith.constant 0 : index
    %8 = vector.load %arg6[%c0_6, %c0_7, %c0_8] : memref<1x32x1xf32, #tpu.memory_space<vmem>>, vector<1x32x1xf32>
    %cst_9 = arith.constant dense<0.000000e+00> : vector<32xf32>
    %9 = vector.multi_reduction <add>, %2, %cst_9 [1] : vector<32x128xf32> to vector<32xf32>
    %10 = vector.shape_cast %9 : vector<32xf32> to vector<32x1xf32>
    %11 = vector.shape_cast %10 : vector<32x1xf32> to vector<1x32x1xf32>
    %12 = arith.addf %8, %11 : vector<1x32x1xf32>
    %c0_10 = arith.constant 0 : index
    %c0_11 = arith.constant 0 : index
    %c0_12 = arith.constant 0 : index
    %13 = vector.load %arg6[%c0_10, %c0_11, %c0_12] : memref<1x32x1xf32, #tpu.memory_space<vmem>>, vector<1x32x1xf32>
    tpu.vector_store %arg6[%c0_10, %c0_11, %c0_12], %12 {strides = array<i32>} : memref<1x32x1xf32, #tpu.memory_space<vmem>>, vector<1x32x1xf32>,
    %c0_13 = arith.constant 0 : index
    %c0_14 = arith.constant 0 : index
    %c0_15 = arith.constant 0 : index
    %14 = vector.load %arg7[%c0_13, %c0_14, %c0_15] : memref<1x32x1xf32, #tpu.memory_space<vmem>>, vector<1x32x1xf32>
    %15 = arith.mulf %2, %2 : vector<32x128xf32>
    %cst_16 = arith.constant dense<0.000000e+00> : vector<32xf32>
    %16 = vector.multi_reduction <add>, %15, %cst_16 [1] : vector<32x128xf32> to vector<32xf32>
    %17 = vector.shape_cast %16 : vector<32xf32> to vector<32x1xf32>
    %18 = vector.shape_cast %17 : vector<32x1xf32> to vector<1x32x1xf32>
    %19 = arith.addf %14, %18 : vector<1x32x1xf32>
    %c0_17 = arith.constant 0 : index
    %c0_18 = arith.constant 0 : index
    %c0_19 = arith.constant 0 : index
    %20 = vector.load %arg7[%c0_17, %c0_18, %c0_19] : memref<1x32x1xf32, #tpu.memory_space<vmem>>, vector<1x32x1xf32>
    tpu.vector_store %arg7[%c0_17, %c0_18, %c0_19], %19 {strides = array<i32>} : memref<1x32x1xf32, #tpu.memory_space<vmem>>, vector<1x32x1xf32>,
    return
  }
  func.func @transform_0(%arg0: i32, %arg1: i32) -> (i32, i32) {
    %c2_i32 = arith.constant 2 : i32
    %0 = arith.muli %arg0, %c2_i32 : i32
    %1 = arith.addi %0, %arg1 : i32
    %c0_i32 = arith.constant 0 : i32
    %c0_i32_0 = arith.constant 0 : i32
    return %c0_i32, %1 : i32, i32
  }
  func.func @transform_1(%arg0: i32, %arg1: i32) -> (i32, i32) {
    %c0_i32 = arith.constant 0 : i32
    %c0_i32_0 = arith.constant 0 : i32
    %c0_i32_1 = arith.constant 0 : i32
    return %c0_i32, %c0_i32_0 : i32, i32
  }
  func.func @transform_2(%arg0: i32, %arg1: i32) -> (i32, i32) {
    %c0_i32 = arith.constant 0 : i32
    %c0_i32_0 = arith.constant 0 : i32
    %c0_i32_1 = arith.constant 0 : i32
    return %c0_i32, %c0_i32_0 : i32, i32
  }
  func.func @transform_3(%arg0: i32, %arg1: i32) -> (i32, i32) {
    %c2_i32 = arith.constant 2 : i32
    %0 = arith.muli %arg0, %c2_i32 : i32
    %1 = arith.addi %0, %arg1 : i32
    %c0_i32 = arith.constant 0 : i32
    %c0_i32_0 = arith.constant 0 : i32
    return %c0_i32, %1 : i32, i32
  }
  func.func @transform_4(%arg0: i32, %arg1: i32) -> (i32, i32, i32) {
    %c0_i32 = arith.constant 0 : i32
    %c0_i32_0 = arith.constant 0 : i32
    %c0_i32_1 = arith.constant 0 : i32
    return %arg0, %c0_i32, %c0_i32_0 : i32, i32, i32
  }
  func.func @transform_5(%arg0: i32, %arg1: i32) -> (i32, i32, i32) {
    %c0_i32 = arith.constant 0 : i32
    %c0_i32_0 = arith.constant 0 : i32
    %c0_i32_1 = arith.constant 0 : i32
    return %arg0, %c0_i32, %c0_i32_0 : i32, i32, i32
  }
}

module attributes {stable_mosaic.version = 11 : i64} {
  func.func @_mlp_layer_kernel(%arg0: i32, %arg1: i32, %arg2: memref<32x128xbf16, #tpu.memory_space<vmem>>, %arg3: memref<32x2xf32, #tpu.memory_space<vmem>>, %arg4: memref<64x32xbf16, #tpu.memory_space<vmem>>, %arg5: memref<64x128xbf16, #tpu.memory_space<vmem>>, %arg6: memref<1x64x1xf32, #tpu.memory_space<vmem>>, %arg7: memref<1x64x1xf32, #tpu.memory_space<vmem>>) attributes {dimension_semantics = [#tpu.dimension_semantics<parallel>, #tpu.dimension_semantics<arbitrary>], iteration_bounds = array<i64: 2, 2>, scalar_prefetch = 0 : i64, scratch_operands = 0 : i64, tpu.core_type = #tpu.core_type<tc>, window_params = [{transform_indices = @transform_0, window_bounds = array<i64: 32, 128>}, {pipeline_mode = #tpu.pipeline_mode<synchronous>, transform_indices = @transform_1, window_bounds = array<i64: 32, 2>}, {pipeline_mode = #tpu.pipeline_mode<synchronous>, transform_indices = @transform_2, window_bounds = array<i64: 64, 32>}, {transform_indices = @transform_3, window_bounds = array<i64: 64, 128>}, {transform_indices = @transform_4, window_bounds = array<i64: 1, 64, 1>}, {transform_indices = @transform_5, window_bounds = array<i64: 1, 64, 1>}]} {
    %c0 = arith.constant 0 : index
    %c0_0 = arith.constant 0 : index
    %0 = vector.load %arg2[%c0, %c0_0] : memref<32x128xbf16, #tpu.memory_space<vmem>>, vector<32x128xbf16>
    %1 = arith.extf %0 : vector<32x128xbf16> to vector<32x128xf32>
    %c0_1 = arith.constant 0 : index
    %c0_2 = arith.constant 0 : index
    %2 = vector.load %arg3[%c0_1, %c0_2] : memref<32x2xf32, #tpu.memory_space<vmem>>, vector<32x1xf32>
    %c0_3 = arith.constant 0 : index
    %c1 = arith.constant 1 : index
    %3 = vector.load %arg3[%c0_3, %c1] : memref<32x2xf32, #tpu.memory_space<vmem>>, vector<32x1xf32>
    %4 = vector.broadcast %2 : vector<32x1xf32> to vector<32x128xf32>
    %5 = arith.mulf %1, %4 : vector<32x128xf32>
    %6 = vector.broadcast %3 : vector<32x1xf32> to vector<32x128xf32>
    %7 = arith.addf %5, %6 : vector<32x128xf32>
    %cst = arith.constant 0.000000e+00 : f32
    %8 = vector.broadcast %cst : f32 to vector<32x128xf32>
    %9 = arith.maximumf %7, %8 : vector<32x128xf32>
    %10 = arith.truncf %9 : vector<32x128xf32> to vector<32x128xbf16>
    %c0_4 = arith.constant 0 : index
    %c0_5 = arith.constant 0 : index
    %11 = vector.load %arg4[%c0_4, %c0_5] : memref<64x32xbf16, #tpu.memory_space<vmem>>, vector<64x32xbf16>
    %cst_6 = arith.constant dense<0.000000e+00> : vector<64x128xf32>
    %12 = tpu.matmul %11, %10, %cst_6 {dimension_numbers = #tpu.dot_dimension_numbers<[1], [0], [0], [1], [0, 0, 1, 1], [], []>} : vector<64x32xbf16>, vector<32x128xbf16>, vector<64x128xf32> -> vector<64x128xf32>
    %13 = arith.truncf %12 : vector<64x128xf32> to vector<64x128xbf16>
    %c0_7 = arith.constant 0 : index
    %c0_8 = arith.constant 0 : index
    %14 = vector.load %arg5[%c0_7, %c0_8] : memref<64x128xbf16, #tpu.memory_space<vmem>>, vector<64x128xbf16>
    tpu.vector_store %arg5[%c0_7, %c0_8], %13 {strides = array<i32>} : memref<64x128xbf16, #tpu.memory_space<vmem>>, vector<64x128xbf16>,
    %c0_i32 = arith.constant 0 : i32
    %15 = arith.cmpi eq, %arg1, %c0_i32 : i32
    %16 = arith.extui %15 : i1 to i32
    %c0_i32_9 = arith.constant 0 : i32
    %17 = arith.cmpi ne, %16, %c0_i32_9 : i32
    scf.if %17 {
      %cst_24 = arith.constant 0.000000e+00 : f32
      %31 = vector.broadcast %cst_24 : f32 to vector<1x64x1xf32>
      %c0_25 = arith.constant 0 : index
      %c0_26 = arith.constant 0 : index
      %c0_27 = arith.constant 0 : index
      %32 = vector.load %arg6[%c0_25, %c0_26, %c0_27] : memref<1x64x1xf32, #tpu.memory_space<vmem>>, vector<1x64x1xf32>
      tpu.vector_store %arg6[%c0_25, %c0_26, %c0_27], %31 {strides = array<i32>} : memref<1x64x1xf32, #tpu.memory_space<vmem>>, vector<1x64x1xf32>,
      %cst_28 = arith.constant 0.000000e+00 : f32
      %33 = vector.broadcast %cst_28 : f32 to vector<1x64x1xf32>
      %c0_29 = arith.constant 0 : index
      %c0_30 = arith.constant 0 : index
      %c0_31 = arith.constant 0 : index
      %34 = vector.load %arg7[%c0_29, %c0_30, %c0_31] : memref<1x64x1xf32, #tpu.memory_space<vmem>>, vector<1x64x1xf32>
      tpu.vector_store %arg7[%c0_29, %c0_30, %c0_31], %33 {strides = array<i32>} : memref<1x64x1xf32, #tpu.memory_space<vmem>>, vector<1x64x1xf32>,
    } else {
    }
    %c0_10 = arith.constant 0 : index
    %c0_11 = arith.constant 0 : index
    %c0_12 = arith.constant 0 : index
    %18 = vector.load %arg6[%c0_10, %c0_11, %c0_12] : memref<1x64x1xf32, #tpu.memory_space<vmem>>, vector<1x64x1xf32>
    %cst_13 = arith.constant dense<0.000000e+00> : vector<64xf32>
    %19 = vector.multi_reduction <add>, %12, %cst_13 [1] : vector<64x128xf32> to vector<64xf32>
    %20 = vector.shape_cast %19 : vector<64xf32> to vector<64x1xf32>
    %21 = vector.shape_cast %20 : vector<64x1xf32> to vector<1x64x1xf32>
    %22 = arith.addf %18, %21 : vector<1x64x1xf32>
    %c0_14 = arith.constant 0 : index
    %c0_15 = arith.constant 0 : index
    %c0_16 = arith.constant 0 : index
    %23 = vector.load %arg6[%c0_14, %c0_15, %c0_16] : memref<1x64x1xf32, #tpu.memory_space<vmem>>, vector<1x64x1xf32>
    tpu.vector_store %arg6[%c0_14, %c0_15, %c0_16], %22 {strides = array<i32>} : memref<1x64x1xf32, #tpu.memory_space<vmem>>, vector<1x64x1xf32>,
    %c0_17 = arith.constant 0 : index
    %c0_18 = arith.constant 0 : index
    %c0_19 = arith.constant 0 : index
    %24 = vector.load %arg7[%c0_17, %c0_18, %c0_19] : memref<1x64x1xf32, #tpu.memory_space<vmem>>, vector<1x64x1xf32>
    %25 = arith.mulf %12, %12 : vector<64x128xf32>
    %cst_20 = arith.constant dense<0.000000e+00> : vector<64xf32>
    %26 = vector.multi_reduction <add>, %25, %cst_20 [1] : vector<64x128xf32> to vector<64xf32>
    %27 = vector.shape_cast %26 : vector<64xf32> to vector<64x1xf32>
    %28 = vector.shape_cast %27 : vector<64x1xf32> to vector<1x64x1xf32>
    %29 = arith.addf %24, %28 : vector<1x64x1xf32>
    %c0_21 = arith.constant 0 : index
    %c0_22 = arith.constant 0 : index
    %c0_23 = arith.constant 0 : index
    %30 = vector.load %arg7[%c0_21, %c0_22, %c0_23] : memref<1x64x1xf32, #tpu.memory_space<vmem>>, vector<1x64x1xf32>
    tpu.vector_store %arg7[%c0_21, %c0_22, %c0_23], %29 {strides = array<i32>} : memref<1x64x1xf32, #tpu.memory_space<vmem>>, vector<1x64x1xf32>,
    return
  }
  func.func @transform_0(%arg0: i32, %arg1: i32) -> (i32, i32) {
    %c2_i32 = arith.constant 2 : i32
    %0 = arith.muli %arg0, %c2_i32 : i32
    %1 = arith.addi %0, %arg1 : i32
    %c0_i32 = arith.constant 0 : i32
    %c0_i32_0 = arith.constant 0 : i32
    return %c0_i32, %1 : i32, i32
  }
  func.func @transform_1(%arg0: i32, %arg1: i32) -> (i32, i32) {
    %c0_i32 = arith.constant 0 : i32
    %c0_i32_0 = arith.constant 0 : i32
    %c0_i32_1 = arith.constant 0 : i32
    return %c0_i32, %c0_i32_0 : i32, i32
  }
  func.func @transform_2(%arg0: i32, %arg1: i32) -> (i32, i32) {
    %c0_i32 = arith.constant 0 : i32
    %c0_i32_0 = arith.constant 0 : i32
    %c0_i32_1 = arith.constant 0 : i32
    return %c0_i32, %c0_i32_0 : i32, i32
  }
  func.func @transform_3(%arg0: i32, %arg1: i32) -> (i32, i32) {
    %c2_i32 = arith.constant 2 : i32
    %0 = arith.muli %arg0, %c2_i32 : i32
    %1 = arith.addi %0, %arg1 : i32
    %c0_i32 = arith.constant 0 : i32
    %c0_i32_0 = arith.constant 0 : i32
    return %c0_i32, %1 : i32, i32
  }
  func.func @transform_4(%arg0: i32, %arg1: i32) -> (i32, i32, i32) {
    %c0_i32 = arith.constant 0 : i32
    %c0_i32_0 = arith.constant 0 : i32
    %c0_i32_1 = arith.constant 0 : i32
    return %arg0, %c0_i32, %c0_i32_0 : i32, i32, i32
  }
  func.func @transform_5(%arg0: i32, %arg1: i32) -> (i32, i32, i32) {
    %c0_i32 = arith.constant 0 : i32
    %c0_i32_0 = arith.constant 0 : i32
    %c0_i32_1 = arith.constant 0 : i32
    return %arg0, %c0_i32, %c0_i32_0 : i32, i32, i32
  }
}

module attributes {stable_mosaic.version = 11 : i64} {
  func.func @_bn_relu_maxk_kernel(%arg0: i32, %arg1: i32, %arg2: memref<64x16x16xbf16, #tpu.memory_space<vmem>>, %arg3: memref<64x2xf32, #tpu.memory_space<vmem>>, %arg4: memref<1x64x16xf32, #tpu.memory_space<vmem>>) attributes {dimension_semantics = [#tpu.dimension_semantics<parallel>, #tpu.dimension_semantics<parallel>], iteration_bounds = array<i64: 2, 1>, scalar_prefetch = 0 : i64, scratch_operands = 0 : i64, tpu.core_type = #tpu.core_type<tc>, window_params = [{transform_indices = @transform_0, window_bounds = array<i64: 64, 16, 16>}, {pipeline_mode = #tpu.pipeline_mode<synchronous>, transform_indices = @transform_1, window_bounds = array<i64: 64, 2>}, {transform_indices = @transform_2, window_bounds = array<i64: 1, 64, 16>}]} {
    %c0 = arith.constant 0 : index
    %c0_0 = arith.constant 0 : index
    %0 = vector.load %arg3[%c0, %c0_0] : memref<64x2xf32, #tpu.memory_space<vmem>>, vector<64x2xf32>
    %1 = vector.extract_strided_slice %0 {offsets = [0, 0], sizes = [64, 1], strides = [1, 1]} : vector<64x2xf32> to vector<64x1xf32>
    %2 = vector.shape_cast %1 : vector<64x1xf32> to vector<64x1x1xf32>
    %3 = vector.extract_strided_slice %0 {offsets = [0, 1], sizes = [64, 1], strides = [1, 1]} : vector<64x2xf32> to vector<64x1xf32>
    %4 = vector.shape_cast %3 : vector<64x1xf32> to vector<64x1x1xf32>
    %c0_1 = arith.constant 0 : index
    %c0_2 = arith.constant 0 : index
    %c0_3 = arith.constant 0 : index
    %5 = vector.load %arg2[%c0_1, %c0_2, %c0_3] : memref<64x16x16xbf16, #tpu.memory_space<vmem>>, vector<64x16x16xbf16>
    %6 = arith.extf %5 : vector<64x16x16xbf16> to vector<64x16x16xf32>
    %7 = vector.broadcast %2 : vector<64x1x1xf32> to vector<64x16x16xf32>
    %8 = arith.mulf %6, %7 : vector<64x16x16xf32>
    %9 = vector.broadcast %4 : vector<64x1x1xf32> to vector<64x16x16xf32>
    %10 = arith.addf %8, %9 : vector<64x16x16xf32>
    %cst = arith.constant 0.000000e+00 : f32
    %11 = vector.broadcast %cst : f32 to vector<64x16x16xf32>
    %12 = arith.maximumf %10, %11 : vector<64x16x16xf32>
    %cst_4 = arith.constant dense<0xFF800000> : vector<64x16xf32>
    %13 = vector.multi_reduction <maximumf>, %12, %cst_4 [1] : vector<64x16x16xf32> to vector<64x16xf32>
    %14 = vector.shape_cast %13 : vector<64x16xf32> to vector<1x64x16xf32>
    %c0_5 = arith.constant 0 : index
    %c0_6 = arith.constant 0 : index
    %c0_7 = arith.constant 0 : index
    %15 = vector.load %arg4[%c0_5, %c0_6, %c0_7] : memref<1x64x16xf32, #tpu.memory_space<vmem>>, vector<1x64x16xf32>
    tpu.vector_store %arg4[%c0_5, %c0_6, %c0_7], %14 {strides = array<i32>} : memref<1x64x16xf32, #tpu.memory_space<vmem>>, vector<1x64x16xf32>,
    return
  }
  func.func @transform_0(%arg0: i32, %arg1: i32) -> (i32, i32, i32) {
    %c0_i32 = arith.constant 0 : i32
    %c0_i32_0 = arith.constant 0 : i32
    return %c0_i32, %arg0, %arg1 : i32, i32, i32
  }
  func.func @transform_1(%arg0: i32, %arg1: i32) -> (i32, i32) {
    %c0_i32 = arith.constant 0 : i32
    %c0_i32_0 = arith.constant 0 : i32
    %c0_i32_1 = arith.constant 0 : i32
    return %c0_i32, %c0_i32_0 : i32, i32
  }
  func.func @transform_2(%arg0: i32, %arg1: i32) -> (i32, i32, i32) {
    %c0_i32 = arith.constant 0 : i32
    %c0_i32_0 = arith.constant 0 : i32
    return %arg0, %c0_i32, %arg1 : i32, i32, i32
  }
}

</mosaic_0001>

<llo_original>
// kernel: custom-call.12
$region0: #{custom-call.12}
  %s0 = inlined_call_operand.vmem [shape: f32[2,64], index: 0, kind: output, shape index: {}]

// kernel: pointnet_set_abstraction_msg.5
$region0: #{pointnet_set_abstraction_msg.5}
  #allocation0 [shape = 'u32[]', space=smem, size = 0x4, offset = 0x4, fixed_abs, tag = 'smem constant byte address 0x4 - core index']
  #allocation1 [shape = 'u32[144,128]{1,0:T(1,128)}', space=vmem, size = 0x12000, scoped, tag = 'internal scratch']
  %s0 = inlined_call_operand.vmem [shape: bf16[16,256], index: 0, kind: input, shape index: {}]
  %s1 = inlined_call_operand.vmem [shape: f32[16,2], index: 1, kind: input, shape index: {}]
  %s2 = inlined_call_operand.vmem [shape: bf16[16,16], index: 2, kind: input, shape index: {}]
  %s3 = inlined_call_operand.vmem [shape: bf16[16,256], index: 3, kind: output, shape index: {0}]
  %s4 = inlined_call_operand.vmem [shape: f32[2,16,1], index: 4, kind: output, shape index: {1}]
  %s5 = inlined_call_operand.vmem [shape: f32[2,16,1], index: 5, kind: output, shape index: {2}]
  %6 = xla_tuple %s3, %s4, %s5
  %s7 = sld [smem:[#allocation0]]
  $region143: #{pointnet_set_abstraction_msg.5} parent=0
    _
  %s9 = ssub.s32 1, %s7
  %s10 = scalar_select 0, %s9, %s7
  $region1: #{pointnet_set_abstraction_msg.5} parent=0
    #allocation2 [shape = 'u8[8192]{0}', space=vmem, size = 0x2000, scoped, tag = 'input window, operand 0']
    #allocation3 [shape = 'u8[8192]{0}', space=vmem, size = 0x2000, scoped, tag = 'output window, operand 0']
    loop: start=0, step=1, limit=4
    $region2: #{pointnet_set_abstraction_msg.5} parent=1 // loop_pre_header
      _
    $region3: #{pointnet_set_abstraction_msg.5} parent=1 // loop_header
      %s12 = sphi 0, %s16
      %p13 = scmp.ge.s32.totalorder %s12, 4
      %s19 = sphi 0, %s31
      %s20 = sphi 0, %s27
      %s21 = sphi 0, %s19
      %s22 = sphi 0, %s20
      %s23 = sphi 0, %s21
      %s24 = sphi 0, %s22
      %s36 = sphi 0, %s38
      %s39 = sphi 0, %s36
      %s40 = sphi 0, %s39
      %s56 = sphi 0, %s40
      %s60 = sphi 0, %s60
      %s62 = sphi 0, %s60
      %s63 = sphi 0, %s62
      %s77 = sphi 0, %s63
      %s81 = sphi 0, %s81
      %s83 = sphi 0, %s81
      %s84 = sphi 0, %s83
      %s98 = sphi 0, %s84
      %s106 = sphi 0, %s108
      %s109 = sphi 0, %s106
      %s110 = sphi 0, %s109
      %s126 = sphi 0, %s110
      %s132 = sphi 0, %s134
      %s135 = sphi 0, %s132
      %s136 = sphi 0, %s135
      %s152 = sphi 0, %s136
      %s158 = sphi 0, %s160
      %s161 = sphi 0, %s158
      %s162 = sphi 0, %s161
      %s178 = sphi 0, %s162
    $region4: #{pointnet_set_abstraction_msg.5} parent=1 // loop_header_branch
      %15 = sbr.rel (%p13) target = $region8
    $region5: #{pointnet_set_abstraction_msg.5} parent=1 // loop_body
      %s17 = ssub.s32 %s12, 1
      %s18 = ssub.s32 %s12, 2
      %s25 = sadd.s32 1, %s20
      %p26 = scmp.ge.s32.totalorder %s25, 1
      %s27 = scalar_select %p26, 0, %s25
      %s28 = sadd.s32 1, %s19
      %s29 = scalar_select %p26, %s28, %s19
      %p30 = scmp.ge.s32.totalorder %s29, 2
      %s31 = scalar_select %p30, 0, %s29
      %s32 = sadd.s32 %s19, %s20
      %s33 = sadd.s32 %s31, %s27
      %s34 = ssub.s32 %s32, %s33
      %p35 = scmp.eq.s32.totalorder %s34, 0
      %s37 = sadd.s32 %s36, 1
      %s38 = scalar_select %p35, %s36, %s37
      %p41 = pneg %p35
      %p42 = scmp.eq.s32.totalorder %s12, 1
      %p43 = por %p41, %p42
      %p44 = scmp.ne.s32.totalorder %s36, %s39
      %p45 = scmp.eq.s32.totalorder %s12, 0
      %p46 = por %p44, %p45
      %p47 = scmp.ne.s32.totalorder %s36, %s39
      %p48 = scmp.eq.s32.totalorder %s17, 1
      %p49 = por %p47, %p48
      %p50 = scmp.ne.s32.totalorder %s39, %s40
      %p51 = scmp.eq.s32.totalorder %s17, 0
      %p52 = por %p50, %p51
      %p53 = scmp.ne.s32.totalorder %s39, %s40
      %p54 = scmp.eq.s32.totalorder %s18, 1
      %p55 = por %p53, %p54
      %p57 = scmp.ne.s32.totalorder %s40, %s56
      %p58 = scmp.eq.s32.totalorder %s18, 0
      %p59 = por %p57, %p58
      %s61 = sadd.s32 %s60, 1
      %p64 = scmp.eq.s32.totalorder %s12, 1
      %p65 = scmp.ne.s32.totalorder %s60, %s62
      %p66 = scmp.eq.s32.totalorder %s12, 0
      %p67 = por %p65, %p66
      %p68 = scmp.ne.s32.totalorder %s60, %s62
      %p69 = scmp.eq.s32.totalorder %s17, 1
      %p70 = por %p68, %p69
      %p71 = scmp.ne.s32.totalorder %s62, %s63
      %p72 = scmp.eq.s32.totalorder %s17, 0
      %p73 = por %p71, %p72
      %p74 = scmp.ne.s32.totalorder %s62, %s63
      %p75 = scmp.eq.s32.totalorder %s18, 1
      %p76 = por %p74, %p75
      %p78 = scmp.ne.s32.totalorder %s63, %s77
      %p79 = scmp.eq.s32.totalorder %s18, 0
      %p80 = por %p78, %p79
      %s82 = sadd.s32 %s81, 1
      %p85 = scmp.eq.s32.totalorder %s12, 1
      %p86 = scmp.ne.s32.totalorder %s81, %s83
      %p87 = scmp.eq.s32.totalorder %s12, 0
      %p88 = por %p86, %p87
      %p89 = scmp.ne.s32.totalorder %s81, %s83
      %p90 = scmp.eq.s32.totalorder %s17, 1
      %p91 = por %p89, %p90
      %p92 = scmp.ne.s32.totalorder %s83, %s84
      %p93 = scmp.eq.s32.totalorder %s17, 0
      %p94 = por %p92, %p93
      %p95 = scmp.ne.s32.totalorder %s83, %s84
      %p96 = scmp.eq.s32.totalorder %s18, 1
      %p97 = por %p95, %p96
      %p99 = scmp.ne.s32.totalorder %s84, %s98
      %p100 = scmp.eq.s32.totalorder %s18, 0
      %p101 = por %p99, %p100
      %s102 = sadd.s32 %s19, %s20
      %s103 = sadd.s32 %s31, %s27
      %s104 = ssub.s32 %s102, %s103
      %p105 = scmp.eq.s32.totalorder %s104, 0
      %s107 = sadd.s32 %s106, 1
      %s108 = scalar_select %p105, %s106, %s107
      %p111 = pneg %p105
      %p112 = scmp.eq.s32.totalorder %s12, 1
      %p113 = por %p111, %p112
      %p114 = scmp.ne.s32.totalorder %s106, %s109
      %p115 = scmp.eq.s32.totalorder %s12, 0
      %p116 = por %p114, %p115
      %p117 = scmp.ne.s32.totalorder %s106, %s109
      %p118 = scmp.eq.s32.totalorder %s17, 1
      %p119 = por %p117, %p118
      %p120 = scmp.ne.s32.totalorder %s109, %s110
      %p121 = scmp.eq.s32.totalorder %s17, 0
      %p122 = por %p120, %p121
      %p123 = scmp.ne.s32.totalorder %s109, %s110
      %p124 = scmp.eq.s32.totalorder %s18, 1
      %p125 = por %p123, %p124
      %p127 = scmp.ne.s32.totalorder %s110, %s126
      %p128 = scmp.eq.s32.totalorder %s18, 0
      %p129 = por %p127, %p128
      %s130 = ssub.s32 %s19, %s31
      %p131 = scmp.eq.s32.totalorder %s130, 0
      %s133 = sadd.s32 %s132, 1
      %s134 = scalar_select %p131, %s132, %s133
      %p137 = pneg %p131
      %p138 = scmp.eq.s32.totalorder %s12, 1
      %p139 = por %p137, %p138
      %p140 = scmp.ne.s32.totalorder %s132, %s135
      %p141 = scmp.eq.s32.totalorder %s12, 0
      %p142 = por %p140, %p141
      %p143 = scmp.ne.s32.totalorder %s132, %s135
      %p144 = scmp.eq.s32.totalorder %s17, 1
      %p145 = por %p143, %p144
      %p146 = scmp.ne.s32.totalorder %s135, %s136
      %p147 = scmp.eq.s32.totalorder %s17, 0
      %p148 = por %p146, %p147
      %p149 = scmp.ne.s32.totalorder %s135, %s136
      %p150 = scmp.eq.s32.totalorder %s18, 1
      %p151 = por %p149, %p150
      %p153 = scmp.ne.s32.totalorder %s136, %s152
      %p154 = scmp.eq.s32.totalorder %s18, 0
      %p155 = por %p153, %p154
      %s156 = ssub.s32 %s19, %s31
      %p157 = scmp.eq.s32.totalorder %s156, 0
      %s159 = sadd.s32 %s158, 1
      %s160 = scalar_select %p157, %s158, %s159
      %p163 = pneg %p157
      %p164 = scmp.eq.s32.totalorder %s12, 1
      %p165 = por %p163, %p164
      %p166 = scmp.ne.s32.totalorder %s158, %s161
      %p167 = scmp.eq.s32.totalorder %s12, 0
      %p168 = por %p166, %p167
      %p169 = scmp.ne.s32.totalorder %s158, %s161
      %p170 = scmp.eq.s32.totalorder %s17, 1
      %p171 = por %p169, %p170
      %p172 = scmp.ne.s32.totalorder %s161, %s162
      %p173 = scmp.eq.s32.totalorder %s17, 0
      %p174 = por %p172, %p173
      %p175 = scmp.ne.s32.totalorder %s161, %s162
      %p176 = scmp.eq.s32.totalorder %s18, 1
      %p177 = por %p175, %p176
      %p179 = scmp.ne.s32.totalorder %s162, %s178
      %p180 = scmp.eq.s32.totalorder %s18, 0
      %p181 = por %p179, %p180
      %p182 = scmp.le.s32.totalorder 1, %s12
      %p183 = scmp.lt.s32.totalorder %s12, 3
      %p184 = pnand %p182, %p183
      %p185 = pneg %p184
      // Predicated region
      $region9: #{pointnet_set_abstraction_msg.5} parent=5 // pred_check
        _
      $region10: #{pointnet_set_abstraction_msg.5} parent=5 // pred_check_branch
        %187 = sbr.rel (%p184) target = $region12
      $region11: #{pointnet_set_abstraction_msg.5} parent=5 // pred_region
        %s188 = ssub.s32 %s12, 1
        // Predicated region
        $region13: #{pointnet_set_abstraction_msg.5} parent=11 // pred_check
          %p189 = pneg %p73
        $region14: #{pointnet_set_abstraction_msg.5} parent=11 // pred_check_branch
          %191 = sbr.rel (%p189) target = $region16
        $region15: #{pointnet_set_abstraction_msg.5} parent=11 // pred_region
          _
        $region16: #{pointnet_set_abstraction_msg.5} parent=11 // pred_fallthru
          _
        // Predicated region
        $region17: #{pointnet_set_abstraction_msg.5} parent=11 // pred_check
          %p192 = pneg %p94
        $region18: #{pointnet_set_abstraction_msg.5} parent=11 // pred_check_branch
          %194 = sbr.rel (%p192) target = $region20
        $region19: #{pointnet_set_abstraction_msg.5} parent=11 // pred_region
          _
        $region20: #{pointnet_set_abstraction_msg.5} parent=11 // pred_fallthru
          _
      $region12: #{pointnet_set_abstraction_msg.5} parent=5 // pred_fallthru
        _
      %p195 = scmp.lt.s32.totalorder %s12, 2
      // Predicated region
      $region21: #{pointnet_set_abstraction_msg.5} parent=5 // pred_check
        %p196 = pneg %p195
      $region22: #{pointnet_set_abstraction_msg.5} parent=5 // pred_check_branch
        %198 = sbr.rel (%p196) target = $region24
      $region23: #{pointnet_set_abstraction_msg.5} parent=5 // pred_region
        // Predicated region
        $region25: #{pointnet_set_abstraction_msg.5} parent=23 // pred_check
          %p199 = pneg %p46
        $region26: #{pointnet_set_abstraction_msg.5} parent=23 // pred_check_branch
          %201 = sbr.rel (%p199) target = $region28
        $region27: #{pointnet_set_abstraction_msg.5} parent=23 // pred_region
          %s202 = sand.u32 %s36, 1
          %s203 = sand.u32 %s36, 1
          %s204 = smul.addr %s203, 8
          %s205 = scalar_lea.vmem [#allocation2], %s204
          %s206 = sadd.s32 %s19, %s20
          %s207 = smul.addr %s206, 4
          %s208 = scalar_lea.vmem %s0, %s207
          // Predicated region
          $region29: #{pointnet_set_abstraction_msg.5} parent=27 // pred_check
            _
          $region30: #{pointnet_set_abstraction_msg.5} parent=27 // pred_check_branch
            %210 = sbr.rel (0) target = $region32
          $region31: #{pointnet_set_abstraction_msg.5} parent=27 // pred_region
            // Predicated region
            $region33: #{pointnet_set_abstraction_msg.5} parent=31 // pred_check
              _
            $region34: #{pointnet_set_abstraction_msg.5} parent=31 // pred_check_branch
              %212 = sbr.rel target = $region36
            $region35: #{pointnet_set_abstraction_msg.5} parent=31 // pred_region
              // Predicated region
              $region48: #{pointnet_set_abstraction_msg.5} parent=35 // pred_check
                _
              $region49: #{pointnet_set_abstraction_msg.5} parent=35 // pred_check_branch
                %230 = sbr.rel (0) target = $region51
              $region50: #{pointnet_set_abstraction_msg.5} parent=35 // pred_region
                loop: start=0, step=1, limit=1
                $region52: #{pointnet_set_abstraction_msg.5} parent=50 // loop_pre_header
                  _
                $region53: #{pointnet_set_abstraction_msg.5} parent=50 // loop_header
                  %s232 = sphi 0, %s236
                  %p233 = scmp.ge.s32.totalorder %s232, 1
                  %s237 = sphi %s208, %s208
                  %s238 = sphi %s205, %s205
                $region54: #{pointnet_set_abstraction_msg.5} parent=50 // loop_header_branch
                  %235 = sbr.rel (%p233) target = $region58
                $region55: #{pointnet_set_abstraction_msg.5} parent=50 // loop_body
                  _
                $region56: #{pointnet_set_abstraction_msg.5} parent=50 // loop_footer
                  %s236 = sadd.s32 1, %s232
                $region57: #{pointnet_set_abstraction_msg.5} parent=50 // loop_footer_branch
                  %231 = sbr.rel target = $region53
                $region58: #{pointnet_set_abstraction_msg.5} parent=50 // loop_exit
                  _
                %s240 = ssub.s32 16, 1
                loop: start=0, step=1, limit=1
                $region59: #{pointnet_set_abstraction_msg.5} parent=50 // loop_pre_header
                  _
                $region60: #{pointnet_set_abstraction_msg.5} parent=50 // loop_header
                  %s242 = sphi 0, %s246
                  %p243 = scmp.ge.s32.totalorder %s242, 1
                  %s247 = sphi %s208, %s208
                  %s248 = sphi %s205, %s205
                $region61: #{pointnet_set_abstraction_msg.5} parent=50 // loop_header_branch
                  %245 = sbr.rel (%p243) target = $region65
                $region62: #{pointnet_set_abstraction_msg.5} parent=50 // loop_body
                  %v249 = vld [vmem:[%s247] sm:%s240]
                  %250 = vst [vmem:[%s248] sm:%s240] %v249
                  %v251 = vld [vmem:[%s247 + $0x8] sm:%s240]
                  %252 = vst [vmem:[%s248 + $0x4] sm:%s240] %v251
                $region63: #{pointnet_set_abstraction_msg.5} parent=50 // loop_footer
                  %s246 = sadd.s32 1, %s242
                $region64: #{pointnet_set_abstraction_msg.5} parent=50 // loop_footer_branch
                  %241 = sbr.rel target = $region60
                $region65: #{pointnet_set_abstraction_msg.5} parent=50 // loop_exit
                  _
              $region51: #{pointnet_set_abstraction_msg.5} parent=35 // pred_fallthru
                _
            $region36: #{pointnet_set_abstraction_msg.5} parent=31 // pred_fallthru
              _
            // Predicated region
            $region37: #{pointnet_set_abstraction_msg.5} parent=31 // pred_check
              _
            $region38: #{pointnet_set_abstraction_msg.5} parent=31 // pred_check_branch
              %214 = sbr.rel (0) target = $region40
            $region39: #{pointnet_set_abstraction_msg.5} parent=31 // pred_region
              %s216 = ssub.s32 16, 1
              loop: start=0, step=1, limit=1
              $region41: #{pointnet_set_abstraction_msg.5} parent=39 // loop_pre_header
                _
              $region42: #{pointnet_set_abstraction_msg.5} parent=39 // loop_header
                %s218 = sphi 0, %s222
                %p219 = scmp.ge.s32.totalorder %s218, 1
                %s223 = sphi %s208, %s208
                %s224 = sphi %s205, %s205
              $region43: #{pointnet_set_abstraction_msg.5} parent=39 // loop_header_branch
                %221 = sbr.rel (%p219) target = $region47
              $region44: #{pointnet_set_abstraction_msg.5} parent=39 // loop_body
                %v225 = vld [vmem:[%s223] sm:%s216]
                %226 = vst [vmem:[%s224] sm:%s216] %v225
                %v227 = vld [vmem:[%s223 + $0x8] sm:%s216]
                %228 = vst [vmem:[%s224 + $0x4] sm:%s216] %v227
              $region45: #{pointnet_set_abstraction_msg.5} parent=39 // loop_footer
                %s222 = sadd.s32 1, %s218
              $region46: #{pointnet_set_abstraction_msg.5} parent=39 // loop_footer_branch
                %217 = sbr.rel target = $region42
              $region47: #{pointnet_set_abstraction_msg.5} parent=39 // loop_exit
                _
            $region40: #{pointnet_set_abstraction_msg.5} parent=31 // pred_fallthru
              _
          $region32: #{pointnet_set_abstraction_msg.5} parent=27 // pred_fallthru
            _
          %253 = vnop
        $region28: #{pointnet_set_abstraction_msg.5} parent=23 // pred_fallthru
          _
      $region24: #{pointnet_set_abstraction_msg.5} parent=5 // pred_fallthru
        _
      %p254 = scmp.le.s32.totalorder 1, %s12
      %p255 = scmp.lt.s32.totalorder %s12, 3
      %p256 = pnand %p254, %p255
      %p257 = pneg %p256
      // Predicated region
      $region66: #{pointnet_set_abstraction_msg.5} parent=5 // pred_check
        _
      $region67: #{pointnet_set_abstraction_msg.5} parent=5 // pred_check_branch
        %259 = sbr.rel (%p256) target = $region69
      $region68: #{pointnet_set_abstraction_msg.5} parent=5 // pred_region
        %s260 = ssub.s32 %s12, 1
        %s261 = sand.u32 %s39, 1
        %s262 = sand.u32 %s39, 1
        %s263 = smul.addr %s262, 8
        %s264 = scalar_lea.vmem [#allocation2], %s263
        // Predicated region
        $region70: #{pointnet_set_abstraction_msg.5} parent=68 // pred_check
          %p265 = pneg %p52
        $region71: #{pointnet_set_abstraction_msg.5} parent=68 // pred_check_branch
          %267 = sbr.rel (%p265) target = $region73
        $region72: #{pointnet_set_abstraction_msg.5} parent=68 // pred_region
          _
        $region73: #{pointnet_set_abstraction_msg.5} parent=68 // pred_fallthru
          _
        %s268 = sand.u32 %s39, 1
        %s269 = sand.u32 %s39, 1
        %s270 = smul.addr %s269, 8
        %s271 = scalar_lea.vmem [#allocation2], %s270
        %p272 = pneg %p52
        %p273 = pneg %p49
        %p274 = pneg %p73
        %p275 = pneg %p70
        %p276 = pneg %p94
        %p277 = pneg %p91
        %p278 = pneg %p122
        %p279 = pneg %p119
        %s280 = sand.u32 %s109, 1
        %s281 = sand.u32 %s109, 1
        %s282 = smul.addr %s281, 8
        %s283 = scalar_lea.vmem [#allocation3], %s282
        %p284 = pneg %p148
        %p285 = pneg %p145
        %p286 = scmp.lt.s32.totalorder %s21, 1
        %s287 = scalar_select %p286, %s21, 1
        %s288 = smul.addr %s287, 2
        %s289 = smul.addr %s288, 8
        %s290 = scalar_lea.vmem %s4, %s289
        %p291 = pneg %p174
        %p292 = pneg %p171
        %p293 = scmp.lt.s32.totalorder %s21, 1
        %s294 = scalar_select %p293, %s21, 1
        %s295 = smul.addr %s294, 2
        %s296 = smul.addr %s295, 8
        %s297 = scalar_lea.vmem %s5, %s296
        %s298 = sadd.s32 %s21, %s22
        %s299 = sadd.s32 %s21, %s22
        %p300 = scmp.lt.s32.totalorder %s21, 1
        %s301 = scalar_select %p300, %s21, 1
        %s302 = smul.addr %s301, 2
        %s303 = smul.addr %s302, 8
        %s304 = scalar_lea.vmem %s4, %s303
        %p305 = scmp.lt.s32.totalorder %s21, 1
        %s306 = scalar_select %p305, %s21, 1
        %s307 = smul.addr %s306, 2
        %s308 = smul.addr %s307, 8
        %s309 = scalar_lea.vmem %s5, %s308
        %v311 = vld [vmem:[%s264] sm:$0xf]
        %v312 = vld [vmem:[%s264 + $0x4] sm:$0xf]
        %v313 = vld [vmem:[%s2] sm:$0xf]
        %v314 = vld [vmem:[%s2 + $0x4] sm:$0xf]
        %v317 = vunpack.c.l.b16 %v313
        %v318 = vunpack.c.l.b16 %v314
        %v319 = vpack.c.b16 %v318, %v317
        %v322 = vunpack.c.l.b16 %v311
        %v323 = vunpack.c.l.b16 %v312
        %v324 = vpack.c.b16 %v323, %v322
        %vm326 = vcmask 130048
        %v328 = vsel %vm326, %v319, 0
        %330 = vmatprep.subr.bf16.mxu0 0
        %331 = vmatpush1.bf16.msra.mxu0 0
        %332 = vmatprep.subr.bf16.mxu0 0
        %333 = vmatpush1.bf16.msra.mxu0 0
        %334 = vmatprep.subr.bf16.mxu0 0
        %335 = vmatpush1.bf16.msra.mxu0 0
        %336 = vmatprep.subr.bf16.mxu0 0
        %337 = vmatpush1.bf16.msra.mxu0 0
        %338 = vmatprep.subr.bf16.mxu0 0
        %339 = vmatpush1.bf16.msra.mxu0 0
        %340 = vmatprep.subr.bf16.mxu0 0
        %341 = vmatpush1.bf16.msra.mxu0 0
        %342 = vmatprep.subr.bf16.mxu0 0
        %343 = vmatpush1.bf16.msra.mxu0 0
        %344 = vmatprep.subr.bf16.mxu0 0
        %345 = vmatpush1.bf16.msra.mxu0 %v324
        %346 = vmatprep.subr.bf16.mxu0 0
        %347 = vmatpush2.bf16.msra.mxu0 0
        %348 = vmatprep.subr.bf16.mxu0 0
        %349 = vmatpush2.bf16.msra.mxu0 0
        %350 = vmatprep.subr.bf16.mxu0 0
        %351 = vmatpush2.bf16.msra.mxu0 0
        %352 = vmatprep.subr.bf16.mxu0 0
        %353 = vmatpush2.bf16.msra.mxu0 0
        %354 = vmatprep.subr.bf16.mxu0 0
        %355 = vmatpush2.bf16.msra.mxu0 0
        %356 = vmatprep.subr.bf16.mxu0 0
        %357 = vmatpush2.bf16.msra.mxu0 0
        %358 = vmatprep.subr.bf16.mxu0 0
        %359 = vmatpush2.bf16.msra.mxu0 0
        %360 = vmatprep.subr.bf16.mxu0 0
        %361 = vmatpush2.bf16.msra.mxu0 0
        %362 = vmatprep.mubr.bf16.mxu0 0
        %363 = vmatmul.mubr.bf16.gmra.mxu0 %v328
        %v364 = vpop.f32.mrf.mxu0
        %v365 = vadd.f32 0.0, %v364
        %v366 = vpop.f32.mrf.mxu0
        %v367 = vpop.f32.mrf.mxu0
        %v368 = vadd.f32 0.0, %v367
        %v369 = vpop.f32.mrf.mxu0
        %370 = vdwg.mxu0
        %v371 = vpack.c.bf16 %v368, %v365
        %v373 = vunpack.c.l.b16 %v371
        %v374 = vunpack.c.h.b16 %v371
        %v375 = vpack.c.b16 %v373, %v373
        %v376 = vpack.c.b16 %v374, %v374
        %379 = vst [vmem:[%s283] sm:$0xf] %v375
        %380 = vst [vmem:[%s283 + $0x4] sm:$0xf] %v376
        %p381 = scmp.eq.s32.totalorder %s22, 0
        // Predicated region
        $region74: #{pointnet_set_abstraction_msg.5} parent=68 // pred_check
          %p382 = pneg %p381
        $region75: #{pointnet_set_abstraction_msg.5} parent=68 // pred_check_branch
          %384 = sbr.rel (%p382) target = $region77
        $region76: #{pointnet_set_abstraction_msg.5} parent=68 // pred_region
          %vm385 = vcmask 7168
          %386 = vst.msk [vmem:[%s304] sm:$0xff] %vm385, 0.0
          %387 = vst.msk [vmem:[%s304 + $0x8] sm:$0xff] %vm385, 0.0
          %388 = vst.msk [vmem:[%s309] sm:$0xff] %vm385, 0.0
          %389 = vst.msk [vmem:[%s309 + $0x8] sm:$0xff] %vm385, 0.0
        $region77: #{pointnet_set_abstraction_msg.5} parent=68 // pred_fallthru
          _
        %v390 = vld [vmem:[%s304] sm:$0xff]
        %v391 = vld [vmem:[%s304 + $0x8] sm:$0xff]
        %392 = vadd.xlane.f32.xlu0 %v365
        %v393 = vpop.xlane.xlu0 %392
        %394 = vadd.xlane.f32.xlu0 %v368
        %v395 = vpop.xlane.xlu0 %394
        %v396 = vadd.f32 %v390, %v393
        %v397 = vadd.f32 %v391, %v395
        %vm398 = vcmask 7168
        %399 = vst.msk [vmem:[%s304] sm:$0xff] %vm398, %v396
        %400 = vst.msk [vmem:[%s304 + $0x8] sm:$0xff] %vm398, %v397
        %v401 = vld [vmem:[%s309] sm:$0xff]
        %v402 = vld [vmem:[%s309 + $0x8] sm:$0xff]
        %v403 = vmul.f32 %v365, %v365
        %v404 = vmul.f32 %v368, %v368
        %405 = vadd.xlane.f32.xlu0 %v403
        %v406 = vpop.xlane.xlu0 %405
        %407 = vadd.xlane.f32.xlu0 %v404
        %v408 = vpop.xlane.xlu0 %407
        %v409 = vadd.f32 %v401, %v406
        %v410 = vadd.f32 %v402, %v408
        %411 = vst.msk [vmem:[%s309] sm:$0xff] %vm398, %v409
        %412 = vst.msk [vmem:[%s309 + $0x8] sm:$0xff] %vm398, %v410
        %s413 = sand.u32 %s109, 1
        %s414 = sand.u32 %s109, 1
        %s415 = smul.addr %s414, 8
        %s416 = scalar_lea.vmem [#allocation3], %s415
        %p417 = scmp.lt.s32.totalorder %s21, 1
        %s418 = scalar_select %p417, %s21, 1
        %s419 = smul.addr %s418, 2
        %s420 = smul.addr %s419, 8
        %s421 = scalar_lea.vmem %s4, %s420
        %p422 = scmp.lt.s32.totalorder %s21, 1
        %s423 = scalar_select %p422, %s21, 1
        %s424 = smul.addr %s423, 2
        %s425 = smul.addr %s424, 8
        %s426 = scalar_lea.vmem %s5, %s425
        // Predicated region
        $region78: #{pointnet_set_abstraction_msg.5} parent=68 // pred_check
          %p427 = pneg %p119
        $region79: #{pointnet_set_abstraction_msg.5} parent=68 // pred_check_branch
          %429 = sbr.rel (%p427) target = $region81
        $region80: #{pointnet_set_abstraction_msg.5} parent=68 // pred_region
          %s430 = sadd.s32 %s21, %s22
          %s431 = smul.addr %s430, 4
          %s432 = scalar_lea.vmem %s3, %s431
          // Predicated region
          $region82: #{pointnet_set_abstraction_msg.5} parent=80 // pred_check
            _
          $region83: #{pointnet_set_abstraction_msg.5} parent=80 // pred_check_branch
            %434 = sbr.rel (0) target = $region85
          $region84: #{pointnet_set_abstraction_msg.5} parent=80 // pred_region
            // Predicated region
            $region86: #{pointnet_set_abstraction_msg.5} parent=84 // pred_check
              _
            $region87: #{pointnet_set_abstraction_msg.5} parent=84 // pred_check_branch
              %436 = sbr.rel target = $region89
            $region88: #{pointnet_set_abstraction_msg.5} parent=84 // pred_region
              // Predicated region
              $region101: #{pointnet_set_abstraction_msg.5} parent=88 // pred_check
                _
              $region102: #{pointnet_set_abstraction_msg.5} parent=88 // pred_check_branch
                %454 = sbr.rel (0) target = $region104
              $region103: #{pointnet_set_abstraction_msg.5} parent=88 // pred_region
                loop: start=0, step=1, limit=1
                $region105: #{pointnet_set_abstraction_msg.5} parent=103 // loop_pre_header
                  _
                $region106: #{pointnet_set_abstraction_msg.5} parent=103 // loop_header
                  %s456 = sphi 0, %s460
                  %p457 = scmp.ge.s32.totalorder %s456, 1
                  %s461 = sphi %s416, %s416
                  %s462 = sphi %s432, %s432
                $region107: #{pointnet_set_abstraction_msg.5} parent=103 // loop_header_branch
                  %459 = sbr.rel (%p457) target = $region111
                $region108: #{pointnet_set_abstraction_msg.5} parent=103 // loop_body
                  _
                $region109: #{pointnet_set_abstraction_msg.5} parent=103 // loop_footer
                  %s460 = sadd.s32 1, %s456
                $region110: #{pointnet_set_abstraction_msg.5} parent=103 // loop_footer_branch
                  %455 = sbr.rel target = $region106
                $region111: #{pointnet_set_abstraction_msg.5} parent=103 // loop_exit
                  _
                %s464 = ssub.s32 16, 1
                loop: start=0, step=1, limit=1
                $region112: #{pointnet_set_abstraction_msg.5} parent=103 // loop_pre_header
                  _
                $region113: #{pointnet_set_abstraction_msg.5} parent=103 // loop_header
                  %s466 = sphi 0, %s470
                  %p467 = scmp.ge.s32.totalorder %s466, 1
                  %s471 = sphi %s416, %s416
                  %s472 = sphi %s432, %s432
                $region114: #{pointnet_set_abstraction_msg.5} parent=103 // loop_header_branch
                  %469 = sbr.rel (%p467) target = $region118
                $region115: #{pointnet_set_abstraction_msg.5} parent=103 // loop_body
                  %v473 = vld [vmem:[%s471] sm:%s464]
                  %474 = vst [vmem:[%s472] sm:%s464] %v473
                  %v475 = vld [vmem:[%s471 + $0x4] sm:%s464]
                  %476 = vst [vmem:[%s472 + $0x8] sm:%s464] %v475
                $region116: #{pointnet_set_abstraction_msg.5} parent=103 // loop_footer
                  %s470 = sadd.s32 1, %s466
                $region117: #{pointnet_set_abstraction_msg.5} parent=103 // loop_footer_branch
                  %465 = sbr.rel target = $region113
                $region118: #{pointnet_set_abstraction_msg.5} parent=103 // loop_exit
                  _
              $region104: #{pointnet_set_abstraction_msg.5} parent=88 // pred_fallthru
                _
            $region89: #{pointnet_set_abstraction_msg.5} parent=84 // pred_fallthru
              _
            // Predicated region
            $region90: #{pointnet_set_abstraction_msg.5} parent=84 // pred_check
              _
            $region91: #{pointnet_set_abstraction_msg.5} parent=84 // pred_check_branch
              %438 = sbr.rel (0) target = $region93
            $region92: #{pointnet_set_abstraction_msg.5} parent=84 // pred_region
              %s440 = ssub.s32 16, 1
              loop: start=0, step=1, limit=1
              $region94: #{pointnet_set_abstraction_msg.5} parent=92 // loop_pre_header
                _
              $region95: #{pointnet_set_abstraction_msg.5} parent=92 // loop_header
                %s442 = sphi 0, %s446
                %p443 = scmp.ge.s32.totalorder %s442, 1
                %s447 = sphi %s416, %s416
                %s448 = sphi %s432, %s432
              $region96: #{pointnet_set_abstraction_msg.5} parent=92 // loop_header_branch
                %445 = sbr.rel (%p443) target = $region100
              $region97: #{pointnet_set_abstraction_msg.5} parent=92 // loop_body
                %v449 = vld [vmem:[%s447] sm:%s440]
                %450 = vst [vmem:[%s448] sm:%s440] %v449
                %v451 = vld [vmem:[%s447 + $0x4] sm:%s440]
                %452 = vst [vmem:[%s448 + $0x8] sm:%s440] %v451
              $region98: #{pointnet_set_abstraction_msg.5} parent=92 // loop_footer
                %s446 = sadd.s32 1, %s442
              $region99: #{pointnet_set_abstraction_msg.5} parent=92 // loop_footer_branch
                %441 = sbr.rel target = $region95
              $region100: #{pointnet_set_abstraction_msg.5} parent=92 // loop_exit
                _
            $region93: #{pointnet_set_abstraction_msg.5} parent=84 // pred_fallthru
              _
          $region85: #{pointnet_set_abstraction_msg.5} parent=80 // pred_fallthru
            _
          %477 = vnop
        $region81: #{pointnet_set_abstraction_msg.5} parent=68 // pred_fallthru
          _
        // Predicated region
        $region119: #{pointnet_set_abstraction_msg.5} parent=68 // pred_check
          %p478 = pneg %p145
        $region120: #{pointnet_set_abstraction_msg.5} parent=68 // pred_check_branch
          %480 = sbr.rel (%p478) target = $region122
        $region121: #{pointnet_set_abstraction_msg.5} parent=68 // pred_region
          _
        $region122: #{pointnet_set_abstraction_msg.5} parent=68 // pred_fallthru
          _
        // Predicated region
        $region123: #{pointnet_set_abstraction_msg.5} parent=68 // pred_check
          %p481 = pneg %p171
        $region124: #{pointnet_set_abstraction_msg.5} parent=68 // pred_check_branch
          %483 = sbr.rel (%p481) target = $region126
        $region125: #{pointnet_set_abstraction_msg.5} parent=68 // pred_region
          _
        $region126: #{pointnet_set_abstraction_msg.5} parent=68 // pred_fallthru
          _
      $region69: #{pointnet_set_abstraction_msg.5} parent=5 // pred_fallthru
        _
      %p484 = scmp.le.s32.totalorder 2, %s12
      // Predicated region
      $region127: #{pointnet_set_abstraction_msg.5} parent=5 // pred_check
        %p485 = pneg %p484
      $region128: #{pointnet_set_abstraction_msg.5} parent=5 // pred_check_branch
        %487 = sbr.rel (%p485) target = $region130
      $region129: #{pointnet_set_abstraction_msg.5} parent=5 // pred_region
        %s488 = ssub.s32 %s12, 2
        // Predicated region
        $region131: #{pointnet_set_abstraction_msg.5} parent=129 // pred_check
          %p489 = pneg %p125
        $region132: #{pointnet_set_abstraction_msg.5} parent=129 // pred_check_branch
          %491 = sbr.rel (%p489) target = $region134
        $region133: #{pointnet_set_abstraction_msg.5} parent=129 // pred_region
          %s492 = sand.u32 %s110, 1
          %s493 = sand.u32 %s110, 1
          %s494 = smul.addr %s493, 8
          %s495 = scalar_lea.vmem [#allocation3], %s494
        $region134: #{pointnet_set_abstraction_msg.5} parent=129 // pred_fallthru
          _
        // Predicated region
        $region135: #{pointnet_set_abstraction_msg.5} parent=129 // pred_check
          %p496 = pneg %p151
        $region136: #{pointnet_set_abstraction_msg.5} parent=129 // pred_check_branch
          %498 = sbr.rel (%p496) target = $region138
        $region137: #{pointnet_set_abstraction_msg.5} parent=129 // pred_region
          %p499 = scmp.lt.s32.totalorder %s23, 1
          %s500 = scalar_select %p499, %s23, 1
          %s501 = smul.addr %s500, 2
          %s502 = smul.addr %s501, 8
          %s503 = scalar_lea.vmem %s4, %s502
        $region138: #{pointnet_set_abstraction_msg.5} parent=129 // pred_fallthru
          _
        // Predicated region
        $region139: #{pointnet_set_abstraction_msg.5} parent=129 // pred_check
          %p504 = pneg %p177
        $region140: #{pointnet_set_abstraction_msg.5} parent=129 // pred_check_branch
          %506 = sbr.rel (%p504) target = $region142
        $region141: #{pointnet_set_abstraction_msg.5} parent=129 // pred_region
          %p507 = scmp.lt.s32.totalorder %s23, 1
          %s508 = scalar_select %p507, %s23, 1
          %s509 = smul.addr %s508, 2
          %s510 = smul.addr %s509, 8
          %s511 = scalar_lea.vmem %s5, %s510
        $region142: #{pointnet_set_abstraction_msg.5} parent=129 // pred_fallthru
          _
      $region130: #{pointnet_set_abstraction_msg.5} parent=5 // pred_fallthru
        _
    $region6: #{pointnet_set_abstraction_msg.5} parent=1 // loop_footer
      %s16 = sadd.s32 1, %s12
    $region7: #{pointnet_set_abstraction_msg.5} parent=1 // loop_footer_branch
      %11 = sbr.rel target = $region3
    $region8: #{pointnet_set_abstraction_msg.5} parent=1 // loop_exit
      _

// kernel: pointnet_set_abstraction_msg.6
$region0: #{pointnet_set_abstraction_msg.6}
  #allocation0 [shape = 'u32[]', space=smem, size = 0x4, offset = 0x4, fixed_abs, tag = 'smem constant byte address 0x4 - core index']
  #allocation1 [shape = 'u32[144,128]{1,0:T(1,128)}', space=vmem, size = 0x12000, scoped, tag = 'internal scratch']
  %s0 = inlined_call_operand.vmem [shape: bf16[16,256], index: 0, kind: input, shape index: {}]
  %s1 = inlined_call_operand.vmem [shape: f32[16,2], index: 1, kind: input, shape index: {}]
  %s2 = inlined_call_operand.vmem [shape: bf16[32,16], index: 2, kind: input, shape index: {}]
  %s3 = inlined_call_operand.vmem [shape: bf16[32,256], index: 3, kind: output, shape index: {0}]
  %s4 = inlined_call_operand.vmem [shape: f32[2,32,1], index: 4, kind: output, shape index: {1}]
  %s5 = inlined_call_operand.vmem [shape: f32[2,32,1], index: 5, kind: output, shape index: {2}]
  %6 = xla_tuple %s3, %s4, %s5
  %s7 = sld [smem:[#allocation0]]
  $region143: #{pointnet_set_abstraction_msg.6} parent=0
    _
  %s9 = ssub.s32 1, %s7
  %s10 = scalar_select 0, %s9, %s7
  $region1: #{pointnet_set_abstraction_msg.6} parent=0
    #allocation2 [shape = 'u8[8192]{0}', space=vmem, size = 0x2000, scoped, tag = 'input window, operand 0']
    #allocation3 [shape = 'u8[16384]{0}', space=vmem, size = 0x4000, scoped, tag = 'output window, operand 0']
    loop: start=0, step=1, limit=4
    $region2: #{pointnet_set_abstraction_msg.6} parent=1 // loop_pre_header
      _
    $region3: #{pointnet_set_abstraction_msg.6} parent=1 // loop_header
      %s12 = sphi 0, %s16
      %p13 = scmp.ge.s32.totalorder %s12, 4
      %s19 = sphi 0, %s31
      %s20 = sphi 0, %s27
      %s21 = sphi 0, %s19
      %s22 = sphi 0, %s20
      %s23 = sphi 0, %s21
      %s24 = sphi 0, %s22
      %s36 = sphi 0, %s38
      %s39 = sphi 0, %s36
      %s40 = sphi 0, %s39
      %s56 = sphi 0, %s40
      %s60 = sphi 0, %s60
      %s62 = sphi 0, %s60
      %s63 = sphi 0, %s62
      %s77 = sphi 0, %s63
      %s81 = sphi 0, %s81
      %s83 = sphi 0, %s81
      %s84 = sphi 0, %s83
      %s98 = sphi 0, %s84
      %s106 = sphi 0, %s108
      %s109 = sphi 0, %s106
      %s110 = sphi 0, %s109
      %s126 = sphi 0, %s110
      %s132 = sphi 0, %s134
      %s135 = sphi 0, %s132
      %s136 = sphi 0, %s135
      %s152 = sphi 0, %s136
      %s158 = sphi 0, %s160
      %s161 = sphi 0, %s158
      %s162 = sphi 0, %s161
      %s178 = sphi 0, %s162
    $region4: #{pointnet_set_abstraction_msg.6} parent=1 // loop_header_branch
      %15 = sbr.rel (%p13) target = $region8
    $region5: #{pointnet_set_abstraction_msg.6} parent=1 // loop_body
      %s17 = ssub.s32 %s12, 1
      %s18 = ssub.s32 %s12, 2
      %s25 = sadd.s32 1, %s20
      %p26 = scmp.ge.s32.totalorder %s25, 1
      %s27 = scalar_select %p26, 0, %s25
      %s28 = sadd.s32 1, %s19
      %s29 = scalar_select %p26, %s28, %s19
      %p30 = scmp.ge.s32.totalorder %s29, 2
      %s31 = scalar_select %p30, 0, %s29
      %s32 = sadd.s32 %s19, %s20
      %s33 = sadd.s32 %s31, %s27
      %s34 = ssub.s32 %s32, %s33
      %p35 = scmp.eq.s32.totalorder %s34, 0
      %s37 = sadd.s32 %s36, 1
      %s38 = scalar_select %p35, %s36, %s37
      %p41 = pneg %p35
      %p42 = scmp.eq.s32.totalorder %s12, 1
      %p43 = por %p41, %p42
      %p44 = scmp.ne.s32.totalorder %s36, %s39
      %p45 = scmp.eq.s32.totalorder %s12, 0
      %p46 = por %p44, %p45
      %p47 = scmp.ne.s32.totalorder %s36, %s39
      %p48 = scmp.eq.s32.totalorder %s17, 1
      %p49 = por %p47, %p48
      %p50 = scmp.ne.s32.totalorder %s39, %s40
      %p51 = scmp.eq.s32.totalorder %s17, 0
      %p52 = por %p50, %p51
      %p53 = scmp.ne.s32.totalorder %s39, %s40
      %p54 = scmp.eq.s32.totalorder %s18, 1
      %p55 = por %p53, %p54
      %p57 = scmp.ne.s32.totalorder %s40, %s56
      %p58 = scmp.eq.s32.totalorder %s18, 0
      %p59 = por %p57, %p58
      %s61 = sadd.s32 %s60, 1
      %p64 = scmp.eq.s32.totalorder %s12, 1
      %p65 = scmp.ne.s32.totalorder %s60, %s62
      %p66 = scmp.eq.s32.totalorder %s12, 0
      %p67 = por %p65, %p66
      %p68 = scmp.ne.s32.totalorder %s60, %s62
      %p69 = scmp.eq.s32.totalorder %s17, 1
      %p70 = por %p68, %p69
      %p71 = scmp.ne.s32.totalorder %s62, %s63
      %p72 = scmp.eq.s32.totalorder %s17, 0
      %p73 = por %p71, %p72
      %p74 = scmp.ne.s32.totalorder %s62, %s63
      %p75 = scmp.eq.s32.totalorder %s18, 1
      %p76 = por %p74, %p75
      %p78 = scmp.ne.s32.totalorder %s63, %s77
      %p79 = scmp.eq.s32.totalorder %s18, 0
      %p80 = por %p78, %p79
      %s82 = sadd.s32 %s81, 1
      %p85 = scmp.eq.s32.totalorder %s12, 1
      %p86 = scmp.ne.s32.totalorder %s81, %s83
      %p87 = scmp.eq.s32.totalorder %s12, 0
      %p88 = por %p86, %p87
      %p89 = scmp.ne.s32.totalorder %s81, %s83
      %p90 = scmp.eq.s32.totalorder %s17, 1
      %p91 = por %p89, %p90
      %p92 = scmp.ne.s32.totalorder %s83, %s84
      %p93 = scmp.eq.s32.totalorder %s17, 0
      %p94 = por %p92, %p93
      %p95 = scmp.ne.s32.totalorder %s83, %s84
      %p96 = scmp.eq.s32.totalorder %s18, 1
      %p97 = por %p95, %p96
      %p99 = scmp.ne.s32.totalorder %s84, %s98
      %p100 = scmp.eq.s32.totalorder %s18, 0
      %p101 = por %p99, %p100
      %s102 = sadd.s32 %s19, %s20
      %s103 = sadd.s32 %s31, %s27
      %s104 = ssub.s32 %s102, %s103
      %p105 = scmp.eq.s32.totalorder %s104, 0
      %s107 = sadd.s32 %s106, 1
      %s108 = scalar_select %p105, %s106, %s107
      %p111 = pneg %p105
      %p112 = scmp.eq.s32.totalorder %s12, 1
      %p113 = por %p111, %p112
      %p114 = scmp.ne.s32.totalorder %s106, %s109
      %p115 = scmp.eq.s32.totalorder %s12, 0
      %p116 = por %p114, %p115
      %p117 = scmp.ne.s32.totalorder %s106, %s109
      %p118 = scmp.eq.s32.totalorder %s17, 1
      %p119 = por %p117, %p118
      %p120 = scmp.ne.s32.totalorder %s109, %s110
      %p121 = scmp.eq.s32.totalorder %s17, 0
      %p122 = por %p120, %p121
      %p123 = scmp.ne.s32.totalorder %s109, %s110
      %p124 = scmp.eq.s32.totalorder %s18, 1
      %p125 = por %p123, %p124
      %p127 = scmp.ne.s32.totalorder %s110, %s126
      %p128 = scmp.eq.s32.totalorder %s18, 0
      %p129 = por %p127, %p128
      %s130 = ssub.s32 %s19, %s31
      %p131 = scmp.eq.s32.totalorder %s130, 0
      %s133 = sadd.s32 %s132, 1
      %s134 = scalar_select %p131, %s132, %s133
      %p137 = pneg %p131
      %p138 = scmp.eq.s32.totalorder %s12, 1
      %p139 = por %p137, %p138
      %p140 = scmp.ne.s32.totalorder %s132, %s135
      %p141 = scmp.eq.s32.totalorder %s12, 0
      %p142 = por %p140, %p141
      %p143 = scmp.ne.s32.totalorder %s132, %s135
      %p144 = scmp.eq.s32.totalorder %s17, 1
      %p145 = por %p143, %p144
      %p146 = scmp.ne.s32.totalorder %s135, %s136
      %p147 = scmp.eq.s32.totalorder %s17, 0
      %p148 = por %p146, %p147
      %p149 = scmp.ne.s32.totalorder %s135, %s136
      %p150 = scmp.eq.s32.totalorder %s18, 1
      %p151 = por %p149, %p150
      %p153 = scmp.ne.s32.totalorder %s136, %s152
      %p154 = scmp.eq.s32.totalorder %s18, 0
      %p155 = por %p153, %p154
      %s156 = ssub.s32 %s19, %s31
      %p157 = scmp.eq.s32.totalorder %s156, 0
      %s159 = sadd.s32 %s158, 1
      %s160 = scalar_select %p157, %s158, %s159
      %p163 = pneg %p157
      %p164 = scmp.eq.s32.totalorder %s12, 1
      %p165 = por %p163, %p164
      %p166 = scmp.ne.s32.totalorder %s158, %s161
      %p167 = scmp.eq.s32.totalorder %s12, 0
      %p168 = por %p166, %p167
      %p169 = scmp.ne.s32.totalorder %s158, %s161
      %p170 = scmp.eq.s32.totalorder %s17, 1
      %p171 = por %p169, %p170
      %p172 = scmp.ne.s32.totalorder %s161, %s162
      %p173 = scmp.eq.s32.totalorder %s17, 0
      %p174 = por %p172, %p173
      %p175 = scmp.ne.s32.totalorder %s161, %s162
      %p176 = scmp.eq.s32.totalorder %s18, 1
      %p177 = por %p175, %p176
      %p179 = scmp.ne.s32.totalorder %s162, %s178
      %p180 = scmp.eq.s32.totalorder %s18, 0
      %p181 = por %p179, %p180
      %p182 = scmp.le.s32.totalorder 1, %s12
      %p183 = scmp.lt.s32.totalorder %s12, 3
      %p184 = pnand %p182, %p183
      %p185 = pneg %p184
      // Predicated region
      $region9: #{pointnet_set_abstraction_msg.6} parent=5 // pred_check
        _
      $region10: #{pointnet_set_abstraction_msg.6} parent=5 // pred_check_branch
        %187 = sbr.rel (%p184) target = $region12
      $region11: #{pointnet_set_abstraction_msg.6} parent=5 // pred_region
        %s188 = ssub.s32 %s12, 1
        // Predicated region
        $region13: #{pointnet_set_abstraction_msg.6} parent=11 // pred_check
          %p189 = pneg %p73
        $region14: #{pointnet_set_abstraction_msg.6} parent=11 // pred_check_branch
          %191 = sbr.rel (%p189) target = $region16
        $region15: #{pointnet_set_abstraction_msg.6} parent=11 // pred_region
          _
        $region16: #{pointnet_set_abstraction_msg.6} parent=11 // pred_fallthru
          _
        // Predicated region
        $region17: #{pointnet_set_abstraction_msg.6} parent=11 // pred_check
          %p192 = pneg %p94
        $region18: #{pointnet_set_abstraction_msg.6} parent=11 // pred_check_branch
          %194 = sbr.rel (%p192) target = $region20
        $region19: #{pointnet_set_abstraction_msg.6} parent=11 // pred_region
          _
        $region20: #{pointnet_set_abstraction_msg.6} parent=11 // pred_fallthru
          _
      $region12: #{pointnet_set_abstraction_msg.6} parent=5 // pred_fallthru
        _
      %p195 = scmp.lt.s32.totalorder %s12, 2
      // Predicated region
      $region21: #{pointnet_set_abstraction_msg.6} parent=5 // pred_check
        %p196 = pneg %p195
      $region22: #{pointnet_set_abstraction_msg.6} parent=5 // pred_check_branch
        %198 = sbr.rel (%p196) target = $region24
      $region23: #{pointnet_set_abstraction_msg.6} parent=5 // pred_region
        // Predicated region
        $region25: #{pointnet_set_abstraction_msg.6} parent=23 // pred_check
          %p199 = pneg %p46
        $region26: #{pointnet_set_abstraction_msg.6} parent=23 // pred_check_branch
          %201 = sbr.rel (%p199) target = $region28
        $region27: #{pointnet_set_abstraction_msg.6} parent=23 // pred_region
          %s202 = sand.u32 %s36, 1
          %s203 = sand.u32 %s36, 1
          %s204 = smul.addr %s203, 8
          %s205 = scalar_lea.vmem [#allocation2], %s204
          %s206 = sadd.s32 %s19, %s20
          %s207 = smul.addr %s206, 4
          %s208 = scalar_lea.vmem %s0, %s207
          // Predicated region
          $region29: #{pointnet_set_abstraction_msg.6} parent=27 // pred_check
            _
          $region30: #{pointnet_set_abstraction_msg.6} parent=27 // pred_check_branch
            %210 = sbr.rel (0) target = $region32
          $region31: #{pointnet_set_abstraction_msg.6} parent=27 // pred_region
            // Predicated region
            $region33: #{pointnet_set_abstraction_msg.6} parent=31 // pred_check
              _
            $region34: #{pointnet_set_abstraction_msg.6} parent=31 // pred_check_branch
              %212 = sbr.rel target = $region36
            $region35: #{pointnet_set_abstraction_msg.6} parent=31 // pred_region
              // Predicated region
              $region48: #{pointnet_set_abstraction_msg.6} parent=35 // pred_check
                _
              $region49: #{pointnet_set_abstraction_msg.6} parent=35 // pred_check_branch
                %230 = sbr.rel (0) target = $region51
              $region50: #{pointnet_set_abstraction_msg.6} parent=35 // pred_region
                loop: start=0, step=1, limit=1
                $region52: #{pointnet_set_abstraction_msg.6} parent=50 // loop_pre_header
                  _
                $region53: #{pointnet_set_abstraction_msg.6} parent=50 // loop_header
                  %s232 = sphi 0, %s236
                  %p233 = scmp.ge.s32.totalorder %s232, 1
                  %s237 = sphi %s208, %s208
                  %s238 = sphi %s205, %s205
                $region54: #{pointnet_set_abstraction_msg.6} parent=50 // loop_header_branch
                  %235 = sbr.rel (%p233) target = $region58
                $region55: #{pointnet_set_abstraction_msg.6} parent=50 // loop_body
                  _
                $region56: #{pointnet_set_abstraction_msg.6} parent=50 // loop_footer
                  %s236 = sadd.s32 1, %s232
                $region57: #{pointnet_set_abstraction_msg.6} parent=50 // loop_footer_branch
                  %231 = sbr.rel target = $region53
                $region58: #{pointnet_set_abstraction_msg.6} parent=50 // loop_exit
                  _
                %s240 = ssub.s32 16, 1
                loop: start=0, step=1, limit=1
                $region59: #{pointnet_set_abstraction_msg.6} parent=50 // loop_pre_header
                  _
                $region60: #{pointnet_set_abstraction_msg.6} parent=50 // loop_header
                  %s242 = sphi 0, %s246
                  %p243 = scmp.ge.s32.totalorder %s242, 1
                  %s247 = sphi %s208, %s208
                  %s248 = sphi %s205, %s205
                $region61: #{pointnet_set_abstraction_msg.6} parent=50 // loop_header_branch
                  %245 = sbr.rel (%p243) target = $region65
                $region62: #{pointnet_set_abstraction_msg.6} parent=50 // loop_body
                  %v249 = vld [vmem:[%s247] sm:%s240]
                  %250 = vst [vmem:[%s248] sm:%s240] %v249
                  %v251 = vld [vmem:[%s247 + $0x8] sm:%s240]
                  %252 = vst [vmem:[%s248 + $0x4] sm:%s240] %v251
                $region63: #{pointnet_set_abstraction_msg.6} parent=50 // loop_footer
                  %s246 = sadd.s32 1, %s242
                $region64: #{pointnet_set_abstraction_msg.6} parent=50 // loop_footer_branch
                  %241 = sbr.rel target = $region60
                $region65: #{pointnet_set_abstraction_msg.6} parent=50 // loop_exit
                  _
              $region51: #{pointnet_set_abstraction_msg.6} parent=35 // pred_fallthru
                _
            $region36: #{pointnet_set_abstraction_msg.6} parent=31 // pred_fallthru
              _
            // Predicated region
            $region37: #{pointnet_set_abstraction_msg.6} parent=31 // pred_check
              _
            $region38: #{pointnet_set_abstraction_msg.6} parent=31 // pred_check_branch
              %214 = sbr.rel (0) target = $region40
            $region39: #{pointnet_set_abstraction_msg.6} parent=31 // pred_region
              %s216 = ssub.s32 16, 1
              loop: start=0, step=1, limit=1
              $region41: #{pointnet_set_abstraction_msg.6} parent=39 // loop_pre_header
                _
              $region42: #{pointnet_set_abstraction_msg.6} parent=39 // loop_header
                %s218 = sphi 0, %s222
                %p219 = scmp.ge.s32.totalorder %s218, 1
                %s223 = sphi %s208, %s208
                %s224 = sphi %s205, %s205
              $region43: #{pointnet_set_abstraction_msg.6} parent=39 // loop_header_branch
                %221 = sbr.rel (%p219) target = $region47
              $region44: #{pointnet_set_abstraction_msg.6} parent=39 // loop_body
                %v225 = vld [vmem:[%s223] sm:%s216]
                %226 = vst [vmem:[%s224] sm:%s216] %v225
                %v227 = vld [vmem:[%s223 + $0x8] sm:%s216]
                %228 = vst [vmem:[%s224 + $0x4] sm:%s216] %v227
              $region45: #{pointnet_set_abstraction_msg.6} parent=39 // loop_footer
                %s222 = sadd.s32 1, %s218
              $region46: #{pointnet_set_abstraction_msg.6} parent=39 // loop_footer_branch
                %217 = sbr.rel target = $region42
              $region47: #{pointnet_set_abstraction_msg.6} parent=39 // loop_exit
                _
            $region40: #{pointnet_set_abstraction_msg.6} parent=31 // pred_fallthru
              _
          $region32: #{pointnet_set_abstraction_msg.6} parent=27 // pred_fallthru
            _
          %253 = vnop
        $region28: #{pointnet_set_abstraction_msg.6} parent=23 // pred_fallthru
          _
      $region24: #{pointnet_set_abstraction_msg.6} parent=5 // pred_fallthru
        _
      %p254 = scmp.le.s32.totalorder 1, %s12
      %p255 = scmp.lt.s32.totalorder %s12, 3
      %p256 = pnand %p254, %p255
      %p257 = pneg %p256
      // Predicated region
      $region66: #{pointnet_set_abstraction_msg.6} parent=5 // pred_check
        _
      $region67: #{pointnet_set_abstraction_msg.6} parent=5 // pred_check_branch
        %259 = sbr.rel (%p256) target = $region69
      $region68: #{pointnet_set_abstraction_msg.6} parent=5 // pred_region
        %s260 = ssub.s32 %s12, 1
        %s261 = sand.u32 %s39, 1
        %s262 = sand.u32 %s39, 1
        %s263 = smul.addr %s262, 8
        %s264 = scalar_lea.vmem [#allocation2], %s263
        // Predicated region
        $region70: #{pointnet_set_abstraction_msg.6} parent=68 // pred_check
          %p265 = pneg %p52
        $region71: #{pointnet_set_abstraction_msg.6} parent=68 // pred_check_branch
          %267 = sbr.rel (%p265) target = $region73
        $region72: #{pointnet_set_abstraction_msg.6} parent=68 // pred_region
          _
        $region73: #{pointnet_set_abstraction_msg.6} parent=68 // pred_fallthru
          _
        %s268 = sand.u32 %s39, 1
        %s269 = sand.u32 %s39, 1
        %s270 = smul.addr %s269, 8
        %s271 = scalar_lea.vmem [#allocation2], %s270
        %p272 = pneg %p52
        %p273 = pneg %p49
        %p274 = pneg %p73
        %p275 = pneg %p70
        %p276 = pneg %p94
        %p277 = pneg %p91
        %p278 = pneg %p122
        %p279 = pneg %p119
        %s280 = sand.u32 %s109, 1
        %s281 = sand.u32 %s109, 1
        %s282 = smul.addr %s281, 16
        %s283 = scalar_lea.vmem [#allocation3], %s282
        %p284 = pneg %p148
        %p285 = pneg %p145
        %p286 = scmp.lt.s32.totalorder %s21, 1
        %s287 = scalar_select %p286, %s21, 1
        %s288 = smul.addr %s287, 4
        %s289 = smul.addr %s288, 8
        %s290 = scalar_lea.vmem %s4, %s289
        %p291 = pneg %p174
        %p292 = pneg %p171
        %p293 = scmp.lt.s32.totalorder %s21, 1
        %s294 = scalar_select %p293, %s21, 1
        %s295 = smul.addr %s294, 4
        %s296 = smul.addr %s295, 8
        %s297 = scalar_lea.vmem %s5, %s296
        %s298 = sadd.s32 %s21, %s22
        %s299 = sadd.s32 %s21, %s22
        %p300 = scmp.lt.s32.totalorder %s21, 1
        %s301 = scalar_select %p300, %s21, 1
        %s302 = smul.addr %s301, 4
        %s303 = smul.addr %s302, 8
        %s304 = scalar_lea.vmem %s4, %s303
        %p305 = scmp.lt.s32.totalorder %s21, 1
        %s306 = scalar_select %p305, %s21, 1
        %s307 = smul.addr %s306, 4
        %s308 = smul.addr %s307, 8
        %s309 = scalar_lea.vmem %s5, %s308
        %v311 = vld [vmem:[%s264] sm:$0xf]
        %v312 = vld [vmem:[%s264 + $0x4] sm:$0xf]
        %v313 = vunpack.c.l.bf16 %v311
        %v314 = vunpack.c.l.bf16 %v312
        %v315 = vld [vmem:[%s1] sm:$0xff]
        %v316 = vld [vmem:[%s1 + $0x8] sm:$0xff]
        %318 = vset.pattern.permute.xlu0 0
        %319 = vperm.xlu0 %318, %v315
        %v320 = vpop.permute.xlu0 %319
        %323 = vset.pattern.permute.xlu0 0
        %324 = vperm.xlu0 %323, %v316
        %v325 = vpop.permute.xlu0 %324
        %v327 = vmul.f32 %v313, %v320
        %v328 = vmul.f32 %v314, %v325
        %329 = vset.pattern.permute.xlu0 1
        %330 = vperm.xlu0 %329, %v315
        %v331 = vpop.permute.xlu0 %330
        %333 = vset.pattern.permute.xlu0 1
        %334 = vperm.xlu0 %333, %v316
        %v335 = vpop.permute.xlu0 %334
        %v337 = vadd.f32 %v327, %v331
        %v338 = vadd.f32 %v328, %v335
        %v339 = vmax.f32 %v337, 0.0
        %v340 = vmax.f32 %v338, 0.0
        %v341 = vpack.c.bf16 %v340, %v339
        %v342 = vld [vmem:[%s2] sm:$0xf]
        %v343 = vld [vmem:[%s2 + $0x4] sm:$0xf]
        %v344 = vld [vmem:[%s2 + $0x8] sm:$0xf]
        %v345 = vld [vmem:[%s2 + $0xc] sm:$0xf]
        %v350 = vunpack.c.l.b16 %v342
        %v351 = vunpack.c.l.b16 %v343
        %v352 = vunpack.c.l.b16 %v344
        %v353 = vunpack.c.l.b16 %v345
        %v354 = vpack.c.b16 %v351, %v350
        %v355 = vpack.c.b16 %v353, %v352
        %vm356 = vcmask 130048
        %v358 = vsel %vm356, %v354, 0
        %v361 = vsel %vm356, %v355, 0
        %363 = vmatprep.subr.bf16.mxu0 0
        %364 = vmatpush1.bf16.msra.mxu0 0
        %365 = vmatprep.subr.bf16.mxu0 0
        %366 = vmatpush1.bf16.msra.mxu0 0
        %367 = vmatprep.subr.bf16.mxu0 0
        %368 = vmatpush1.bf16.msra.mxu0 0
        %369 = vmatprep.subr.bf16.mxu0 0
        %370 = vmatpush1.bf16.msra.mxu0 0
        %371 = vmatprep.subr.bf16.mxu0 0
        %372 = vmatpush1.bf16.msra.mxu0 0
        %373 = vmatprep.subr.bf16.mxu0 0
        %374 = vmatpush1.bf16.msra.mxu0 0
        %375 = vmatprep.subr.bf16.mxu0 0
        %376 = vmatpush1.bf16.msra.mxu0 0
        %377 = vmatprep.subr.bf16.mxu0 0
        %378 = vmatpush1.bf16.msra.mxu0 %v341
        %379 = vmatprep.subr.bf16.mxu0 0
        %380 = vmatpush2.bf16.msra.mxu0 0
        %381 = vmatprep.subr.bf16.mxu0 0
        %382 = vmatpush2.bf16.msra.mxu0 0
        %383 = vmatprep.subr.bf16.mxu0 0
        %384 = vmatpush2.bf16.msra.mxu0 0
        %385 = vmatprep.subr.bf16.mxu0 0
        %386 = vmatpush2.bf16.msra.mxu0 0
        %387 = vmatprep.subr.bf16.mxu0 0
        %388 = vmatpush2.bf16.msra.mxu0 0
        %389 = vmatprep.subr.bf16.mxu0 0
        %390 = vmatpush2.bf16.msra.mxu0 0
        %391 = vmatprep.subr.bf16.mxu0 0
        %392 = vmatpush2.bf16.msra.mxu0 0
        %393 = vmatprep.subr.bf16.mxu0 0
        %394 = vmatpush2.bf16.msra.mxu0 0
        %395 = vmatprep.mubr.bf16.mxu0 0
        %396 = vmatmul.mubr.bf16.gmra.mxu0 %v358
        %v397 = vpop.f32.mrf.mxu0
        %v398 = vadd.f32 0.0, %v397
        %v399 = vpop.f32.mrf.mxu0
        %v400 = vpop.f32.mrf.mxu0
        %v401 = vadd.f32 0.0, %v400
        %v402 = vpop.f32.mrf.mxu0
        %403 = vmatprep.mubr.bf16.mxu0 0
        %404 = vmatmul.mubr.bf16.gmra.mxu0 %v361
        %v405 = vpop.f32.mrf.mxu0
        %v406 = vadd.f32 0.0, %v405
        %v407 = vpop.f32.mrf.mxu0
        %v408 = vpop.f32.mrf.mxu0
        %v409 = vadd.f32 0.0, %v408
        %v410 = vpop.f32.mrf.mxu0
        %411 = vdwg.mxu0
        %v412 = vpack.c.bf16 %v401, %v398
        %v413 = vpack.c.bf16 %v409, %v406
        %v416 = vunpack.c.l.b16 %v412
        %v417 = vunpack.c.h.b16 %v412
        %v418 = vunpack.c.l.b16 %v413
        %v419 = vunpack.c.h.b16 %v413
        %v420 = vpack.c.b16 %v416, %v416
        %v421 = vpack.c.b16 %v417, %v417
        %v422 = vpack.c.b16 %v418, %v418
        %v423 = vpack.c.b16 %v419, %v419
        %428 = vst [vmem:[%s283] sm:$0xf] %v420
        %429 = vst [vmem:[%s283 + $0x4] sm:$0xf] %v421
        %430 = vst [vmem:[%s283 + $0x8] sm:$0xf] %v422
        %431 = vst [vmem:[%s283 + $0xc] sm:$0xf] %v423
        %p432 = scmp.eq.s32.totalorder %s22, 0
        // Predicated region
        $region74: #{pointnet_set_abstraction_msg.6} parent=68 // pred_check
          %p433 = pneg %p432
        $region75: #{pointnet_set_abstraction_msg.6} parent=68 // pred_check_branch
          %435 = sbr.rel (%p433) target = $region77
        $region76: #{pointnet_set_abstraction_msg.6} parent=68 // pred_region
          %vm436 = vcmask 7168
          %437 = vst.msk [vmem:[%s304] sm:$0xff] %vm436, 0.0
          %438 = vst.msk [vmem:[%s304 + $0x8] sm:$0xff] %vm436, 0.0
          %439 = vst.msk [vmem:[%s304 + $0x10] sm:$0xff] %vm436, 0.0
          %440 = vst.msk [vmem:[%s304 + $0x18] sm:$0xff] %vm436, 0.0
          %441 = vst.msk [vmem:[%s309] sm:$0xff] %vm436, 0.0
          %442 = vst.msk [vmem:[%s309 + $0x8] sm:$0xff] %vm436, 0.0
          %443 = vst.msk [vmem:[%s309 + $0x10] sm:$0xff] %vm436, 0.0
          %444 = vst.msk [vmem:[%s309 + $0x18] sm:$0xff] %vm436, 0.0
        $region77: #{pointnet_set_abstraction_msg.6} parent=68 // pred_fallthru
          _
        %v445 = vld [vmem:[%s304] sm:$0xff]
        %v446 = vld [vmem:[%s304 + $0x8] sm:$0xff]
        %v447 = vld [vmem:[%s304 + $0x10] sm:$0xff]
        %v448 = vld [vmem:[%s304 + $0x18] sm:$0xff]
        %449 = vadd.xlane.f32.xlu0 %v398
        %v450 = vpop.xlane.xlu0 %449
        %451 = vadd.xlane.f32.xlu0 %v401
        %v452 = vpop.xlane.xlu0 %451
        %453 = vadd.xlane.f32.xlu0 %v406
        %v454 = vpop.xlane.xlu0 %453
        %455 = vadd.xlane.f32.xlu0 %v409
        %v456 = vpop.xlane.xlu0 %455
        %v457 = vadd.f32 %v445, %v450
        %v458 = vadd.f32 %v446, %v452
        %v459 = vadd.f32 %v447, %v454
        %v460 = vadd.f32 %v448, %v456
        %vm461 = vcmask 7168
        %462 = vst.msk [vmem:[%s304] sm:$0xff] %vm461, %v457
        %463 = vst.msk [vmem:[%s304 + $0x8] sm:$0xff] %vm461, %v458
        %464 = vst.msk [vmem:[%s304 + $0x10] sm:$0xff] %vm461, %v459
        %465 = vst.msk [vmem:[%s304 + $0x18] sm:$0xff] %vm461, %v460
        %v466 = vld [vmem:[%s309] sm:$0xff]
        %v467 = vld [vmem:[%s309 + $0x8] sm:$0xff]
        %v468 = vld [vmem:[%s309 + $0x10] sm:$0xff]
        %v469 = vld [vmem:[%s309 + $0x18] sm:$0xff]
        %v470 = vmul.f32 %v398, %v398
        %v471 = vmul.f32 %v401, %v401
        %v472 = vmul.f32 %v406, %v406
        %v473 = vmul.f32 %v409, %v409
        %474 = vadd.xlane.f32.xlu0 %v470
        %v475 = vpop.xlane.xlu0 %474
        %476 = vadd.xlane.f32.xlu0 %v471
        %v477 = vpop.xlane.xlu0 %476
        %478 = vadd.xlane.f32.xlu0 %v472
        %v479 = vpop.xlane.xlu0 %478
        %480 = vadd.xlane.f32.xlu0 %v473
        %v481 = vpop.xlane.xlu0 %480
        %v482 = vadd.f32 %v466, %v475
        %v483 = vadd.f32 %v467, %v477
        %v484 = vadd.f32 %v468, %v479
        %v485 = vadd.f32 %v469, %v481
        %486 = vst.msk [vmem:[%s309] sm:$0xff] %vm461, %v482
        %487 = vst.msk [vmem:[%s309 + $0x8] sm:$0xff] %vm461, %v483
        %488 = vst.msk [vmem:[%s309 + $0x10] sm:$0xff] %vm461, %v484
        %489 = vst.msk [vmem:[%s309 + $0x18] sm:$0xff] %vm461, %v485
        %s490 = sand.u32 %s109, 1
        %s491 = sand.u32 %s109, 1
        %s492 = smul.addr %s491, 16
        %s493 = scalar_lea.vmem [#allocation3], %s492
        %p494 = scmp.lt.s32.totalorder %s21, 1
        %s495 = scalar_select %p494, %s21, 1
        %s496 = smul.addr %s495, 4
        %s497 = smul.addr %s496, 8
        %s498 = scalar_lea.vmem %s4, %s497
        %p499 = scmp.lt.s32.totalorder %s21, 1
        %s500 = scalar_select %p499, %s21, 1
        %s501 = smul.addr %s500, 4
        %s502 = smul.addr %s501, 8
        %s503 = scalar_lea.vmem %s5, %s502
        // Predicated region
        $region78: #{pointnet_set_abstraction_msg.6} parent=68 // pred_check
          %p504 = pneg %p119
        $region79: #{pointnet_set_abstraction_msg.6} parent=68 // pred_check_branch
          %506 = sbr.rel (%p504) target = $region81
        $region80: #{pointnet_set_abstraction_msg.6} parent=68 // pred_region
          %s507 = sadd.s32 %s21, %s22
          %s508 = smul.addr %s507, 4
          %s509 = scalar_lea.vmem %s3, %s508
          // Predicated region
          $region82: #{pointnet_set_abstraction_msg.6} parent=80 // pred_check
            _
          $region83: #{pointnet_set_abstraction_msg.6} parent=80 // pred_check_branch
            %511 = sbr.rel (0) target = $region85
          $region84: #{pointnet_set_abstraction_msg.6} parent=80 // pred_region
            // Predicated region
            $region86: #{pointnet_set_abstraction_msg.6} parent=84 // pred_check
              _
            $region87: #{pointnet_set_abstraction_msg.6} parent=84 // pred_check_branch
              %513 = sbr.rel target = $region89
            $region88: #{pointnet_set_abstraction_msg.6} parent=84 // pred_region
              // Predicated region
              $region101: #{pointnet_set_abstraction_msg.6} parent=88 // pred_check
                _
              $region102: #{pointnet_set_abstraction_msg.6} parent=88 // pred_check_branch
                %535 = sbr.rel (0) target = $region104
              $region103: #{pointnet_set_abstraction_msg.6} parent=88 // pred_region
                loop: start=0, step=1, limit=1
                $region105: #{pointnet_set_abstraction_msg.6} parent=103 // loop_pre_header
                  _
                $region106: #{pointnet_set_abstraction_msg.6} parent=103 // loop_header
                  %s537 = sphi 0, %s541
                  %p538 = scmp.ge.s32.totalorder %s537, 1
                  %s542 = sphi %s493, %s493
                  %s543 = sphi %s509, %s509
                $region107: #{pointnet_set_abstraction_msg.6} parent=103 // loop_header_branch
                  %540 = sbr.rel (%p538) target = $region111
                $region108: #{pointnet_set_abstraction_msg.6} parent=103 // loop_body
                  _
                $region109: #{pointnet_set_abstraction_msg.6} parent=103 // loop_footer
                  %s541 = sadd.s32 1, %s537
                $region110: #{pointnet_set_abstraction_msg.6} parent=103 // loop_footer_branch
                  %536 = sbr.rel target = $region106
                $region111: #{pointnet_set_abstraction_msg.6} parent=103 // loop_exit
                  _
                %s545 = ssub.s32 16, 1
                loop: start=0, step=1, limit=1
                $region112: #{pointnet_set_abstraction_msg.6} parent=103 // loop_pre_header
                  _
                $region113: #{pointnet_set_abstraction_msg.6} parent=103 // loop_header
                  %s547 = sphi 0, %s551
                  %p548 = scmp.ge.s32.totalorder %s547, 1
                  %s552 = sphi %s493, %s493
                  %s553 = sphi %s509, %s509
                $region114: #{pointnet_set_abstraction_msg.6} parent=103 // loop_header_branch
                  %550 = sbr.rel (%p548) target = $region118
                $region115: #{pointnet_set_abstraction_msg.6} parent=103 // loop_body
                  %v554 = vld [vmem:[%s552] sm:%s545]
                  %555 = vst [vmem:[%s553] sm:%s545] %v554
                  %v556 = vld [vmem:[%s552 + $0x4] sm:%s545]
                  %557 = vst [vmem:[%s553 + $0x8] sm:%s545] %v556
                  %v558 = vld [vmem:[%s552 + $0x8] sm:%s545]
                  %559 = vst [vmem:[%s553 + $0x10] sm:%s545] %v558
                  %v560 = vld [vmem:[%s552 + $0xc] sm:%s545]
                  %561 = vst [vmem:[%s553 + $0x18] sm:%s545] %v560
                $region116: #{pointnet_set_abstraction_msg.6} parent=103 // loop_footer
                  %s551 = sadd.s32 1, %s547
                $region117: #{pointnet_set_abstraction_msg.6} parent=103 // loop_footer_branch
                  %546 = sbr.rel target = $region113
                $region118: #{pointnet_set_abstraction_msg.6} parent=103 // loop_exit
                  _
              $region104: #{pointnet_set_abstraction_msg.6} parent=88 // pred_fallthru
                _
            $region89: #{pointnet_set_abstraction_msg.6} parent=84 // pred_fallthru
              _
            // Predicated region
            $region90: #{pointnet_set_abstraction_msg.6} parent=84 // pred_check
              _
            $region91: #{pointnet_set_abstraction_msg.6} parent=84 // pred_check_branch
              %515 = sbr.rel (0) target = $region93
            $region92: #{pointnet_set_abstraction_msg.6} parent=84 // pred_region
              %s517 = ssub.s32 16, 1
              loop: start=0, step=1, limit=1
              $region94: #{pointnet_set_abstraction_msg.6} parent=92 // loop_pre_header
                _
              $region95: #{pointnet_set_abstraction_msg.6} parent=92 // loop_header
                %s519 = sphi 0, %s523
                %p520 = scmp.ge.s32.totalorder %s519, 1
                %s524 = sphi %s493, %s493
                %s525 = sphi %s509, %s509
              $region96: #{pointnet_set_abstraction_msg.6} parent=92 // loop_header_branch
                %522 = sbr.rel (%p520) target = $region100
              $region97: #{pointnet_set_abstraction_msg.6} parent=92 // loop_body
                %v526 = vld [vmem:[%s524] sm:%s517]
                %527 = vst [vmem:[%s525] sm:%s517] %v526
                %v528 = vld [vmem:[%s524 + $0x4] sm:%s517]
                %529 = vst [vmem:[%s525 + $0x8] sm:%s517] %v528
                %v530 = vld [vmem:[%s524 + $0x8] sm:%s517]
                %531 = vst [vmem:[%s525 + $0x10] sm:%s517] %v530
                %v532 = vld [vmem:[%s524 + $0xc] sm:%s517]
                %533 = vst [vmem:[%s525 + $0x18] sm:%s517] %v532
              $region98: #{pointnet_set_abstraction_msg.6} parent=92 // loop_footer
                %s523 = sadd.s32 1, %s519
              $region99: #{pointnet_set_abstraction_msg.6} parent=92 // loop_footer_branch
                %518 = sbr.rel target = $region95
              $region100: #{pointnet_set_abstraction_msg.6} parent=92 // loop_exit
                _
            $region93: #{pointnet_set_abstraction_msg.6} parent=84 // pred_fallthru
              _
          $region85: #{pointnet_set_abstraction_msg.6} parent=80 // pred_fallthru
            _
          %562 = vnop
        $region81: #{pointnet_set_abstraction_msg.6} parent=68 // pred_fallthru
          _
        // Predicated region
        $region119: #{pointnet_set_abstraction_msg.6} parent=68 // pred_check
          %p563 = pneg %p145
        $region120: #{pointnet_set_abstraction_msg.6} parent=68 // pred_check_branch
          %565 = sbr.rel (%p563) target = $region122
        $region121: #{pointnet_set_abstraction_msg.6} parent=68 // pred_region
          _
        $region122: #{pointnet_set_abstraction_msg.6} parent=68 // pred_fallthru
          _
        // Predicated region
        $region123: #{pointnet_set_abstraction_msg.6} parent=68 // pred_check
          %p566 = pneg %p171
        $region124: #{pointnet_set_abstraction_msg.6} parent=68 // pred_check_branch
          %568 = sbr.rel (%p566) target = $region126
        $region125: #{pointnet_set_abstraction_msg.6} parent=68 // pred_region
          _
        $region126: #{pointnet_set_abstraction_msg.6} parent=68 // pred_fallthru
          _
      $region69: #{pointnet_set_abstraction_msg.6} parent=5 // pred_fallthru
        _
      %p569 = scmp.le.s32.totalorder 2, %s12
      // Predicated region
      $region127: #{pointnet_set_abstraction_msg.6} parent=5 // pred_check
        %p570 = pneg %p569
      $region128: #{pointnet_set_abstraction_msg.6} parent=5 // pred_check_branch
        %572 = sbr.rel (%p570) target = $region130
      $region129: #{pointnet_set_abstraction_msg.6} parent=5 // pred_region
        %s573 = ssub.s32 %s12, 2
        // Predicated region
        $region131: #{pointnet_set_abstraction_msg.6} parent=129 // pred_check
          %p574 = pneg %p125
        $region132: #{pointnet_set_abstraction_msg.6} parent=129 // pred_check_branch
          %576 = sbr.rel (%p574) target = $region134
        $region133: #{pointnet_set_abstraction_msg.6} parent=129 // pred_region
          %s577 = sand.u32 %s110, 1
          %s578 = sand.u32 %s110, 1
          %s579 = smul.addr %s578, 16
          %s580 = scalar_lea.vmem [#allocation3], %s579
        $region134: #{pointnet_set_abstraction_msg.6} parent=129 // pred_fallthru
          _
        // Predicated region
        $region135: #{pointnet_set_abstraction_msg.6} parent=129 // pred_check
          %p581 = pneg %p151
        $region136: #{pointnet_set_abstraction_msg.6} parent=129 // pred_check_branch
          %583 = sbr.rel (%p581) target = $region138
        $region137: #{pointnet_set_abstraction_msg.6} parent=129 // pred_region
          %p584 = scmp.lt.s32.totalorder %s23, 1
          %s585 = scalar_select %p584, %s23, 1
          %s586 = smul.addr %s585, 4
          %s587 = smul.addr %s586, 8
          %s588 = scalar_lea.vmem %s4, %s587
        $region138: #{pointnet_set_abstraction_msg.6} parent=129 // pred_fallthru
          _
        // Predicated region
        $region139: #{pointnet_set_abstraction_msg.6} parent=129 // pred_check
          %p589 = pneg %p177
        $region140: #{pointnet_set_abstraction_msg.6} parent=129 // pred_check_branch
          %591 = sbr.rel (%p589) target = $region142
        $region141: #{pointnet_set_abstraction_msg.6} parent=129 // pred_region
          %p592 = scmp.lt.s32.totalorder %s23, 1
          %s593 = scalar_select %p592, %s23, 1
          %s594 = smul.addr %s593, 4
          %s595 = smul.addr %s594, 8
          %s596 = scalar_lea.vmem %s5, %s595
        $region142: #{pointnet_set_abstraction_msg.6} parent=129 // pred_fallthru
          _
      $region130: #{pointnet_set_abstraction_msg.6} parent=5 // pred_fallthru
        _
    $region6: #{pointnet_set_abstraction_msg.6} parent=1 // loop_footer
      %s16 = sadd.s32 1, %s12
    $region7: #{pointnet_set_abstraction_msg.6} parent=1 // loop_footer_branch
      %11 = sbr.rel target = $region3
    $region8: #{pointnet_set_abstraction_msg.6} parent=1 // loop_exit
      _

// kernel: pointnet_set_abstraction_msg.7
$region0: #{pointnet_set_abstraction_msg.7}
  #allocation0 [shape = 'u32[]', space=smem, size = 0x4, offset = 0x4, fixed_abs, tag = 'smem constant byte address 0x4 - core index']
  #allocation1 [shape = 'u32[144,128]{1,0:T(1,128)}', space=vmem, size = 0x12000, scoped, tag = 'internal scratch']
  %s0 = inlined_call_operand.vmem [shape: bf16[16,512], index: 0, kind: input, shape index: {}]
  %s1 = inlined_call_operand.vmem [shape: f32[16,2], index: 1, kind: input, shape index: {}]
  %s2 = inlined_call_operand.vmem [shape: bf16[32,16], index: 2, kind: input, shape index: {}]
  %s3 = inlined_call_operand.vmem [shape: bf16[32,512], index: 3, kind: output, shape index: {0}]
  %s4 = inlined_call_operand.vmem [shape: f32[2,32,1], index: 4, kind: output, shape index: {1}]
  %s5 = inlined_call_operand.vmem [shape: f32[2,32,1], index: 5, kind: output, shape index: {2}]
  %6 = xla_tuple %s3, %s4, %s5
  %s7 = sld [smem:[#allocation0]]
  $region143: #{pointnet_set_abstraction_msg.7} parent=0
    _
  %s9 = ssub.s32 1, %s7
  %s10 = scalar_select 0, %s9, %s7
  $region1: #{pointnet_set_abstraction_msg.7} parent=0
    #allocation2 [shape = 'u8[8192]{0}', space=vmem, size = 0x2000, scoped, tag = 'input window, operand 0']
    #allocation3 [shape = 'u8[16384]{0}', space=vmem, size = 0x4000, scoped, tag = 'output window, operand 0']
    loop: start=0, step=1, limit=6
    $region2: #{pointnet_set_abstraction_msg.7} parent=1 // loop_pre_header
      _
    $region3: #{pointnet_set_abstraction_msg.7} parent=1 // loop_header
      %s12 = sphi 0, %s16
      %p13 = scmp.ge.s32.totalorder %s12, 6
      %s19 = sphi 0, %s31
      %s20 = sphi 0, %s27
      %s21 = sphi 0, %s19
      %s22 = sphi 0, %s20
      %s23 = sphi 0, %s21
      %s24 = sphi 0, %s22
      %s38 = sphi 0, %s40
      %s41 = sphi 0, %s38
      %s42 = sphi 0, %s41
      %s58 = sphi 0, %s42
      %s62 = sphi 0, %s62
      %s64 = sphi 0, %s62
      %s65 = sphi 0, %s64
      %s79 = sphi 0, %s65
      %s83 = sphi 0, %s83
      %s85 = sphi 0, %s83
      %s86 = sphi 0, %s85
      %s100 = sphi 0, %s86
      %s110 = sphi 0, %s112
      %s113 = sphi 0, %s110
      %s114 = sphi 0, %s113
      %s130 = sphi 0, %s114
      %s136 = sphi 0, %s138
      %s139 = sphi 0, %s136
      %s140 = sphi 0, %s139
      %s156 = sphi 0, %s140
      %s162 = sphi 0, %s164
      %s165 = sphi 0, %s162
      %s166 = sphi 0, %s165
      %s182 = sphi 0, %s166
    $region4: #{pointnet_set_abstraction_msg.7} parent=1 // loop_header_branch
      %15 = sbr.rel (%p13) target = $region8
    $region5: #{pointnet_set_abstraction_msg.7} parent=1 // loop_body
      %s17 = ssub.s32 %s12, 1
      %s18 = ssub.s32 %s12, 2
      %s25 = sadd.s32 1, %s20
      %p26 = scmp.ge.s32.totalorder %s25, 2
      %s27 = scalar_select %p26, 0, %s25
      %s28 = sadd.s32 1, %s19
      %s29 = scalar_select %p26, %s28, %s19
      %p30 = scmp.ge.s32.totalorder %s29, 2
      %s31 = scalar_select %p30, 0, %s29
      %s32 = smul.u32 %s19, 2
      %s33 = sadd.s32 %s32, %s20
      %s34 = smul.u32 %s31, 2
      %s35 = sadd.s32 %s34, %s27
      %s36 = ssub.s32 %s33, %s35
      %p37 = scmp.eq.s32.totalorder %s36, 0
      %s39 = sadd.s32 %s38, 1
      %s40 = scalar_select %p37, %s38, %s39
      %p43 = pneg %p37
      %p44 = scmp.eq.s32.totalorder %s12, 3
      %p45 = por %p43, %p44
      %p46 = scmp.ne.s32.totalorder %s38, %s41
      %p47 = scmp.eq.s32.totalorder %s12, 0
      %p48 = por %p46, %p47
      %p49 = scmp.ne.s32.totalorder %s38, %s41
      %p50 = scmp.eq.s32.totalorder %s17, 3
      %p51 = por %p49, %p50
      %p52 = scmp.ne.s32.totalorder %s41, %s42
      %p53 = scmp.eq.s32.totalorder %s17, 0
      %p54 = por %p52, %p53
      %p55 = scmp.ne.s32.totalorder %s41, %s42
      %p56 = scmp.eq.s32.totalorder %s18, 3
      %p57 = por %p55, %p56
      %p59 = scmp.ne.s32.totalorder %s42, %s58
      %p60 = scmp.eq.s32.totalorder %s18, 0
      %p61 = por %p59, %p60
      %s63 = sadd.s32 %s62, 1
      %p66 = scmp.eq.s32.totalorder %s12, 3
      %p67 = scmp.ne.s32.totalorder %s62, %s64
      %p68 = scmp.eq.s32.totalorder %s12, 0
      %p69 = por %p67, %p68
      %p70 = scmp.ne.s32.totalorder %s62, %s64
      %p71 = scmp.eq.s32.totalorder %s17, 3
      %p72 = por %p70, %p71
      %p73 = scmp.ne.s32.totalorder %s64, %s65
      %p74 = scmp.eq.s32.totalorder %s17, 0
      %p75 = por %p73, %p74
      %p76 = scmp.ne.s32.totalorder %s64, %s65
      %p77 = scmp.eq.s32.totalorder %s18, 3
      %p78 = por %p76, %p77
      %p80 = scmp.ne.s32.totalorder %s65, %s79
      %p81 = scmp.eq.s32.totalorder %s18, 0
      %p82 = por %p80, %p81
      %s84 = sadd.s32 %s83, 1
      %p87 = scmp.eq.s32.totalorder %s12, 3
      %p88 = scmp.ne.s32.totalorder %s83, %s85
      %p89 = scmp.eq.s32.totalorder %s12, 0
      %p90 = por %p88, %p89
      %p91 = scmp.ne.s32.totalorder %s83, %s85
      %p92 = scmp.eq.s32.totalorder %s17, 3
      %p93 = por %p91, %p92
      %p94 = scmp.ne.s32.totalorder %s85, %s86
      %p95 = scmp.eq.s32.totalorder %s17, 0
      %p96 = por %p94, %p95
      %p97 = scmp.ne.s32.totalorder %s85, %s86
      %p98 = scmp.eq.s32.totalorder %s18, 3
      %p99 = por %p97, %p98
      %p101 = scmp.ne.s32.totalorder %s86, %s100
      %p102 = scmp.eq.s32.totalorder %s18, 0
      %p103 = por %p101, %p102
      %s104 = smul.u32 %s19, 2
      %s105 = sadd.s32 %s104, %s20
      %s106 = smul.u32 %s31, 2
      %s107 = sadd.s32 %s106, %s27
      %s108 = ssub.s32 %s105, %s107
      %p109 = scmp.eq.s32.totalorder %s108, 0
      %s111 = sadd.s32 %s110, 1
      %s112 = scalar_select %p109, %s110, %s111
      %p115 = pneg %p109
      %p116 = scmp.eq.s32.totalorder %s12, 3
      %p117 = por %p115, %p116
      %p118 = scmp.ne.s32.totalorder %s110, %s113
      %p119 = scmp.eq.s32.totalorder %s12, 0
      %p120 = por %p118, %p119
      %p121 = scmp.ne.s32.totalorder %s110, %s113
      %p122 = scmp.eq.s32.totalorder %s17, 3
      %p123 = por %p121, %p122
      %p124 = scmp.ne.s32.totalorder %s113, %s114
      %p125 = scmp.eq.s32.totalorder %s17, 0
      %p126 = por %p124, %p125
      %p127 = scmp.ne.s32.totalorder %s113, %s114
      %p128 = scmp.eq.s32.totalorder %s18, 3
      %p129 = por %p127, %p128
      %p131 = scmp.ne.s32.totalorder %s114, %s130
      %p132 = scmp.eq.s32.totalorder %s18, 0
      %p133 = por %p131, %p132
      %s134 = ssub.s32 %s19, %s31
      %p135 = scmp.eq.s32.totalorder %s134, 0
      %s137 = sadd.s32 %s136, 1
      %s138 = scalar_select %p135, %s136, %s137
      %p141 = pneg %p135
      %p142 = scmp.eq.s32.totalorder %s12, 3
      %p143 = por %p141, %p142
      %p144 = scmp.ne.s32.totalorder %s136, %s139
      %p145 = scmp.eq.s32.totalorder %s12, 0
      %p146 = por %p144, %p145
      %p147 = scmp.ne.s32.totalorder %s136, %s139
      %p148 = scmp.eq.s32.totalorder %s17, 3
      %p149 = por %p147, %p148
      %p150 = scmp.ne.s32.totalorder %s139, %s140
      %p151 = scmp.eq.s32.totalorder %s17, 0
      %p152 = por %p150, %p151
      %p153 = scmp.ne.s32.totalorder %s139, %s140
      %p154 = scmp.eq.s32.totalorder %s18, 3
      %p155 = por %p153, %p154
      %p157 = scmp.ne.s32.totalorder %s140, %s156
      %p158 = scmp.eq.s32.totalorder %s18, 0
      %p159 = por %p157, %p158
      %s160 = ssub.s32 %s19, %s31
      %p161 = scmp.eq.s32.totalorder %s160, 0
      %s163 = sadd.s32 %s162, 1
      %s164 = scalar_select %p161, %s162, %s163
      %p167 = pneg %p161
      %p168 = scmp.eq.s32.totalorder %s12, 3
      %p169 = por %p167, %p168
      %p170 = scmp.ne.s32.totalorder %s162, %s165
      %p171 = scmp.eq.s32.totalorder %s12, 0
      %p172 = por %p170, %p171
      %p173 = scmp.ne.s32.totalorder %s162, %s165
      %p174 = scmp.eq.s32.totalorder %s17, 3
      %p175 = por %p173, %p174
      %p176 = scmp.ne.s32.totalorder %s165, %s166
      %p177 = scmp.eq.s32.totalorder %s17, 0
      %p178 = por %p176, %p177
      %p179 = scmp.ne.s32.totalorder %s165, %s166
      %p180 = scmp.eq.s32.totalorder %s18, 3
      %p181 = por %p179, %p180
      %p183 = scmp.ne.s32.totalorder %s166, %s182
      %p184 = scmp.eq.s32.totalorder %s18, 0
      %p185 = por %p183, %p184
      %p186 = scmp.le.s32.totalorder 1, %s12
      %p187 = scmp.lt.s32.totalorder %s12, 5
      %p188 = pnand %p186, %p187
      %p189 = pneg %p188
      // Predicated region
      $region9: #{pointnet_set_abstraction_msg.7} parent=5 // pred_check
        _
      $region10: #{pointnet_set_abstraction_msg.7} parent=5 // pred_check_branch
        %191 = sbr.rel (%p188) target = $region12
      $region11: #{pointnet_set_abstraction_msg.7} parent=5 // pred_region
        %s192 = ssub.s32 %s12, 1
        // Predicated region
        $region13: #{pointnet_set_abstraction_msg.7} parent=11 // pred_check
          %p193 = pneg %p75
        $region14: #{pointnet_set_abstraction_msg.7} parent=11 // pred_check_branch
          %195 = sbr.rel (%p193) target = $region16
        $region15: #{pointnet_set_abstraction_msg.7} parent=11 // pred_region
          _
        $region16: #{pointnet_set_abstraction_msg.7} parent=11 // pred_fallthru
          _
        // Predicated region
        $region17: #{pointnet_set_abstraction_msg.7} parent=11 // pred_check
          %p196 = pneg %p96
        $region18: #{pointnet_set_abstraction_msg.7} parent=11 // pred_check_branch
          %198 = sbr.rel (%p196) target = $region20
        $region19: #{pointnet_set_abstraction_msg.7} parent=11 // pred_region
          _
        $region20: #{pointnet_set_abstraction_msg.7} parent=11 // pred_fallthru
          _
      $region12: #{pointnet_set_abstraction_msg.7} parent=5 // pred_fallthru
        _
      %p199 = scmp.lt.s32.totalorder %s12, 4
      // Predicated region
      $region21: #{pointnet_set_abstraction_msg.7} parent=5 // pred_check
        %p200 = pneg %p199
      $region22: #{pointnet_set_abstraction_msg.7} parent=5 // pred_check_branch
        %202 = sbr.rel (%p200) target = $region24
      $region23: #{pointnet_set_abstraction_msg.7} parent=5 // pred_region
        // Predicated region
        $region25: #{pointnet_set_abstraction_msg.7} parent=23 // pred_check
          %p203 = pneg %p48
        $region26: #{pointnet_set_abstraction_msg.7} parent=23 // pred_check_branch
          %205 = sbr.rel (%p203) target = $region28
        $region27: #{pointnet_set_abstraction_msg.7} parent=23 // pred_region
          %s206 = sand.u32 %s38, 1
          %s207 = sand.u32 %s38, 1
          %s208 = smul.addr %s207, 8
          %s209 = scalar_lea.vmem [#allocation2], %s208
          %s210 = smul.u32 %s19, 2
          %s211 = sadd.s32 %s210, %s20
          %s212 = smul.addr %s211, 4
          %s213 = scalar_lea.vmem %s0, %s212
          // Predicated region
          $region29: #{pointnet_set_abstraction_msg.7} parent=27 // pred_check
            _
          $region30: #{pointnet_set_abstraction_msg.7} parent=27 // pred_check_branch
            %215 = sbr.rel (0) target = $region32
          $region31: #{pointnet_set_abstraction_msg.7} parent=27 // pred_region
            // Predicated region
            $region33: #{pointnet_set_abstraction_msg.7} parent=31 // pred_check
              _
            $region34: #{pointnet_set_abstraction_msg.7} parent=31 // pred_check_branch
              %217 = sbr.rel target = $region36
            $region35: #{pointnet_set_abstraction_msg.7} parent=31 // pred_region
              // Predicated region
              $region48: #{pointnet_set_abstraction_msg.7} parent=35 // pred_check
                _
              $region49: #{pointnet_set_abstraction_msg.7} parent=35 // pred_check_branch
                %235 = sbr.rel (0) target = $region51
              $region50: #{pointnet_set_abstraction_msg.7} parent=35 // pred_region
                loop: start=0, step=1, limit=1
                $region52: #{pointnet_set_abstraction_msg.7} parent=50 // loop_pre_header
                  _
                $region53: #{pointnet_set_abstraction_msg.7} parent=50 // loop_header
                  %s237 = sphi 0, %s241
                  %p238 = scmp.ge.s32.totalorder %s237, 1
                  %s242 = sphi %s213, %s213
                  %s243 = sphi %s209, %s209
                $region54: #{pointnet_set_abstraction_msg.7} parent=50 // loop_header_branch
                  %240 = sbr.rel (%p238) target = $region58
                $region55: #{pointnet_set_abstraction_msg.7} parent=50 // loop_body
                  _
                $region56: #{pointnet_set_abstraction_msg.7} parent=50 // loop_footer
                  %s241 = sadd.s32 1, %s237
                $region57: #{pointnet_set_abstraction_msg.7} parent=50 // loop_footer_branch
                  %236 = sbr.rel target = $region53
                $region58: #{pointnet_set_abstraction_msg.7} parent=50 // loop_exit
                  _
                %s245 = ssub.s32 16, 1
                loop: start=0, step=1, limit=1
                $region59: #{pointnet_set_abstraction_msg.7} parent=50 // loop_pre_header
                  _
                $region60: #{pointnet_set_abstraction_msg.7} parent=50 // loop_header
                  %s247 = sphi 0, %s251
                  %p248 = scmp.ge.s32.totalorder %s247, 1
                  %s252 = sphi %s213, %s213
                  %s253 = sphi %s209, %s209
                $region61: #{pointnet_set_abstraction_msg.7} parent=50 // loop_header_branch
                  %250 = sbr.rel (%p248) target = $region65
                $region62: #{pointnet_set_abstraction_msg.7} parent=50 // loop_body
                  %v254 = vld [vmem:[%s252] sm:%s245]
                  %255 = vst [vmem:[%s253] sm:%s245] %v254
                  %v256 = vld [vmem:[%s252 + $0x10] sm:%s245]
                  %257 = vst [vmem:[%s253 + $0x4] sm:%s245] %v256
                $region63: #{pointnet_set_abstraction_msg.7} parent=50 // loop_footer
                  %s251 = sadd.s32 1, %s247
                $region64: #{pointnet_set_abstraction_msg.7} parent=50 // loop_footer_branch
                  %246 = sbr.rel target = $region60
                $region65: #{pointnet_set_abstraction_msg.7} parent=50 // loop_exit
                  _
              $region51: #{pointnet_set_abstraction_msg.7} parent=35 // pred_fallthru
                _
            $region36: #{pointnet_set_abstraction_msg.7} parent=31 // pred_fallthru
              _
            // Predicated region
            $region37: #{pointnet_set_abstraction_msg.7} parent=31 // pred_check
              _
            $region38: #{pointnet_set_abstraction_msg.7} parent=31 // pred_check_branch
              %219 = sbr.rel (0) target = $region40
            $region39: #{pointnet_set_abstraction_msg.7} parent=31 // pred_region
              %s221 = ssub.s32 16, 1
              loop: start=0, step=1, limit=1
              $region41: #{pointnet_set_abstraction_msg.7} parent=39 // loop_pre_header
                _
              $region42: #{pointnet_set_abstraction_msg.7} parent=39 // loop_header
                %s223 = sphi 0, %s227
                %p224 = scmp.ge.s32.totalorder %s223, 1
                %s228 = sphi %s213, %s213
                %s229 = sphi %s209, %s209
              $region43: #{pointnet_set_abstraction_msg.7} parent=39 // loop_header_branch
                %226 = sbr.rel (%p224) target = $region47
              $region44: #{pointnet_set_abstraction_msg.7} parent=39 // loop_body
                %v230 = vld [vmem:[%s228] sm:%s221]
                %231 = vst [vmem:[%s229] sm:%s221] %v230
                %v232 = vld [vmem:[%s228 + $0x10] sm:%s221]
                %233 = vst [vmem:[%s229 + $0x4] sm:%s221] %v232
              $region45: #{pointnet_set_abstraction_msg.7} parent=39 // loop_footer
                %s227 = sadd.s32 1, %s223
              $region46: #{pointnet_set_abstraction_msg.7} parent=39 // loop_footer_branch
                %222 = sbr.rel target = $region42
              $region47: #{pointnet_set_abstraction_msg.7} parent=39 // loop_exit
                _
            $region40: #{pointnet_set_abstraction_msg.7} parent=31 // pred_fallthru
              _
          $region32: #{pointnet_set_abstraction_msg.7} parent=27 // pred_fallthru
            _
          %258 = vnop
        $region28: #{pointnet_set_abstraction_msg.7} parent=23 // pred_fallthru
          _
      $region24: #{pointnet_set_abstraction_msg.7} parent=5 // pred_fallthru
        _
      %p259 = scmp.le.s32.totalorder 1, %s12
      %p260 = scmp.lt.s32.totalorder %s12, 5
      %p261 = pnand %p259, %p260
      %p262 = pneg %p261
      // Predicated region
      $region66: #{pointnet_set_abstraction_msg.7} parent=5 // pred_check
        _
      $region67: #{pointnet_set_abstraction_msg.7} parent=5 // pred_check_branch
        %264 = sbr.rel (%p261) target = $region69
      $region68: #{pointnet_set_abstraction_msg.7} parent=5 // pred_region
        %s265 = ssub.s32 %s12, 1
        %s266 = sand.u32 %s41, 1
        %s267 = sand.u32 %s41, 1
        %s268 = smul.addr %s267, 8
        %s269 = scalar_lea.vmem [#allocation2], %s268
        // Predicated region
        $region70: #{pointnet_set_abstraction_msg.7} parent=68 // pred_check
          %p270 = pneg %p54
        $region71: #{pointnet_set_abstraction_msg.7} parent=68 // pred_check_branch
          %272 = sbr.rel (%p270) target = $region73
        $region72: #{pointnet_set_abstraction_msg.7} parent=68 // pred_region
          _
        $region73: #{pointnet_set_abstraction_msg.7} parent=68 // pred_fallthru
          _
        %s273 = sand.u32 %s41, 1
        %s274 = sand.u32 %s41, 1
        %s275 = smul.addr %s274, 8
        %s276 = scalar_lea.vmem [#allocation2], %s275
        %p277 = pneg %p54
        %p278 = pneg %p51
        %p279 = pneg %p75
        %p280 = pneg %p72
        %p281 = pneg %p96
        %p282 = pneg %p93
        %p283 = pneg %p126
        %p284 = pneg %p123
        %s285 = sand.u32 %s113, 1
        %s286 = sand.u32 %s113, 1
        %s287 = smul.addr %s286, 16
        %s288 = scalar_lea.vmem [#allocation3], %s287
        %p289 = pneg %p152
        %p290 = pneg %p149
        %p291 = scmp.lt.s32.totalorder %s21, 1
        %s292 = scalar_select %p291, %s21, 1
        %s293 = smul.addr %s292, 4
        %s294 = smul.addr %s293, 8
        %s295 = scalar_lea.vmem %s4, %s294
        %p296 = pneg %p178
        %p297 = pneg %p175
        %p298 = scmp.lt.s32.totalorder %s21, 1
        %s299 = scalar_select %p298, %s21, 1
        %s300 = smul.addr %s299, 4
        %s301 = smul.addr %s300, 8
        %s302 = scalar_lea.vmem %s5, %s301
        %s303 = smul.u32 %s21, 2
        %s304 = sadd.s32 %s303, %s22
        %s305 = smul.u32 %s21, 2
        %s306 = sadd.s32 %s305, %s22
        %p307 = scmp.lt.s32.totalorder %s21, 1
        %s308 = scalar_select %p307, %s21, 1
        %s309 = smul.addr %s308, 4
        %s310 = smul.addr %s309, 8
        %s311 = scalar_lea.vmem %s4, %s310
        %p312 = scmp.lt.s32.totalorder %s21, 1
        %s313 = scalar_select %p312, %s21, 1
        %s314 = smul.addr %s313, 4
        %s315 = smul.addr %s314, 8
        %s316 = scalar_lea.vmem %s5, %s315
        %v318 = vld [vmem:[%s269] sm:$0xf]
        %v319 = vld [vmem:[%s269 + $0x4] sm:$0xf]
        %v320 = vld [vmem:[%s2] sm:$0xf]
        %v321 = vld [vmem:[%s2 + $0x4] sm:$0xf]
        %v322 = vld [vmem:[%s2 + $0x8] sm:$0xf]
        %v323 = vld [vmem:[%s2 + $0xc] sm:$0xf]
        %v328 = vunpack.c.l.b16 %v320
        %v329 = vunpack.c.l.b16 %v321
        %v330 = vunpack.c.l.b16 %v322
        %v331 = vunpack.c.l.b16 %v323
        %v332 = vpack.c.b16 %v329, %v328
        %v333 = vpack.c.b16 %v331, %v330
        %v336 = vunpack.c.l.b16 %v318
        %v337 = vunpack.c.l.b16 %v319
        %v338 = vpack.c.b16 %v337, %v336
        %vm340 = vcmask 130048
        %v342 = vsel %vm340, %v332, 0
        %v345 = vsel %vm340, %v333, 0
        %347 = vmatprep.subr.bf16.mxu0 0
        %348 = vmatpush1.bf16.msra.mxu0 0
        %349 = vmatprep.subr.bf16.mxu0 0
        %350 = vmatpush1.bf16.msra.mxu0 0
        %351 = vmatprep.subr.bf16.mxu0 0
        %352 = vmatpush1.bf16.msra.mxu0 0
        %353 = vmatprep.subr.bf16.mxu0 0
        %354 = vmatpush1.bf16.msra.mxu0 0
        %355 = vmatprep.subr.bf16.mxu0 0
        %356 = vmatpush1.bf16.msra.mxu0 0
        %357 = vmatprep.subr.bf16.mxu0 0
        %358 = vmatpush1.bf16.msra.mxu0 0
        %359 = vmatprep.subr.bf16.mxu0 0
        %360 = vmatpush1.bf16.msra.mxu0 0
        %361 = vmatprep.subr.bf16.mxu0 0
        %362 = vmatpush1.bf16.msra.mxu0 %v338
        %363 = vmatprep.subr.bf16.mxu0 0
        %364 = vmatpush2.bf16.msra.mxu0 0
        %365 = vmatprep.subr.bf16.mxu0 0
        %366 = vmatpush2.bf16.msra.mxu0 0
        %367 = vmatprep.subr.bf16.mxu0 0
        %368 = vmatpush2.bf16.msra.mxu0 0
        %369 = vmatprep.subr.bf16.mxu0 0
        %370 = vmatpush2.bf16.msra.mxu0 0
        %371 = vmatprep.subr.bf16.mxu0 0
        %372 = vmatpush2.bf16.msra.mxu0 0
        %373 = vmatprep.subr.bf16.mxu0 0
        %374 = vmatpush2.bf16.msra.mxu0 0
        %375 = vmatprep.subr.bf16.mxu0 0
        %376 = vmatpush2.bf16.msra.mxu0 0
        %377 = vmatprep.subr.bf16.mxu0 0
        %378 = vmatpush2.bf16.msra.mxu0 0
        %379 = vmatprep.mubr.bf16.mxu0 0
        %380 = vmatmul.mubr.bf16.gmra.mxu0 %v342
        %v381 = vpop.f32.mrf.mxu0
        %v382 = vadd.f32 0.0, %v381
        %v383 = vpop.f32.mrf.mxu0
        %v384 = vpop.f32.mrf.mxu0
        %v385 = vadd.f32 0.0, %v384
        %v386 = vpop.f32.mrf.mxu0
        %387 = vmatprep.mubr.bf16.mxu0 0
        %388 = vmatmul.mubr.bf16.gmra.mxu0 %v345
        %v389 = vpop.f32.mrf.mxu0
        %v390 = vadd.f32 0.0, %v389
        %v391 = vpop.f32.mrf.mxu0
        %v392 = vpop.f32.mrf.mxu0
        %v393 = vadd.f32 0.0, %v392
        %v394 = vpop.f32.mrf.mxu0
        %395 = vdwg.mxu0
        %v396 = vpack.c.bf16 %v385, %v382
        %v397 = vpack.c.bf16 %v393, %v390
        %v400 = vunpack.c.l.b16 %v396
        %v401 = vunpack.c.h.b16 %v396
        %v402 = vunpack.c.l.b16 %v397
        %v403 = vunpack.c.h.b16 %v397
        %v404 = vpack.c.b16 %v400, %v400
        %v405 = vpack.c.b16 %v401, %v401
        %v406 = vpack.c.b16 %v402, %v402
        %v407 = vpack.c.b16 %v403, %v403
        %412 = vst [vmem:[%s288] sm:$0xf] %v404
        %413 = vst [vmem:[%s288 + $0x4] sm:$0xf] %v405
        %414 = vst [vmem:[%s288 + $0x8] sm:$0xf] %v406
        %415 = vst [vmem:[%s288 + $0xc] sm:$0xf] %v407
        %p416 = scmp.eq.s32.totalorder %s22, 0
        // Predicated region
        $region74: #{pointnet_set_abstraction_msg.7} parent=68 // pred_check
          %p417 = pneg %p416
        $region75: #{pointnet_set_abstraction_msg.7} parent=68 // pred_check_branch
          %419 = sbr.rel (%p417) target = $region77
        $region76: #{pointnet_set_abstraction_msg.7} parent=68 // pred_region
          %vm420 = vcmask 7168
          %421 = vst.msk [vmem:[%s311] sm:$0xff] %vm420, 0.0
          %422 = vst.msk [vmem:[%s311 + $0x8] sm:$0xff] %vm420, 0.0
          %423 = vst.msk [vmem:[%s311 + $0x10] sm:$0xff] %vm420, 0.0
          %424 = vst.msk [vmem:[%s311 + $0x18] sm:$0xff] %vm420, 0.0
          %425 = vst.msk [vmem:[%s316] sm:$0xff] %vm420, 0.0
          %426 = vst.msk [vmem:[%s316 + $0x8] sm:$0xff] %vm420, 0.0
          %427 = vst.msk [vmem:[%s316 + $0x10] sm:$0xff] %vm420, 0.0
          %428 = vst.msk [vmem:[%s316 + $0x18] sm:$0xff] %vm420, 0.0
        $region77: #{pointnet_set_abstraction_msg.7} parent=68 // pred_fallthru
          _
        %v429 = vld [vmem:[%s311] sm:$0xff]
        %v430 = vld [vmem:[%s311 + $0x8] sm:$0xff]
        %v431 = vld [vmem:[%s311 + $0x10] sm:$0xff]
        %v432 = vld [vmem:[%s311 + $0x18] sm:$0xff]
        %433 = vadd.xlane.f32.xlu0 %v382
        %v434 = vpop.xlane.xlu0 %433
        %435 = vadd.xlane.f32.xlu0 %v385
        %v436 = vpop.xlane.xlu0 %435
        %437 = vadd.xlane.f32.xlu0 %v390
        %v438 = vpop.xlane.xlu0 %437
        %439 = vadd.xlane.f32.xlu0 %v393
        %v440 = vpop.xlane.xlu0 %439
        %v441 = vadd.f32 %v429, %v434
        %v442 = vadd.f32 %v430, %v436
        %v443 = vadd.f32 %v431, %v438
        %v444 = vadd.f32 %v432, %v440
        %vm445 = vcmask 7168
        %446 = vst.msk [vmem:[%s311] sm:$0xff] %vm445, %v441
        %447 = vst.msk [vmem:[%s311 + $0x8] sm:$0xff] %vm445, %v442
        %448 = vst.msk [vmem:[%s311 + $0x10] sm:$0xff] %vm445, %v443
        %449 = vst.msk [vmem:[%s311 + $0x18] sm:$0xff] %vm445, %v444
        %v450 = vld [vmem:[%s316] sm:$0xff]
        %v451 = vld [vmem:[%s316 + $0x8] sm:$0xff]
        %v452 = vld [vmem:[%s316 + $0x10] sm:$0xff]
        %v453 = vld [vmem:[%s316 + $0x18] sm:$0xff]
        %v454 = vmul.f32 %v382, %v382
        %v455 = vmul.f32 %v385, %v385
        %v456 = vmul.f32 %v390, %v390
        %v457 = vmul.f32 %v393, %v393
        %458 = vadd.xlane.f32.xlu0 %v454
        %v459 = vpop.xlane.xlu0 %458
        %460 = vadd.xlane.f32.xlu0 %v455
        %v461 = vpop.xlane.xlu0 %460
        %462 = vadd.xlane.f32.xlu0 %v456
        %v463 = vpop.xlane.xlu0 %462
        %464 = vadd.xlane.f32.xlu0 %v457
        %v465 = vpop.xlane.xlu0 %464
        %v466 = vadd.f32 %v450, %v459
        %v467 = vadd.f32 %v451, %v461
        %v468 = vadd.f32 %v452, %v463
        %v469 = vadd.f32 %v453, %v465
        %470 = vst.msk [vmem:[%s316] sm:$0xff] %vm445, %v466
        %471 = vst.msk [vmem:[%s316 + $0x8] sm:$0xff] %vm445, %v467
        %472 = vst.msk [vmem:[%s316 + $0x10] sm:$0xff] %vm445, %v468
        %473 = vst.msk [vmem:[%s316 + $0x18] sm:$0xff] %vm445, %v469
        %s474 = sand.u32 %s113, 1
        %s475 = sand.u32 %s113, 1
        %s476 = smul.addr %s475, 16
        %s477 = scalar_lea.vmem [#allocation3], %s476
        %p478 = scmp.lt.s32.totalorder %s21, 1
        %s479 = scalar_select %p478, %s21, 1
        %s480 = smul.addr %s479, 4
        %s481 = smul.addr %s480, 8
        %s482 = scalar_lea.vmem %s4, %s481
        %p483 = scmp.lt.s32.totalorder %s21, 1
        %s484 = scalar_select %p483, %s21, 1
        %s485 = smul.addr %s484, 4
        %s486 = smul.addr %s485, 8
        %s487 = scalar_lea.vmem %s5, %s486
        // Predicated region
        $region78: #{pointnet_set_abstraction_msg.7} parent=68 // pred_check
          %p488 = pneg %p123
        $region79: #{pointnet_set_abstraction_msg.7} parent=68 // pred_check_branch
          %490 = sbr.rel (%p488) target = $region81
        $region80: #{pointnet_set_abstraction_msg.7} parent=68 // pred_region
          %s491 = smul.u32 %s21, 2
          %s492 = sadd.s32 %s491, %s22
          %s493 = smul.addr %s492, 4
          %s494 = scalar_lea.vmem %s3, %s493
          // Predicated region
          $region82: #{pointnet_set_abstraction_msg.7} parent=80 // pred_check
            _
          $region83: #{pointnet_set_abstraction_msg.7} parent=80 // pred_check_branch
            %496 = sbr.rel (0) target = $region85
          $region84: #{pointnet_set_abstraction_msg.7} parent=80 // pred_region
            // Predicated region
            $region86: #{pointnet_set_abstraction_msg.7} parent=84 // pred_check
              _
            $region87: #{pointnet_set_abstraction_msg.7} parent=84 // pred_check_branch
              %498 = sbr.rel target = $region89
            $region88: #{pointnet_set_abstraction_msg.7} parent=84 // pred_region
              // Predicated region
              $region101: #{pointnet_set_abstraction_msg.7} parent=88 // pred_check
                _
              $region102: #{pointnet_set_abstraction_msg.7} parent=88 // pred_check_branch
                %520 = sbr.rel (0) target = $region104
              $region103: #{pointnet_set_abstraction_msg.7} parent=88 // pred_region
                loop: start=0, step=1, limit=1
                $region105: #{pointnet_set_abstraction_msg.7} parent=103 // loop_pre_header
                  _
                $region106: #{pointnet_set_abstraction_msg.7} parent=103 // loop_header
                  %s522 = sphi 0, %s526
                  %p523 = scmp.ge.s32.totalorder %s522, 1
                  %s527 = sphi %s477, %s477
                  %s528 = sphi %s494, %s494
                $region107: #{pointnet_set_abstraction_msg.7} parent=103 // loop_header_branch
                  %525 = sbr.rel (%p523) target = $region111
                $region108: #{pointnet_set_abstraction_msg.7} parent=103 // loop_body
                  _
                $region109: #{pointnet_set_abstraction_msg.7} parent=103 // loop_footer
                  %s526 = sadd.s32 1, %s522
                $region110: #{pointnet_set_abstraction_msg.7} parent=103 // loop_footer_branch
                  %521 = sbr.rel target = $region106
                $region111: #{pointnet_set_abstraction_msg.7} parent=103 // loop_exit
                  _
                %s530 = ssub.s32 16, 1
                loop: start=0, step=1, limit=1
                $region112: #{pointnet_set_abstraction_msg.7} parent=103 // loop_pre_header
                  _
                $region113: #{pointnet_set_abstraction_msg.7} parent=103 // loop_header
                  %s532 = sphi 0, %s536
                  %p533 = scmp.ge.s32.totalorder %s532, 1
                  %s537 = sphi %s477, %s477
                  %s538 = sphi %s494, %s494
                $region114: #{pointnet_set_abstraction_msg.7} parent=103 // loop_header_branch
                  %535 = sbr.rel (%p533) target = $region118
                $region115: #{pointnet_set_abstraction_msg.7} parent=103 // loop_body
                  %v539 = vld [vmem:[%s537] sm:%s530]
                  %540 = vst [vmem:[%s538] sm:%s530] %v539
                  %v541 = vld [vmem:[%s537 + $0x4] sm:%s530]
                  %542 = vst [vmem:[%s538 + $0x10] sm:%s530] %v541
                  %v543 = vld [vmem:[%s537 + $0x8] sm:%s530]
                  %544 = vst [vmem:[%s538 + $0x20] sm:%s530] %v543
                  %v545 = vld [vmem:[%s537 + $0xc] sm:%s530]
                  %546 = vst [vmem:[%s538 + $0x30] sm:%s530] %v545
                $region116: #{pointnet_set_abstraction_msg.7} parent=103 // loop_footer
                  %s536 = sadd.s32 1, %s532
                $region117: #{pointnet_set_abstraction_msg.7} parent=103 // loop_footer_branch
                  %531 = sbr.rel target = $region113
                $region118: #{pointnet_set_abstraction_msg.7} parent=103 // loop_exit
                  _
              $region104: #{pointnet_set_abstraction_msg.7} parent=88 // pred_fallthru
                _
            $region89: #{pointnet_set_abstraction_msg.7} parent=84 // pred_fallthru
              _
            // Predicated region
            $region90: #{pointnet_set_abstraction_msg.7} parent=84 // pred_check
              _
            $region91: #{pointnet_set_abstraction_msg.7} parent=84 // pred_check_branch
              %500 = sbr.rel (0) target = $region93
            $region92: #{pointnet_set_abstraction_msg.7} parent=84 // pred_region
              %s502 = ssub.s32 16, 1
              loop: start=0, step=1, limit=1
              $region94: #{pointnet_set_abstraction_msg.7} parent=92 // loop_pre_header
                _
              $region95: #{pointnet_set_abstraction_msg.7} parent=92 // loop_header
                %s504 = sphi 0, %s508
                %p505 = scmp.ge.s32.totalorder %s504, 1
                %s509 = sphi %s477, %s477
                %s510 = sphi %s494, %s494
              $region96: #{pointnet_set_abstraction_msg.7} parent=92 // loop_header_branch
                %507 = sbr.rel (%p505) target = $region100
              $region97: #{pointnet_set_abstraction_msg.7} parent=92 // loop_body
                %v511 = vld [vmem:[%s509] sm:%s502]
                %512 = vst [vmem:[%s510] sm:%s502] %v511
                %v513 = vld [vmem:[%s509 + $0x4] sm:%s502]
                %514 = vst [vmem:[%s510 + $0x10] sm:%s502] %v513
                %v515 = vld [vmem:[%s509 + $0x8] sm:%s502]
                %516 = vst [vmem:[%s510 + $0x20] sm:%s502] %v515
                %v517 = vld [vmem:[%s509 + $0xc] sm:%s502]
                %518 = vst [vmem:[%s510 + $0x30] sm:%s502] %v517
              $region98: #{pointnet_set_abstraction_msg.7} parent=92 // loop_footer
                %s508 = sadd.s32 1, %s504
              $region99: #{pointnet_set_abstraction_msg.7} parent=92 // loop_footer_branch
                %503 = sbr.rel target = $region95
              $region100: #{pointnet_set_abstraction_msg.7} parent=92 // loop_exit
                _
            $region93: #{pointnet_set_abstraction_msg.7} parent=84 // pred_fallthru
              _
          $region85: #{pointnet_set_abstraction_msg.7} parent=80 // pred_fallthru
            _
          %547 = vnop
        $region81: #{pointnet_set_abstraction_msg.7} parent=68 // pred_fallthru
          _
        // Predicated region
        $region119: #{pointnet_set_abstraction_msg.7} parent=68 // pred_check
          %p548 = pneg %p149
        $region120: #{pointnet_set_abstraction_msg.7} parent=68 // pred_check_branch
          %550 = sbr.rel (%p548) target = $region122
        $region121: #{pointnet_set_abstraction_msg.7} parent=68 // pred_region
          _
        $region122: #{pointnet_set_abstraction_msg.7} parent=68 // pred_fallthru
          _
        // Predicated region
        $region123: #{pointnet_set_abstraction_msg.7} parent=68 // pred_check
          %p551 = pneg %p175
        $region124: #{pointnet_set_abstraction_msg.7} parent=68 // pred_check_branch
          %553 = sbr.rel (%p551) target = $region126
        $region125: #{pointnet_set_abstraction_msg.7} parent=68 // pred_region
          _
        $region126: #{pointnet_set_abstraction_msg.7} parent=68 // pred_fallthru
          _
      $region69: #{pointnet_set_abstraction_msg.7} parent=5 // pred_fallthru
        _
      %p554 = scmp.le.s32.totalorder 2, %s12
      // Predicated region
      $region127: #{pointnet_set_abstraction_msg.7} parent=5 // pred_check
        %p555 = pneg %p554
      $region128: #{pointnet_set_abstraction_msg.7} parent=5 // pred_check_branch
        %557 = sbr.rel (%p555) target = $region130
      $region129: #{pointnet_set_abstraction_msg.7} parent=5 // pred_region
        %s558 = ssub.s32 %s12, 2
        // Predicated region
        $region131: #{pointnet_set_abstraction_msg.7} parent=129 // pred_check
          %p559 = pneg %p129
        $region132: #{pointnet_set_abstraction_msg.7} parent=129 // pred_check_branch
          %561 = sbr.rel (%p559) target = $region134
        $region133: #{pointnet_set_abstraction_msg.7} parent=129 // pred_region
          %s562 = sand.u32 %s114, 1
          %s563 = sand.u32 %s114, 1
          %s564 = smul.addr %s563, 16
          %s565 = scalar_lea.vmem [#allocation3], %s564
        $region134: #{pointnet_set_abstraction_msg.7} parent=129 // pred_fallthru
          _
        // Predicated region
        $region135: #{pointnet_set_abstraction_msg.7} parent=129 // pred_check
          %p566 = pneg %p155
        $region136: #{pointnet_set_abstraction_msg.7} parent=129 // pred_check_branch
          %568 = sbr.rel (%p566) target = $region138
        $region137: #{pointnet_set_abstraction_msg.7} parent=129 // pred_region
          %p569 = scmp.lt.s32.totalorder %s23, 1
          %s570 = scalar_select %p569, %s23, 1
          %s571 = smul.addr %s570, 4
          %s572 = smul.addr %s571, 8
          %s573 = scalar_lea.vmem %s4, %s572
        $region138: #{pointnet_set_abstraction_msg.7} parent=129 // pred_fallthru
          _
        // Predicated region
        $region139: #{pointnet_set_abstraction_msg.7} parent=129 // pred_check
          %p574 = pneg %p181
        $region140: #{pointnet_set_abstraction_msg.7} parent=129 // pred_check_branch
          %576 = sbr.rel (%p574) target = $region142
        $region141: #{pointnet_set_abstraction_msg.7} parent=129 // pred_region
          %p577 = scmp.lt.s32.totalorder %s23, 1
          %s578 = scalar_select %p577, %s23, 1
          %s579 = smul.addr %s578, 4
          %s580 = smul.addr %s579, 8
          %s581 = scalar_lea.vmem %s5, %s580
        $region142: #{pointnet_set_abstraction_msg.7} parent=129 // pred_fallthru
          _
      $region130: #{pointnet_set_abstraction_msg.7} parent=5 // pred_fallthru
        _
    $region6: #{pointnet_set_abstraction_msg.7} parent=1 // loop_footer
      %s16 = sadd.s32 1, %s12
    $region7: #{pointnet_set_abstraction_msg.7} parent=1 // loop_footer_branch
      %11 = sbr.rel target = $region3
    $region8: #{pointnet_set_abstraction_msg.7} parent=1 // loop_exit
      _

// kernel: pointnet_set_abstraction_msg.8
$region0: #{pointnet_set_abstraction_msg.8}
  #allocation0 [shape = 'u32[]', space=smem, size = 0x4, offset = 0x4, fixed_abs, tag = 'smem constant byte address 0x4 - core index']
  #allocation1 [shape = 'u32[144,128]{1,0:T(1,128)}', space=vmem, size = 0x12000, scoped, tag = 'internal scratch']
  %s0 = inlined_call_operand.vmem [shape: bf16[32,512], index: 0, kind: input, shape index: {}]
  %s1 = inlined_call_operand.vmem [shape: f32[32,2], index: 1, kind: input, shape index: {}]
  %s2 = inlined_call_operand.vmem [shape: bf16[64,32], index: 2, kind: input, shape index: {}]
  %s3 = inlined_call_operand.vmem [shape: bf16[64,512], index: 3, kind: output, shape index: {0}]
  %s4 = inlined_call_operand.vmem [shape: f32[2,64,1], index: 4, kind: output, shape index: {1}]
  %s5 = inlined_call_operand.vmem [shape: f32[2,64,1], index: 5, kind: output, shape index: {2}]
  %6 = xla_tuple %s3, %s4, %s5
  %s7 = sld [smem:[#allocation0]]
  $region143: #{pointnet_set_abstraction_msg.8} parent=0
    _
  %s9 = ssub.s32 1, %s7
  %s10 = scalar_select 0, %s9, %s7
  $region1: #{pointnet_set_abstraction_msg.8} parent=0
    #allocation2 [shape = 'u8[16384]{0}', space=vmem, size = 0x4000, scoped, tag = 'input window, operand 0']
    #allocation3 [shape = 'u8[32768]{0}', space=vmem, size = 0x8000, scoped, tag = 'output window, operand 0']
    loop: start=0, step=1, limit=6
    $region2: #{pointnet_set_abstraction_msg.8} parent=1 // loop_pre_header
      _
    $region3: #{pointnet_set_abstraction_msg.8} parent=1 // loop_header
      %s12 = sphi 0, %s16
      %p13 = scmp.ge.s32.totalorder %s12, 6
      %s19 = sphi 0, %s31
      %s20 = sphi 0, %s27
      %s21 = sphi 0, %s19
      %s22 = sphi 0, %s20
      %s23 = sphi 0, %s21
      %s24 = sphi 0, %s22
      %s38 = sphi 0, %s40
      %s41 = sphi 0, %s38
      %s42 = sphi 0, %s41
      %s58 = sphi 0, %s42
      %s62 = sphi 0, %s62
      %s64 = sphi 0, %s62
      %s65 = sphi 0, %s64
      %s79 = sphi 0, %s65
      %s83 = sphi 0, %s83
      %s85 = sphi 0, %s83
      %s86 = sphi 0, %s85
      %s100 = sphi 0, %s86
      %s110 = sphi 0, %s112
      %s113 = sphi 0, %s110
      %s114 = sphi 0, %s113
      %s130 = sphi 0, %s114
      %s136 = sphi 0, %s138
      %s139 = sphi 0, %s136
      %s140 = sphi 0, %s139
      %s156 = sphi 0, %s140
      %s162 = sphi 0, %s164
      %s165 = sphi 0, %s162
      %s166 = sphi 0, %s165
      %s182 = sphi 0, %s166
    $region4: #{pointnet_set_abstraction_msg.8} parent=1 // loop_header_branch
      %15 = sbr.rel (%p13) target = $region8
    $region5: #{pointnet_set_abstraction_msg.8} parent=1 // loop_body
      %s17 = ssub.s32 %s12, 1
      %s18 = ssub.s32 %s12, 2
      %s25 = sadd.s32 1, %s20
      %p26 = scmp.ge.s32.totalorder %s25, 2
      %s27 = scalar_select %p26, 0, %s25
      %s28 = sadd.s32 1, %s19
      %s29 = scalar_select %p26, %s28, %s19
      %p30 = scmp.ge.s32.totalorder %s29, 2
      %s31 = scalar_select %p30, 0, %s29
      %s32 = smul.u32 %s19, 2
      %s33 = sadd.s32 %s32, %s20
      %s34 = smul.u32 %s31, 2
      %s35 = sadd.s32 %s34, %s27
      %s36 = ssub.s32 %s33, %s35
      %p37 = scmp.eq.s32.totalorder %s36, 0
      %s39 = sadd.s32 %s38, 1
      %s40 = scalar_select %p37, %s38, %s39
      %p43 = pneg %p37
      %p44 = scmp.eq.s32.totalorder %s12, 3
      %p45 = por %p43, %p44
      %p46 = scmp.ne.s32.totalorder %s38, %s41
      %p47 = scmp.eq.s32.totalorder %s12, 0
      %p48 = por %p46, %p47
      %p49 = scmp.ne.s32.totalorder %s38, %s41
      %p50 = scmp.eq.s32.totalorder %s17, 3
      %p51 = por %p49, %p50
      %p52 = scmp.ne.s32.totalorder %s41, %s42
      %p53 = scmp.eq.s32.totalorder %s17, 0
      %p54 = por %p52, %p53
      %p55 = scmp.ne.s32.totalorder %s41, %s42
      %p56 = scmp.eq.s32.totalorder %s18, 3
      %p57 = por %p55, %p56
      %p59 = scmp.ne.s32.totalorder %s42, %s58
      %p60 = scmp.eq.s32.totalorder %s18, 0
      %p61 = por %p59, %p60
      %s63 = sadd.s32 %s62, 1
      %p66 = scmp.eq.s32.totalorder %s12, 3
      %p67 = scmp.ne.s32.totalorder %s62, %s64
      %p68 = scmp.eq.s32.totalorder %s12, 0
      %p69 = por %p67, %p68
      %p70 = scmp.ne.s32.totalorder %s62, %s64
      %p71 = scmp.eq.s32.totalorder %s17, 3
      %p72 = por %p70, %p71
      %p73 = scmp.ne.s32.totalorder %s64, %s65
      %p74 = scmp.eq.s32.totalorder %s17, 0
      %p75 = por %p73, %p74
      %p76 = scmp.ne.s32.totalorder %s64, %s65
      %p77 = scmp.eq.s32.totalorder %s18, 3
      %p78 = por %p76, %p77
      %p80 = scmp.ne.s32.totalorder %s65, %s79
      %p81 = scmp.eq.s32.totalorder %s18, 0
      %p82 = por %p80, %p81
      %s84 = sadd.s32 %s83, 1
      %p87 = scmp.eq.s32.totalorder %s12, 3
      %p88 = scmp.ne.s32.totalorder %s83, %s85
      %p89 = scmp.eq.s32.totalorder %s12, 0
      %p90 = por %p88, %p89
      %p91 = scmp.ne.s32.totalorder %s83, %s85
      %p92 = scmp.eq.s32.totalorder %s17, 3
      %p93 = por %p91, %p92
      %p94 = scmp.ne.s32.totalorder %s85, %s86
      %p95 = scmp.eq.s32.totalorder %s17, 0
      %p96 = por %p94, %p95
      %p97 = scmp.ne.s32.totalorder %s85, %s86
      %p98 = scmp.eq.s32.totalorder %s18, 3
      %p99 = por %p97, %p98
      %p101 = scmp.ne.s32.totalorder %s86, %s100
      %p102 = scmp.eq.s32.totalorder %s18, 0
      %p103 = por %p101, %p102
      %s104 = smul.u32 %s19, 2
      %s105 = sadd.s32 %s104, %s20
      %s106 = smul.u32 %s31, 2
      %s107 = sadd.s32 %s106, %s27
      %s108 = ssub.s32 %s105, %s107
      %p109 = scmp.eq.s32.totalorder %s108, 0
      %s111 = sadd.s32 %s110, 1
      %s112 = scalar_select %p109, %s110, %s111
      %p115 = pneg %p109
      %p116 = scmp.eq.s32.totalorder %s12, 3
      %p117 = por %p115, %p116
      %p118 = scmp.ne.s32.totalorder %s110, %s113
      %p119 = scmp.eq.s32.totalorder %s12, 0
      %p120 = por %p118, %p119
      %p121 = scmp.ne.s32.totalorder %s110, %s113
      %p122 = scmp.eq.s32.totalorder %s17, 3
      %p123 = por %p121, %p122
      %p124 = scmp.ne.s32.totalorder %s113, %s114
      %p125 = scmp.eq.s32.totalorder %s17, 0
      %p126 = por %p124, %p125
      %p127 = scmp.ne.s32.totalorder %s113, %s114
      %p128 = scmp.eq.s32.totalorder %s18, 3
      %p129 = por %p127, %p128
      %p131 = scmp.ne.s32.totalorder %s114, %s130
      %p132 = scmp.eq.s32.totalorder %s18, 0
      %p133 = por %p131, %p132
      %s134 = ssub.s32 %s19, %s31
      %p135 = scmp.eq.s32.totalorder %s134, 0
      %s137 = sadd.s32 %s136, 1
      %s138 = scalar_select %p135, %s136, %s137
      %p141 = pneg %p135
      %p142 = scmp.eq.s32.totalorder %s12, 3
      %p143 = por %p141, %p142
      %p144 = scmp.ne.s32.totalorder %s136, %s139
      %p145 = scmp.eq.s32.totalorder %s12, 0
      %p146 = por %p144, %p145
      %p147 = scmp.ne.s32.totalorder %s136, %s139
      %p148 = scmp.eq.s32.totalorder %s17, 3
      %p149 = por %p147, %p148
      %p150 = scmp.ne.s32.totalorder %s139, %s140
      %p151 = scmp.eq.s32.totalorder %s17, 0
      %p152 = por %p150, %p151
      %p153 = scmp.ne.s32.totalorder %s139, %s140
      %p154 = scmp.eq.s32.totalorder %s18, 3
      %p155 = por %p153, %p154
      %p157 = scmp.ne.s32.totalorder %s140, %s156
      %p158 = scmp.eq.s32.totalorder %s18, 0
      %p159 = por %p157, %p158
      %s160 = ssub.s32 %s19, %s31
      %p161 = scmp.eq.s32.totalorder %s160, 0
      %s163 = sadd.s32 %s162, 1
      %s164 = scalar_select %p161, %s162, %s163
      %p167 = pneg %p161
      %p168 = scmp.eq.s32.totalorder %s12, 3
      %p169 = por %p167, %p168
      %p170 = scmp.ne.s32.totalorder %s162, %s165
      %p171 = scmp.eq.s32.totalorder %s12, 0
      %p172 = por %p170, %p171
      %p173 = scmp.ne.s32.totalorder %s162, %s165
      %p174 = scmp.eq.s32.totalorder %s17, 3
      %p175 = por %p173, %p174
      %p176 = scmp.ne.s32.totalorder %s165, %s166
      %p177 = scmp.eq.s32.totalorder %s17, 0
      %p178 = por %p176, %p177
      %p179 = scmp.ne.s32.totalorder %s165, %s166
      %p180 = scmp.eq.s32.totalorder %s18, 3
      %p181 = por %p179, %p180
      %p183 = scmp.ne.s32.totalorder %s166, %s182
      %p184 = scmp.eq.s32.totalorder %s18, 0
      %p185 = por %p183, %p184
      %p186 = scmp.le.s32.totalorder 1, %s12
      %p187 = scmp.lt.s32.totalorder %s12, 5
      %p188 = pnand %p186, %p187
      %p189 = pneg %p188
      // Predicated region
      $region9: #{pointnet_set_abstraction_msg.8} parent=5 // pred_check
        _
      $region10: #{pointnet_set_abstraction_msg.8} parent=5 // pred_check_branch
        %191 = sbr.rel (%p188) target = $region12
      $region11: #{pointnet_set_abstraction_msg.8} parent=5 // pred_region
        %s192 = ssub.s32 %s12, 1
        // Predicated region
        $region13: #{pointnet_set_abstraction_msg.8} parent=11 // pred_check
          %p193 = pneg %p75
        $region14: #{pointnet_set_abstraction_msg.8} parent=11 // pred_check_branch
          %195 = sbr.rel (%p193) target = $region16
        $region15: #{pointnet_set_abstraction_msg.8} parent=11 // pred_region
          _
        $region16: #{pointnet_set_abstraction_msg.8} parent=11 // pred_fallthru
          _
        // Predicated region
        $region17: #{pointnet_set_abstraction_msg.8} parent=11 // pred_check
          %p196 = pneg %p96
        $region18: #{pointnet_set_abstraction_msg.8} parent=11 // pred_check_branch
          %198 = sbr.rel (%p196) target = $region20
        $region19: #{pointnet_set_abstraction_msg.8} parent=11 // pred_region
          _
        $region20: #{pointnet_set_abstraction_msg.8} parent=11 // pred_fallthru
          _
      $region12: #{pointnet_set_abstraction_msg.8} parent=5 // pred_fallthru
        _
      %p199 = scmp.lt.s32.totalorder %s12, 4
      // Predicated region
      $region21: #{pointnet_set_abstraction_msg.8} parent=5 // pred_check
        %p200 = pneg %p199
      $region22: #{pointnet_set_abstraction_msg.8} parent=5 // pred_check_branch
        %202 = sbr.rel (%p200) target = $region24
      $region23: #{pointnet_set_abstraction_msg.8} parent=5 // pred_region
        // Predicated region
        $region25: #{pointnet_set_abstraction_msg.8} parent=23 // pred_check
          %p203 = pneg %p48
        $region26: #{pointnet_set_abstraction_msg.8} parent=23 // pred_check_branch
          %205 = sbr.rel (%p203) target = $region28
        $region27: #{pointnet_set_abstraction_msg.8} parent=23 // pred_region
          %s206 = sand.u32 %s38, 1
          %s207 = sand.u32 %s38, 1
          %s208 = smul.addr %s207, 16
          %s209 = scalar_lea.vmem [#allocation2], %s208
          %s210 = smul.u32 %s19, 2
          %s211 = sadd.s32 %s210, %s20
          %s212 = smul.addr %s211, 4
          %s213 = scalar_lea.vmem %s0, %s212
          // Predicated region
          $region29: #{pointnet_set_abstraction_msg.8} parent=27 // pred_check
            _
          $region30: #{pointnet_set_abstraction_msg.8} parent=27 // pred_check_branch
            %215 = sbr.rel (0) target = $region32
          $region31: #{pointnet_set_abstraction_msg.8} parent=27 // pred_region
            // Predicated region
            $region33: #{pointnet_set_abstraction_msg.8} parent=31 // pred_check
              _
            $region34: #{pointnet_set_abstraction_msg.8} parent=31 // pred_check_branch
              %217 = sbr.rel target = $region36
            $region35: #{pointnet_set_abstraction_msg.8} parent=31 // pred_region
              // Predicated region
              $region48: #{pointnet_set_abstraction_msg.8} parent=35 // pred_check
                _
              $region49: #{pointnet_set_abstraction_msg.8} parent=35 // pred_check_branch
                %239 = sbr.rel (0) target = $region51
              $region50: #{pointnet_set_abstraction_msg.8} parent=35 // pred_region
                loop: start=0, step=1, limit=1
                $region52: #{pointnet_set_abstraction_msg.8} parent=50 // loop_pre_header
                  _
                $region53: #{pointnet_set_abstraction_msg.8} parent=50 // loop_header
                  %s241 = sphi 0, %s245
                  %p242 = scmp.ge.s32.totalorder %s241, 1
                  %s246 = sphi %s213, %s213
                  %s247 = sphi %s209, %s209
                $region54: #{pointnet_set_abstraction_msg.8} parent=50 // loop_header_branch
                  %244 = sbr.rel (%p242) target = $region58
                $region55: #{pointnet_set_abstraction_msg.8} parent=50 // loop_body
                  _
                $region56: #{pointnet_set_abstraction_msg.8} parent=50 // loop_footer
                  %s245 = sadd.s32 1, %s241
                $region57: #{pointnet_set_abstraction_msg.8} parent=50 // loop_footer_branch
                  %240 = sbr.rel target = $region53
                $region58: #{pointnet_set_abstraction_msg.8} parent=50 // loop_exit
                  _
                %s249 = ssub.s32 16, 1
                loop: start=0, step=1, limit=1
                $region59: #{pointnet_set_abstraction_msg.8} parent=50 // loop_pre_header
                  _
                $region60: #{pointnet_set_abstraction_msg.8} parent=50 // loop_header
                  %s251 = sphi 0, %s255
                  %p252 = scmp.ge.s32.totalorder %s251, 1
                  %s256 = sphi %s213, %s213
                  %s257 = sphi %s209, %s209
                $region61: #{pointnet_set_abstraction_msg.8} parent=50 // loop_header_branch
                  %254 = sbr.rel (%p252) target = $region65
                $region62: #{pointnet_set_abstraction_msg.8} parent=50 // loop_body
                  %v258 = vld [vmem:[%s256] sm:%s249]
                  %259 = vst [vmem:[%s257] sm:%s249] %v258
                  %v260 = vld [vmem:[%s256 + $0x10] sm:%s249]
                  %261 = vst [vmem:[%s257 + $0x4] sm:%s249] %v260
                  %v262 = vld [vmem:[%s256 + $0x20] sm:%s249]
                  %263 = vst [vmem:[%s257 + $0x8] sm:%s249] %v262
                  %v264 = vld [vmem:[%s256 + $0x30] sm:%s249]
                  %265 = vst [vmem:[%s257 + $0xc] sm:%s249] %v264
                $region63: #{pointnet_set_abstraction_msg.8} parent=50 // loop_footer
                  %s255 = sadd.s32 1, %s251
                $region64: #{pointnet_set_abstraction_msg.8} parent=50 // loop_footer_branch
                  %250 = sbr.rel target = $region60
                $region65: #{pointnet_set_abstraction_msg.8} parent=50 // loop_exit
                  _
              $region51: #{pointnet_set_abstraction_msg.8} parent=35 // pred_fallthru
                _
            $region36: #{pointnet_set_abstraction_msg.8} parent=31 // pred_fallthru
              _
            // Predicated region
            $region37: #{pointnet_set_abstraction_msg.8} parent=31 // pred_check
              _
            $region38: #{pointnet_set_abstraction_msg.8} parent=31 // pred_check_branch
              %219 = sbr.rel (0) target = $region40
            $region39: #{pointnet_set_abstraction_msg.8} parent=31 // pred_region
              %s221 = ssub.s32 16, 1
              loop: start=0, step=1, limit=1
              $region41: #{pointnet_set_abstraction_msg.8} parent=39 // loop_pre_header
                _
              $region42: #{pointnet_set_abstraction_msg.8} parent=39 // loop_header
                %s223 = sphi 0, %s227
                %p224 = scmp.ge.s32.totalorder %s223, 1
                %s228 = sphi %s213, %s213
                %s229 = sphi %s209, %s209
              $region43: #{pointnet_set_abstraction_msg.8} parent=39 // loop_header_branch
                %226 = sbr.rel (%p224) target = $region47
              $region44: #{pointnet_set_abstraction_msg.8} parent=39 // loop_body
                %v230 = vld [vmem:[%s228] sm:%s221]
                %231 = vst [vmem:[%s229] sm:%s221] %v230
                %v232 = vld [vmem:[%s228 + $0x10] sm:%s221]
                %233 = vst [vmem:[%s229 + $0x4] sm:%s221] %v232
                %v234 = vld [vmem:[%s228 + $0x20] sm:%s221]
                %235 = vst [vmem:[%s229 + $0x8] sm:%s221] %v234
                %v236 = vld [vmem:[%s228 + $0x30] sm:%s221]
                %237 = vst [vmem:[%s229 + $0xc] sm:%s221] %v236
              $region45: #{pointnet_set_abstraction_msg.8} parent=39 // loop_footer
                %s227 = sadd.s32 1, %s223
              $region46: #{pointnet_set_abstraction_msg.8} parent=39 // loop_footer_branch
                %222 = sbr.rel target = $region42
              $region47: #{pointnet_set_abstraction_msg.8} parent=39 // loop_exit
                _
            $region40: #{pointnet_set_abstraction_msg.8} parent=31 // pred_fallthru
              _
          $region32: #{pointnet_set_abstraction_msg.8} parent=27 // pred_fallthru
            _
          %266 = vnop
        $region28: #{pointnet_set_abstraction_msg.8} parent=23 // pred_fallthru
          _
      $region24: #{pointnet_set_abstraction_msg.8} parent=5 // pred_fallthru
        _
      %p267 = scmp.le.s32.totalorder 1, %s12
      %p268 = scmp.lt.s32.totalorder %s12, 5
      %p269 = pnand %p267, %p268
      %p270 = pneg %p269
      // Predicated region
      $region66: #{pointnet_set_abstraction_msg.8} parent=5 // pred_check
        _
      $region67: #{pointnet_set_abstraction_msg.8} parent=5 // pred_check_branch
        %272 = sbr.rel (%p269) target = $region69
      $region68: #{pointnet_set_abstraction_msg.8} parent=5 // pred_region
        %s273 = ssub.s32 %s12, 1
        %s274 = sand.u32 %s41, 1
        %s275 = sand.u32 %s41, 1
        %s276 = smul.addr %s275, 16
        %s277 = scalar_lea.vmem [#allocation2], %s276
        // Predicated region
        $region70: #{pointnet_set_abstraction_msg.8} parent=68 // pred_check
          %p278 = pneg %p54
        $region71: #{pointnet_set_abstraction_msg.8} parent=68 // pred_check_branch
          %280 = sbr.rel (%p278) target = $region73
        $region72: #{pointnet_set_abstraction_msg.8} parent=68 // pred_region
          _
        $region73: #{pointnet_set_abstraction_msg.8} parent=68 // pred_fallthru
          _
        %s281 = sand.u32 %s41, 1
        %s282 = sand.u32 %s41, 1
        %s283 = smul.addr %s282, 16
        %s284 = scalar_lea.vmem [#allocation2], %s283
        %p285 = pneg %p54
        %p286 = pneg %p51
        %p287 = pneg %p75
        %p288 = pneg %p72
        %p289 = pneg %p96
        %p290 = pneg %p93
        %p291 = pneg %p126
        %p292 = pneg %p123
        %s293 = sand.u32 %s113, 1
        %s294 = sand.u32 %s113, 1
        %s295 = smul.addr %s294, 32
        %s296 = scalar_lea.vmem [#allocation3], %s295
        %p297 = pneg %p152
        %p298 = pneg %p149
        %p299 = scmp.lt.s32.totalorder %s21, 1
        %s300 = scalar_select %p299, %s21, 1
        %s301 = smul.addr %s300, 8
        %s302 = smul.addr %s301, 8
        %s303 = scalar_lea.vmem %s4, %s302
        %p304 = pneg %p178
        %p305 = pneg %p175
        %p306 = scmp.lt.s32.totalorder %s21, 1
        %s307 = scalar_select %p306, %s21, 1
        %s308 = smul.addr %s307, 8
        %s309 = smul.addr %s308, 8
        %s310 = scalar_lea.vmem %s5, %s309
        %s311 = smul.u32 %s21, 2
        %s312 = sadd.s32 %s311, %s22
        %s313 = smul.u32 %s21, 2
        %s314 = sadd.s32 %s313, %s22
        %p315 = scmp.lt.s32.totalorder %s21, 1
        %s316 = scalar_select %p315, %s21, 1
        %s317 = smul.addr %s316, 8
        %s318 = smul.addr %s317, 8
        %s319 = scalar_lea.vmem %s4, %s318
        %p320 = scmp.lt.s32.totalorder %s21, 1
        %s321 = scalar_select %p320, %s21, 1
        %s322 = smul.addr %s321, 8
        %s323 = smul.addr %s322, 8
        %s324 = scalar_lea.vmem %s5, %s323
        %v326 = vld [vmem:[%s277] sm:$0xf]
        %v327 = vld [vmem:[%s277 + $0x4] sm:$0xf]
        %v328 = vld [vmem:[%s277 + $0x8] sm:$0xf]
        %v329 = vld [vmem:[%s277 + $0xc] sm:$0xf]
        %v330 = vunpack.c.l.bf16 %v326
        %v331 = vunpack.c.l.bf16 %v327
        %v332 = vunpack.c.l.bf16 %v328
        %v333 = vunpack.c.l.bf16 %v329
        %v334 = vld [vmem:[%s1] sm:$0xff]
        %v335 = vld [vmem:[%s1 + $0x8] sm:$0xff]
        %v336 = vld [vmem:[%s1 + $0x10] sm:$0xff]
        %v337 = vld [vmem:[%s1 + $0x18] sm:$0xff]
        %339 = vset.pattern.permute.xlu0 0
        %340 = vperm.xlu0 %339, %v334
        %v341 = vpop.permute.xlu0 %340
        %344 = vset.pattern.permute.xlu0 0
        %345 = vperm.xlu0 %344, %v335
        %v346 = vpop.permute.xlu0 %345
        %349 = vset.pattern.permute.xlu0 0
        %350 = vperm.xlu0 %349, %v336
        %v351 = vpop.permute.xlu0 %350
        %354 = vset.pattern.permute.xlu0 0
        %355 = vperm.xlu0 %354, %v337
        %v356 = vpop.permute.xlu0 %355
        %v358 = vmul.f32 %v330, %v341
        %v359 = vmul.f32 %v331, %v346
        %v360 = vmul.f32 %v332, %v351
        %v361 = vmul.f32 %v333, %v356
        %362 = vset.pattern.permute.xlu0 1
        %363 = vperm.xlu0 %362, %v334
        %v364 = vpop.permute.xlu0 %363
        %366 = vset.pattern.permute.xlu0 1
        %367 = vperm.xlu0 %366, %v335
        %v368 = vpop.permute.xlu0 %367
        %370 = vset.pattern.permute.xlu0 1
        %371 = vperm.xlu0 %370, %v336
        %v372 = vpop.permute.xlu0 %371
        %374 = vset.pattern.permute.xlu0 1
        %375 = vperm.xlu0 %374, %v337
        %v376 = vpop.permute.xlu0 %375
        %v378 = vadd.f32 %v358, %v364
        %v379 = vadd.f32 %v359, %v368
        %v380 = vadd.f32 %v360, %v372
        %v381 = vadd.f32 %v361, %v376
        %v382 = vmax.f32 %v378, 0.0
        %v383 = vmax.f32 %v379, 0.0
        %v384 = vmax.f32 %v380, 0.0
        %v385 = vmax.f32 %v381, 0.0
        %v386 = vpack.c.bf16 %v383, %v382
        %v387 = vpack.c.bf16 %v385, %v384
        %v388 = vld [vmem:[%s2] sm:$0xf]
        %v389 = vld [vmem:[%s2 + $0x4] sm:$0xf]
        %v390 = vld [vmem:[%s2 + $0x8] sm:$0xf]
        %v391 = vld [vmem:[%s2 + $0xc] sm:$0xf]
        %v392 = vld [vmem:[%s2 + $0x10] sm:$0xf]
        %v393 = vld [vmem:[%s2 + $0x14] sm:$0xf]
        %v394 = vld [vmem:[%s2 + $0x18] sm:$0xf]
        %v395 = vld [vmem:[%s2 + $0x1c] sm:$0xf]
        %v404 = vunpack.c.l.b16 %v388
        %v405 = vunpack.c.l.b16 %v389
        %v406 = vunpack.c.l.b16 %v390
        %v407 = vunpack.c.l.b16 %v391
        %v408 = vunpack.c.l.b16 %v392
        %v409 = vunpack.c.l.b16 %v393
        %v410 = vunpack.c.l.b16 %v394
        %v411 = vunpack.c.l.b16 %v395
        %v412 = vpack.c.b16 %v405, %v404
        %v413 = vpack.c.b16 %v407, %v406
        %v414 = vpack.c.b16 %v409, %v408
        %v415 = vpack.c.b16 %v411, %v410
        %vm416 = vcmask 261120
        %v418 = vsel %vm416, %v412, 0
        %v421 = vsel %vm416, %v413, 0
        %v424 = vsel %vm416, %v414, 0
        %v427 = vsel %vm416, %v415, 0
        %429 = vmatprep.subr.bf16.mxu0 0
        %430 = vmatpush1.bf16.msra.mxu0 0
        %431 = vmatprep.subr.bf16.mxu0 0
        %432 = vmatpush1.bf16.msra.mxu0 0
        %433 = vmatprep.subr.bf16.mxu0 0
        %434 = vmatpush1.bf16.msra.mxu0 0
        %435 = vmatprep.subr.bf16.mxu0 0
        %436 = vmatpush1.bf16.msra.mxu0 0
        %437 = vmatprep.subr.bf16.mxu0 0
        %438 = vmatpush1.bf16.msra.mxu0 0
        %439 = vmatprep.subr.bf16.mxu0 0
        %440 = vmatpush1.bf16.msra.mxu0 0
        %441 = vmatprep.subr.bf16.mxu0 0
        %442 = vmatpush1.bf16.msra.mxu0 %v387
        %443 = vmatprep.subr.bf16.mxu0 0
        %444 = vmatpush1.bf16.msra.mxu0 %v386
        %445 = vmatprep.subr.bf16.mxu0 0
        %446 = vmatpush2.bf16.msra.mxu0 0
        %447 = vmatprep.subr.bf16.mxu0 0
        %448 = vmatpush2.bf16.msra.mxu0 0
        %449 = vmatprep.subr.bf16.mxu0 0
        %450 = vmatpush2.bf16.msra.mxu0 0
        %451 = vmatprep.subr.bf16.mxu0 0
        %452 = vmatpush2.bf16.msra.mxu0 0
        %453 = vmatprep.subr.bf16.mxu0 0
        %454 = vmatpush2.bf16.msra.mxu0 0
        %455 = vmatprep.subr.bf16.mxu0 0
        %456 = vmatpush2.bf16.msra.mxu0 0
        %457 = vmatprep.subr.bf16.mxu0 0
        %458 = vmatpush2.bf16.msra.mxu0 0
        %459 = vmatprep.subr.bf16.mxu0 0
        %460 = vmatpush2.bf16.msra.mxu0 0
        %461 = vmatprep.mubr.bf16.mxu0 0
        %462 = vmatmul.mubr.bf16.gmra.mxu0 %v418
        %v463 = vpop.f32.mrf.mxu0
        %v464 = vadd.f32 0.0, %v463
        %v465 = vpop.f32.mrf.mxu0
        %v466 = vpop.f32.mrf.mxu0
        %v467 = vadd.f32 0.0, %v466
        %v468 = vpop.f32.mrf.mxu0
        %469 = vmatprep.mubr.bf16.mxu0 0
        %470 = vmatmul.mubr.bf16.gmra.mxu0 %v421
        %v471 = vpop.f32.mrf.mxu0
        %v472 = vadd.f32 0.0, %v471
        %v473 = vpop.f32.mrf.mxu0
        %v474 = vpop.f32.mrf.mxu0
        %v475 = vadd.f32 0.0, %v474
        %v476 = vpop.f32.mrf.mxu0
        %477 = vmatprep.mubr.bf16.mxu0 0
        %478 = vmatmul.mubr.bf16.gmra.mxu0 %v424
        %v479 = vpop.f32.mrf.mxu0
        %v480 = vadd.f32 0.0, %v479
        %v481 = vpop.f32.mrf.mxu0
        %v482 = vpop.f32.mrf.mxu0
        %v483 = vadd.f32 0.0, %v482
        %v484 = vpop.f32.mrf.mxu0
        %485 = vmatprep.mubr.bf16.mxu0 0
        %486 = vmatmul.mubr.bf16.gmra.mxu0 %v427
        %v487 = vpop.f32.mrf.mxu0
        %v488 = vadd.f32 0.0, %v487
        %v489 = vpop.f32.mrf.mxu0
        %v490 = vpop.f32.mrf.mxu0
        %v491 = vadd.f32 0.0, %v490
        %v492 = vpop.f32.mrf.mxu0
        %493 = vdwg.mxu0
        %v494 = vpack.c.bf16 %v467, %v464
        %v495 = vpack.c.bf16 %v475, %v472
        %v496 = vpack.c.bf16 %v483, %v480
        %v497 = vpack.c.bf16 %v491, %v488
        %v502 = vunpack.c.l.b16 %v494
        %v503 = vunpack.c.h.b16 %v494
        %v504 = vunpack.c.l.b16 %v495
        %v505 = vunpack.c.h.b16 %v495
        %v506 = vunpack.c.l.b16 %v496
        %v507 = vunpack.c.h.b16 %v496
        %v508 = vunpack.c.l.b16 %v497
        %v509 = vunpack.c.h.b16 %v497
        %v510 = vpack.c.b16 %v502, %v502
        %v511 = vpack.c.b16 %v503, %v503
        %v512 = vpack.c.b16 %v504, %v504
        %v513 = vpack.c.b16 %v505, %v505
        %v514 = vpack.c.b16 %v506, %v506
        %v515 = vpack.c.b16 %v507, %v507
        %v516 = vpack.c.b16 %v508, %v508
        %v517 = vpack.c.b16 %v509, %v509
        %526 = vst [vmem:[%s296] sm:$0xf] %v510
        %527 = vst [vmem:[%s296 + $0x4] sm:$0xf] %v511
        %528 = vst [vmem:[%s296 + $0x8] sm:$0xf] %v512
        %529 = vst [vmem:[%s296 + $0xc] sm:$0xf] %v513
        %530 = vst [vmem:[%s296 + $0x10] sm:$0xf] %v514
        %531 = vst [vmem:[%s296 + $0x14] sm:$0xf] %v515
        %532 = vst [vmem:[%s296 + $0x18] sm:$0xf] %v516
        %533 = vst [vmem:[%s296 + $0x1c] sm:$0xf] %v517
        %p534 = scmp.eq.s32.totalorder %s22, 0
        // Predicated region
        $region74: #{pointnet_set_abstraction_msg.8} parent=68 // pred_check
          %p535 = pneg %p534
        $region75: #{pointnet_set_abstraction_msg.8} parent=68 // pred_check_branch
          %537 = sbr.rel (%p535) target = $region77
        $region76: #{pointnet_set_abstraction_msg.8} parent=68 // pred_region
          %vm538 = vcmask 7168
          %539 = vst.msk [vmem:[%s319] sm:$0xff] %vm538, 0.0
          %540 = vst.msk [vmem:[%s319 + $0x8] sm:$0xff] %vm538, 0.0
          %541 = vst.msk [vmem:[%s319 + $0x10] sm:$0xff] %vm538, 0.0
          %542 = vst.msk [vmem:[%s319 + $0x18] sm:$0xff] %vm538, 0.0
          %543 = vst.msk [vmem:[%s319 + $0x20] sm:$0xff] %vm538, 0.0
          %544 = vst.msk [vmem:[%s319 + $0x28] sm:$0xff] %vm538, 0.0
          %545 = vst.msk [vmem:[%s319 + $0x30] sm:$0xff] %vm538, 0.0
          %546 = vst.msk [vmem:[%s319 + $0x38] sm:$0xff] %vm538, 0.0
          %547 = vst.msk [vmem:[%s324] sm:$0xff] %vm538, 0.0
          %548 = vst.msk [vmem:[%s324 + $0x8] sm:$0xff] %vm538, 0.0
          %549 = vst.msk [vmem:[%s324 + $0x10] sm:$0xff] %vm538, 0.0
          %550 = vst.msk [vmem:[%s324 + $0x18] sm:$0xff] %vm538, 0.0
          %551 = vst.msk [vmem:[%s324 + $0x20] sm:$0xff] %vm538, 0.0
          %552 = vst.msk [vmem:[%s324 + $0x28] sm:$0xff] %vm538, 0.0
          %553 = vst.msk [vmem:[%s324 + $0x30] sm:$0xff] %vm538, 0.0
          %554 = vst.msk [vmem:[%s324 + $0x38] sm:$0xff] %vm538, 0.0
        $region77: #{pointnet_set_abstraction_msg.8} parent=68 // pred_fallthru
          _
        %v555 = vld [vmem:[%s319] sm:$0xff]
        %v556 = vld [vmem:[%s319 + $0x8] sm:$0xff]
        %v557 = vld [vmem:[%s319 + $0x10] sm:$0xff]
        %v558 = vld [vmem:[%s319 + $0x18] sm:$0xff]
        %v559 = vld [vmem:[%s319 + $0x20] sm:$0xff]
        %v560 = vld [vmem:[%s319 + $0x28] sm:$0xff]
        %v561 = vld [vmem:[%s319 + $0x30] sm:$0xff]
        %v562 = vld [vmem:[%s319 + $0x38] sm:$0xff]
        %563 = vadd.xlane.f32.xlu0 %v464
        %v564 = vpop.xlane.xlu0 %563
        %565 = vadd.xlane.f32.xlu0 %v467
        %v566 = vpop.xlane.xlu0 %565
        %567 = vadd.xlane.f32.xlu0 %v472
        %v568 = vpop.xlane.xlu0 %567
        %569 = vadd.xlane.f32.xlu0 %v475
        %v570 = vpop.xlane.xlu0 %569
        %571 = vadd.xlane.f32.xlu0 %v480
        %v572 = vpop.xlane.xlu0 %571
        %573 = vadd.xlane.f32.xlu0 %v483
        %v574 = vpop.xlane.xlu0 %573
        %575 = vadd.xlane.f32.xlu0 %v488
        %v576 = vpop.xlane.xlu0 %575
        %577 = vadd.xlane.f32.xlu0 %v491
        %v578 = vpop.xlane.xlu0 %577
        %v579 = vadd.f32 %v555, %v564
        %v580 = vadd.f32 %v556, %v566
        %v581 = vadd.f32 %v557, %v568
        %v582 = vadd.f32 %v558, %v570
        %v583 = vadd.f32 %v559, %v572
        %v584 = vadd.f32 %v560, %v574
        %v585 = vadd.f32 %v561, %v576
        %v586 = vadd.f32 %v562, %v578
        %vm587 = vcmask 7168
        %588 = vst.msk [vmem:[%s319] sm:$0xff] %vm587, %v579
        %589 = vst.msk [vmem:[%s319 + $0x8] sm:$0xff] %vm587, %v580
        %590 = vst.msk [vmem:[%s319 + $0x10] sm:$0xff] %vm587, %v581
        %591 = vst.msk [vmem:[%s319 + $0x18] sm:$0xff] %vm587, %v582
        %592 = vst.msk [vmem:[%s319 + $0x20] sm:$0xff] %vm587, %v583
        %593 = vst.msk [vmem:[%s319 + $0x28] sm:$0xff] %vm587, %v584
        %594 = vst.msk [vmem:[%s319 + $0x30] sm:$0xff] %vm587, %v585
        %595 = vst.msk [vmem:[%s319 + $0x38] sm:$0xff] %vm587, %v586
        %v596 = vld [vmem:[%s324] sm:$0xff]
        %v597 = vld [vmem:[%s324 + $0x8] sm:$0xff]
        %v598 = vld [vmem:[%s324 + $0x10] sm:$0xff]
        %v599 = vld [vmem:[%s324 + $0x18] sm:$0xff]
        %v600 = vld [vmem:[%s324 + $0x20] sm:$0xff]
        %v601 = vld [vmem:[%s324 + $0x28] sm:$0xff]
        %v602 = vld [vmem:[%s324 + $0x30] sm:$0xff]
        %v603 = vld [vmem:[%s324 + $0x38] sm:$0xff]
        %v604 = vmul.f32 %v464, %v464
        %v605 = vmul.f32 %v467, %v467
        %v606 = vmul.f32 %v472, %v472
        %v607 = vmul.f32 %v475, %v475
        %v608 = vmul.f32 %v480, %v480
        %v609 = vmul.f32 %v483, %v483
        %v610 = vmul.f32 %v488, %v488
        %v611 = vmul.f32 %v491, %v491
        %612 = vadd.xlane.f32.xlu0 %v604
        %v613 = vpop.xlane.xlu0 %612
        %614 = vadd.xlane.f32.xlu0 %v605
        %v615 = vpop.xlane.xlu0 %614
        %616 = vadd.xlane.f32.xlu0 %v606
        %v617 = vpop.xlane.xlu0 %616
        %618 = vadd.xlane.f32.xlu0 %v607
        %v619 = vpop.xlane.xlu0 %618
        %620 = vadd.xlane.f32.xlu0 %v608
        %v621 = vpop.xlane.xlu0 %620
        %622 = vadd.xlane.f32.xlu0 %v609
        %v623 = vpop.xlane.xlu0 %622
        %624 = vadd.xlane.f32.xlu0 %v610
        %v625 = vpop.xlane.xlu0 %624
        %626 = vadd.xlane.f32.xlu0 %v611
        %v627 = vpop.xlane.xlu0 %626
        %v628 = vadd.f32 %v596, %v613
        %v629 = vadd.f32 %v597, %v615
        %v630 = vadd.f32 %v598, %v617
        %v631 = vadd.f32 %v599, %v619
        %v632 = vadd.f32 %v600, %v621
        %v633 = vadd.f32 %v601, %v623
        %v634 = vadd.f32 %v602, %v625
        %v635 = vadd.f32 %v603, %v627
        %636 = vst.msk [vmem:[%s324] sm:$0xff] %vm587, %v628
        %637 = vst.msk [vmem:[%s324 + $0x8] sm:$0xff] %vm587, %v629
        %638 = vst.msk [vmem:[%s324 + $0x10] sm:$0xff] %vm587, %v630
        %639 = vst.msk [vmem:[%s324 + $0x18] sm:$0xff] %vm587, %v631
        %640 = vst.msk [vmem:[%s324 + $0x20] sm:$0xff] %vm587, %v632
        %641 = vst.msk [vmem:[%s324 + $0x28] sm:$0xff] %vm587, %v633
        %642 = vst.msk [vmem:[%s324 + $0x30] sm:$0xff] %vm587, %v634
        %643 = vst.msk [vmem:[%s324 + $0x38] sm:$0xff] %vm587, %v635
        %s644 = sand.u32 %s113, 1
        %s645 = sand.u32 %s113, 1
        %s646 = smul.addr %s645, 32
        %s647 = scalar_lea.vmem [#allocation3], %s646
        %p648 = scmp.lt.s32.totalorder %s21, 1
        %s649 = scalar_select %p648, %s21, 1
        %s650 = smul.addr %s649, 8
        %s651 = smul.addr %s650, 8
        %s652 = scalar_lea.vmem %s4, %s651
        %p653 = scmp.lt.s32.totalorder %s21, 1
        %s654 = scalar_select %p653, %s21, 1
        %s655 = smul.addr %s654, 8
        %s656 = smul.addr %s655, 8
        %s657 = scalar_lea.vmem %s5, %s656
        // Predicated region
        $region78: #{pointnet_set_abstraction_msg.8} parent=68 // pred_check
          %p658 = pneg %p123
        $region79: #{pointnet_set_abstraction_msg.8} parent=68 // pred_check_branch
          %660 = sbr.rel (%p658) target = $region81
        $region80: #{pointnet_set_abstraction_msg.8} parent=68 // pred_region
          %s661 = smul.u32 %s21, 2
          %s662 = sadd.s32 %s661, %s22
          %s663 = smul.addr %s662, 4
          %s664 = scalar_lea.vmem %s3, %s663
          // Predicated region
          $region82: #{pointnet_set_abstraction_msg.8} parent=80 // pred_check
            _
          $region83: #{pointnet_set_abstraction_msg.8} parent=80 // pred_check_branch
            %666 = sbr.rel (0) target = $region85
          $region84: #{pointnet_set_abstraction_msg.8} parent=80 // pred_region
            // Predicated region
            $region86: #{pointnet_set_abstraction_msg.8} parent=84 // pred_check
              _
            $region87: #{pointnet_set_abstraction_msg.8} parent=84 // pred_check_branch
              %668 = sbr.rel target = $region89
            $region88: #{pointnet_set_abstraction_msg.8} parent=84 // pred_region
              // Predicated region
              $region101: #{pointnet_set_abstraction_msg.8} parent=88 // pred_check
                _
              $region102: #{pointnet_set_abstraction_msg.8} parent=88 // pred_check_branch
                %698 = sbr.rel (0) target = $region104
              $region103: #{pointnet_set_abstraction_msg.8} parent=88 // pred_region
                loop: start=0, step=1, limit=1
                $region105: #{pointnet_set_abstraction_msg.8} parent=103 // loop_pre_header
                  _
                $region106: #{pointnet_set_abstraction_msg.8} parent=103 // loop_header
                  %s700 = sphi 0, %s704
                  %p701 = scmp.ge.s32.totalorder %s700, 1
                  %s705 = sphi %s647, %s647
                  %s706 = sphi %s664, %s664
                $region107: #{pointnet_set_abstraction_msg.8} parent=103 // loop_header_branch
                  %703 = sbr.rel (%p701) target = $region111
                $region108: #{pointnet_set_abstraction_msg.8} parent=103 // loop_body
                  _
                $region109: #{pointnet_set_abstraction_msg.8} parent=103 // loop_footer
                  %s704 = sadd.s32 1, %s700
                $region110: #{pointnet_set_abstraction_msg.8} parent=103 // loop_footer_branch
                  %699 = sbr.rel target = $region106
                $region111: #{pointnet_set_abstraction_msg.8} parent=103 // loop_exit
                  _
                %s708 = ssub.s32 16, 1
                loop: start=0, step=1, limit=1
                $region112: #{pointnet_set_abstraction_msg.8} parent=103 // loop_pre_header
                  _
                $region113: #{pointnet_set_abstraction_msg.8} parent=103 // loop_header
                  %s710 = sphi 0, %s714
                  %p711 = scmp.ge.s32.totalorder %s710, 1
                  %s715 = sphi %s647, %s647
                  %s716 = sphi %s664, %s664
                $region114: #{pointnet_set_abstraction_msg.8} parent=103 // loop_header_branch
                  %713 = sbr.rel (%p711) target = $region118
                $region115: #{pointnet_set_abstraction_msg.8} parent=103 // loop_body
                  %v717 = vld [vmem:[%s715] sm:%s708]
                  %718 = vst [vmem:[%s716] sm:%s708] %v717
                  %v719 = vld [vmem:[%s715 + $0x4] sm:%s708]
                  %720 = vst [vmem:[%s716 + $0x10] sm:%s708] %v719
                  %v721 = vld [vmem:[%s715 + $0x8] sm:%s708]
                  %722 = vst [vmem:[%s716 + $0x20] sm:%s708] %v721
                  %v723 = vld [vmem:[%s715 + $0xc] sm:%s708]
                  %724 = vst [vmem:[%s716 + $0x30] sm:%s708] %v723
                  %v725 = vld [vmem:[%s715 + $0x10] sm:%s708]
                  %726 = vst [vmem:[%s716 + $0x40] sm:%s708] %v725
                  %v727 = vld [vmem:[%s715 + $0x14] sm:%s708]
                  %728 = vst [vmem:[%s716 + $0x50] sm:%s708] %v727
                  %v729 = vld [vmem:[%s715 + $0x18] sm:%s708]
                  %730 = vst [vmem:[%s716 + $0x60] sm:%s708] %v729
                  %v731 = vld [vmem:[%s715 + $0x1c] sm:%s708]
                  %732 = vst [vmem:[%s716 + $0x70] sm:%s708] %v731
                $region116: #{pointnet_set_abstraction_msg.8} parent=103 // loop_footer
                  %s714 = sadd.s32 1, %s710
                $region117: #{pointnet_set_abstraction_msg.8} parent=103 // loop_footer_branch
                  %709 = sbr.rel target = $region113
                $region118: #{pointnet_set_abstraction_msg.8} parent=103 // loop_exit
                  _
              $region104: #{pointnet_set_abstraction_msg.8} parent=88 // pred_fallthru
                _
            $region89: #{pointnet_set_abstraction_msg.8} parent=84 // pred_fallthru
              _
            // Predicated region
            $region90: #{pointnet_set_abstraction_msg.8} parent=84 // pred_check
              _
            $region91: #{pointnet_set_abstraction_msg.8} parent=84 // pred_check_branch
              %670 = sbr.rel (0) target = $region93
            $region92: #{pointnet_set_abstraction_msg.8} parent=84 // pred_region
              %s672 = ssub.s32 16, 1
              loop: start=0, step=1, limit=1
              $region94: #{pointnet_set_abstraction_msg.8} parent=92 // loop_pre_header
                _
              $region95: #{pointnet_set_abstraction_msg.8} parent=92 // loop_header
                %s674 = sphi 0, %s678
                %p675 = scmp.ge.s32.totalorder %s674, 1
                %s679 = sphi %s647, %s647
                %s680 = sphi %s664, %s664
              $region96: #{pointnet_set_abstraction_msg.8} parent=92 // loop_header_branch
                %677 = sbr.rel (%p675) target = $region100
              $region97: #{pointnet_set_abstraction_msg.8} parent=92 // loop_body
                %v681 = vld [vmem:[%s679] sm:%s672]
                %682 = vst [vmem:[%s680] sm:%s672] %v681
                %v683 = vld [vmem:[%s679 + $0x4] sm:%s672]
                %684 = vst [vmem:[%s680 + $0x10] sm:%s672] %v683
                %v685 = vld [vmem:[%s679 + $0x8] sm:%s672]
                %686 = vst [vmem:[%s680 + $0x20] sm:%s672] %v685
                %v687 = vld [vmem:[%s679 + $0xc] sm:%s672]
                %688 = vst [vmem:[%s680 + $0x30] sm:%s672] %v687
                %v689 = vld [vmem:[%s679 + $0x10] sm:%s672]
                %690 = vst [vmem:[%s680 + $0x40] sm:%s672] %v689
                %v691 = vld [vmem:[%s679 + $0x14] sm:%s672]
                %692 = vst [vmem:[%s680 + $0x50] sm:%s672] %v691
                %v693 = vld [vmem:[%s679 + $0x18] sm:%s672]
                %694 = vst [vmem:[%s680 + $0x60] sm:%s672] %v693
                %v695 = vld [vmem:[%s679 + $0x1c] sm:%s672]
                %696 = vst [vmem:[%s680 + $0x70] sm:%s672] %v695
              $region98: #{pointnet_set_abstraction_msg.8} parent=92 // loop_footer
                %s678 = sadd.s32 1, %s674
              $region99: #{pointnet_set_abstraction_msg.8} parent=92 // loop_footer_branch
                %673 = sbr.rel target = $region95
              $region100: #{pointnet_set_abstraction_msg.8} parent=92 // loop_exit
                _
            $region93: #{pointnet_set_abstraction_msg.8} parent=84 // pred_fallthru
              _
          $region85: #{pointnet_set_abstraction_msg.8} parent=80 // pred_fallthru
            _
          %733 = vnop
        $region81: #{pointnet_set_abstraction_msg.8} parent=68 // pred_fallthru
          _
        // Predicated region
        $region119: #{pointnet_set_abstraction_msg.8} parent=68 // pred_check
          %p734 = pneg %p149
        $region120: #{pointnet_set_abstraction_msg.8} parent=68 // pred_check_branch
          %736 = sbr.rel (%p734) target = $region122
        $region121: #{pointnet_set_abstraction_msg.8} parent=68 // pred_region
          _
        $region122: #{pointnet_set_abstraction_msg.8} parent=68 // pred_fallthru
          _
        // Predicated region
        $region123: #{pointnet_set_abstraction_msg.8} parent=68 // pred_check
          %p737 = pneg %p175
        $region124: #{pointnet_set_abstraction_msg.8} parent=68 // pred_check_branch
          %739 = sbr.rel (%p737) target = $region126
        $region125: #{pointnet_set_abstraction_msg.8} parent=68 // pred_region
          _
        $region126: #{pointnet_set_abstraction_msg.8} parent=68 // pred_fallthru
          _
      $region69: #{pointnet_set_abstraction_msg.8} parent=5 // pred_fallthru
        _
      %p740 = scmp.le.s32.totalorder 2, %s12
      // Predicated region
      $region127: #{pointnet_set_abstraction_msg.8} parent=5 // pred_check
        %p741 = pneg %p740
      $region128: #{pointnet_set_abstraction_msg.8} parent=5 // pred_check_branch
        %743 = sbr.rel (%p741) target = $region130
      $region129: #{pointnet_set_abstraction_msg.8} parent=5 // pred_region
        %s744 = ssub.s32 %s12, 2
        // Predicated region
        $region131: #{pointnet_set_abstraction_msg.8} parent=129 // pred_check
          %p745 = pneg %p129
        $region132: #{pointnet_set_abstraction_msg.8} parent=129 // pred_check_branch
          %747 = sbr.rel (%p745) target = $region134
        $region133: #{pointnet_set_abstraction_msg.8} parent=129 // pred_region
          %s748 = sand.u32 %s114, 1
          %s749 = sand.u32 %s114, 1
          %s750 = smul.addr %s749, 32
          %s751 = scalar_lea.vmem [#allocation3], %s750
        $region134: #{pointnet_set_abstraction_msg.8} parent=129 // pred_fallthru
          _
        // Predicated region
        $region135: #{pointnet_set_abstraction_msg.8} parent=129 // pred_check
          %p752 = pneg %p155
        $region136: #{pointnet_set_abstraction_msg.8} parent=129 // pred_check_branch
          %754 = sbr.rel (%p752) target = $region138
        $region137: #{pointnet_set_abstraction_msg.8} parent=129 // pred_region
          %p755 = scmp.lt.s32.totalorder %s23, 1
          %s756 = scalar_select %p755, %s23, 1
          %s757 = smul.addr %s756, 8
          %s758 = smul.addr %s757, 8
          %s759 = scalar_lea.vmem %s4, %s758
        $region138: #{pointnet_set_abstraction_msg.8} parent=129 // pred_fallthru
          _
        // Predicated region
        $region139: #{pointnet_set_abstraction_msg.8} parent=129 // pred_check
          %p760 = pneg %p181
        $region140: #{pointnet_set_abstraction_msg.8} parent=129 // pred_check_branch
          %762 = sbr.rel (%p760) target = $region142
        $region141: #{pointnet_set_abstraction_msg.8} parent=129 // pred_region
          %p763 = scmp.lt.s32.totalorder %s23, 1
          %s764 = scalar_select %p763, %s23, 1
          %s765 = smul.addr %s764, 8
          %s766 = smul.addr %s765, 8
          %s767 = scalar_lea.vmem %s5, %s766
        $region142: #{pointnet_set_abstraction_msg.8} parent=129 // pred_fallthru
          _
      $region130: #{pointnet_set_abstraction_msg.8} parent=5 // pred_fallthru
        _
    $region6: #{pointnet_set_abstraction_msg.8} parent=1 // loop_footer
      %s16 = sadd.s32 1, %s12
    $region7: #{pointnet_set_abstraction_msg.8} parent=1 // loop_footer_branch
      %11 = sbr.rel target = $region3
    $region8: #{pointnet_set_abstraction_msg.8} parent=1 // loop_exit
      _

// kernel: pointnet_set_abstraction_msg.9
$region0: #{pointnet_set_abstraction_msg.9}
  #allocation0 [shape = 'u32[]', space=smem, size = 0x4, offset = 0x4, fixed_abs, tag = 'smem constant byte address 0x4 - core index']
  #allocation1 [shape = 'u32[144,128]{1,0:T(1,128)}', space=vmem, size = 0x12000, scoped, tag = 'internal scratch']
  %s0 = inlined_call_operand.vmem [shape: bf16[64,32,16], index: 0, kind: input, shape index: {}]
  %s1 = inlined_call_operand.vmem [shape: f32[64,2], index: 1, kind: input, shape index: {}]
  %s2 = inlined_call_operand.vmem [shape: f32[2,64,16], index: 2, kind: output, shape index: {}]
  %s3 = sld [smem:[#allocation0]]
  $region82: #{pointnet_set_abstraction_msg.9} parent=0
    _
  %s5 = ssub.s32 1, %s3
  %s6 = scalar_select 0, %s5, %s3
  $region1: #{pointnet_set_abstraction_msg.9} parent=0
    #allocation2 [shape = 'u8[524288]{0}', space=vmem, size = 0x80000, scoped, tag = 'input window, operand 0']
    loop: start=0, step=1, limit=4
    $region2: #{pointnet_set_abstraction_msg.9} parent=1 // loop_pre_header
      _
    $region3: #{pointnet_set_abstraction_msg.9} parent=1 // loop_header
      %s8 = sphi 0, %s12
      %p9 = scmp.ge.s32.totalorder %s8, 4
      %s15 = sphi 0, %s27
      %s16 = sphi 0, %s23
      %s17 = sphi 0, %s15
      %s18 = sphi 0, %s16
      %s19 = sphi 0, %s17
      %s20 = sphi 0, %s18
      %s32 = sphi 0, %s34
      %s35 = sphi 0, %s32
      %s36 = sphi 0, %s35
      %s52 = sphi 0, %s36
      %s56 = sphi 0, %s56
      %s58 = sphi 0, %s56
      %s59 = sphi 0, %s58
      %s73 = sphi 0, %s59
      %s81 = sphi 0, %s83
      %s84 = sphi 0, %s81
      %s85 = sphi 0, %s84
      %s101 = sphi 0, %s85
    $region4: #{pointnet_set_abstraction_msg.9} parent=1 // loop_header_branch
      %11 = sbr.rel (%p9) target = $region8
    $region5: #{pointnet_set_abstraction_msg.9} parent=1 // loop_body
      %s13 = ssub.s32 %s8, 1
      %s14 = ssub.s32 %s8, 2
      %s21 = sadd.s32 1, %s16
      %p22 = scmp.ge.s32.totalorder %s21, 1
      %s23 = scalar_select %p22, 0, %s21
      %s24 = sadd.s32 1, %s15
      %s25 = scalar_select %p22, %s24, %s15
      %p26 = scmp.ge.s32.totalorder %s25, 2
      %s27 = scalar_select %p26, 0, %s25
      %s28 = ssub.s32 %s15, %s27
      %s29 = ssub.s32 %s16, %s23
      %s30 = sor.u32 %s28, %s29
      %p31 = scmp.eq.s32.totalorder %s30, 0
      %s33 = sadd.s32 %s32, 1
      %s34 = scalar_select %p31, %s32, %s33
      %p37 = pneg %p31
      %p38 = scmp.eq.s32.totalorder %s8, 1
      %p39 = por %p37, %p38
      %p40 = scmp.ne.s32.totalorder %s32, %s35
      %p41 = scmp.eq.s32.totalorder %s8, 0
      %p42 = por %p40, %p41
      %p43 = scmp.ne.s32.totalorder %s32, %s35
      %p44 = scmp.eq.s32.totalorder %s13, 1
      %p45 = por %p43, %p44
      %p46 = scmp.ne.s32.totalorder %s35, %s36
      %p47 = scmp.eq.s32.totalorder %s13, 0
      %p48 = por %p46, %p47
      %p49 = scmp.ne.s32.totalorder %s35, %s36
      %p50 = scmp.eq.s32.totalorder %s14, 1
      %p51 = por %p49, %p50
      %p53 = scmp.ne.s32.totalorder %s36, %s52
      %p54 = scmp.eq.s32.totalorder %s14, 0
      %p55 = por %p53, %p54
      %s57 = sadd.s32 %s56, 1
      %p60 = scmp.eq.s32.totalorder %s8, 1
      %p61 = scmp.ne.s32.totalorder %s56, %s58
      %p62 = scmp.eq.s32.totalorder %s8, 0
      %p63 = por %p61, %p62
      %p64 = scmp.ne.s32.totalorder %s56, %s58
      %p65 = scmp.eq.s32.totalorder %s13, 1
      %p66 = por %p64, %p65
      %p67 = scmp.ne.s32.totalorder %s58, %s59
      %p68 = scmp.eq.s32.totalorder %s13, 0
      %p69 = por %p67, %p68
      %p70 = scmp.ne.s32.totalorder %s58, %s59
      %p71 = scmp.eq.s32.totalorder %s14, 1
      %p72 = por %p70, %p71
      %p74 = scmp.ne.s32.totalorder %s59, %s73
      %p75 = scmp.eq.s32.totalorder %s14, 0
      %p76 = por %p74, %p75
      %s77 = ssub.s32 %s15, %s27
      %s78 = ssub.s32 %s16, %s23
      %s79 = sor.u32 %s77, %s78
      %p80 = scmp.eq.s32.totalorder %s79, 0
      %s82 = sadd.s32 %s81, 1
      %s83 = scalar_select %p80, %s81, %s82
      %p86 = pneg %p80
      %p87 = scmp.eq.s32.totalorder %s8, 1
      %p88 = por %p86, %p87
      %p89 = scmp.ne.s32.totalorder %s81, %s84
      %p90 = scmp.eq.s32.totalorder %s8, 0
      %p91 = por %p89, %p90
      %p92 = scmp.ne.s32.totalorder %s81, %s84
      %p93 = scmp.eq.s32.totalorder %s13, 1
      %p94 = por %p92, %p93
      %p95 = scmp.ne.s32.totalorder %s84, %s85
      %p96 = scmp.eq.s32.totalorder %s13, 0
      %p97 = por %p95, %p96
      %p98 = scmp.ne.s32.totalorder %s84, %s85
      %p99 = scmp.eq.s32.totalorder %s14, 1
      %p100 = por %p98, %p99
      %p102 = scmp.ne.s32.totalorder %s85, %s101
      %p103 = scmp.eq.s32.totalorder %s14, 0
      %p104 = por %p102, %p103
      %p105 = scmp.le.s32.totalorder 1, %s8
      %p106 = scmp.lt.s32.totalorder %s8, 3
      %p107 = pnand %p105, %p106
      %p108 = pneg %p107
      // Predicated region
      $region9: #{pointnet_set_abstraction_msg.9} parent=5 // pred_check
        _
      $region10: #{pointnet_set_abstraction_msg.9} parent=5 // pred_check_branch
        %110 = sbr.rel (%p107) target = $region12
      $region11: #{pointnet_set_abstraction_msg.9} parent=5 // pred_region
        %s111 = ssub.s32 %s8, 1
        // Predicated region
        $region13: #{pointnet_set_abstraction_msg.9} parent=11 // pred_check
          %p112 = pneg %p69
        $region14: #{pointnet_set_abstraction_msg.9} parent=11 // pred_check_branch
          %114 = sbr.rel (%p112) target = $region16
        $region15: #{pointnet_set_abstraction_msg.9} parent=11 // pred_region
          _
        $region16: #{pointnet_set_abstraction_msg.9} parent=11 // pred_fallthru
          _
      $region12: #{pointnet_set_abstraction_msg.9} parent=5 // pred_fallthru
        _
      %p115 = scmp.lt.s32.totalorder %s8, 2
      // Predicated region
      $region17: #{pointnet_set_abstraction_msg.9} parent=5 // pred_check
        %p116 = pneg %p115
      $region18: #{pointnet_set_abstraction_msg.9} parent=5 // pred_check_branch
        %118 = sbr.rel (%p116) target = $region20
      $region19: #{pointnet_set_abstraction_msg.9} parent=5 // pred_region
        // Predicated region
        $region21: #{pointnet_set_abstraction_msg.9} parent=19 // pred_check
          %p119 = pneg %p42
        $region22: #{pointnet_set_abstraction_msg.9} parent=19 // pred_check_branch
          %121 = sbr.rel (%p119) target = $region24
        $region23: #{pointnet_set_abstraction_msg.9} parent=19 // pred_region
          %s122 = sand.u32 %s32, 1
          %s123 = sand.u32 %s32, 1
          %s124 = smul.addr %s123, 512
          %s125 = scalar_lea.vmem [#allocation2], %s124
          %s126 = smul.u32 2, %s15
          %s127 = sadd.s32 %s16, %s126
          %s128 = smul.addr %s127, 4
          %s129 = scalar_lea.vmem %s0, %s128
          // Predicated region
          $region25: #{pointnet_set_abstraction_msg.9} parent=23 // pred_check
            _
          $region26: #{pointnet_set_abstraction_msg.9} parent=23 // pred_check_branch
            %131 = sbr.rel (0) target = $region28
          $region27: #{pointnet_set_abstraction_msg.9} parent=23 // pred_region
            // Predicated region
            $region29: #{pointnet_set_abstraction_msg.9} parent=27 // pred_check
              _
            $region30: #{pointnet_set_abstraction_msg.9} parent=27 // pred_check_branch
              %133 = sbr.rel target = $region32
            $region31: #{pointnet_set_abstraction_msg.9} parent=27 // pred_region
              // Predicated region
              $region44: #{pointnet_set_abstraction_msg.9} parent=31 // pred_check
                _
              $region45: #{pointnet_set_abstraction_msg.9} parent=31 // pred_check_branch
                %403 = sbr.rel (0) target = $region47
              $region46: #{pointnet_set_abstraction_msg.9} parent=31 // pred_region
                loop: start=0, step=1, limit=1
                $region48: #{pointnet_set_abstraction_msg.9} parent=46 // loop_pre_header
                  _
                $region49: #{pointnet_set_abstraction_msg.9} parent=46 // loop_header
                  %s405 = sphi 0, %s409
                  %p406 = scmp.ge.s32.totalorder %s405, 1
                  %s410 = sphi %s129, %s129
                  %s411 = sphi %s125, %s125
                $region50: #{pointnet_set_abstraction_msg.9} parent=46 // loop_header_branch
                  %408 = sbr.rel (%p406) target = $region54
                $region51: #{pointnet_set_abstraction_msg.9} parent=46 // loop_body
                  _
                $region52: #{pointnet_set_abstraction_msg.9} parent=46 // loop_footer
                  %s409 = sadd.s32 1, %s405
                $region53: #{pointnet_set_abstraction_msg.9} parent=46 // loop_footer_branch
                  %404 = sbr.rel target = $region49
                $region54: #{pointnet_set_abstraction_msg.9} parent=46 // loop_exit
                  _
                %s413 = ssub.s32 16, 1
                loop: start=0, step=1, limit=1
                $region55: #{pointnet_set_abstraction_msg.9} parent=46 // loop_pre_header
                  _
                $region56: #{pointnet_set_abstraction_msg.9} parent=46 // loop_header
                  %s415 = sphi 0, %s419
                  %p416 = scmp.ge.s32.totalorder %s415, 1
                  %s420 = sphi %s129, %s129
                  %s421 = sphi %s125, %s125
                $region57: #{pointnet_set_abstraction_msg.9} parent=46 // loop_header_branch
                  %418 = sbr.rel (%p416) target = $region61
                $region58: #{pointnet_set_abstraction_msg.9} parent=46 // loop_body
                  %v422 = vld [vmem:[%s420] sm:%s413]
                  %423 = vst [vmem:[%s421] sm:%s413] %v422
                  %v424 = vld [vmem:[%s420 + $0x4] sm:%s413]
                  %425 = vst [vmem:[%s421 + $0x4] sm:%s413] %v424
                  %v426 = vld [vmem:[%s420 + $0x10] sm:%s413]
                  %427 = vst [vmem:[%s421 + $0x8] sm:%s413] %v426
                  %v428 = vld [vmem:[%s420 + $0x14] sm:%s413]
                  %429 = vst [vmem:[%s421 + $0xc] sm:%s413] %v428
                  %v430 = vld [vmem:[%s420 + $0x20] sm:%s413]
                  %431 = vst [vmem:[%s421 + $0x10] sm:%s413] %v430
                  %v432 = vld [vmem:[%s420 + $0x24] sm:%s413]
                  %433 = vst [vmem:[%s421 + $0x14] sm:%s413] %v432
                  %v434 = vld [vmem:[%s420 + $0x30] sm:%s413]
                  %435 = vst [vmem:[%s421 + $0x18] sm:%s413] %v434
                  %v436 = vld [vmem:[%s420 + $0x34] sm:%s413]
                  %437 = vst [vmem:[%s421 + $0x1c] sm:%s413] %v436
                  %v438 = vld [vmem:[%s420 + $0x40] sm:%s413]
                  %439 = vst [vmem:[%s421 + $0x20] sm:%s413] %v438
                  %v440 = vld [vmem:[%s420 + $0x44] sm:%s413]
                  %441 = vst [vmem:[%s421 + $0x24] sm:%s413] %v440
                  %v442 = vld [vmem:[%s420 + $0x50] sm:%s413]
                  %443 = vst [vmem:[%s421 + $0x28] sm:%s413] %v442
                  %v444 = vld [vmem:[%s420 + $0x54] sm:%s413]
                  %445 = vst [vmem:[%s421 + $0x2c] sm:%s413] %v444
                  %v446 = vld [vmem:[%s420 + $0x60] sm:%s413]
                  %447 = vst [vmem:[%s421 + $0x30] sm:%s413] %v446
                  %v448 = vld [vmem:[%s420 + $0x64] sm:%s413]
                  %449 = vst [vmem:[%s421 + $0x34] sm:%s413] %v448
                  %v450 = vld [vmem:[%s420 + $0x70] sm:%s413]
                  %451 = vst [vmem:[%s421 + $0x38] sm:%s413] %v450
                  %v452 = vld [vmem:[%s420 + $0x74] sm:%s413]
                  %453 = vst [vmem:[%s421 + $0x3c] sm:%s413] %v452
                  %v454 = vld [vmem:[%s420 + $0x80] sm:%s413]
                  %455 = vst [vmem:[%s421 + $0x40] sm:%s413] %v454
                  %v456 = vld [vmem:[%s420 + $0x84] sm:%s413]
                  %457 = vst [vmem:[%s421 + $0x44] sm:%s413] %v456
                  %v458 = vld [vmem:[%s420 + $0x90] sm:%s413]
                  %459 = vst [vmem:[%s421 + $0x48] sm:%s413] %v458
                  %v460 = vld [vmem:[%s420 + $0x94] sm:%s413]
                  %461 = vst [vmem:[%s421 + $0x4c] sm:%s413] %v460
                  %v462 = vld [vmem:[%s420 + $0xa0] sm:%s413]
                  %463 = vst [vmem:[%s421 + $0x50] sm:%s413] %v462
                  %v464 = vld [vmem:[%s420 + $0xa4] sm:%s413]
                  %465 = vst [vmem:[%s421 + $0x54] sm:%s413] %v464
                  %v466 = vld [vmem:[%s420 + $0xb0] sm:%s413]
                  %467 = vst [vmem:[%s421 + $0x58] sm:%s413] %v466
                  %v468 = vld [vmem:[%s420 + $0xb4] sm:%s413]
                  %469 = vst [vmem:[%s421 + $0x5c] sm:%s413] %v468
                  %v470 = vld [vmem:[%s420 + $0xc0] sm:%s413]
                  %471 = vst [vmem:[%s421 + $0x60] sm:%s413] %v470
                  %v472 = vld [vmem:[%s420 + $0xc4] sm:%s413]
                  %473 = vst [vmem:[%s421 + $0x64] sm:%s413] %v472
                  %v474 = vld [vmem:[%s420 + $0xd0] sm:%s413]
                  %475 = vst [vmem:[%s421 + $0x68] sm:%s413] %v474
                  %v476 = vld [vmem:[%s420 + $0xd4] sm:%s413]
                  %477 = vst [vmem:[%s421 + $0x6c] sm:%s413] %v476
                  %v478 = vld [vmem:[%s420 + $0xe0] sm:%s413]
                  %479 = vst [vmem:[%s421 + $0x70] sm:%s413] %v478
                  %v480 = vld [vmem:[%s420 + $0xe4] sm:%s413]
                  %481 = vst [vmem:[%s421 + $0x74] sm:%s413] %v480
                  %v482 = vld [vmem:[%s420 + $0xf0] sm:%s413]
                  %483 = vst [vmem:[%s421 + $0x78] sm:%s413] %v482
                  %v484 = vld [vmem:[%s420 + $0xf4] sm:%s413]
                  %485 = vst [vmem:[%s421 + $0x7c] sm:%s413] %v484
                  %v486 = vld [vmem:[%s420 + $0x100] sm:%s413]
                  %487 = vst [vmem:[%s421 + $0x80] sm:%s413] %v486
                  %v488 = vld [vmem:[%s420 + $0x104] sm:%s413]
                  %489 = vst [vmem:[%s421 + $0x84] sm:%s413] %v488
                  %v490 = vld [vmem:[%s420 + $0x110] sm:%s413]
                  %491 = vst [vmem:[%s421 + $0x88] sm:%s413] %v490
                  %v492 = vld [vmem:[%s420 + $0x114] sm:%s413]
                  %493 = vst [vmem:[%s421 + $0x8c] sm:%s413] %v492
                  %v494 = vld [vmem:[%s420 + $0x120] sm:%s413]
                  %495 = vst [vmem:[%s421 + $0x90] sm:%s413] %v494
                  %v496 = vld [vmem:[%s420 + $0x124] sm:%s413]
                  %497 = vst [vmem:[%s421 + $0x94] sm:%s413] %v496
                  %v498 = vld [vmem:[%s420 + $0x130] sm:%s413]
                  %499 = vst [vmem:[%s421 + $0x98] sm:%s413] %v498
                  %v500 = vld [vmem:[%s420 + $0x134] sm:%s413]
                  %501 = vst [vmem:[%s421 + $0x9c] sm:%s413] %v500
                  %v502 = vld [vmem:[%s420 + $0x140] sm:%s413]
                  %503 = vst [vmem:[%s421 + $0xa0] sm:%s413] %v502
                  %v504 = vld [vmem:[%s420 + $0x144] sm:%s413]
                  %505 = vst [vmem:[%s421 + $0xa4] sm:%s413] %v504
                  %v506 = vld [vmem:[%s420 + $0x150] sm:%s413]
                  %507 = vst [vmem:[%s421 + $0xa8] sm:%s413] %v506
                  %v508 = vld [vmem:[%s420 + $0x154] sm:%s413]
                  %509 = vst [vmem:[%s421 + $0xac] sm:%s413] %v508
                  %v510 = vld [vmem:[%s420 + $0x160] sm:%s413]
                  %511 = vst [vmem:[%s421 + $0xb0] sm:%s413] %v510
                  %v512 = vld [vmem:[%s420 + $0x164] sm:%s413]
                  %513 = vst [vmem:[%s421 + $0xb4] sm:%s413] %v512
                  %v514 = vld [vmem:[%s420 + $0x170] sm:%s413]
                  %515 = vst [vmem:[%s421 + $0xb8] sm:%s413] %v514
                  %v516 = vld [vmem:[%s420 + $0x174] sm:%s413]
                  %517 = vst [vmem:[%s421 + $0xbc] sm:%s413] %v516
                  %v518 = vld [vmem:[%s420 + $0x180] sm:%s413]
                  %519 = vst [vmem:[%s421 + $0xc0] sm:%s413] %v518
                  %v520 = vld [vmem:[%s420 + $0x184] sm:%s413]
                  %521 = vst [vmem:[%s421 + $0xc4] sm:%s413] %v520
                  %v522 = vld [vmem:[%s420 + $0x190] sm:%s413]
                  %523 = vst [vmem:[%s421 + $0xc8] sm:%s413] %v522
                  %v524 = vld [vmem:[%s420 + $0x194] sm:%s413]
                  %525 = vst [vmem:[%s421 + $0xcc] sm:%s413] %v524
                  %v526 = vld [vmem:[%s420 + $0x1a0] sm:%s413]
                  %527 = vst [vmem:[%s421 + $0xd0] sm:%s413] %v526
                  %v528 = vld [vmem:[%s420 + $0x1a4] sm:%s413]
                  %529 = vst [vmem:[%s421 + $0xd4] sm:%s413] %v528
                  %v530 = vld [vmem:[%s420 + $0x1b0] sm:%s413]
                  %531 = vst [vmem:[%s421 + $0xd8] sm:%s413] %v530
                  %v532 = vld [vmem:[%s420 + $0x1b4] sm:%s413]
                  %533 = vst [vmem:[%s421 + $0xdc] sm:%s413] %v532
                  %v534 = vld [vmem:[%s420 + $0x1c0] sm:%s413]
                  %535 = vst [vmem:[%s421 + $0xe0] sm:%s413] %v534
                  %v536 = vld [vmem:[%s420 + $0x1c4] sm:%s413]
                  %537 = vst [vmem:[%s421 + $0xe4] sm:%s413] %v536
                  %v538 = vld [vmem:[%s420 + $0x1d0] sm:%s413]
                  %539 = vst [vmem:[%s421 + $0xe8] sm:%s413] %v538
                  %v540 = vld [vmem:[%s420 + $0x1d4] sm:%s413]
                  %541 = vst [vmem:[%s421 + $0xec] sm:%s413] %v540
                  %v542 = vld [vmem:[%s420 + $0x1e0] sm:%s413]
                  %543 = vst [vmem:[%s421 + $0xf0] sm:%s413] %v542
                  %v544 = vld [vmem:[%s420 + $0x1e4] sm:%s413]
                  %545 = vst [vmem:[%s421 + $0xf4] sm:%s413] %v544
                  %v546 = vld [vmem:[%s420 + $0x1f0] sm:%s413]
                  %547 = vst [vmem:[%s421 + $0xf8] sm:%s413] %v546
                  %v548 = vld [vmem:[%s420 + $0x1f4] sm:%s413]
                  %549 = vst [vmem:[%s421 + $0xfc] sm:%s413] %v548
                  %v550 = vld [vmem:[%s420 + $0x200] sm:%s413]
                  %551 = vst [vmem:[%s421 + $0x100] sm:%s413] %v550
                  %v552 = vld [vmem:[%s420 + $0x204] sm:%s413]
                  %553 = vst [vmem:[%s421 + $0x104] sm:%s413] %v552
                  %v554 = vld [vmem:[%s420 + $0x210] sm:%s413]
                  %555 = vst [vmem:[%s421 + $0x108] sm:%s413] %v554
                  %v556 = vld [vmem:[%s420 + $0x214] sm:%s413]
                  %557 = vst [vmem:[%s421 + $0x10c] sm:%s413] %v556
                  %v558 = vld [vmem:[%s420 + $0x220] sm:%s413]
                  %559 = vst [vmem:[%s421 + $0x110] sm:%s413] %v558
                  %v560 = vld [vmem:[%s420 + $0x224] sm:%s413]
                  %561 = vst [vmem:[%s421 + $0x114] sm:%s413] %v560
                  %v562 = vld [vmem:[%s420 + $0x230] sm:%s413]
                  %563 = vst [vmem:[%s421 + $0x118] sm:%s413] %v562
                  %v564 = vld [vmem:[%s420 + $0x234] sm:%s413]
                  %565 = vst [vmem:[%s421 + $0x11c] sm:%s413] %v564
                  %v566 = vld [vmem:[%s420 + $0x240] sm:%s413]
                  %567 = vst [vmem:[%s421 + $0x120] sm:%s413] %v566
                  %v568 = vld [vmem:[%s420 + $0x244] sm:%s413]
                  %569 = vst [vmem:[%s421 + $0x124] sm:%s413] %v568
                  %v570 = vld [vmem:[%s420 + $0x250] sm:%s413]
                  %571 = vst [vmem:[%s421 + $0x128] sm:%s413] %v570
                  %v572 = vld [vmem:[%s420 + $0x254] sm:%s413]
                  %573 = vst [vmem:[%s421 + $0x12c] sm:%s413] %v572
                  %v574 = vld [vmem:[%s420 + $0x260] sm:%s413]
                  %575 = vst [vmem:[%s421 + $0x130] sm:%s413] %v574
                  %v576 = vld [vmem:[%s420 + $0x264] sm:%s413]
                  %577 = vst [vmem:[%s421 + $0x134] sm:%s413] %v576
                  %v578 = vld [vmem:[%s420 + $0x270] sm:%s413]
                  %579 = vst [vmem:[%s421 + $0x138] sm:%s413] %v578
                  %v580 = vld [vmem:[%s420 + $0x274] sm:%s413]
                  %581 = vst [vmem:[%s421 + $0x13c] sm:%s413] %v580
                  %v582 = vld [vmem:[%s420 + $0x280] sm:%s413]
                  %583 = vst [vmem:[%s421 + $0x140] sm:%s413] %v582
                  %v584 = vld [vmem:[%s420 + $0x284] sm:%s413]
                  %585 = vst [vmem:[%s421 + $0x144] sm:%s413] %v584
                  %v586 = vld [vmem:[%s420 + $0x290] sm:%s413]
                  %587 = vst [vmem:[%s421 + $0x148] sm:%s413] %v586
                  %v588 = vld [vmem:[%s420 + $0x294] sm:%s413]
                  %589 = vst [vmem:[%s421 + $0x14c] sm:%s413] %v588
                  %v590 = vld [vmem:[%s420 + $0x2a0] sm:%s413]
                  %591 = vst [vmem:[%s421 + $0x150] sm:%s413] %v590
                  %v592 = vld [vmem:[%s420 + $0x2a4] sm:%s413]
                  %593 = vst [vmem:[%s421 + $0x154] sm:%s413] %v592
                  %v594 = vld [vmem:[%s420 + $0x2b0] sm:%s413]
                  %595 = vst [vmem:[%s421 + $0x158] sm:%s413] %v594
                  %v596 = vld [vmem:[%s420 + $0x2b4] sm:%s413]
                  %597 = vst [vmem:[%s421 + $0x15c] sm:%s413] %v596
                  %v598 = vld [vmem:[%s420 + $0x2c0] sm:%s413]
                  %599 = vst [vmem:[%s421 + $0x160] sm:%s413] %v598
                  %v600 = vld [vmem:[%s420 + $0x2c4] sm:%s413]
                  %601 = vst [vmem:[%s421 + $0x164] sm:%s413] %v600
                  %v602 = vld [vmem:[%s420 + $0x2d0] sm:%s413]
                  %603 = vst [vmem:[%s421 + $0x168] sm:%s413] %v602
                  %v604 = vld [vmem:[%s420 + $0x2d4] sm:%s413]
                  %605 = vst [vmem:[%s421 + $0x16c] sm:%s413] %v604
                  %v606 = vld [vmem:[%s420 + $0x2e0] sm:%s413]
                  %607 = vst [vmem:[%s421 + $0x170] sm:%s413] %v606
                  %v608 = vld [vmem:[%s420 + $0x2e4] sm:%s413]
                  %609 = vst [vmem:[%s421 + $0x174] sm:%s413] %v608
                  %v610 = vld [vmem:[%s420 + $0x2f0] sm:%s413]
                  %611 = vst [vmem:[%s421 + $0x178] sm:%s413] %v610
                  %v612 = vld [vmem:[%s420 + $0x2f4] sm:%s413]
                  %613 = vst [vmem:[%s421 + $0x17c] sm:%s413] %v612
                  %v614 = vld [vmem:[%s420 + $0x300] sm:%s413]
                  %615 = vst [vmem:[%s421 + $0x180] sm:%s413] %v614
                  %v616 = vld [vmem:[%s420 + $0x304] sm:%s413]
                  %617 = vst [vmem:[%s421 + $0x184] sm:%s413] %v616
                  %v618 = vld [vmem:[%s420 + $0x310] sm:%s413]
                  %619 = vst [vmem:[%s421 + $0x188] sm:%s413] %v618
                  %v620 = vld [vmem:[%s420 + $0x314] sm:%s413]
                  %621 = vst [vmem:[%s421 + $0x18c] sm:%s413] %v620
                  %v622 = vld [vmem:[%s420 + $0x320] sm:%s413]
                  %623 = vst [vmem:[%s421 + $0x190] sm:%s413] %v622
                  %v624 = vld [vmem:[%s420 + $0x324] sm:%s413]
                  %625 = vst [vmem:[%s421 + $0x194] sm:%s413] %v624
                  %v626 = vld [vmem:[%s420 + $0x330] sm:%s413]
                  %627 = vst [vmem:[%s421 + $0x198] sm:%s413] %v626
                  %v628 = vld [vmem:[%s420 + $0x334] sm:%s413]
                  %629 = vst [vmem:[%s421 + $0x19c] sm:%s413] %v628
                  %v630 = vld [vmem:[%s420 + $0x340] sm:%s413]
                  %631 = vst [vmem:[%s421 + $0x1a0] sm:%s413] %v630
                  %v632 = vld [vmem:[%s420 + $0x344] sm:%s413]
                  %633 = vst [vmem:[%s421 + $0x1a4] sm:%s413] %v632
                  %v634 = vld [vmem:[%s420 + $0x350] sm:%s413]
                  %635 = vst [vmem:[%s421 + $0x1a8] sm:%s413] %v634
                  %v636 = vld [vmem:[%s420 + $0x354] sm:%s413]
                  %637 = vst [vmem:[%s421 + $0x1ac] sm:%s413] %v636
                  %v638 = vld [vmem:[%s420 + $0x360] sm:%s413]
                  %639 = vst [vmem:[%s421 + $0x1b0] sm:%s413] %v638
                  %v640 = vld [vmem:[%s420 + $0x364] sm:%s413]
                  %641 = vst [vmem:[%s421 + $0x1b4] sm:%s413] %v640
                  %v642 = vld [vmem:[%s420 + $0x370] sm:%s413]
                  %643 = vst [vmem:[%s421 + $0x1b8] sm:%s413] %v642
                  %v644 = vld [vmem:[%s420 + $0x374] sm:%s413]
                  %645 = vst [vmem:[%s421 + $0x1bc] sm:%s413] %v644
                  %v646 = vld [vmem:[%s420 + $0x380] sm:%s413]
                  %647 = vst [vmem:[%s421 + $0x1c0] sm:%s413] %v646
                  %v648 = vld [vmem:[%s420 + $0x384] sm:%s413]
                  %649 = vst [vmem:[%s421 + $0x1c4] sm:%s413] %v648
                  %v650 = vld [vmem:[%s420 + $0x390] sm:%s413]
                  %651 = vst [vmem:[%s421 + $0x1c8] sm:%s413] %v650
                  %v652 = vld [vmem:[%s420 + $0x394] sm:%s413]
                  %653 = vst [vmem:[%s421 + $0x1cc] sm:%s413] %v652
                  %v654 = vld [vmem:[%s420 + $0x3a0] sm:%s413]
                  %655 = vst [vmem:[%s421 + $0x1d0] sm:%s413] %v654
                  %v656 = vld [vmem:[%s420 + $0x3a4] sm:%s413]
                  %657 = vst [vmem:[%s421 + $0x1d4] sm:%s413] %v656
                  %v658 = vld [vmem:[%s420 + $0x3b0] sm:%s413]
                  %659 = vst [vmem:[%s421 + $0x1d8] sm:%s413] %v658
                  %v660 = vld [vmem:[%s420 + $0x3b4] sm:%s413]
                  %661 = vst [vmem:[%s421 + $0x1dc] sm:%s413] %v660
                  %v662 = vld [vmem:[%s420 + $0x3c0] sm:%s413]
                  %663 = vst [vmem:[%s421 + $0x1e0] sm:%s413] %v662
                  %v664 = vld [vmem:[%s420 + $0x3c4] sm:%s413]
                  %665 = vst [vmem:[%s421 + $0x1e4] sm:%s413] %v664
                  %v666 = vld [vmem:[%s420 + $0x3d0] sm:%s413]
                  %667 = vst [vmem:[%s421 + $0x1e8] sm:%s413] %v666
                  %v668 = vld [vmem:[%s420 + $0x3d4] sm:%s413]
                  %669 = vst [vmem:[%s421 + $0x1ec] sm:%s413] %v668
                  %v670 = vld [vmem:[%s420 + $0x3e0] sm:%s413]
                  %671 = vst [vmem:[%s421 + $0x1f0] sm:%s413] %v670
                  %v672 = vld [vmem:[%s420 + $0x3e4] sm:%s413]
                  %673 = vst [vmem:[%s421 + $0x1f4] sm:%s413] %v672
                  %v674 = vld [vmem:[%s420 + $0x3f0] sm:%s413]
                  %675 = vst [vmem:[%s421 + $0x1f8] sm:%s413] %v674
                  %v676 = vld [vmem:[%s420 + $0x3f4] sm:%s413]
                  %677 = vst [vmem:[%s421 + $0x1fc] sm:%s413] %v676
                $region59: #{pointnet_set_abstraction_msg.9} parent=46 // loop_footer
                  %s419 = sadd.s32 1, %s415
                $region60: #{pointnet_set_abstraction_msg.9} parent=46 // loop_footer_branch
                  %414 = sbr.rel target = $region56
                $region61: #{pointnet_set_abstraction_msg.9} parent=46 // loop_exit
                  _
              $region47: #{pointnet_set_abstraction_msg.9} parent=31 // pred_fallthru
                _
            $region32: #{pointnet_set_abstraction_msg.9} parent=27 // pred_fallthru
              _
            // Predicated region
            $region33: #{pointnet_set_abstraction_msg.9} parent=27 // pred_check
              _
            $region34: #{pointnet_set_abstraction_msg.9} parent=27 // pred_check_branch
              %135 = sbr.rel (0) target = $region36
            $region35: #{pointnet_set_abstraction_msg.9} parent=27 // pred_region
              %s137 = ssub.s32 16, 1
              loop: start=0, step=1, limit=1
              $region37: #{pointnet_set_abstraction_msg.9} parent=35 // loop_pre_header
                _
              $region38: #{pointnet_set_abstraction_msg.9} parent=35 // loop_header
                %s139 = sphi 0, %s143
                %p140 = scmp.ge.s32.totalorder %s139, 1
                %s144 = sphi %s129, %s129
                %s145 = sphi %s125, %s125
              $region39: #{pointnet_set_abstraction_msg.9} parent=35 // loop_header_branch
                %142 = sbr.rel (%p140) target = $region43
              $region40: #{pointnet_set_abstraction_msg.9} parent=35 // loop_body
                %v146 = vld [vmem:[%s144] sm:%s137]
                %147 = vst [vmem:[%s145] sm:%s137] %v146
                %v148 = vld [vmem:[%s144 + $0x4] sm:%s137]
                %149 = vst [vmem:[%s145 + $0x4] sm:%s137] %v148
                %v150 = vld [vmem:[%s144 + $0x10] sm:%s137]
                %151 = vst [vmem:[%s145 + $0x8] sm:%s137] %v150
                %v152 = vld [vmem:[%s144 + $0x14] sm:%s137]
                %153 = vst [vmem:[%s145 + $0xc] sm:%s137] %v152
                %v154 = vld [vmem:[%s144 + $0x20] sm:%s137]
                %155 = vst [vmem:[%s145 + $0x10] sm:%s137] %v154
                %v156 = vld [vmem:[%s144 + $0x24] sm:%s137]
                %157 = vst [vmem:[%s145 + $0x14] sm:%s137] %v156
                %v158 = vld [vmem:[%s144 + $0x30] sm:%s137]
                %159 = vst [vmem:[%s145 + $0x18] sm:%s137] %v158
                %v160 = vld [vmem:[%s144 + $0x34] sm:%s137]
                %161 = vst [vmem:[%s145 + $0x1c] sm:%s137] %v160
                %v162 = vld [vmem:[%s144 + $0x40] sm:%s137]
                %163 = vst [vmem:[%s145 + $0x20] sm:%s137] %v162
                %v164 = vld [vmem:[%s144 + $0x44] sm:%s137]
                %165 = vst [vmem:[%s145 + $0x24] sm:%s137] %v164
                %v166 = vld [vmem:[%s144 + $0x50] sm:%s137]
                %167 = vst [vmem:[%s145 + $0x28] sm:%s137] %v166
                %v168 = vld [vmem:[%s144 + $0x54] sm:%s137]
                %169 = vst [vmem:[%s145 + $0x2c] sm:%s137] %v168
                %v170 = vld [vmem:[%s144 + $0x60] sm:%s137]
                %171 = vst [vmem:[%s145 + $0x30] sm:%s137] %v170
                %v172 = vld [vmem:[%s144 + $0x64] sm:%s137]
                %173 = vst [vmem:[%s145 + $0x34] sm:%s137] %v172
                %v174 = vld [vmem:[%s144 + $0x70] sm:%s137]
                %175 = vst [vmem:[%s145 + $0x38] sm:%s137] %v174
                %v176 = vld [vmem:[%s144 + $0x74] sm:%s137]
                %177 = vst [vmem:[%s145 + $0x3c] sm:%s137] %v176
                %v178 = vld [vmem:[%s144 + $0x80] sm:%s137]
                %179 = vst [vmem:[%s145 + $0x40] sm:%s137] %v178
                %v180 = vld [vmem:[%s144 + $0x84] sm:%s137]
                %181 = vst [vmem:[%s145 + $0x44] sm:%s137] %v180
                %v182 = vld [vmem:[%s144 + $0x90] sm:%s137]
                %183 = vst [vmem:[%s145 + $0x48] sm:%s137] %v182
                %v184 = vld [vmem:[%s144 + $0x94] sm:%s137]
                %185 = vst [vmem:[%s145 + $0x4c] sm:%s137] %v184
                %v186 = vld [vmem:[%s144 + $0xa0] sm:%s137]
                %187 = vst [vmem:[%s145 + $0x50] sm:%s137] %v186
                %v188 = vld [vmem:[%s144 + $0xa4] sm:%s137]
                %189 = vst [vmem:[%s145 + $0x54] sm:%s137] %v188
                %v190 = vld [vmem:[%s144 + $0xb0] sm:%s137]
                %191 = vst [vmem:[%s145 + $0x58] sm:%s137] %v190
                %v192 = vld [vmem:[%s144 + $0xb4] sm:%s137]
                %193 = vst [vmem:[%s145 + $0x5c] sm:%s137] %v192
                %v194 = vld [vmem:[%s144 + $0xc0] sm:%s137]
                %195 = vst [vmem:[%s145 + $0x60] sm:%s137] %v194
                %v196 = vld [vmem:[%s144 + $0xc4] sm:%s137]
                %197 = vst [vmem:[%s145 + $0x64] sm:%s137] %v196
                %v198 = vld [vmem:[%s144 + $0xd0] sm:%s137]
                %199 = vst [vmem:[%s145 + $0x68] sm:%s137] %v198
                %v200 = vld [vmem:[%s144 + $0xd4] sm:%s137]
                %201 = vst [vmem:[%s145 + $0x6c] sm:%s137] %v200
                %v202 = vld [vmem:[%s144 + $0xe0] sm:%s137]
                %203 = vst [vmem:[%s145 + $0x70] sm:%s137] %v202
                %v204 = vld [vmem:[%s144 + $0xe4] sm:%s137]
                %205 = vst [vmem:[%s145 + $0x74] sm:%s137] %v204
                %v206 = vld [vmem:[%s144 + $0xf0] sm:%s137]
                %207 = vst [vmem:[%s145 + $0x78] sm:%s137] %v206
                %v208 = vld [vmem:[%s144 + $0xf4] sm:%s137]
                %209 = vst [vmem:[%s145 + $0x7c] sm:%s137] %v208
                %v210 = vld [vmem:[%s144 + $0x100] sm:%s137]
                %211 = vst [vmem:[%s145 + $0x80] sm:%s137] %v210
                %v212 = vld [vmem:[%s144 + $0x104] sm:%s137]
                %213 = vst [vmem:[%s145 + $0x84] sm:%s137] %v212
                %v214 = vld [vmem:[%s144 + $0x110] sm:%s137]
                %215 = vst [vmem:[%s145 + $0x88] sm:%s137] %v214
                %v216 = vld [vmem:[%s144 + $0x114] sm:%s137]
                %217 = vst [vmem:[%s145 + $0x8c] sm:%s137] %v216
                %v218 = vld [vmem:[%s144 + $0x120] sm:%s137]
                %219 = vst [vmem:[%s145 + $0x90] sm:%s137] %v218
                %v220 = vld [vmem:[%s144 + $0x124] sm:%s137]
                %221 = vst [vmem:[%s145 + $0x94] sm:%s137] %v220
                %v222 = vld [vmem:[%s144 + $0x130] sm:%s137]
                %223 = vst [vmem:[%s145 + $0x98] sm:%s137] %v222
                %v224 = vld [vmem:[%s144 + $0x134] sm:%s137]
                %225 = vst [vmem:[%s145 + $0x9c] sm:%s137] %v224
                %v226 = vld [vmem:[%s144 + $0x140] sm:%s137]
                %227 = vst [vmem:[%s145 + $0xa0] sm:%s137] %v226
                %v228 = vld [vmem:[%s144 + $0x144] sm:%s137]
                %229 = vst [vmem:[%s145 + $0xa4] sm:%s137] %v228
                %v230 = vld [vmem:[%s144 + $0x150] sm:%s137]
                %231 = vst [vmem:[%s145 + $0xa8] sm:%s137] %v230
                %v232 = vld [vmem:[%s144 + $0x154] sm:%s137]
                %233 = vst [vmem:[%s145 + $0xac] sm:%s137] %v232
                %v234 = vld [vmem:[%s144 + $0x160] sm:%s137]
                %235 = vst [vmem:[%s145 + $0xb0] sm:%s137] %v234
                %v236 = vld [vmem:[%s144 + $0x164] sm:%s137]
                %237 = vst [vmem:[%s145 + $0xb4] sm:%s137] %v236
                %v238 = vld [vmem:[%s144 + $0x170] sm:%s137]
                %239 = vst [vmem:[%s145 + $0xb8] sm:%s137] %v238
                %v240 = vld [vmem:[%s144 + $0x174] sm:%s137]
                %241 = vst [vmem:[%s145 + $0xbc] sm:%s137] %v240
                %v242 = vld [vmem:[%s144 + $0x180] sm:%s137]
                %243 = vst [vmem:[%s145 + $0xc0] sm:%s137] %v242
                %v244 = vld [vmem:[%s144 + $0x184] sm:%s137]
                %245 = vst [vmem:[%s145 + $0xc4] sm:%s137] %v244
                %v246 = vld [vmem:[%s144 + $0x190] sm:%s137]
                %247 = vst [vmem:[%s145 + $0xc8] sm:%s137] %v246
                %v248 = vld [vmem:[%s144 + $0x194] sm:%s137]
                %249 = vst [vmem:[%s145 + $0xcc] sm:%s137] %v248
                %v250 = vld [vmem:[%s144 + $0x1a0] sm:%s137]
                %251 = vst [vmem:[%s145 + $0xd0] sm:%s137] %v250
                %v252 = vld [vmem:[%s144 + $0x1a4] sm:%s137]
                %253 = vst [vmem:[%s145 + $0xd4] sm:%s137] %v252
                %v254 = vld [vmem:[%s144 + $0x1b0] sm:%s137]
                %255 = vst [vmem:[%s145 + $0xd8] sm:%s137] %v254
                %v256 = vld [vmem:[%s144 + $0x1b4] sm:%s137]
                %257 = vst [vmem:[%s145 + $0xdc] sm:%s137] %v256
                %v258 = vld [vmem:[%s144 + $0x1c0] sm:%s137]
                %259 = vst [vmem:[%s145 + $0xe0] sm:%s137] %v258
                %v260 = vld [vmem:[%s144 + $0x1c4] sm:%s137]
                %261 = vst [vmem:[%s145 + $0xe4] sm:%s137] %v260
                %v262 = vld [vmem:[%s144 + $0x1d0] sm:%s137]
                %263 = vst [vmem:[%s145 + $0xe8] sm:%s137] %v262
                %v264 = vld [vmem:[%s144 + $0x1d4] sm:%s137]
                %265 = vst [vmem:[%s145 + $0xec] sm:%s137] %v264
                %v266 = vld [vmem:[%s144 + $0x1e0] sm:%s137]
                %267 = vst [vmem:[%s145 + $0xf0] sm:%s137] %v266
                %v268 = vld [vmem:[%s144 + $0x1e4] sm:%s137]
                %269 = vst [vmem:[%s145 + $0xf4] sm:%s137] %v268
                %v270 = vld [vmem:[%s144 + $0x1f0] sm:%s137]
                %271 = vst [vmem:[%s145 + $0xf8] sm:%s137] %v270
                %v272 = vld [vmem:[%s144 + $0x1f4] sm:%s137]
                %273 = vst [vmem:[%s145 + $0xfc] sm:%s137] %v272
                %v274 = vld [vmem:[%s144 + $0x200] sm:%s137]
                %275 = vst [vmem:[%s145 + $0x100] sm:%s137] %v274
                %v276 = vld [vmem:[%s144 + $0x204] sm:%s137]
                %277 = vst [vmem:[%s145 + $0x104] sm:%s137] %v276
                %v278 = vld [vmem:[%s144 + $0x210] sm:%s137]
                %279 = vst [vmem:[%s145 + $0x108] sm:%s137] %v278
                %v280 = vld [vmem:[%s144 + $0x214] sm:%s137]
                %281 = vst [vmem:[%s145 + $0x10c] sm:%s137] %v280
                %v282 = vld [vmem:[%s144 + $0x220] sm:%s137]
                %283 = vst [vmem:[%s145 + $0x110] sm:%s137] %v282
                %v284 = vld [vmem:[%s144 + $0x224] sm:%s137]
                %285 = vst [vmem:[%s145 + $0x114] sm:%s137] %v284
                %v286 = vld [vmem:[%s144 + $0x230] sm:%s137]
                %287 = vst [vmem:[%s145 + $0x118] sm:%s137] %v286
                %v288 = vld [vmem:[%s144 + $0x234] sm:%s137]
                %289 = vst [vmem:[%s145 + $0x11c] sm:%s137] %v288
                %v290 = vld [vmem:[%s144 + $0x240] sm:%s137]
                %291 = vst [vmem:[%s145 + $0x120] sm:%s137] %v290
                %v292 = vld [vmem:[%s144 + $0x244] sm:%s137]
                %293 = vst [vmem:[%s145 + $0x124] sm:%s137] %v292
                %v294 = vld [vmem:[%s144 + $0x250] sm:%s137]
                %295 = vst [vmem:[%s145 + $0x128] sm:%s137] %v294
                %v296 = vld [vmem:[%s144 + $0x254] sm:%s137]
                %297 = vst [vmem:[%s145 + $0x12c] sm:%s137] %v296
                %v298 = vld [vmem:[%s144 + $0x260] sm:%s137]
                %299 = vst [vmem:[%s145 + $0x130] sm:%s137] %v298
                %v300 = vld [vmem:[%s144 + $0x264] sm:%s137]
                %301 = vst [vmem:[%s145 + $0x134] sm:%s137] %v300
                %v302 = vld [vmem:[%s144 + $0x270] sm:%s137]
                %303 = vst [vmem:[%s145 + $0x138] sm:%s137] %v302
                %v304 = vld [vmem:[%s144 + $0x274] sm:%s137]
                %305 = vst [vmem:[%s145 + $0x13c] sm:%s137] %v304
                %v306 = vld [vmem:[%s144 + $0x280] sm:%s137]
                %307 = vst [vmem:[%s145 + $0x140] sm:%s137] %v306
                %v308 = vld [vmem:[%s144 + $0x284] sm:%s137]
                %309 = vst [vmem:[%s145 + $0x144] sm:%s137] %v308
                %v310 = vld [vmem:[%s144 + $0x290] sm:%s137]
                %311 = vst [vmem:[%s145 + $0x148] sm:%s137] %v310
                %v312 = vld [vmem:[%s144 + $0x294] sm:%s137]
                %313 = vst [vmem:[%s145 + $0x14c] sm:%s137] %v312
                %v314 = vld [vmem:[%s144 + $0x2a0] sm:%s137]
                %315 = vst [vmem:[%s145 + $0x150] sm:%s137] %v314
                %v316 = vld [vmem:[%s144 + $0x2a4] sm:%s137]
                %317 = vst [vmem:[%s145 + $0x154] sm:%s137] %v316
                %v318 = vld [vmem:[%s144 + $0x2b0] sm:%s137]
                %319 = vst [vmem:[%s145 + $0x158] sm:%s137] %v318
                %v320 = vld [vmem:[%s144 + $0x2b4] sm:%s137]
                %321 = vst [vmem:[%s145 + $0x15c] sm:%s137] %v320
                %v322 = vld [vmem:[%s144 + $0x2c0] sm:%s137]
                %323 = vst [vmem:[%s145 + $0x160] sm:%s137] %v322
                %v324 = vld [vmem:[%s144 + $0x2c4] sm:%s137]
                %325 = vst [vmem:[%s145 + $0x164] sm:%s137] %v324
                %v326 = vld [vmem:[%s144 + $0x2d0] sm:%s137]
                %327 = vst [vmem:[%s145 + $0x168] sm:%s137] %v326
                %v328 = vld [vmem:[%s144 + $0x2d4] sm:%s137]
                %329 = vst [vmem:[%s145 + $0x16c] sm:%s137] %v328
                %v330 = vld [vmem:[%s144 + $0x2e0] sm:%s137]
                %331 = vst [vmem:[%s145 + $0x170] sm:%s137] %v330
                %v332 = vld [vmem:[%s144 + $0x2e4] sm:%s137]
                %333 = vst [vmem:[%s145 + $0x174] sm:%s137] %v332
                %v334 = vld [vmem:[%s144 + $0x2f0] sm:%s137]
                %335 = vst [vmem:[%s145 + $0x178] sm:%s137] %v334
                %v336 = vld [vmem:[%s144 + $0x2f4] sm:%s137]
                %337 = vst [vmem:[%s145 + $0x17c] sm:%s137] %v336
                %v338 = vld [vmem:[%s144 + $0x300] sm:%s137]
                %339 = vst [vmem:[%s145 + $0x180] sm:%s137] %v338
                %v340 = vld [vmem:[%s144 + $0x304] sm:%s137]
                %341 = vst [vmem:[%s145 + $0x184] sm:%s137] %v340
                %v342 = vld [vmem:[%s144 + $0x310] sm:%s137]
                %343 = vst [vmem:[%s145 + $0x188] sm:%s137] %v342
                %v344 = vld [vmem:[%s144 + $0x314] sm:%s137]
                %345 = vst [vmem:[%s145 + $0x18c] sm:%s137] %v344
                %v346 = vld [vmem:[%s144 + $0x320] sm:%s137]
                %347 = vst [vmem:[%s145 + $0x190] sm:%s137] %v346
                %v348 = vld [vmem:[%s144 + $0x324] sm:%s137]
                %349 = vst [vmem:[%s145 + $0x194] sm:%s137] %v348
                %v350 = vld [vmem:[%s144 + $0x330] sm:%s137]
                %351 = vst [vmem:[%s145 + $0x198] sm:%s137] %v350
                %v352 = vld [vmem:[%s144 + $0x334] sm:%s137]
                %353 = vst [vmem:[%s145 + $0x19c] sm:%s137] %v352
                %v354 = vld [vmem:[%s144 + $0x340] sm:%s137]
                %355 = vst [vmem:[%s145 + $0x1a0] sm:%s137] %v354
                %v356 = vld [vmem:[%s144 + $0x344] sm:%s137]
                %357 = vst [vmem:[%s145 + $0x1a4] sm:%s137] %v356
                %v358 = vld [vmem:[%s144 + $0x350] sm:%s137]
                %359 = vst [vmem:[%s145 + $0x1a8] sm:%s137] %v358
                %v360 = vld [vmem:[%s144 + $0x354] sm:%s137]
                %361 = vst [vmem:[%s145 + $0x1ac] sm:%s137] %v360
                %v362 = vld [vmem:[%s144 + $0x360] sm:%s137]
                %363 = vst [vmem:[%s145 + $0x1b0] sm:%s137] %v362
                %v364 = vld [vmem:[%s144 + $0x364] sm:%s137]
                %365 = vst [vmem:[%s145 + $0x1b4] sm:%s137] %v364
                %v366 = vld [vmem:[%s144 + $0x370] sm:%s137]
                %367 = vst [vmem:[%s145 + $0x1b8] sm:%s137] %v366
                %v368 = vld [vmem:[%s144 + $0x374] sm:%s137]
                %369 = vst [vmem:[%s145 + $0x1bc] sm:%s137] %v368
                %v370 = vld [vmem:[%s144 + $0x380] sm:%s137]
                %371 = vst [vmem:[%s145 + $0x1c0] sm:%s137] %v370
                %v372 = vld [vmem:[%s144 + $0x384] sm:%s137]
                %373 = vst [vmem:[%s145 + $0x1c4] sm:%s137] %v372
                %v374 = vld [vmem:[%s144 + $0x390] sm:%s137]
                %375 = vst [vmem:[%s145 + $0x1c8] sm:%s137] %v374
                %v376 = vld [vmem:[%s144 + $0x394] sm:%s137]
                %377 = vst [vmem:[%s145 + $0x1cc] sm:%s137] %v376
                %v378 = vld [vmem:[%s144 + $0x3a0] sm:%s137]
                %379 = vst [vmem:[%s145 + $0x1d0] sm:%s137] %v378
                %v380 = vld [vmem:[%s144 + $0x3a4] sm:%s137]
                %381 = vst [vmem:[%s145 + $0x1d4] sm:%s137] %v380
                %v382 = vld [vmem:[%s144 + $0x3b0] sm:%s137]
                %383 = vst [vmem:[%s145 + $0x1d8] sm:%s137] %v382
                %v384 = vld [vmem:[%s144 + $0x3b4] sm:%s137]
                %385 = vst [vmem:[%s145 + $0x1dc] sm:%s137] %v384
                %v386 = vld [vmem:[%s144 + $0x3c0] sm:%s137]
                %387 = vst [vmem:[%s145 + $0x1e0] sm:%s137] %v386
                %v388 = vld [vmem:[%s144 + $0x3c4] sm:%s137]
                %389 = vst [vmem:[%s145 + $0x1e4] sm:%s137] %v388
                %v390 = vld [vmem:[%s144 + $0x3d0] sm:%s137]
                %391 = vst [vmem:[%s145 + $0x1e8] sm:%s137] %v390
                %v392 = vld [vmem:[%s144 + $0x3d4] sm:%s137]
                %393 = vst [vmem:[%s145 + $0x1ec] sm:%s137] %v392
                %v394 = vld [vmem:[%s144 + $0x3e0] sm:%s137]
                %395 = vst [vmem:[%s145 + $0x1f0] sm:%s137] %v394
                %v396 = vld [vmem:[%s144 + $0x3e4] sm:%s137]
                %397 = vst [vmem:[%s145 + $0x1f4] sm:%s137] %v396
                %v398 = vld [vmem:[%s144 + $0x3f0] sm:%s137]
                %399 = vst [vmem:[%s145 + $0x1f8] sm:%s137] %v398
                %v400 = vld [vmem:[%s144 + $0x3f4] sm:%s137]
                %401 = vst [vmem:[%s145 + $0x1fc] sm:%s137] %v400
              $region41: #{pointnet_set_abstraction_msg.9} parent=35 // loop_footer
                %s143 = sadd.s32 1, %s139
              $region42: #{pointnet_set_abstraction_msg.9} parent=35 // loop_footer_branch
                %138 = sbr.rel target = $region38
              $region43: #{pointnet_set_abstraction_msg.9} parent=35 // loop_exit
                _
            $region36: #{pointnet_set_abstraction_msg.9} parent=27 // pred_fallthru
              _
          $region28: #{pointnet_set_abstraction_msg.9} parent=23 // pred_fallthru
            _
          %678 = vnop
        $region24: #{pointnet_set_abstraction_msg.9} parent=19 // pred_fallthru
          _
      $region20: #{pointnet_set_abstraction_msg.9} parent=5 // pred_fallthru
        _
      %p679 = scmp.le.s32.totalorder 1, %s8
      %p680 = scmp.lt.s32.totalorder %s8, 3
      %p681 = pnand %p679, %p680
      %p682 = pneg %p681
      // Predicated region
      $region62: #{pointnet_set_abstraction_msg.9} parent=5 // pred_check
        _
      $region63: #{pointnet_set_abstraction_msg.9} parent=5 // pred_check_branch
        %684 = sbr.rel (%p681) target = $region65
      $region64: #{pointnet_set_abstraction_msg.9} parent=5 // pred_region
        %s685 = ssub.s32 %s8, 1
        %s686 = sand.u32 %s35, 1
        %s687 = sand.u32 %s35, 1
        %s688 = smul.addr %s687, 512
        %s689 = scalar_lea.vmem [#allocation2], %s688
        // Predicated region
        $region66: #{pointnet_set_abstraction_msg.9} parent=64 // pred_check
          %p690 = pneg %p48
        $region67: #{pointnet_set_abstraction_msg.9} parent=64 // pred_check_branch
          %692 = sbr.rel (%p690) target = $region69
        $region68: #{pointnet_set_abstraction_msg.9} parent=64 // pred_region
          _
        $region69: #{pointnet_set_abstraction_msg.9} parent=64 // pred_fallthru
          _
        %s693 = sand.u32 %s35, 1
        %s694 = sand.u32 %s35, 1
        %s695 = smul.addr %s694, 512
        %s696 = scalar_lea.vmem [#allocation2], %s695
        %p697 = pneg %p48
        %p698 = pneg %p45
        %p699 = pneg %p69
        %p700 = pneg %p66
        %p701 = pneg %p97
        %p702 = pneg %p94
        %p703 = scmp.lt.s32.totalorder %s17, 1
        %s704 = scalar_select %p703, %s17, 1
        %p705 = scmp.lt.s32.totalorder %s18, 0
        %s706 = scalar_select %p705, %s18, 0
        %s707 = smul.addr %s704, 8
        %s708 = sadd.s32 %s706, %s707
        %s709 = smul.addr %s708, 8
        %s710 = scalar_lea.vmem %s2, %s709
        %s711 = smul.u32 2, %s17
        %p712 = scmp.lt.s32.totalorder %s17, 1
        %s713 = scalar_select %p712, %s17, 1
        %p714 = scmp.lt.s32.totalorder %s18, 0
        %s715 = scalar_select %p714, %s18, 0
        %s716 = smul.addr %s713, 8
        %s717 = sadd.s32 %s715, %s716
        %s718 = smul.addr %s717, 8
        %s719 = scalar_lea.vmem %s2, %s718
        %v720 = vld [vmem:[%s1] sm:$0xff]
        %v721 = vld [vmem:[%s1 + $0x8] sm:$0xff]
        %v722 = vld [vmem:[%s1 + $0x10] sm:$0xff]
        %v723 = vld [vmem:[%s1 + $0x18] sm:$0xff]
        %v724 = vld [vmem:[%s1 + $0x20] sm:$0xff]
        %v725 = vld [vmem:[%s1 + $0x28] sm:$0xff]
        %v726 = vld [vmem:[%s1 + $0x30] sm:$0xff]
        %v727 = vld [vmem:[%s1 + $0x38] sm:$0xff]
        %v736 = vcombine.high %v720, %v720
        %v738 = vunpack.c.l.s4 1966171168
        %v739 = vunpack.c.0.s8 %v738
        %v740 = vlaneseq
        %v741 = vshrl.u32 %v740, 7
        %v742 = vsub.s32 %v739, %v741
        %v743 = vrot.slane %v720, %v742
        %v745 = vunpack.c.l.s4 1966171168
        %v746 = vunpack.c.0.s8 %v745
        %v747 = vlaneseq
        %v748 = vshrl.u32 %v747, 7
        %v749 = vsub.s32 %v746, %v748
        %v750 = vrot.slane %v736, %v749
        %v751 = vcombine.high %v743, %v743
        %v752 = vcombine.high %v750, %v750
        %v754 = vunpack.c.l.s4 1966171168
        %v755 = vunpack.c.0.s8 %v754
        %v756 = vlaneseq
        %v757 = vshrl.u32 %v756, 7
        %v758 = vsub.s32 %v755, %v757
        %v759 = vrot.slane %v743, %v758
        %v761 = vunpack.c.l.s4 1966171168
        %v762 = vunpack.c.0.s8 %v761
        %v763 = vlaneseq
        %v764 = vshrl.u32 %v763, 7
        %v765 = vsub.s32 %v762, %v764
        %v766 = vrot.slane %v750, %v765
        %v768 = vunpack.c.l.s4 1966171168
        %v769 = vunpack.c.0.s8 %v768
        %v770 = vlaneseq
        %v771 = vshrl.u32 %v770, 7
        %v772 = vsub.s32 %v769, %v771
        %v773 = vrot.slane %v751, %v772
        %v775 = vunpack.c.l.s4 1966171168
        %v776 = vunpack.c.0.s8 %v775
        %v777 = vlaneseq
        %v778 = vshrl.u32 %v777, 7
        %v779 = vsub.s32 %v776, %v778
        %v780 = vrot.slane %v752, %v779
        %v781 = vcombine.high %v759, %v759
        %v782 = vcombine.high %v766, %v766
        %v783 = vcombine.high %v773, %v773
        %v784 = vcombine.high %v780, %v780
        %v785 = vcombine.high %v721, %v721
        %v787 = vunpack.c.l.s4 1966171168
        %v788 = vunpack.c.0.s8 %v787
        %v789 = vlaneseq
        %v790 = vshrl.u32 %v789, 7
        %v791 = vsub.s32 %v788, %v790
        %v792 = vrot.slane %v721, %v791
        %v794 = vunpack.c.l.s4 1966171168
        %v795 = vunpack.c.0.s8 %v794
        %v796 = vlaneseq
        %v797 = vshrl.u32 %v796, 7
        %v798 = vsub.s32 %v795, %v797
        %v799 = vrot.slane %v785, %v798
        %v800 = vcombine.high %v792, %v792
        %v801 = vcombine.high %v799, %v799
        %v803 = vunpack.c.l.s4 1966171168
        %v804 = vunpack.c.0.s8 %v803
        %v805 = vlaneseq
        %v806 = vshrl.u32 %v805, 7
        %v807 = vsub.s32 %v804, %v806
        %v808 = vrot.slane %v792, %v807
        %v810 = vunpack.c.l.s4 1966171168
        %v811 = vunpack.c.0.s8 %v810
        %v812 = vlaneseq
        %v813 = vshrl.u32 %v812, 7
        %v814 = vsub.s32 %v811, %v813
        %v815 = vrot.slane %v799, %v814
        %v817 = vunpack.c.l.s4 1966171168
        %v818 = vunpack.c.0.s8 %v817
        %v819 = vlaneseq
        %v820 = vshrl.u32 %v819, 7
        %v821 = vsub.s32 %v818, %v820
        %v822 = vrot.slane %v800, %v821
        %v824 = vunpack.c.l.s4 1966171168
        %v825 = vunpack.c.0.s8 %v824
        %v826 = vlaneseq
        %v827 = vshrl.u32 %v826, 7
        %v828 = vsub.s32 %v825, %v827
        %v829 = vrot.slane %v801, %v828
        %v830 = vcombine.high %v808, %v808
        %v831 = vcombine.high %v815, %v815
        %v832 = vcombine.high %v822, %v822
        %v833 = vcombine.high %v829, %v829
        %v834 = vcombine.high %v722, %v722
        %v836 = vunpack.c.l.s4 1966171168
        %v837 = vunpack.c.0.s8 %v836
        %v838 = vlaneseq
        %v839 = vshrl.u32 %v838, 7
        %v840 = vsub.s32 %v837, %v839
        %v841 = vrot.slane %v722, %v840
        %v843 = vunpack.c.l.s4 1966171168
        %v844 = vunpack.c.0.s8 %v843
        %v845 = vlaneseq
        %v846 = vshrl.u32 %v845, 7
        %v847 = vsub.s32 %v844, %v846
        %v848 = vrot.slane %v834, %v847
        %v849 = vcombine.high %v841, %v841
        %v850 = vcombine.high %v848, %v848
        %v852 = vunpack.c.l.s4 1966171168
        %v853 = vunpack.c.0.s8 %v852
        %v854 = vlaneseq
        %v855 = vshrl.u32 %v854, 7
        %v856 = vsub.s32 %v853, %v855
        %v857 = vrot.slane %v841, %v856
        %v859 = vunpack.c.l.s4 1966171168
        %v860 = vunpack.c.0.s8 %v859
        %v861 = vlaneseq
        %v862 = vshrl.u32 %v861, 7
        %v863 = vsub.s32 %v860, %v862
        %v864 = vrot.slane %v848, %v863
        %v866 = vunpack.c.l.s4 1966171168
        %v867 = vunpack.c.0.s8 %v866
        %v868 = vlaneseq
        %v869 = vshrl.u32 %v868, 7
        %v870 = vsub.s32 %v867, %v869
        %v871 = vrot.slane %v849, %v870
        %v873 = vunpack.c.l.s4 1966171168
        %v874 = vunpack.c.0.s8 %v873
        %v875 = vlaneseq
        %v876 = vshrl.u32 %v875, 7
        %v877 = vsub.s32 %v874, %v876
        %v878 = vrot.slane %v850, %v877
        %v879 = vcombine.high %v857, %v857
        %v880 = vcombine.high %v864, %v864
        %v881 = vcombine.high %v871, %v871
        %v882 = vcombine.high %v878, %v878
        %v883 = vcombine.high %v723, %v723
        %v885 = vunpack.c.l.s4 1966171168
        %v886 = vunpack.c.0.s8 %v885
        %v887 = vlaneseq
        %v888 = vshrl.u32 %v887, 7
        %v889 = vsub.s32 %v886, %v888
        %v890 = vrot.slane %v723, %v889
        %v892 = vunpack.c.l.s4 1966171168
        %v893 = vunpack.c.0.s8 %v892
        %v894 = vlaneseq
        %v895 = vshrl.u32 %v894, 7
        %v896 = vsub.s32 %v893, %v895
        %v897 = vrot.slane %v883, %v896
        %v898 = vcombine.high %v890, %v890
        %v899 = vcombine.high %v897, %v897
        %v901 = vunpack.c.l.s4 1966171168
        %v902 = vunpack.c.0.s8 %v901
        %v903 = vlaneseq
        %v904 = vshrl.u32 %v903, 7
        %v905 = vsub.s32 %v902, %v904
        %v906 = vrot.slane %v890, %v905
        %v908 = vunpack.c.l.s4 1966171168
        %v909 = vunpack.c.0.s8 %v908
        %v910 = vlaneseq
        %v911 = vshrl.u32 %v910, 7
        %v912 = vsub.s32 %v909, %v911
        %v913 = vrot.slane %v897, %v912
        %v915 = vunpack.c.l.s4 1966171168
        %v916 = vunpack.c.0.s8 %v915
        %v917 = vlaneseq
        %v918 = vshrl.u32 %v917, 7
        %v919 = vsub.s32 %v916, %v918
        %v920 = vrot.slane %v898, %v919
        %v922 = vunpack.c.l.s4 1966171168
        %v923 = vunpack.c.0.s8 %v922
        %v924 = vlaneseq
        %v925 = vshrl.u32 %v924, 7
        %v926 = vsub.s32 %v923, %v925
        %v927 = vrot.slane %v899, %v926
        %v928 = vcombine.high %v906, %v906
        %v929 = vcombine.high %v913, %v913
        %v930 = vcombine.high %v920, %v920
        %v931 = vcombine.high %v927, %v927
        %v932 = vcombine.high %v724, %v724
        %v934 = vunpack.c.l.s4 1966171168
        %v935 = vunpack.c.0.s8 %v934
        %v936 = vlaneseq
        %v937 = vshrl.u32 %v936, 7
        %v938 = vsub.s32 %v935, %v937
        %v939 = vrot.slane %v724, %v938
        %v941 = vunpack.c.l.s4 1966171168
        %v942 = vunpack.c.0.s8 %v941
        %v943 = vlaneseq
        %v944 = vshrl.u32 %v943, 7
        %v945 = vsub.s32 %v942, %v944
        %v946 = vrot.slane %v932, %v945
        %v947 = vcombine.high %v939, %v939
        %v948 = vcombine.high %v946, %v946
        %v950 = vunpack.c.l.s4 1966171168
        %v951 = vunpack.c.0.s8 %v950
        %v952 = vlaneseq
        %v953 = vshrl.u32 %v952, 7
        %v954 = vsub.s32 %v951, %v953
        %v955 = vrot.slane %v939, %v954
        %v957 = vunpack.c.l.s4 1966171168
        %v958 = vunpack.c.0.s8 %v957
        %v959 = vlaneseq
        %v960 = vshrl.u32 %v959, 7
        %v961 = vsub.s32 %v958, %v960
        %v962 = vrot.slane %v946, %v961
        %v964 = vunpack.c.l.s4 1966171168
        %v965 = vunpack.c.0.s8 %v964
        %v966 = vlaneseq
        %v967 = vshrl.u32 %v966, 7
        %v968 = vsub.s32 %v965, %v967
        %v969 = vrot.slane %v947, %v968
        %v971 = vunpack.c.l.s4 1966171168
        %v972 = vunpack.c.0.s8 %v971
        %v973 = vlaneseq
        %v974 = vshrl.u32 %v973, 7
        %v975 = vsub.s32 %v972, %v974
        %v976 = vrot.slane %v948, %v975
        %v977 = vcombine.high %v955, %v955
        %v978 = vcombine.high %v962, %v962
        %v979 = vcombine.high %v969, %v969
        %v980 = vcombine.high %v976, %v976
        %v981 = vcombine.high %v725, %v725
        %v983 = vunpack.c.l.s4 1966171168
        %v984 = vunpack.c.0.s8 %v983
        %v985 = vlaneseq
        %v986 = vshrl.u32 %v985, 7
        %v987 = vsub.s32 %v984, %v986
        %v988 = vrot.slane %v725, %v987
        %v990 = vunpack.c.l.s4 1966171168
        %v991 = vunpack.c.0.s8 %v990
        %v992 = vlaneseq
        %v993 = vshrl.u32 %v992, 7
        %v994 = vsub.s32 %v991, %v993
        %v995 = vrot.slane %v981, %v994
        %v996 = vcombine.high %v988, %v988
        %v997 = vcombine.high %v995, %v995
        %v999 = vunpack.c.l.s4 1966171168
        %v1000 = vunpack.c.0.s8 %v999
        %v1001 = vlaneseq
        %v1002 = vshrl.u32 %v1001, 7
        %v1003 = vsub.s32 %v1000, %v1002
        %v1004 = vrot.slane %v988, %v1003
        %v1006 = vunpack.c.l.s4 1966171168
        %v1007 = vunpack.c.0.s8 %v1006
        %v1008 = vlaneseq
        %v1009 = vshrl.u32 %v1008, 7
        %v1010 = vsub.s32 %v1007, %v1009
        %v1011 = vrot.slane %v995, %v1010
        %v1013 = vunpack.c.l.s4 1966171168
        %v1014 = vunpack.c.0.s8 %v1013
        %v1015 = vlaneseq
        %v1016 = vshrl.u32 %v1015, 7
        %v1017 = vsub.s32 %v1014, %v1016
        %v1018 = vrot.slane %v996, %v1017
        %v1020 = vunpack.c.l.s4 1966171168
        %v1021 = vunpack.c.0.s8 %v1020
        %v1022 = vlaneseq
        %v1023 = vshrl.u32 %v1022, 7
        %v1024 = vsub.s32 %v1021, %v1023
        %v1025 = vrot.slane %v997, %v1024
        %v1026 = vcombine.high %v1004, %v1004
        %v1027 = vcombine.high %v1011, %v1011
        %v1028 = vcombine.high %v1018, %v1018
        %v1029 = vcombine.high %v1025, %v1025
        %v1030 = vcombine.high %v726, %v726
        %v1032 = vunpack.c.l.s4 1966171168
        %v1033 = vunpack.c.0.s8 %v1032
        %v1034 = vlaneseq
        %v1035 = vshrl.u32 %v1034, 7
        %v1036 = vsub.s32 %v1033, %v1035
        %v1037 = vrot.slane %v726, %v1036
        %v1039 = vunpack.c.l.s4 1966171168
        %v1040 = vunpack.c.0.s8 %v1039
        %v1041 = vlaneseq
        %v1042 = vshrl.u32 %v1041, 7
        %v1043 = vsub.s32 %v1040, %v1042
        %v1044 = vrot.slane %v1030, %v1043
        %v1045 = vcombine.high %v1037, %v1037
        %v1046 = vcombine.high %v1044, %v1044
        %v1048 = vunpack.c.l.s4 1966171168
        %v1049 = vunpack.c.0.s8 %v1048
        %v1050 = vlaneseq
        %v1051 = vshrl.u32 %v1050, 7
        %v1052 = vsub.s32 %v1049, %v1051
        %v1053 = vrot.slane %v1037, %v1052
        %v1055 = vunpack.c.l.s4 1966171168
        %v1056 = vunpack.c.0.s8 %v1055
        %v1057 = vlaneseq
        %v1058 = vshrl.u32 %v1057, 7
        %v1059 = vsub.s32 %v1056, %v1058
        %v1060 = vrot.slane %v1044, %v1059
        %v1062 = vunpack.c.l.s4 1966171168
        %v1063 = vunpack.c.0.s8 %v1062
        %v1064 = vlaneseq
        %v1065 = vshrl.u32 %v1064, 7
        %v1066 = vsub.s32 %v1063, %v1065
        %v1067 = vrot.slane %v1045, %v1066
        %v1069 = vunpack.c.l.s4 1966171168
        %v1070 = vunpack.c.0.s8 %v1069
        %v1071 = vlaneseq
        %v1072 = vshrl.u32 %v1071, 7
        %v1073 = vsub.s32 %v1070, %v1072
        %v1074 = vrot.slane %v1046, %v1073
        %v1075 = vcombine.high %v1053, %v1053
        %v1076 = vcombine.high %v1060, %v1060
        %v1077 = vcombine.high %v1067, %v1067
        %v1078 = vcombine.high %v1074, %v1074
        %v1079 = vcombine.high %v727, %v727
        %v1081 = vunpack.c.l.s4 1966171168
        %v1082 = vunpack.c.0.s8 %v1081
        %v1083 = vlaneseq
        %v1084 = vshrl.u32 %v1083, 7
        %v1085 = vsub.s32 %v1082, %v1084
        %v1086 = vrot.slane %v727, %v1085
        %v1088 = vunpack.c.l.s4 1966171168
        %v1089 = vunpack.c.0.s8 %v1088
        %v1090 = vlaneseq
        %v1091 = vshrl.u32 %v1090, 7
        %v1092 = vsub.s32 %v1089, %v1091
        %v1093 = vrot.slane %v1079, %v1092
        %v1094 = vcombine.high %v1086, %v1086
        %v1095 = vcombine.high %v1093, %v1093
        %v1097 = vunpack.c.l.s4 1966171168
        %v1098 = vunpack.c.0.s8 %v1097
        %v1099 = vlaneseq
        %v1100 = vshrl.u32 %v1099, 7
        %v1101 = vsub.s32 %v1098, %v1100
        %v1102 = vrot.slane %v1086, %v1101
        %v1104 = vunpack.c.l.s4 1966171168
        %v1105 = vunpack.c.0.s8 %v1104
        %v1106 = vlaneseq
        %v1107 = vshrl.u32 %v1106, 7
        %v1108 = vsub.s32 %v1105, %v1107
        %v1109 = vrot.slane %v1093, %v1108
        %v1111 = vunpack.c.l.s4 1966171168
        %v1112 = vunpack.c.0.s8 %v1111
        %v1113 = vlaneseq
        %v1114 = vshrl.u32 %v1113, 7
        %v1115 = vsub.s32 %v1112, %v1114
        %v1116 = vrot.slane %v1094, %v1115
        %v1118 = vunpack.c.l.s4 1966171168
        %v1119 = vunpack.c.0.s8 %v1118
        %v1120 = vlaneseq
        %v1121 = vshrl.u32 %v1120, 7
        %v1122 = vsub.s32 %v1119, %v1121
        %v1123 = vrot.slane %v1095, %v1122
        %v1124 = vcombine.high %v1102, %v1102
        %v1125 = vcombine.high %v1109, %v1109
        %v1126 = vcombine.high %v1116, %v1116
        %v1127 = vcombine.high %v1123, %v1123
        %v1128 = vld [vmem:[%s689] sm:$0xf]
        %v1129 = vld [vmem:[%s689 + $0x4] sm:$0xf]
        %v1130 = vld [vmem:[%s689 + $0x8] sm:$0xf]
        %v1131 = vld [vmem:[%s689 + $0xc] sm:$0xf]
        %v1132 = vld [vmem:[%s689 + $0x10] sm:$0xf]
        %v1133 = vld [vmem:[%s689 + $0x14] sm:$0xf]
        %v1134 = vld [vmem:[%s689 + $0x18] sm:$0xf]
        %v1135 = vld [vmem:[%s689 + $0x1c] sm:$0xf]
        %v1136 = vld [vmem:[%s689 + $0x20] sm:$0xf]
        %v1137 = vld [vmem:[%s689 + $0x24] sm:$0xf]
        %v1138 = vld [vmem:[%s689 + $0x28] sm:$0xf]
        %v1139 = vld [vmem:[%s689 + $0x2c] sm:$0xf]
        %v1140 = vld [vmem:[%s689 + $0x30] sm:$0xf]
        %v1141 = vld [vmem:[%s689 + $0x34] sm:$0xf]
        %v1142 = vld [vmem:[%s689 + $0x38] sm:$0xf]
        %v1143 = vld [vmem:[%s689 + $0x3c] sm:$0xf]
        %v1144 = vld [vmem:[%s689 + $0x40] sm:$0xf]
        %v1145 = vld [vmem:[%s689 + $0x44] sm:$0xf]
        %v1146 = vld [vmem:[%s689 + $0x48] sm:$0xf]
        %v1147 = vld [vmem:[%s689 + $0x4c] sm:$0xf]
        %v1148 = vld [vmem:[%s689 + $0x50] sm:$0xf]
        %v1149 = vld [vmem:[%s689 + $0x54] sm:$0xf]
        %v1150 = vld [vmem:[%s689 + $0x58] sm:$0xf]
        %v1151 = vld [vmem:[%s689 + $0x5c] sm:$0xf]
        %v1152 = vld [vmem:[%s689 + $0x60] sm:$0xf]
        %v1153 = vld [vmem:[%s689 + $0x64] sm:$0xf]
        %v1154 = vld [vmem:[%s689 + $0x68] sm:$0xf]
        %v1155 = vld [vmem:[%s689 + $0x6c] sm:$0xf]
        %v1156 = vld [vmem:[%s689 + $0x70] sm:$0xf]
        %v1157 = vld [vmem:[%s689 + $0x74] sm:$0xf]
        %v1158 = vld [vmem:[%s689 + $0x78] sm:$0xf]
        %v1159 = vld [vmem:[%s689 + $0x7c] sm:$0xf]
        %v1160 = vld [vmem:[%s689 + $0x80] sm:$0xf]
        %v1161 = vld [vmem:[%s689 + $0x84] sm:$0xf]
        %v1162 = vld [vmem:[%s689 + $0x88] sm:$0xf]
        %v1163 = vld [vmem:[%s689 + $0x8c] sm:$0xf]
        %v1164 = vld [vmem:[%s689 + $0x90] sm:$0xf]
        %v1165 = vld [vmem:[%s689 + $0x94] sm:$0xf]
        %v1166 = vld [vmem:[%s689 + $0x98] sm:$0xf]
        %v1167 = vld [vmem:[%s689 + $0x9c] sm:$0xf]
        %v1168 = vld [vmem:[%s689 + $0xa0] sm:$0xf]
        %v1169 = vld [vmem:[%s689 + $0xa4] sm:$0xf]
        %v1170 = vld [vmem:[%s689 + $0xa8] sm:$0xf]
        %v1171 = vld [vmem:[%s689 + $0xac] sm:$0xf]
        %v1172 = vld [vmem:[%s689 + $0xb0] sm:$0xf]
        %v1173 = vld [vmem:[%s689 + $0xb4] sm:$0xf]
        %v1174 = vld [vmem:[%s689 + $0xb8] sm:$0xf]
        %v1175 = vld [vmem:[%s689 + $0xbc] sm:$0xf]
        %v1176 = vld [vmem:[%s689 + $0xc0] sm:$0xf]
        %v1177 = vld [vmem:[%s689 + $0xc4] sm:$0xf]
        %v1178 = vld [vmem:[%s689 + $0xc8] sm:$0xf]
        %v1179 = vld [vmem:[%s689 + $0xcc] sm:$0xf]
        %v1180 = vld [vmem:[%s689 + $0xd0] sm:$0xf]
        %v1181 = vld [vmem:[%s689 + $0xd4] sm:$0xf]
        %v1182 = vld [vmem:[%s689 + $0xd8] sm:$0xf]
        %v1183 = vld [vmem:[%s689 + $0xdc] sm:$0xf]
        %v1184 = vld [vmem:[%s689 + $0xe0] sm:$0xf]
        %v1185 = vld [vmem:[%s689 + $0xe4] sm:$0xf]
        %v1186 = vld [vmem:[%s689 + $0xe8] sm:$0xf]
        %v1187 = vld [vmem:[%s689 + $0xec] sm:$0xf]
        %v1188 = vld [vmem:[%s689 + $0xf0] sm:$0xf]
        %v1189 = vld [vmem:[%s689 + $0xf4] sm:$0xf]
        %v1190 = vld [vmem:[%s689 + $0xf8] sm:$0xf]
        %v1191 = vld [vmem:[%s689 + $0xfc] sm:$0xf]
        %v1192 = vld [vmem:[%s689 + $0x100] sm:$0xf]
        %v1193 = vld [vmem:[%s689 + $0x104] sm:$0xf]
        %v1194 = vld [vmem:[%s689 + $0x108] sm:$0xf]
        %v1195 = vld [vmem:[%s689 + $0x10c] sm:$0xf]
        %v1196 = vld [vmem:[%s689 + $0x110] sm:$0xf]
        %v1197 = vld [vmem:[%s689 + $0x114] sm:$0xf]
        %v1198 = vld [vmem:[%s689 + $0x118] sm:$0xf]
        %v1199 = vld [vmem:[%s689 + $0x11c] sm:$0xf]
        %v1200 = vld [vmem:[%s689 + $0x120] sm:$0xf]
        %v1201 = vld [vmem:[%s689 + $0x124] sm:$0xf]
        %v1202 = vld [vmem:[%s689 + $0x128] sm:$0xf]
        %v1203 = vld [vmem:[%s689 + $0x12c] sm:$0xf]
        %v1204 = vld [vmem:[%s689 + $0x130] sm:$0xf]
        %v1205 = vld [vmem:[%s689 + $0x134] sm:$0xf]
        %v1206 = vld [vmem:[%s689 + $0x138] sm:$0xf]
        %v1207 = vld [vmem:[%s689 + $0x13c] sm:$0xf]
        %v1208 = vld [vmem:[%s689 + $0x140] sm:$0xf]
        %v1209 = vld [vmem:[%s689 + $0x144] sm:$0xf]
        %v1210 = vld [vmem:[%s689 + $0x148] sm:$0xf]
        %v1211 = vld [vmem:[%s689 + $0x14c] sm:$0xf]
        %v1212 = vld [vmem:[%s689 + $0x150] sm:$0xf]
        %v1213 = vld [vmem:[%s689 + $0x154] sm:$0xf]
        %v1214 = vld [vmem:[%s689 + $0x158] sm:$0xf]
        %v1215 = vld [vmem:[%s689 + $0x15c] sm:$0xf]
        %v1216 = vld [vmem:[%s689 + $0x160] sm:$0xf]
        %v1217 = vld [vmem:[%s689 + $0x164] sm:$0xf]
        %v1218 = vld [vmem:[%s689 + $0x168] sm:$0xf]
        %v1219 = vld [vmem:[%s689 + $0x16c] sm:$0xf]
        %v1220 = vld [vmem:[%s689 + $0x170] sm:$0xf]
        %v1221 = vld [vmem:[%s689 + $0x174] sm:$0xf]
        %v1222 = vld [vmem:[%s689 + $0x178] sm:$0xf]
        %v1223 = vld [vmem:[%s689 + $0x17c] sm:$0xf]
        %v1224 = vld [vmem:[%s689 + $0x180] sm:$0xf]
        %v1225 = vld [vmem:[%s689 + $0x184] sm:$0xf]
        %v1226 = vld [vmem:[%s689 + $0x188] sm:$0xf]
        %v1227 = vld [vmem:[%s689 + $0x18c] sm:$0xf]
        %v1228 = vld [vmem:[%s689 + $0x190] sm:$0xf]
        %v1229 = vld [vmem:[%s689 + $0x194] sm:$0xf]
        %v1230 = vld [vmem:[%s689 + $0x198] sm:$0xf]
        %v1231 = vld [vmem:[%s689 + $0x19c] sm:$0xf]
        %v1232 = vld [vmem:[%s689 + $0x1a0] sm:$0xf]
        %v1233 = vld [vmem:[%s689 + $0x1a4] sm:$0xf]
        %v1234 = vld [vmem:[%s689 + $0x1a8] sm:$0xf]
        %v1235 = vld [vmem:[%s689 + $0x1ac] sm:$0xf]
        %v1236 = vld [vmem:[%s689 + $0x1b0] sm:$0xf]
        %v1237 = vld [vmem:[%s689 + $0x1b4] sm:$0xf]
        %v1238 = vld [vmem:[%s689 + $0x1b8] sm:$0xf]
        %v1239 = vld [vmem:[%s689 + $0x1bc] sm:$0xf]
        %v1240 = vld [vmem:[%s689 + $0x1c0] sm:$0xf]
        %v1241 = vld [vmem:[%s689 + $0x1c4] sm:$0xf]
        %v1242 = vld [vmem:[%s689 + $0x1c8] sm:$0xf]
        %v1243 = vld [vmem:[%s689 + $0x1cc] sm:$0xf]
        %v1244 = vld [vmem:[%s689 + $0x1d0] sm:$0xf]
        %v1245 = vld [vmem:[%s689 + $0x1d4] sm:$0xf]
        %v1246 = vld [vmem:[%s689 + $0x1d8] sm:$0xf]
        %v1247 = vld [vmem:[%s689 + $0x1dc] sm:$0xf]
        %v1248 = vld [vmem:[%s689 + $0x1e0] sm:$0xf]
        %v1249 = vld [vmem:[%s689 + $0x1e4] sm:$0xf]
        %v1250 = vld [vmem:[%s689 + $0x1e8] sm:$0xf]
        %v1251 = vld [vmem:[%s689 + $0x1ec] sm:$0xf]
        %v1252 = vld [vmem:[%s689 + $0x1f0] sm:$0xf]
        %v1253 = vld [vmem:[%s689 + $0x1f4] sm:$0xf]
        %v1254 = vld [vmem:[%s689 + $0x1f8] sm:$0xf]
        %v1255 = vld [vmem:[%s689 + $0x1fc] sm:$0xf]
        %v1256 = vunpack.c.l.bf16 %v1128
        %v1257 = vunpack.c.l.bf16 %v1129
        %v1258 = vunpack.c.l.bf16 %v1130
        %v1259 = vunpack.c.l.bf16 %v1131
        %v1260 = vunpack.c.l.bf16 %v1132
        %v1261 = vunpack.c.l.bf16 %v1133
        %v1262 = vunpack.c.l.bf16 %v1134
        %v1263 = vunpack.c.l.bf16 %v1135
        %v1264 = vunpack.c.l.bf16 %v1136
        %v1265 = vunpack.c.l.bf16 %v1137
        %v1266 = vunpack.c.l.bf16 %v1138
        %v1267 = vunpack.c.l.bf16 %v1139
        %v1268 = vunpack.c.l.bf16 %v1140
        %v1269 = vunpack.c.l.bf16 %v1141
        %v1270 = vunpack.c.l.bf16 %v1142
        %v1271 = vunpack.c.l.bf16 %v1143
        %v1272 = vunpack.c.l.bf16 %v1144
        %v1273 = vunpack.c.l.bf16 %v1145
        %v1274 = vunpack.c.l.bf16 %v1146
        %v1275 = vunpack.c.l.bf16 %v1147
        %v1276 = vunpack.c.l.bf16 %v1148
        %v1277 = vunpack.c.l.bf16 %v1149
        %v1278 = vunpack.c.l.bf16 %v1150
        %v1279 = vunpack.c.l.bf16 %v1151
        %v1280 = vunpack.c.l.bf16 %v1152
        %v1281 = vunpack.c.l.bf16 %v1153
        %v1282 = vunpack.c.l.bf16 %v1154
        %v1283 = vunpack.c.l.bf16 %v1155
        %v1284 = vunpack.c.l.bf16 %v1156
        %v1285 = vunpack.c.l.bf16 %v1157
        %v1286 = vunpack.c.l.bf16 %v1158
        %v1287 = vunpack.c.l.bf16 %v1159
        %v1288 = vunpack.c.l.bf16 %v1160
        %v1289 = vunpack.c.l.bf16 %v1161
        %v1290 = vunpack.c.l.bf16 %v1162
        %v1291 = vunpack.c.l.bf16 %v1163
        %v1292 = vunpack.c.l.bf16 %v1164
        %v1293 = vunpack.c.l.bf16 %v1165
        %v1294 = vunpack.c.l.bf16 %v1166
        %v1295 = vunpack.c.l.bf16 %v1167
        %v1296 = vunpack.c.l.bf16 %v1168
        %v1297 = vunpack.c.l.bf16 %v1169
        %v1298 = vunpack.c.l.bf16 %v1170
        %v1299 = vunpack.c.l.bf16 %v1171
        %v1300 = vunpack.c.l.bf16 %v1172
        %v1301 = vunpack.c.l.bf16 %v1173
        %v1302 = vunpack.c.l.bf16 %v1174
        %v1303 = vunpack.c.l.bf16 %v1175
        %v1304 = vunpack.c.l.bf16 %v1176
        %v1305 = vunpack.c.l.bf16 %v1177
        %v1306 = vunpack.c.l.bf16 %v1178
        %v1307 = vunpack.c.l.bf16 %v1179
        %v1308 = vunpack.c.l.bf16 %v1180
        %v1309 = vunpack.c.l.bf16 %v1181
        %v1310 = vunpack.c.l.bf16 %v1182
        %v1311 = vunpack.c.l.bf16 %v1183
        %v1312 = vunpack.c.l.bf16 %v1184
        %v1313 = vunpack.c.l.bf16 %v1185
        %v1314 = vunpack.c.l.bf16 %v1186
        %v1315 = vunpack.c.l.bf16 %v1187
        %v1316 = vunpack.c.l.bf16 %v1188
        %v1317 = vunpack.c.l.bf16 %v1189
        %v1318 = vunpack.c.l.bf16 %v1190
        %v1319 = vunpack.c.l.bf16 %v1191
        %v1320 = vunpack.c.l.bf16 %v1192
        %v1321 = vunpack.c.l.bf16 %v1193
        %v1322 = vunpack.c.l.bf16 %v1194
        %v1323 = vunpack.c.l.bf16 %v1195
        %v1324 = vunpack.c.l.bf16 %v1196
        %v1325 = vunpack.c.l.bf16 %v1197
        %v1326 = vunpack.c.l.bf16 %v1198
        %v1327 = vunpack.c.l.bf16 %v1199
        %v1328 = vunpack.c.l.bf16 %v1200
        %v1329 = vunpack.c.l.bf16 %v1201
        %v1330 = vunpack.c.l.bf16 %v1202
        %v1331 = vunpack.c.l.bf16 %v1203
        %v1332 = vunpack.c.l.bf16 %v1204
        %v1333 = vunpack.c.l.bf16 %v1205
        %v1334 = vunpack.c.l.bf16 %v1206
        %v1335 = vunpack.c.l.bf16 %v1207
        %v1336 = vunpack.c.l.bf16 %v1208
        %v1337 = vunpack.c.l.bf16 %v1209
        %v1338 = vunpack.c.l.bf16 %v1210
        %v1339 = vunpack.c.l.bf16 %v1211
        %v1340 = vunpack.c.l.bf16 %v1212
        %v1341 = vunpack.c.l.bf16 %v1213
        %v1342 = vunpack.c.l.bf16 %v1214
        %v1343 = vunpack.c.l.bf16 %v1215
        %v1344 = vunpack.c.l.bf16 %v1216
        %v1345 = vunpack.c.l.bf16 %v1217
        %v1346 = vunpack.c.l.bf16 %v1218
        %v1347 = vunpack.c.l.bf16 %v1219
        %v1348 = vunpack.c.l.bf16 %v1220
        %v1349 = vunpack.c.l.bf16 %v1221
        %v1350 = vunpack.c.l.bf16 %v1222
        %v1351 = vunpack.c.l.bf16 %v1223
        %v1352 = vunpack.c.l.bf16 %v1224
        %v1353 = vunpack.c.l.bf16 %v1225
        %v1354 = vunpack.c.l.bf16 %v1226
        %v1355 = vunpack.c.l.bf16 %v1227
        %v1356 = vunpack.c.l.bf16 %v1228
        %v1357 = vunpack.c.l.bf16 %v1229
        %v1358 = vunpack.c.l.bf16 %v1230
        %v1359 = vunpack.c.l.bf16 %v1231
        %v1360 = vunpack.c.l.bf16 %v1232
        %v1361 = vunpack.c.l.bf16 %v1233
        %v1362 = vunpack.c.l.bf16 %v1234
        %v1363 = vunpack.c.l.bf16 %v1235
        %v1364 = vunpack.c.l.bf16 %v1236
        %v1365 = vunpack.c.l.bf16 %v1237
        %v1366 = vunpack.c.l.bf16 %v1238
        %v1367 = vunpack.c.l.bf16 %v1239
        %v1368 = vunpack.c.l.bf16 %v1240
        %v1369 = vunpack.c.l.bf16 %v1241
        %v1370 = vunpack.c.l.bf16 %v1242
        %v1371 = vunpack.c.l.bf16 %v1243
        %v1372 = vunpack.c.l.bf16 %v1244
        %v1373 = vunpack.c.l.bf16 %v1245
        %v1374 = vunpack.c.l.bf16 %v1246
        %v1375 = vunpack.c.l.bf16 %v1247
        %v1376 = vunpack.c.l.bf16 %v1248
        %v1377 = vunpack.c.l.bf16 %v1249
        %v1378 = vunpack.c.l.bf16 %v1250
        %v1379 = vunpack.c.l.bf16 %v1251
        %v1380 = vunpack.c.l.bf16 %v1252
        %v1381 = vunpack.c.l.bf16 %v1253
        %v1382 = vunpack.c.l.bf16 %v1254
        %v1383 = vunpack.c.l.bf16 %v1255
        %v1384 = vlaneseq
        %v1385 = vshrl.u32 %v1384, 7
        %v1386 = vsub.s32 0, %v1385
        %v1387 = vrot.slane %v759, %v1386
        %v1388 = vlaneseq
        %v1389 = vshrl.u32 %v1388, 7
        %v1390 = vsub.s32 0, %v1389
        %v1391 = vrot.slane %v773, %v1390
        %v1392 = vlaneseq
        %v1393 = vshrl.u32 %v1392, 7
        %v1394 = vsub.s32 0, %v1393
        %v1395 = vrot.slane %v781, %v1394
        %v1396 = vlaneseq
        %v1397 = vshrl.u32 %v1396, 7
        %v1398 = vsub.s32 0, %v1397
        %v1399 = vrot.slane %v783, %v1398
        %v1400 = vlaneseq
        %v1401 = vshrl.u32 %v1400, 7
        %v1402 = vsub.s32 0, %v1401
        %v1403 = vrot.slane %v766, %v1402
        %v1404 = vlaneseq
        %v1405 = vshrl.u32 %v1404, 7
        %v1406 = vsub.s32 0, %v1405
        %v1407 = vrot.slane %v780, %v1406
        %v1408 = vlaneseq
        %v1409 = vshrl.u32 %v1408, 7
        %v1410 = vsub.s32 0, %v1409
        %v1411 = vrot.slane %v782, %v1410
        %v1412 = vlaneseq
        %v1413 = vshrl.u32 %v1412, 7
        %v1414 = vsub.s32 0, %v1413
        %v1415 = vrot.slane %v784, %v1414
        %v1416 = vlaneseq
        %v1417 = vshrl.u32 %v1416, 7
        %v1418 = vsub.s32 0, %v1417
        %v1419 = vrot.slane %v808, %v1418
        %v1420 = vlaneseq
        %v1421 = vshrl.u32 %v1420, 7
        %v1422 = vsub.s32 0, %v1421
        %v1423 = vrot.slane %v822, %v1422
        %v1424 = vlaneseq
        %v1425 = vshrl.u32 %v1424, 7
        %v1426 = vsub.s32 0, %v1425
        %v1427 = vrot.slane %v830, %v1426
        %v1428 = vlaneseq
        %v1429 = vshrl.u32 %v1428, 7
        %v1430 = vsub.s32 0, %v1429
        %v1431 = vrot.slane %v832, %v1430
        %v1432 = vlaneseq
        %v1433 = vshrl.u32 %v1432, 7
        %v1434 = vsub.s32 0, %v1433
        %v1435 = vrot.slane %v815, %v1434
        %v1436 = vlaneseq
        %v1437 = vshrl.u32 %v1436, 7
        %v1438 = vsub.s32 0, %v1437
        %v1439 = vrot.slane %v829, %v1438
        %v1440 = vlaneseq
        %v1441 = vshrl.u32 %v1440, 7
        %v1442 = vsub.s32 0, %v1441
        %v1443 = vrot.slane %v831, %v1442
        %v1444 = vlaneseq
        %v1445 = vshrl.u32 %v1444, 7
        %v1446 = vsub.s32 0, %v1445
        %v1447 = vrot.slane %v833, %v1446
        %v1448 = vlaneseq
        %v1449 = vshrl.u32 %v1448, 7
        %v1450 = vsub.s32 0, %v1449
        %v1451 = vrot.slane %v857, %v1450
        %v1452 = vlaneseq
        %v1453 = vshrl.u32 %v1452, 7
        %v1454 = vsub.s32 0, %v1453
        %v1455 = vrot.slane %v871, %v1454
        %v1456 = vlaneseq
        %v1457 = vshrl.u32 %v1456, 7
        %v1458 = vsub.s32 0, %v1457
        %v1459 = vrot.slane %v879, %v1458
        %v1460 = vlaneseq
        %v1461 = vshrl.u32 %v1460, 7
        %v1462 = vsub.s32 0, %v1461
        %v1463 = vrot.slane %v881, %v1462
        %v1464 = vlaneseq
        %v1465 = vshrl.u32 %v1464, 7
        %v1466 = vsub.s32 0, %v1465
        %v1467 = vrot.slane %v864, %v1466
        %v1468 = vlaneseq
        %v1469 = vshrl.u32 %v1468, 7
        %v1470 = vsub.s32 0, %v1469
        %v1471 = vrot.slane %v878, %v1470
        %v1472 = vlaneseq
        %v1473 = vshrl.u32 %v1472, 7
        %v1474 = vsub.s32 0, %v1473
        %v1475 = vrot.slane %v880, %v1474
        %v1476 = vlaneseq
        %v1477 = vshrl.u32 %v1476, 7
        %v1478 = vsub.s32 0, %v1477
        %v1479 = vrot.slane %v882, %v1478
        %v1480 = vlaneseq
        %v1481 = vshrl.u32 %v1480, 7
        %v1482 = vsub.s32 0, %v1481
        %v1483 = vrot.slane %v906, %v1482
        %v1484 = vlaneseq
        %v1485 = vshrl.u32 %v1484, 7
        %v1486 = vsub.s32 0, %v1485
        %v1487 = vrot.slane %v920, %v1486
        %v1488 = vlaneseq
        %v1489 = vshrl.u32 %v1488, 7
        %v1490 = vsub.s32 0, %v1489
        %v1491 = vrot.slane %v928, %v1490
        %v1492 = vlaneseq
        %v1493 = vshrl.u32 %v1492, 7
        %v1494 = vsub.s32 0, %v1493
        %v1495 = vrot.slane %v930, %v1494
        %v1496 = vlaneseq
        %v1497 = vshrl.u32 %v1496, 7
        %v1498 = vsub.s32 0, %v1497
        %v1499 = vrot.slane %v913, %v1498
        %v1500 = vlaneseq
        %v1501 = vshrl.u32 %v1500, 7
        %v1502 = vsub.s32 0, %v1501
        %v1503 = vrot.slane %v927, %v1502
        %v1504 = vlaneseq
        %v1505 = vshrl.u32 %v1504, 7
        %v1506 = vsub.s32 0, %v1505
        %v1507 = vrot.slane %v929, %v1506
        %v1508 = vlaneseq
        %v1509 = vshrl.u32 %v1508, 7
        %v1510 = vsub.s32 0, %v1509
        %v1511 = vrot.slane %v931, %v1510
        %v1512 = vlaneseq
        %v1513 = vshrl.u32 %v1512, 7
        %v1514 = vsub.s32 0, %v1513
        %v1515 = vrot.slane %v955, %v1514
        %v1516 = vlaneseq
        %v1517 = vshrl.u32 %v1516, 7
        %v1518 = vsub.s32 0, %v1517
        %v1519 = vrot.slane %v969, %v1518
        %v1520 = vlaneseq
        %v1521 = vshrl.u32 %v1520, 7
        %v1522 = vsub.s32 0, %v1521
        %v1523 = vrot.slane %v977, %v1522
        %v1524 = vlaneseq
        %v1525 = vshrl.u32 %v1524, 7
        %v1526 = vsub.s32 0, %v1525
        %v1527 = vrot.slane %v979, %v1526
        %v1528 = vlaneseq
        %v1529 = vshrl.u32 %v1528, 7
        %v1530 = vsub.s32 0, %v1529
        %v1531 = vrot.slane %v962, %v1530
        %v1532 = vlaneseq
        %v1533 = vshrl.u32 %v1532, 7
        %v1534 = vsub.s32 0, %v1533
        %v1535 = vrot.slane %v976, %v1534
        %v1536 = vlaneseq
        %v1537 = vshrl.u32 %v1536, 7
        %v1538 = vsub.s32 0, %v1537
        %v1539 = vrot.slane %v978, %v1538
        %v1540 = vlaneseq
        %v1541 = vshrl.u32 %v1540, 7
        %v1542 = vsub.s32 0, %v1541
        %v1543 = vrot.slane %v980, %v1542
        %v1544 = vlaneseq
        %v1545 = vshrl.u32 %v1544, 7
        %v1546 = vsub.s32 0, %v1545
        %v1547 = vrot.slane %v1004, %v1546
        %v1548 = vlaneseq
        %v1549 = vshrl.u32 %v1548, 7
        %v1550 = vsub.s32 0, %v1549
        %v1551 = vrot.slane %v1018, %v1550
        %v1552 = vlaneseq
        %v1553 = vshrl.u32 %v1552, 7
        %v1554 = vsub.s32 0, %v1553
        %v1555 = vrot.slane %v1026, %v1554
        %v1556 = vlaneseq
        %v1557 = vshrl.u32 %v1556, 7
        %v1558 = vsub.s32 0, %v1557
        %v1559 = vrot.slane %v1028, %v1558
        %v1560 = vlaneseq
        %v1561 = vshrl.u32 %v1560, 7
        %v1562 = vsub.s32 0, %v1561
        %v1563 = vrot.slane %v1011, %v1562
        %v1564 = vlaneseq
        %v1565 = vshrl.u32 %v1564, 7
        %v1566 = vsub.s32 0, %v1565
        %v1567 = vrot.slane %v1025, %v1566
        %v1568 = vlaneseq
        %v1569 = vshrl.u32 %v1568, 7
        %v1570 = vsub.s32 0, %v1569
        %v1571 = vrot.slane %v1027, %v1570
        %v1572 = vlaneseq
        %v1573 = vshrl.u32 %v1572, 7
        %v1574 = vsub.s32 0, %v1573
        %v1575 = vrot.slane %v1029, %v1574
        %v1576 = vlaneseq
        %v1577 = vshrl.u32 %v1576, 7
        %v1578 = vsub.s32 0, %v1577
        %v1579 = vrot.slane %v1053, %v1578
        %v1580 = vlaneseq
        %v1581 = vshrl.u32 %v1580, 7
        %v1582 = vsub.s32 0, %v1581
        %v1583 = vrot.slane %v1067, %v1582
        %v1584 = vlaneseq
        %v1585 = vshrl.u32 %v1584, 7
        %v1586 = vsub.s32 0, %v1585
        %v1587 = vrot.slane %v1075, %v1586
        %v1588 = vlaneseq
        %v1589 = vshrl.u32 %v1588, 7
        %v1590 = vsub.s32 0, %v1589
        %v1591 = vrot.slane %v1077, %v1590
        %v1592 = vlaneseq
        %v1593 = vshrl.u32 %v1592, 7
        %v1594 = vsub.s32 0, %v1593
        %v1595 = vrot.slane %v1060, %v1594
        %v1596 = vlaneseq
        %v1597 = vshrl.u32 %v1596, 7
        %v1598 = vsub.s32 0, %v1597
        %v1599 = vrot.slane %v1074, %v1598
        %v1600 = vlaneseq
        %v1601 = vshrl.u32 %v1600, 7
        %v1602 = vsub.s32 0, %v1601
        %v1603 = vrot.slane %v1076, %v1602
        %v1604 = vlaneseq
        %v1605 = vshrl.u32 %v1604, 7
        %v1606 = vsub.s32 0, %v1605
        %v1607 = vrot.slane %v1078, %v1606
        %v1608 = vlaneseq
        %v1609 = vshrl.u32 %v1608, 7
        %v1610 = vsub.s32 0, %v1609
        %v1611 = vrot.slane %v1102, %v1610
        %v1612 = vlaneseq
        %v1613 = vshrl.u32 %v1612, 7
        %v1614 = vsub.s32 0, %v1613
        %v1615 = vrot.slane %v1116, %v1614
        %v1616 = vlaneseq
        %v1617 = vshrl.u32 %v1616, 7
        %v1618 = vsub.s32 0, %v1617
        %v1619 = vrot.slane %v1124, %v1618
        %v1620 = vlaneseq
        %v1621 = vshrl.u32 %v1620, 7
        %v1622 = vsub.s32 0, %v1621
        %v1623 = vrot.slane %v1126, %v1622
        %v1624 = vlaneseq
        %v1625 = vshrl.u32 %v1624, 7
        %v1626 = vsub.s32 0, %v1625
        %v1627 = vrot.slane %v1109, %v1626
        %v1628 = vlaneseq
        %v1629 = vshrl.u32 %v1628, 7
        %v1630 = vsub.s32 0, %v1629
        %v1631 = vrot.slane %v1123, %v1630
        %v1632 = vlaneseq
        %v1633 = vshrl.u32 %v1632, 7
        %v1634 = vsub.s32 0, %v1633
        %v1635 = vrot.slane %v1125, %v1634
        %v1636 = vlaneseq
        %v1637 = vshrl.u32 %v1636, 7
        %v1638 = vsub.s32 0, %v1637
        %v1639 = vrot.slane %v1127, %v1638
        %1640 = vset.pattern.permute.xlu0 0
        %1641 = vperm.xlu0 %1640, %v1387
        %v1642 = vpop.permute.xlu0 %1641
        %1644 = vset.pattern.permute.xlu0 0
        %1645 = vperm.xlu0 %1644, %v1391
        %v1646 = vpop.permute.xlu0 %1645
        %1648 = vset.pattern.permute.xlu0 0
        %1649 = vperm.xlu0 %1648, %v1395
        %v1650 = vpop.permute.xlu0 %1649
        %1652 = vset.pattern.permute.xlu0 0
        %1653 = vperm.xlu0 %1652, %v1399
        %v1654 = vpop.permute.xlu0 %1653
        %1656 = vset.pattern.permute.xlu0 0
        %1657 = vperm.xlu0 %1656, %v1403
        %v1658 = vpop.permute.xlu0 %1657
        %1660 = vset.pattern.permute.xlu0 0
        %1661 = vperm.xlu0 %1660, %v1407
        %v1662 = vpop.permute.xlu0 %1661
        %1664 = vset.pattern.permute.xlu0 0
        %1665 = vperm.xlu0 %1664, %v1411
        %v1666 = vpop.permute.xlu0 %1665
        %1668 = vset.pattern.permute.xlu0 0
        %1669 = vperm.xlu0 %1668, %v1415
        %v1670 = vpop.permute.xlu0 %1669
        %1672 = vset.pattern.permute.xlu0 0
        %1673 = vperm.xlu0 %1672, %v1419
        %v1674 = vpop.permute.xlu0 %1673
        %1676 = vset.pattern.permute.xlu0 0
        %1677 = vperm.xlu0 %1676, %v1423
        %v1678 = vpop.permute.xlu0 %1677
        %1680 = vset.pattern.permute.xlu0 0
        %1681 = vperm.xlu0 %1680, %v1427
        %v1682 = vpop.permute.xlu0 %1681
        %1684 = vset.pattern.permute.xlu0 0
        %1685 = vperm.xlu0 %1684, %v1431
        %v1686 = vpop.permute.xlu0 %1685
        %1688 = vset.pattern.permute.xlu0 0
        %1689 = vperm.xlu0 %1688, %v1435
        %v1690 = vpop.permute.xlu0 %1689
        %1692 = vset.pattern.permute.xlu0 0
        %1693 = vperm.xlu0 %1692, %v1439
        %v1694 = vpop.permute.xlu0 %1693
        %1696 = vset.pattern.permute.xlu0 0
        %1697 = vperm.xlu0 %1696, %v1443
        %v1698 = vpop.permute.xlu0 %1697
        %1700 = vset.pattern.permute.xlu0 0
        %1701 = vperm.xlu0 %1700, %v1447
        %v1702 = vpop.permute.xlu0 %1701
        %1704 = vset.pattern.permute.xlu0 0
        %1705 = vperm.xlu0 %1704, %v1451
        %v1706 = vpop.permute.xlu0 %1705
        %1708 = vset.pattern.permute.xlu0 0
        %1709 = vperm.xlu0 %1708, %v1455
        %v1710 = vpop.permute.xlu0 %1709
        %1712 = vset.pattern.permute.xlu0 0
        %1713 = vperm.xlu0 %1712, %v1459
        %v1714 = vpop.permute.xlu0 %1713
        %1716 = vset.pattern.permute.xlu0 0
        %1717 = vperm.xlu0 %1716, %v1463
        %v1718 = vpop.permute.xlu0 %1717
        %1720 = vset.pattern.permute.xlu0 0
        %1721 = vperm.xlu0 %1720, %v1467
        %v1722 = vpop.permute.xlu0 %1721
        %1724 = vset.pattern.permute.xlu0 0
        %1725 = vperm.xlu0 %1724, %v1471
        %v1726 = vpop.permute.xlu0 %1725
        %1728 = vset.pattern.permute.xlu0 0
        %1729 = vperm.xlu0 %1728, %v1475
        %v1730 = vpop.permute.xlu0 %1729
        %1732 = vset.pattern.permute.xlu0 0
        %1733 = vperm.xlu0 %1732, %v1479
        %v1734 = vpop.permute.xlu0 %1733
        %1736 = vset.pattern.permute.xlu0 0
        %1737 = vperm.xlu0 %1736, %v1483
        %v1738 = vpop.permute.xlu0 %1737
        %1740 = vset.pattern.permute.xlu0 0
        %1741 = vperm.xlu0 %1740, %v1487
        %v1742 = vpop.permute.xlu0 %1741
        %1744 = vset.pattern.permute.xlu0 0
        %1745 = vperm.xlu0 %1744, %v1491
        %v1746 = vpop.permute.xlu0 %1745
        %1748 = vset.pattern.permute.xlu0 0
        %1749 = vperm.xlu0 %1748, %v1495
        %v1750 = vpop.permute.xlu0 %1749
        %1752 = vset.pattern.permute.xlu0 0
        %1753 = vperm.xlu0 %1752, %v1499
        %v1754 = vpop.permute.xlu0 %1753
        %1756 = vset.pattern.permute.xlu0 0
        %1757 = vperm.xlu0 %1756, %v1503
        %v1758 = vpop.permute.xlu0 %1757
        %1760 = vset.pattern.permute.xlu0 0
        %1761 = vperm.xlu0 %1760, %v1507
        %v1762 = vpop.permute.xlu0 %1761
        %1764 = vset.pattern.permute.xlu0 0
        %1765 = vperm.xlu0 %1764, %v1511
        %v1766 = vpop.permute.xlu0 %1765
        %1768 = vset.pattern.permute.xlu0 0
        %1769 = vperm.xlu0 %1768, %v1515
        %v1770 = vpop.permute.xlu0 %1769
        %1772 = vset.pattern.permute.xlu0 0
        %1773 = vperm.xlu0 %1772, %v1519
        %v1774 = vpop.permute.xlu0 %1773
        %1776 = vset.pattern.permute.xlu0 0
        %1777 = vperm.xlu0 %1776, %v1523
        %v1778 = vpop.permute.xlu0 %1777
        %1780 = vset.pattern.permute.xlu0 0
        %1781 = vperm.xlu0 %1780, %v1527
        %v1782 = vpop.permute.xlu0 %1781
        %1784 = vset.pattern.permute.xlu0 0
        %1785 = vperm.xlu0 %1784, %v1531
        %v1786 = vpop.permute.xlu0 %1785
        %1788 = vset.pattern.permute.xlu0 0
        %1789 = vperm.xlu0 %1788, %v1535
        %v1790 = vpop.permute.xlu0 %1789
        %1792 = vset.pattern.permute.xlu0 0
        %1793 = vperm.xlu0 %1792, %v1539
        %v1794 = vpop.permute.xlu0 %1793
        %1796 = vset.pattern.permute.xlu0 0
        %1797 = vperm.xlu0 %1796, %v1543
        %v1798 = vpop.permute.xlu0 %1797
        %1800 = vset.pattern.permute.xlu0 0
        %1801 = vperm.xlu0 %1800, %v1547
        %v1802 = vpop.permute.xlu0 %1801
        %1804 = vset.pattern.permute.xlu0 0
        %1805 = vperm.xlu0 %1804, %v1551
        %v1806 = vpop.permute.xlu0 %1805
        %1808 = vset.pattern.permute.xlu0 0
        %1809 = vperm.xlu0 %1808, %v1555
        %v1810 = vpop.permute.xlu0 %1809
        %1812 = vset.pattern.permute.xlu0 0
        %1813 = vperm.xlu0 %1812, %v1559
        %v1814 = vpop.permute.xlu0 %1813
        %1816 = vset.pattern.permute.xlu0 0
        %1817 = vperm.xlu0 %1816, %v1563
        %v1818 = vpop.permute.xlu0 %1817
        %1820 = vset.pattern.permute.xlu0 0
        %1821 = vperm.xlu0 %1820, %v1567
        %v1822 = vpop.permute.xlu0 %1821
        %1824 = vset.pattern.permute.xlu0 0
        %1825 = vperm.xlu0 %1824, %v1571
        %v1826 = vpop.permute.xlu0 %1825
        %1828 = vset.pattern.permute.xlu0 0
        %1829 = vperm.xlu0 %1828, %v1575
        %v1830 = vpop.permute.xlu0 %1829
        %1832 = vset.pattern.permute.xlu0 0
        %1833 = vperm.xlu0 %1832, %v1579
        %v1834 = vpop.permute.xlu0 %1833
        %1836 = vset.pattern.permute.xlu0 0
        %1837 = vperm.xlu0 %1836, %v1583
        %v1838 = vpop.permute.xlu0 %1837
        %1840 = vset.pattern.permute.xlu0 0
        %1841 = vperm.xlu0 %1840, %v1587
        %v1842 = vpop.permute.xlu0 %1841
        %1844 = vset.pattern.permute.xlu0 0
        %1845 = vperm.xlu0 %1844, %v1591
        %v1846 = vpop.permute.xlu0 %1845
        %1848 = vset.pattern.permute.xlu0 0
        %1849 = vperm.xlu0 %1848, %v1595
        %v1850 = vpop.permute.xlu0 %1849
        %1852 = vset.pattern.permute.xlu0 0
        %1853 = vperm.xlu0 %1852, %v1599
        %v1854 = vpop.permute.xlu0 %1853
        %1856 = vset.pattern.permute.xlu0 0
        %1857 = vperm.xlu0 %1856, %v1603
        %v1858 = vpop.permute.xlu0 %1857
        %1860 = vset.pattern.permute.xlu0 0
        %1861 = vperm.xlu0 %1860, %v1607
        %v1862 = vpop.permute.xlu0 %1861
        %1864 = vset.pattern.permute.xlu0 0
        %1865 = vperm.xlu0 %1864, %v1611
        %v1866 = vpop.permute.xlu0 %1865
        %1868 = vset.pattern.permute.xlu0 0
        %1869 = vperm.xlu0 %1868, %v1615
        %v1870 = vpop.permute.xlu0 %1869
        %1872 = vset.pattern.permute.xlu0 0
        %1873 = vperm.xlu0 %1872, %v1619
        %v1874 = vpop.permute.xlu0 %1873
        %1876 = vset.pattern.permute.xlu0 0
        %1877 = vperm.xlu0 %1876, %v1623
        %v1878 = vpop.permute.xlu0 %1877
        %1880 = vset.pattern.permute.xlu0 0
        %1881 = vperm.xlu0 %1880, %v1627
        %v1882 = vpop.permute.xlu0 %1881
        %1884 = vset.pattern.permute.xlu0 0
        %1885 = vperm.xlu0 %1884, %v1631
        %v1886 = vpop.permute.xlu0 %1885
        %1888 = vset.pattern.permute.xlu0 0
        %1889 = vperm.xlu0 %1888, %v1635
        %v1890 = vpop.permute.xlu0 %1889
        %1892 = vset.pattern.permute.xlu0 0
        %1893 = vperm.xlu0 %1892, %v1639
        %v1894 = vpop.permute.xlu0 %1893
        %v1896 = vmul.f32 %v1256, %v1642
        %v1897 = vmul.f32 %v1257, %v1642
        %v1898 = vmul.f32 %v1258, %v1646
        %v1899 = vmul.f32 %v1259, %v1646
        %v1900 = vmul.f32 %v1260, %v1650
        %v1901 = vmul.f32 %v1261, %v1650
        %v1902 = vmul.f32 %v1262, %v1654
        %v1903 = vmul.f32 %v1263, %v1654
        %v1904 = vmul.f32 %v1264, %v1658
        %v1905 = vmul.f32 %v1265, %v1658
        %v1906 = vmul.f32 %v1266, %v1662
        %v1907 = vmul.f32 %v1267, %v1662
        %v1908 = vmul.f32 %v1268, %v1666
        %v1909 = vmul.f32 %v1269, %v1666
        %v1910 = vmul.f32 %v1270, %v1670
        %v1911 = vmul.f32 %v1271, %v1670
        %v1912 = vmul.f32 %v1272, %v1674
        %v1913 = vmul.f32 %v1273, %v1674
        %v1914 = vmul.f32 %v1274, %v1678
        %v1915 = vmul.f32 %v1275, %v1678
        %v1916 = vmul.f32 %v1276, %v1682
        %v1917 = vmul.f32 %v1277, %v1682
        %v1918 = vmul.f32 %v1278, %v1686
        %v1919 = vmul.f32 %v1279, %v1686
        %v1920 = vmul.f32 %v1280, %v1690
        %v1921 = vmul.f32 %v1281, %v1690
        %v1922 = vmul.f32 %v1282, %v1694
        %v1923 = vmul.f32 %v1283, %v1694
        %v1924 = vmul.f32 %v1284, %v1698
        %v1925 = vmul.f32 %v1285, %v1698
        %v1926 = vmul.f32 %v1286, %v1702
        %v1927 = vmul.f32 %v1287, %v1702
        %v1928 = vmul.f32 %v1288, %v1706
        %v1929 = vmul.f32 %v1289, %v1706
        %v1930 = vmul.f32 %v1290, %v1710
        %v1931 = vmul.f32 %v1291, %v1710
        %v1932 = vmul.f32 %v1292, %v1714
        %v1933 = vmul.f32 %v1293, %v1714
        %v1934 = vmul.f32 %v1294, %v1718
        %v1935 = vmul.f32 %v1295, %v1718
        %v1936 = vmul.f32 %v1296, %v1722
        %v1937 = vmul.f32 %v1297, %v1722
        %v1938 = vmul.f32 %v1298, %v1726
        %v1939 = vmul.f32 %v1299, %v1726
        %v1940 = vmul.f32 %v1300, %v1730
        %v1941 = vmul.f32 %v1301, %v1730
        %v1942 = vmul.f32 %v1302, %v1734
        %v1943 = vmul.f32 %v1303, %v1734
        %v1944 = vmul.f32 %v1304, %v1738
        %v1945 = vmul.f32 %v1305, %v1738
        %v1946 = vmul.f32 %v1306, %v1742
        %v1947 = vmul.f32 %v1307, %v1742
        %v1948 = vmul.f32 %v1308, %v1746
        %v1949 = vmul.f32 %v1309, %v1746
        %v1950 = vmul.f32 %v1310, %v1750
        %v1951 = vmul.f32 %v1311, %v1750
        %v1952 = vmul.f32 %v1312, %v1754
        %v1953 = vmul.f32 %v1313, %v1754
        %v1954 = vmul.f32 %v1314, %v1758
        %v1955 = vmul.f32 %v1315, %v1758
        %v1956 = vmul.f32 %v1316, %v1762
        %v1957 = vmul.f32 %v1317, %v1762
        %v1958 = vmul.f32 %v1318, %v1766
        %v1959 = vmul.f32 %v1319, %v1766
        %v1960 = vmul.f32 %v1320, %v1770
        %v1961 = vmul.f32 %v1321, %v1770
        %v1962 = vmul.f32 %v1322, %v1774
        %v1963 = vmul.f32 %v1323, %v1774
        %v1964 = vmul.f32 %v1324, %v1778
        %v1965 = vmul.f32 %v1325, %v1778
        %v1966 = vmul.f32 %v1326, %v1782
        %v1967 = vmul.f32 %v1327, %v1782
        %v1968 = vmul.f32 %v1328, %v1786
        %v1969 = vmul.f32 %v1329, %v1786
        %v1970 = vmul.f32 %v1330, %v1790
        %v1971 = vmul.f32 %v1331, %v1790
        %v1972 = vmul.f32 %v1332, %v1794
        %v1973 = vmul.f32 %v1333, %v1794
        %v1974 = vmul.f32 %v1334, %v1798
        %v1975 = vmul.f32 %v1335, %v1798
        %v1976 = vmul.f32 %v1336, %v1802
        %v1977 = vmul.f32 %v1337, %v1802
        %v1978 = vmul.f32 %v1338, %v1806
        %v1979 = vmul.f32 %v1339, %v1806
        %v1980 = vmul.f32 %v1340, %v1810
        %v1981 = vmul.f32 %v1341, %v1810
        %v1982 = vmul.f32 %v1342, %v1814
        %v1983 = vmul.f32 %v1343, %v1814
        %v1984 = vmul.f32 %v1344, %v1818
        %v1985 = vmul.f32 %v1345, %v1818
        %v1986 = vmul.f32 %v1346, %v1822
        %v1987 = vmul.f32 %v1347, %v1822
        %v1988 = vmul.f32 %v1348, %v1826
        %v1989 = vmul.f32 %v1349, %v1826
        %v1990 = vmul.f32 %v1350, %v1830
        %v1991 = vmul.f32 %v1351, %v1830
        %v1992 = vmul.f32 %v1352, %v1834
        %v1993 = vmul.f32 %v1353, %v1834
        %v1994 = vmul.f32 %v1354, %v1838
        %v1995 = vmul.f32 %v1355, %v1838
        %v1996 = vmul.f32 %v1356, %v1842
        %v1997 = vmul.f32 %v1357, %v1842
        %v1998 = vmul.f32 %v1358, %v1846
        %v1999 = vmul.f32 %v1359, %v1846
        %v2000 = vmul.f32 %v1360, %v1850
        %v2001 = vmul.f32 %v1361, %v1850
        %v2002 = vmul.f32 %v1362, %v1854
        %v2003 = vmul.f32 %v1363, %v1854
        %v2004 = vmul.f32 %v1364, %v1858
        %v2005 = vmul.f32 %v1365, %v1858
        %v2006 = vmul.f32 %v1366, %v1862
        %v2007 = vmul.f32 %v1367, %v1862
        %v2008 = vmul.f32 %v1368, %v1866
        %v2009 = vmul.f32 %v1369, %v1866
        %v2010 = vmul.f32 %v1370, %v1870
        %v2011 = vmul.f32 %v1371, %v1870
        %v2012 = vmul.f32 %v1372, %v1874
        %v2013 = vmul.f32 %v1373, %v1874
        %v2014 = vmul.f32 %v1374, %v1878
        %v2015 = vmul.f32 %v1375, %v1878
        %v2016 = vmul.f32 %v1376, %v1882
        %v2017 = vmul.f32 %v1377, %v1882
        %v2018 = vmul.f32 %v1378, %v1886
        %v2019 = vmul.f32 %v1379, %v1886
        %v2020 = vmul.f32 %v1380, %v1890
        %v2021 = vmul.f32 %v1381, %v1890
        %v2022 = vmul.f32 %v1382, %v1894
        %v2023 = vmul.f32 %v1383, %v1894
        %2024 = vset.pattern.permute.xlu0 1
        %2025 = vperm.xlu0 %2024, %v1387
        %v2026 = vpop.permute.xlu0 %2025
        %2028 = vset.pattern.permute.xlu0 1
        %2029 = vperm.xlu0 %2028, %v1391
        %v2030 = vpop.permute.xlu0 %2029
        %2032 = vset.pattern.permute.xlu0 1
        %2033 = vperm.xlu0 %2032, %v1395
        %v2034 = vpop.permute.xlu0 %2033
        %2036 = vset.pattern.permute.xlu0 1
        %2037 = vperm.xlu0 %2036, %v1399
        %v2038 = vpop.permute.xlu0 %2037
        %2040 = vset.pattern.permute.xlu0 1
        %2041 = vperm.xlu0 %2040, %v1403
        %v2042 = vpop.permute.xlu0 %2041
        %2044 = vset.pattern.permute.xlu0 1
        %2045 = vperm.xlu0 %2044, %v1407
        %v2046 = vpop.permute.xlu0 %2045
        %2048 = vset.pattern.permute.xlu0 1
        %2049 = vperm.xlu0 %2048, %v1411
        %v2050 = vpop.permute.xlu0 %2049
        %2052 = vset.pattern.permute.xlu0 1
        %2053 = vperm.xlu0 %2052, %v1415
        %v2054 = vpop.permute.xlu0 %2053
        %2056 = vset.pattern.permute.xlu0 1
        %2057 = vperm.xlu0 %2056, %v1419
        %v2058 = vpop.permute.xlu0 %2057
        %2060 = vset.pattern.permute.xlu0 1
        %2061 = vperm.xlu0 %2060, %v1423
        %v2062 = vpop.permute.xlu0 %2061
        %2064 = vset.pattern.permute.xlu0 1
        %2065 = vperm.xlu0 %2064, %v1427
        %v2066 = vpop.permute.xlu0 %2065
        %2068 = vset.pattern.permute.xlu0 1
        %2069 = vperm.xlu0 %2068, %v1431
        %v2070 = vpop.permute.xlu0 %2069
        %2072 = vset.pattern.permute.xlu0 1
        %2073 = vperm.xlu0 %2072, %v1435
        %v2074 = vpop.permute.xlu0 %2073
        %2076 = vset.pattern.permute.xlu0 1
        %2077 = vperm.xlu0 %2076, %v1439
        %v2078 = vpop.permute.xlu0 %2077
        %2080 = vset.pattern.permute.xlu0 1
        %2081 = vperm.xlu0 %2080, %v1443
        %v2082 = vpop.permute.xlu0 %2081
        %2084 = vset.pattern.permute.xlu0 1
        %2085 = vperm.xlu0 %2084, %v1447
        %v2086 = vpop.permute.xlu0 %2085
        %2088 = vset.pattern.permute.xlu0 1
        %2089 = vperm.xlu0 %2088, %v1451
        %v2090 = vpop.permute.xlu0 %2089
        %2092 = vset.pattern.permute.xlu0 1
        %2093 = vperm.xlu0 %2092, %v1455
        %v2094 = vpop.permute.xlu0 %2093
        %2096 = vset.pattern.permute.xlu0 1
        %2097 = vperm.xlu0 %2096, %v1459
        %v2098 = vpop.permute.xlu0 %2097
        %2100 = vset.pattern.permute.xlu0 1
        %2101 = vperm.xlu0 %2100, %v1463
        %v2102 = vpop.permute.xlu0 %2101
        %2104 = vset.pattern.permute.xlu0 1
        %2105 = vperm.xlu0 %2104, %v1467
        %v2106 = vpop.permute.xlu0 %2105
        %2108 = vset.pattern.permute.xlu0 1
        %2109 = vperm.xlu0 %2108, %v1471
        %v2110 = vpop.permute.xlu0 %2109
        %2112 = vset.pattern.permute.xlu0 1
        %2113 = vperm.xlu0 %2112, %v1475
        %v2114 = vpop.permute.xlu0 %2113
        %2116 = vset.pattern.permute.xlu0 1
        %2117 = vperm.xlu0 %2116, %v1479
        %v2118 = vpop.permute.xlu0 %2117
        %2120 = vset.pattern.permute.xlu0 1
        %2121 = vperm.xlu0 %2120, %v1483
        %v2122 = vpop.permute.xlu0 %2121
        %2124 = vset.pattern.permute.xlu0 1
        %2125 = vperm.xlu0 %2124, %v1487
        %v2126 = vpop.permute.xlu0 %2125
        %2128 = vset.pattern.permute.xlu0 1
        %2129 = vperm.xlu0 %2128, %v1491
        %v2130 = vpop.permute.xlu0 %2129
        %2132 = vset.pattern.permute.xlu0 1
        %2133 = vperm.xlu0 %2132, %v1495
        %v2134 = vpop.permute.xlu0 %2133
        %2136 = vset.pattern.permute.xlu0 1
        %2137 = vperm.xlu0 %2136, %v1499
        %v2138 = vpop.permute.xlu0 %2137
        %2140 = vset.pattern.permute.xlu0 1
        %2141 = vperm.xlu0 %2140, %v1503
        %v2142 = vpop.permute.xlu0 %2141
        %2144 = vset.pattern.permute.xlu0 1
        %2145 = vperm.xlu0 %2144, %v1507
        %v2146 = vpop.permute.xlu0 %2145
        %2148 = vset.pattern.permute.xlu0 1
        %2149 = vperm.xlu0 %2148, %v1511
        %v2150 = vpop.permute.xlu0 %2149
        %2152 = vset.pattern.permute.xlu0 1
        %2153 = vperm.xlu0 %2152, %v1515
        %v2154 = vpop.permute.xlu0 %2153
        %2156 = vset.pattern.permute.xlu0 1
        %2157 = vperm.xlu0 %2156, %v1519
        %v2158 = vpop.permute.xlu0 %2157
        %2160 = vset.pattern.permute.xlu0 1
        %2161 = vperm.xlu0 %2160, %v1523
        %v2162 = vpop.permute.xlu0 %2161
        %2164 = vset.pattern.permute.xlu0 1
        %2165 = vperm.xlu0 %2164, %v1527
        %v2166 = vpop.permute.xlu0 %2165
        %2168 = vset.pattern.permute.xlu0 1
        %2169 = vperm.xlu0 %2168, %v1531
        %v2170 = vpop.permute.xlu0 %2169
        %2172 = vset.pattern.permute.xlu0 1
        %2173 = vperm.xlu0 %2172, %v1535
        %v2174 = vpop.permute.xlu0 %2173
        %2176 = vset.pattern.permute.xlu0 1
        %2177 = vperm.xlu0 %2176, %v1539
        %v2178 = vpop.permute.xlu0 %2177
        %2180 = vset.pattern.permute.xlu0 1
        %2181 = vperm.xlu0 %2180, %v1543
        %v2182 = vpop.permute.xlu0 %2181
        %2184 = vset.pattern.permute.xlu0 1
        %2185 = vperm.xlu0 %2184, %v1547
        %v2186 = vpop.permute.xlu0 %2185
        %2188 = vset.pattern.permute.xlu0 1
        %2189 = vperm.xlu0 %2188, %v1551
        %v2190 = vpop.permute.xlu0 %2189
        %2192 = vset.pattern.permute.xlu0 1
        %2193 = vperm.xlu0 %2192, %v1555
        %v2194 = vpop.permute.xlu0 %2193
        %2196 = vset.pattern.permute.xlu0 1
        %2197 = vperm.xlu0 %2196, %v1559
        %v2198 = vpop.permute.xlu0 %2197
        %2200 = vset.pattern.permute.xlu0 1
        %2201 = vperm.xlu0 %2200, %v1563
        %v2202 = vpop.permute.xlu0 %2201
        %2204 = vset.pattern.permute.xlu0 1
        %2205 = vperm.xlu0 %2204, %v1567
        %v2206 = vpop.permute.xlu0 %2205
        %2208 = vset.pattern.permute.xlu0 1
        %2209 = vperm.xlu0 %2208, %v1571
        %v2210 = vpop.permute.xlu0 %2209
        %2212 = vset.pattern.permute.xlu0 1
        %2213 = vperm.xlu0 %2212, %v1575
        %v2214 = vpop.permute.xlu0 %2213
        %2216 = vset.pattern.permute.xlu0 1
        %2217 = vperm.xlu0 %2216, %v1579
        %v2218 = vpop.permute.xlu0 %2217
        %2220 = vset.pattern.permute.xlu0 1
        %2221 = vperm.xlu0 %2220, %v1583
        %v2222 = vpop.permute.xlu0 %2221
        %2224 = vset.pattern.permute.xlu0 1
        %2225 = vperm.xlu0 %2224, %v1587
        %v2226 = vpop.permute.xlu0 %2225
        %2228 = vset.pattern.permute.xlu0 1
        %2229 = vperm.xlu0 %2228, %v1591
        %v2230 = vpop.permute.xlu0 %2229
        %2232 = vset.pattern.permute.xlu0 1
        %2233 = vperm.xlu0 %2232, %v1595
        %v2234 = vpop.permute.xlu0 %2233
        %2236 = vset.pattern.permute.xlu0 1
        %2237 = vperm.xlu0 %2236, %v1599
        %v2238 = vpop.permute.xlu0 %2237
        %2240 = vset.pattern.permute.xlu0 1
        %2241 = vperm.xlu0 %2240, %v1603
        %v2242 = vpop.permute.xlu0 %2241
        %2244 = vset.pattern.permute.xlu0 1
        %2245 = vperm.xlu0 %2244, %v1607
        %v2246 = vpop.permute.xlu0 %2245
        %2248 = vset.pattern.permute.xlu0 1
        %2249 = vperm.xlu0 %2248, %v1611
        %v2250 = vpop.permute.xlu0 %2249
        %2252 = vset.pattern.permute.xlu0 1
        %2253 = vperm.xlu0 %2252, %v1615
        %v2254 = vpop.permute.xlu0 %2253
        %2256 = vset.pattern.permute.xlu0 1
        %2257 = vperm.xlu0 %2256, %v1619
        %v2258 = vpop.permute.xlu0 %2257
        %2260 = vset.pattern.permute.xlu0 1
        %2261 = vperm.xlu0 %2260, %v1623
        %v2262 = vpop.permute.xlu0 %2261
        %2264 = vset.pattern.permute.xlu0 1
        %2265 = vperm.xlu0 %2264, %v1627
        %v2266 = vpop.permute.xlu0 %2265
        %2268 = vset.pattern.permute.xlu0 1
        %2269 = vperm.xlu0 %2268, %v1631
        %v2270 = vpop.permute.xlu0 %2269
        %2272 = vset.pattern.permute.xlu0 1
        %2273 = vperm.xlu0 %2272, %v1635
        %v2274 = vpop.permute.xlu0 %2273
        %2276 = vset.pattern.permute.xlu0 1
        %2277 = vperm.xlu0 %2276, %v1639
        %v2278 = vpop.permute.xlu0 %2277
        %v2280 = vadd.f32 %v1896, %v2026
        %v2281 = vadd.f32 %v1897, %v2026
        %v2282 = vadd.f32 %v1898, %v2030
        %v2283 = vadd.f32 %v1899, %v2030
        %v2284 = vadd.f32 %v1900, %v2034
        %v2285 = vadd.f32 %v1901, %v2034
        %v2286 = vadd.f32 %v1902, %v2038
        %v2287 = vadd.f32 %v1903, %v2038
        %v2288 = vadd.f32 %v1904, %v2042
        %v2289 = vadd.f32 %v1905, %v2042
        %v2290 = vadd.f32 %v1906, %v2046
        %v2291 = vadd.f32 %v1907, %v2046
        %v2292 = vadd.f32 %v1908, %v2050
        %v2293 = vadd.f32 %v1909, %v2050
        %v2294 = vadd.f32 %v1910, %v2054
        %v2295 = vadd.f32 %v1911, %v2054
        %v2296 = vadd.f32 %v1912, %v2058
        %v2297 = vadd.f32 %v1913, %v2058
        %v2298 = vadd.f32 %v1914, %v2062
        %v2299 = vadd.f32 %v1915, %v2062
        %v2300 = vadd.f32 %v1916, %v2066
        %v2301 = vadd.f32 %v1917, %v2066
        %v2302 = vadd.f32 %v1918, %v2070
        %v2303 = vadd.f32 %v1919, %v2070
        %v2304 = vadd.f32 %v1920, %v2074
        %v2305 = vadd.f32 %v1921, %v2074
        %v2306 = vadd.f32 %v1922, %v2078
        %v2307 = vadd.f32 %v1923, %v2078
        %v2308 = vadd.f32 %v1924, %v2082
        %v2309 = vadd.f32 %v1925, %v2082
        %v2310 = vadd.f32 %v1926, %v2086
        %v2311 = vadd.f32 %v1927, %v2086
        %v2312 = vadd.f32 %v1928, %v2090
        %v2313 = vadd.f32 %v1929, %v2090
        %v2314 = vadd.f32 %v1930, %v2094
        %v2315 = vadd.f32 %v1931, %v2094
        %v2316 = vadd.f32 %v1932, %v2098
        %v2317 = vadd.f32 %v1933, %v2098
        %v2318 = vadd.f32 %v1934, %v2102
        %v2319 = vadd.f32 %v1935, %v2102
        %v2320 = vadd.f32 %v1936, %v2106
        %v2321 = vadd.f32 %v1937, %v2106
        %v2322 = vadd.f32 %v1938, %v2110
        %v2323 = vadd.f32 %v1939, %v2110
        %v2324 = vadd.f32 %v1940, %v2114
        %v2325 = vadd.f32 %v1941, %v2114
        %v2326 = vadd.f32 %v1942, %v2118
        %v2327 = vadd.f32 %v1943, %v2118
        %v2328 = vadd.f32 %v1944, %v2122
        %v2329 = vadd.f32 %v1945, %v2122
        %v2330 = vadd.f32 %v1946, %v2126
        %v2331 = vadd.f32 %v1947, %v2126
        %v2332 = vadd.f32 %v1948, %v2130
        %v2333 = vadd.f32 %v1949, %v2130
        %v2334 = vadd.f32 %v1950, %v2134
        %v2335 = vadd.f32 %v1951, %v2134
        %v2336 = vadd.f32 %v1952, %v2138
        %v2337 = vadd.f32 %v1953, %v2138
        %v2338 = vadd.f32 %v1954, %v2142
        %v2339 = vadd.f32 %v1955, %v2142
        %v2340 = vadd.f32 %v1956, %v2146
        %v2341 = vadd.f32 %v1957, %v2146
        %v2342 = vadd.f32 %v1958, %v2150
        %v2343 = vadd.f32 %v1959, %v2150
        %v2344 = vadd.f32 %v1960, %v2154
        %v2345 = vadd.f32 %v1961, %v2154
        %v2346 = vadd.f32 %v1962, %v2158
        %v2347 = vadd.f32 %v1963, %v2158
        %v2348 = vadd.f32 %v1964, %v2162
        %v2349 = vadd.f32 %v1965, %v2162
        %v2350 = vadd.f32 %v1966, %v2166
        %v2351 = vadd.f32 %v1967, %v2166
        %v2352 = vadd.f32 %v1968, %v2170
        %v2353 = vadd.f32 %v1969, %v2170
        %v2354 = vadd.f32 %v1970, %v2174
        %v2355 = vadd.f32 %v1971, %v2174
        %v2356 = vadd.f32 %v1972, %v2178
        %v2357 = vadd.f32 %v1973, %v2178
        %v2358 = vadd.f32 %v1974, %v2182
        %v2359 = vadd.f32 %v1975, %v2182
        %v2360 = vadd.f32 %v1976, %v2186
        %v2361 = vadd.f32 %v1977, %v2186
        %v2362 = vadd.f32 %v1978, %v2190
        %v2363 = vadd.f32 %v1979, %v2190
        %v2364 = vadd.f32 %v1980, %v2194
        %v2365 = vadd.f32 %v1981, %v2194
        %v2366 = vadd.f32 %v1982, %v2198
        %v2367 = vadd.f32 %v1983, %v2198
        %v2368 = vadd.f32 %v1984, %v2202
        %v2369 = vadd.f32 %v1985, %v2202
        %v2370 = vadd.f32 %v1986, %v2206
        %v2371 = vadd.f32 %v1987, %v2206
        %v2372 = vadd.f32 %v1988, %v2210
        %v2373 = vadd.f32 %v1989, %v2210
        %v2374 = vadd.f32 %v1990, %v2214
        %v2375 = vadd.f32 %v1991, %v2214
        %v2376 = vadd.f32 %v1992, %v2218
        %v2377 = vadd.f32 %v1993, %v2218
        %v2378 = vadd.f32 %v1994, %v2222
        %v2379 = vadd.f32 %v1995, %v2222
        %v2380 = vadd.f32 %v1996, %v2226
        %v2381 = vadd.f32 %v1997, %v2226
        %v2382 = vadd.f32 %v1998, %v2230
        %v2383 = vadd.f32 %v1999, %v2230
        %v2384 = vadd.f32 %v2000, %v2234
        %v2385 = vadd.f32 %v2001, %v2234
        %v2386 = vadd.f32 %v2002, %v2238
        %v2387 = vadd.f32 %v2003, %v2238
        %v2388 = vadd.f32 %v2004, %v2242
        %v2389 = vadd.f32 %v2005, %v2242
        %v2390 = vadd.f32 %v2006, %v2246
        %v2391 = vadd.f32 %v2007, %v2246
        %v2392 = vadd.f32 %v2008, %v2250
        %v2393 = vadd.f32 %v2009, %v2250
        %v2394 = vadd.f32 %v2010, %v2254
        %v2395 = vadd.f32 %v2011, %v2254
        %v2396 = vadd.f32 %v2012, %v2258
        %v2397 = vadd.f32 %v2013, %v2258
        %v2398 = vadd.f32 %v2014, %v2262
        %v2399 = vadd.f32 %v2015, %v2262
        %v2400 = vadd.f32 %v2016, %v2266
        %v2401 = vadd.f32 %v2017, %v2266
        %v2402 = vadd.f32 %v2018, %v2270
        %v2403 = vadd.f32 %v2019, %v2270
        %v2404 = vadd.f32 %v2020, %v2274
        %v2405 = vadd.f32 %v2021, %v2274
        %v2406 = vadd.f32 %v2022, %v2278
        %v2407 = vadd.f32 %v2023, %v2278
        %v2408 = vmax.f32 %v2280, 0.0
        %v2409 = vmax.f32 %v2281, 0.0
        %v2410 = vmax.f32 %v2282, 0.0
        %v2411 = vmax.f32 %v2283, 0.0
        %v2412 = vmax.f32 %v2284, 0.0
        %v2413 = vmax.f32 %v2285, 0.0
        %v2414 = vmax.f32 %v2286, 0.0
        %v2415 = vmax.f32 %v2287, 0.0
        %v2416 = vmax.f32 %v2288, 0.0
        %v2417 = vmax.f32 %v2289, 0.0
        %v2418 = vmax.f32 %v2290, 0.0
        %v2419 = vmax.f32 %v2291, 0.0
        %v2420 = vmax.f32 %v2292, 0.0
        %v2421 = vmax.f32 %v2293, 0.0
        %v2422 = vmax.f32 %v2294, 0.0
        %v2423 = vmax.f32 %v2295, 0.0
        %v2424 = vmax.f32 %v2296, 0.0
        %v2425 = vmax.f32 %v2297, 0.0
        %v2426 = vmax.f32 %v2298, 0.0
        %v2427 = vmax.f32 %v2299, 0.0
        %v2428 = vmax.f32 %v2300, 0.0
        %v2429 = vmax.f32 %v2301, 0.0
        %v2430 = vmax.f32 %v2302, 0.0
        %v2431 = vmax.f32 %v2303, 0.0
        %v2432 = vmax.f32 %v2304, 0.0
        %v2433 = vmax.f32 %v2305, 0.0
        %v2434 = vmax.f32 %v2306, 0.0
        %v2435 = vmax.f32 %v2307, 0.0
        %v2436 = vmax.f32 %v2308, 0.0
        %v2437 = vmax.f32 %v2309, 0.0
        %v2438 = vmax.f32 %v2310, 0.0
        %v2439 = vmax.f32 %v2311, 0.0
        %v2440 = vmax.f32 %v2312, 0.0
        %v2441 = vmax.f32 %v2313, 0.0
        %v2442 = vmax.f32 %v2314, 0.0
        %v2443 = vmax.f32 %v2315, 0.0
        %v2444 = vmax.f32 %v2316, 0.0
        %v2445 = vmax.f32 %v2317, 0.0
        %v2446 = vmax.f32 %v2318, 0.0
        %v2447 = vmax.f32 %v2319, 0.0
        %v2448 = vmax.f32 %v2320, 0.0
        %v2449 = vmax.f32 %v2321, 0.0
        %v2450 = vmax.f32 %v2322, 0.0
        %v2451 = vmax.f32 %v2323, 0.0
        %v2452 = vmax.f32 %v2324, 0.0
        %v2453 = vmax.f32 %v2325, 0.0
        %v2454 = vmax.f32 %v2326, 0.0
        %v2455 = vmax.f32 %v2327, 0.0
        %v2456 = vmax.f32 %v2328, 0.0
        %v2457 = vmax.f32 %v2329, 0.0
        %v2458 = vmax.f32 %v2330, 0.0
        %v2459 = vmax.f32 %v2331, 0.0
        %v2460 = vmax.f32 %v2332, 0.0
        %v2461 = vmax.f32 %v2333, 0.0
        %v2462 = vmax.f32 %v2334, 0.0
        %v2463 = vmax.f32 %v2335, 0.0
        %v2464 = vmax.f32 %v2336, 0.0
        %v2465 = vmax.f32 %v2337, 0.0
        %v2466 = vmax.f32 %v2338, 0.0
        %v2467 = vmax.f32 %v2339, 0.0
        %v2468 = vmax.f32 %v2340, 0.0
        %v2469 = vmax.f32 %v2341, 0.0
        %v2470 = vmax.f32 %v2342, 0.0
        %v2471 = vmax.f32 %v2343, 0.0
        %v2472 = vmax.f32 %v2344, 0.0
        %v2473 = vmax.f32 %v2345, 0.0
        %v2474 = vmax.f32 %v2346, 0.0
        %v2475 = vmax.f32 %v2347, 0.0
        %v2476 = vmax.f32 %v2348, 0.0
        %v2477 = vmax.f32 %v2349, 0.0
        %v2478 = vmax.f32 %v2350, 0.0
        %v2479 = vmax.f32 %v2351, 0.0
        %v2480 = vmax.f32 %v2352, 0.0
        %v2481 = vmax.f32 %v2353, 0.0
        %v2482 = vmax.f32 %v2354, 0.0
        %v2483 = vmax.f32 %v2355, 0.0
        %v2484 = vmax.f32 %v2356, 0.0
        %v2485 = vmax.f32 %v2357, 0.0
        %v2486 = vmax.f32 %v2358, 0.0
        %v2487 = vmax.f32 %v2359, 0.0
        %v2488 = vmax.f32 %v2360, 0.0
        %v2489 = vmax.f32 %v2361, 0.0
        %v2490 = vmax.f32 %v2362, 0.0
        %v2491 = vmax.f32 %v2363, 0.0
        %v2492 = vmax.f32 %v2364, 0.0
        %v2493 = vmax.f32 %v2365, 0.0
        %v2494 = vmax.f32 %v2366, 0.0
        %v2495 = vmax.f32 %v2367, 0.0
        %v2496 = vmax.f32 %v2368, 0.0
        %v2497 = vmax.f32 %v2369, 0.0
        %v2498 = vmax.f32 %v2370, 0.0
        %v2499 = vmax.f32 %v2371, 0.0
        %v2500 = vmax.f32 %v2372, 0.0
        %v2501 = vmax.f32 %v2373, 0.0
        %v2502 = vmax.f32 %v2374, 0.0
        %v2503 = vmax.f32 %v2375, 0.0
        %v2504 = vmax.f32 %v2376, 0.0
        %v2505 = vmax.f32 %v2377, 0.0
        %v2506 = vmax.f32 %v2378, 0.0
        %v2507 = vmax.f32 %v2379, 0.0
        %v2508 = vmax.f32 %v2380, 0.0
        %v2509 = vmax.f32 %v2381, 0.0
        %v2510 = vmax.f32 %v2382, 0.0
        %v2511 = vmax.f32 %v2383, 0.0
        %v2512 = vmax.f32 %v2384, 0.0
        %v2513 = vmax.f32 %v2385, 0.0
        %v2514 = vmax.f32 %v2386, 0.0
        %v2515 = vmax.f32 %v2387, 0.0
        %v2516 = vmax.f32 %v2388, 0.0
        %v2517 = vmax.f32 %v2389, 0.0
        %v2518 = vmax.f32 %v2390, 0.0
        %v2519 = vmax.f32 %v2391, 0.0
        %v2520 = vmax.f32 %v2392, 0.0
        %v2521 = vmax.f32 %v2393, 0.0
        %v2522 = vmax.f32 %v2394, 0.0
        %v2523 = vmax.f32 %v2395, 0.0
        %v2524 = vmax.f32 %v2396, 0.0
        %v2525 = vmax.f32 %v2397, 0.0
        %v2526 = vmax.f32 %v2398, 0.0
        %v2527 = vmax.f32 %v2399, 0.0
        %v2528 = vmax.f32 %v2400, 0.0
        %v2529 = vmax.f32 %v2401, 0.0
        %v2530 = vmax.f32 %v2402, 0.0
        %v2531 = vmax.f32 %v2403, 0.0
        %v2532 = vmax.f32 %v2404, 0.0
        %v2533 = vmax.f32 %v2405, 0.0
        %v2534 = vmax.f32 %v2406, 0.0
        %v2535 = vmax.f32 %v2407, 0.0
        %vm2536 = vcmask 130048
        %v2537 = vsel %vm2536, %v2408, -inf
        %v2538 = vsel %vm2536, %v2409, -inf
        %v2539 = vmax.f32 %v2537, %v2538
        %v2540 = vrot.slane %v2539, 4
        %v2541 = vmax.f32 %v2539, %v2540
        %v2542 = vrot.slane %v2541, 2
        %v2543 = vmax.f32 %v2541, %v2542
        %v2544 = vrot.slane %v2543, 1
        %v2545 = vmax.f32 %v2543, %v2544
        %v2546 = vsel %vm2536, %v2410, -inf
        %v2547 = vsel %vm2536, %v2411, -inf
        %v2548 = vmax.f32 %v2546, %v2547
        %v2549 = vrot.slane %v2548, 4
        %v2550 = vmax.f32 %v2548, %v2549
        %v2551 = vrot.slane %v2550, 2
        %v2552 = vmax.f32 %v2550, %v2551
        %v2553 = vrot.slane %v2552, 1
        %v2554 = vmax.f32 %v2552, %v2553
        %v2555 = vsel %vm2536, %v2412, -inf
        %v2556 = vsel %vm2536, %v2413, -inf
        %v2557 = vmax.f32 %v2555, %v2556
        %v2558 = vrot.slane %v2557, 4
        %v2559 = vmax.f32 %v2557, %v2558
        %v2560 = vrot.slane %v2559, 2
        %v2561 = vmax.f32 %v2559, %v2560
        %v2562 = vrot.slane %v2561, 1
        %v2563 = vmax.f32 %v2561, %v2562
        %v2564 = vsel %vm2536, %v2414, -inf
        %v2565 = vsel %vm2536, %v2415, -inf
        %v2566 = vmax.f32 %v2564, %v2565
        %v2567 = vrot.slane %v2566, 4
        %v2568 = vmax.f32 %v2566, %v2567
        %v2569 = vrot.slane %v2568, 2
        %v2570 = vmax.f32 %v2568, %v2569
        %v2571 = vrot.slane %v2570, 1
        %v2572 = vmax.f32 %v2570, %v2571
        %v2573 = vsel %vm2536, %v2416, -inf
        %v2574 = vsel %vm2536, %v2417, -inf
        %v2575 = vmax.f32 %v2573, %v2574
        %v2576 = vrot.slane %v2575, 4
        %v2577 = vmax.f32 %v2575, %v2576
        %v2578 = vrot.slane %v2577, 2
        %v2579 = vmax.f32 %v2577, %v2578
        %v2580 = vrot.slane %v2579, 1
        %v2581 = vmax.f32 %v2579, %v2580
        %v2582 = vsel %vm2536, %v2418, -inf
        %v2583 = vsel %vm2536, %v2419, -inf
        %v2584 = vmax.f32 %v2582, %v2583
        %v2585 = vrot.slane %v2584, 4
        %v2586 = vmax.f32 %v2584, %v2585
        %v2587 = vrot.slane %v2586, 2
        %v2588 = vmax.f32 %v2586, %v2587
        %v2589 = vrot.slane %v2588, 1
        %v2590 = vmax.f32 %v2588, %v2589
        %v2591 = vsel %vm2536, %v2420, -inf
        %v2592 = vsel %vm2536, %v2421, -inf
        %v2593 = vmax.f32 %v2591, %v2592
        %v2594 = vrot.slane %v2593, 4
        %v2595 = vmax.f32 %v2593, %v2594
        %v2596 = vrot.slane %v2595, 2
        %v2597 = vmax.f32 %v2595, %v2596
        %v2598 = vrot.slane %v2597, 1
        %v2599 = vmax.f32 %v2597, %v2598
        %v2600 = vsel %vm2536, %v2422, -inf
        %v2601 = vsel %vm2536, %v2423, -inf
        %v2602 = vmax.f32 %v2600, %v2601
        %v2603 = vrot.slane %v2602, 4
        %v2604 = vmax.f32 %v2602, %v2603
        %v2605 = vrot.slane %v2604, 2
        %v2606 = vmax.f32 %v2604, %v2605
        %v2607 = vrot.slane %v2606, 1
        %v2608 = vmax.f32 %v2606, %v2607
        %v2609 = vsel %vm2536, %v2424, -inf
        %v2610 = vsel %vm2536, %v2425, -inf
        %v2611 = vmax.f32 %v2609, %v2610
        %v2612 = vrot.slane %v2611, 4
        %v2613 = vmax.f32 %v2611, %v2612
        %v2614 = vrot.slane %v2613, 2
        %v2615 = vmax.f32 %v2613, %v2614
        %v2616 = vrot.slane %v2615, 1
        %v2617 = vmax.f32 %v2615, %v2616
        %v2618 = vsel %vm2536, %v2426, -inf
        %v2619 = vsel %vm2536, %v2427, -inf
        %v2620 = vmax.f32 %v2618, %v2619
        %v2621 = vrot.slane %v2620, 4
        %v2622 = vmax.f32 %v2620, %v2621
        %v2623 = vrot.slane %v2622, 2
        %v2624 = vmax.f32 %v2622, %v2623
        %v2625 = vrot.slane %v2624, 1
        %v2626 = vmax.f32 %v2624, %v2625
        %v2627 = vsel %vm2536, %v2428, -inf
        %v2628 = vsel %vm2536, %v2429, -inf
        %v2629 = vmax.f32 %v2627, %v2628
        %v2630 = vrot.slane %v2629, 4
        %v2631 = vmax.f32 %v2629, %v2630
        %v2632 = vrot.slane %v2631, 2
        %v2633 = vmax.f32 %v2631, %v2632
        %v2634 = vrot.slane %v2633, 1
        %v2635 = vmax.f32 %v2633, %v2634
        %v2636 = vsel %vm2536, %v2430, -inf
        %v2637 = vsel %vm2536, %v2431, -inf
        %v2638 = vmax.f32 %v2636, %v2637
        %v2639 = vrot.slane %v2638, 4
        %v2640 = vmax.f32 %v2638, %v2639
        %v2641 = vrot.slane %v2640, 2
        %v2642 = vmax.f32 %v2640, %v2641
        %v2643 = vrot.slane %v2642, 1
        %v2644 = vmax.f32 %v2642, %v2643
        %v2645 = vsel %vm2536, %v2432, -inf
        %v2646 = vsel %vm2536, %v2433, -inf
        %v2647 = vmax.f32 %v2645, %v2646
        %v2648 = vrot.slane %v2647, 4
        %v2649 = vmax.f32 %v2647, %v2648
        %v2650 = vrot.slane %v2649, 2
        %v2651 = vmax.f32 %v2649, %v2650
        %v2652 = vrot.slane %v2651, 1
        %v2653 = vmax.f32 %v2651, %v2652
        %v2654 = vsel %vm2536, %v2434, -inf
        %v2655 = vsel %vm2536, %v2435, -inf
        %v2656 = vmax.f32 %v2654, %v2655
        %v2657 = vrot.slane %v2656, 4
        %v2658 = vmax.f32 %v2656, %v2657
        %v2659 = vrot.slane %v2658, 2
        %v2660 = vmax.f32 %v2658, %v2659
        %v2661 = vrot.slane %v2660, 1
        %v2662 = vmax.f32 %v2660, %v2661
        %v2663 = vsel %vm2536, %v2436, -inf
        %v2664 = vsel %vm2536, %v2437, -inf
        %v2665 = vmax.f32 %v2663, %v2664
        %v2666 = vrot.slane %v2665, 4
        %v2667 = vmax.f32 %v2665, %v2666
        %v2668 = vrot.slane %v2667, 2
        %v2669 = vmax.f32 %v2667, %v2668
        %v2670 = vrot.slane %v2669, 1
        %v2671 = vmax.f32 %v2669, %v2670
        %v2672 = vsel %vm2536, %v2438, -inf
        %v2673 = vsel %vm2536, %v2439, -inf
        %v2674 = vmax.f32 %v2672, %v2673
        %v2675 = vrot.slane %v2674, 4
        %v2676 = vmax.f32 %v2674, %v2675
        %v2677 = vrot.slane %v2676, 2
        %v2678 = vmax.f32 %v2676, %v2677
        %v2679 = vrot.slane %v2678, 1
        %v2680 = vmax.f32 %v2678, %v2679
        %v2681 = vsel %vm2536, %v2440, -inf
        %v2682 = vsel %vm2536, %v2441, -inf
        %v2683 = vmax.f32 %v2681, %v2682
        %v2684 = vrot.slane %v2683, 4
        %v2685 = vmax.f32 %v2683, %v2684
        %v2686 = vrot.slane %v2685, 2
        %v2687 = vmax.f32 %v2685, %v2686
        %v2688 = vrot.slane %v2687, 1
        %v2689 = vmax.f32 %v2687, %v2688
        %v2690 = vsel %vm2536, %v2442, -inf
        %v2691 = vsel %vm2536, %v2443, -inf
        %v2692 = vmax.f32 %v2690, %v2691
        %v2693 = vrot.slane %v2692, 4
        %v2694 = vmax.f32 %v2692, %v2693
        %v2695 = vrot.slane %v2694, 2
        %v2696 = vmax.f32 %v2694, %v2695
        %v2697 = vrot.slane %v2696, 1
        %v2698 = vmax.f32 %v2696, %v2697
        %v2699 = vsel %vm2536, %v2444, -inf
        %v2700 = vsel %vm2536, %v2445, -inf
        %v2701 = vmax.f32 %v2699, %v2700
        %v2702 = vrot.slane %v2701, 4
        %v2703 = vmax.f32 %v2701, %v2702
        %v2704 = vrot.slane %v2703, 2
        %v2705 = vmax.f32 %v2703, %v2704
        %v2706 = vrot.slane %v2705, 1
        %v2707 = vmax.f32 %v2705, %v2706
        %v2708 = vsel %vm2536, %v2446, -inf
        %v2709 = vsel %vm2536, %v2447, -inf
        %v2710 = vmax.f32 %v2708, %v2709
        %v2711 = vrot.slane %v2710, 4
        %v2712 = vmax.f32 %v2710, %v2711
        %v2713 = vrot.slane %v2712, 2
        %v2714 = vmax.f32 %v2712, %v2713
        %v2715 = vrot.slane %v2714, 1
        %v2716 = vmax.f32 %v2714, %v2715
        %v2717 = vsel %vm2536, %v2448, -inf
        %v2718 = vsel %vm2536, %v2449, -inf
        %v2719 = vmax.f32 %v2717, %v2718
        %v2720 = vrot.slane %v2719, 4
        %v2721 = vmax.f32 %v2719, %v2720
        %v2722 = vrot.slane %v2721, 2
        %v2723 = vmax.f32 %v2721, %v2722
        %v2724 = vrot.slane %v2723, 1
        %v2725 = vmax.f32 %v2723, %v2724
        %v2726 = vsel %vm2536, %v2450, -inf
        %v2727 = vsel %vm2536, %v2451, -inf
        %v2728 = vmax.f32 %v2726, %v2727
        %v2729 = vrot.slane %v2728, 4
        %v2730 = vmax.f32 %v2728, %v2729
        %v2731 = vrot.slane %v2730, 2
        %v2732 = vmax.f32 %v2730, %v2731
        %v2733 = vrot.slane %v2732, 1
        %v2734 = vmax.f32 %v2732, %v2733
        %v2735 = vsel %vm2536, %v2452, -inf
        %v2736 = vsel %vm2536, %v2453, -inf
        %v2737 = vmax.f32 %v2735, %v2736
        %v2738 = vrot.slane %v2737, 4
        %v2739 = vmax.f32 %v2737, %v2738
        %v2740 = vrot.slane %v2739, 2
        %v2741 = vmax.f32 %v2739, %v2740
        %v2742 = vrot.slane %v2741, 1
        %v2743 = vmax.f32 %v2741, %v2742
        %v2744 = vsel %vm2536, %v2454, -inf
        %v2745 = vsel %vm2536, %v2455, -inf
        %v2746 = vmax.f32 %v2744, %v2745
        %v2747 = vrot.slane %v2746, 4
        %v2748 = vmax.f32 %v2746, %v2747
        %v2749 = vrot.slane %v2748, 2
        %v2750 = vmax.f32 %v2748, %v2749
        %v2751 = vrot.slane %v2750, 1
        %v2752 = vmax.f32 %v2750, %v2751
        %v2753 = vsel %vm2536, %v2456, -inf
        %v2754 = vsel %vm2536, %v2457, -inf
        %v2755 = vmax.f32 %v2753, %v2754
        %v2756 = vrot.slane %v2755, 4
        %v2757 = vmax.f32 %v2755, %v2756
        %v2758 = vrot.slane %v2757, 2
        %v2759 = vmax.f32 %v2757, %v2758
        %v2760 = vrot.slane %v2759, 1
        %v2761 = vmax.f32 %v2759, %v2760
        %v2762 = vsel %vm2536, %v2458, -inf
        %v2763 = vsel %vm2536, %v2459, -inf
        %v2764 = vmax.f32 %v2762, %v2763
        %v2765 = vrot.slane %v2764, 4
        %v2766 = vmax.f32 %v2764, %v2765
        %v2767 = vrot.slane %v2766, 2
        %v2768 = vmax.f32 %v2766, %v2767
        %v2769 = vrot.slane %v2768, 1
        %v2770 = vmax.f32 %v2768, %v2769
        %v2771 = vsel %vm2536, %v2460, -inf
        %v2772 = vsel %vm2536, %v2461, -inf
        %v2773 = vmax.f32 %v2771, %v2772
        %v2774 = vrot.slane %v2773, 4
        %v2775 = vmax.f32 %v2773, %v2774
        %v2776 = vrot.slane %v2775, 2
        %v2777 = vmax.f32 %v2775, %v2776
        %v2778 = vrot.slane %v2777, 1
        %v2779 = vmax.f32 %v2777, %v2778
        %v2780 = vsel %vm2536, %v2462, -inf
        %v2781 = vsel %vm2536, %v2463, -inf
        %v2782 = vmax.f32 %v2780, %v2781
        %v2783 = vrot.slane %v2782, 4
        %v2784 = vmax.f32 %v2782, %v2783
        %v2785 = vrot.slane %v2784, 2
        %v2786 = vmax.f32 %v2784, %v2785
        %v2787 = vrot.slane %v2786, 1
        %v2788 = vmax.f32 %v2786, %v2787
        %v2789 = vsel %vm2536, %v2464, -inf
        %v2790 = vsel %vm2536, %v2465, -inf
        %v2791 = vmax.f32 %v2789, %v2790
        %v2792 = vrot.slane %v2791, 4
        %v2793 = vmax.f32 %v2791, %v2792
        %v2794 = vrot.slane %v2793, 2
        %v2795 = vmax.f32 %v2793, %v2794
        %v2796 = vrot.slane %v2795, 1
        %v2797 = vmax.f32 %v2795, %v2796
        %v2798 = vsel %vm2536, %v2466, -inf
        %v2799 = vsel %vm2536, %v2467, -inf
        %v2800 = vmax.f32 %v2798, %v2799
        %v2801 = vrot.slane %v2800, 4
        %v2802 = vmax.f32 %v2800, %v2801
        %v2803 = vrot.slane %v2802, 2
        %v2804 = vmax.f32 %v2802, %v2803
        %v2805 = vrot.slane %v2804, 1
        %v2806 = vmax.f32 %v2804, %v2805
        %v2807 = vsel %vm2536, %v2468, -inf
        %v2808 = vsel %vm2536, %v2469, -inf
        %v2809 = vmax.f32 %v2807, %v2808
        %v2810 = vrot.slane %v2809, 4
        %v2811 = vmax.f32 %v2809, %v2810
        %v2812 = vrot.slane %v2811, 2
        %v2813 = vmax.f32 %v2811, %v2812
        %v2814 = vrot.slane %v2813, 1
        %v2815 = vmax.f32 %v2813, %v2814
        %v2816 = vsel %vm2536, %v2470, -inf
        %v2817 = vsel %vm2536, %v2471, -inf
        %v2818 = vmax.f32 %v2816, %v2817
        %v2819 = vrot.slane %v2818, 4
        %v2820 = vmax.f32 %v2818, %v2819
        %v2821 = vrot.slane %v2820, 2
        %v2822 = vmax.f32 %v2820, %v2821
        %v2823 = vrot.slane %v2822, 1
        %v2824 = vmax.f32 %v2822, %v2823
        %v2825 = vsel %vm2536, %v2472, -inf
        %v2826 = vsel %vm2536, %v2473, -inf
        %v2827 = vmax.f32 %v2825, %v2826
        %v2828 = vrot.slane %v2827, 4
        %v2829 = vmax.f32 %v2827, %v2828
        %v2830 = vrot.slane %v2829, 2
        %v2831 = vmax.f32 %v2829, %v2830
        %v2832 = vrot.slane %v2831, 1
        %v2833 = vmax.f32 %v2831, %v2832
        %v2834 = vsel %vm2536, %v2474, -inf
        %v2835 = vsel %vm2536, %v2475, -inf
        %v2836 = vmax.f32 %v2834, %v2835
        %v2837 = vrot.slane %v2836, 4
        %v2838 = vmax.f32 %v2836, %v2837
        %v2839 = vrot.slane %v2838, 2
        %v2840 = vmax.f32 %v2838, %v2839
        %v2841 = vrot.slane %v2840, 1
        %v2842 = vmax.f32 %v2840, %v2841
        %v2843 = vsel %vm2536, %v2476, -inf
        %v2844 = vsel %vm2536, %v2477, -inf
        %v2845 = vmax.f32 %v2843, %v2844
        %v2846 = vrot.slane %v2845, 4
        %v2847 = vmax.f32 %v2845, %v2846
        %v2848 = vrot.slane %v2847, 2
        %v2849 = vmax.f32 %v2847, %v2848
        %v2850 = vrot.slane %v2849, 1
        %v2851 = vmax.f32 %v2849, %v2850
        %v2852 = vsel %vm2536, %v2478, -inf
        %v2853 = vsel %vm2536, %v2479, -inf
        %v2854 = vmax.f32 %v2852, %v2853
        %v2855 = vrot.slane %v2854, 4
        %v2856 = vmax.f32 %v2854, %v2855
        %v2857 = vrot.slane %v2856, 2
        %v2858 = vmax.f32 %v2856, %v2857
        %v2859 = vrot.slane %v2858, 1
        %v2860 = vmax.f32 %v2858, %v2859
        %v2861 = vsel %vm2536, %v2480, -inf
        %v2862 = vsel %vm2536, %v2481, -inf
        %v2863 = vmax.f32 %v2861, %v2862
        %v2864 = vrot.slane %v2863, 4
        %v2865 = vmax.f32 %v2863, %v2864
        %v2866 = vrot.slane %v2865, 2
        %v2867 = vmax.f32 %v2865, %v2866
        %v2868 = vrot.slane %v2867, 1
        %v2869 = vmax.f32 %v2867, %v2868
        %v2870 = vsel %vm2536, %v2482, -inf
        %v2871 = vsel %vm2536, %v2483, -inf
        %v2872 = vmax.f32 %v2870, %v2871
        %v2873 = vrot.slane %v2872, 4
        %v2874 = vmax.f32 %v2872, %v2873
        %v2875 = vrot.slane %v2874, 2
        %v2876 = vmax.f32 %v2874, %v2875
        %v2877 = vrot.slane %v2876, 1
        %v2878 = vmax.f32 %v2876, %v2877
        %v2879 = vsel %vm2536, %v2484, -inf
        %v2880 = vsel %vm2536, %v2485, -inf
        %v2881 = vmax.f32 %v2879, %v2880
        %v2882 = vrot.slane %v2881, 4
        %v2883 = vmax.f32 %v2881, %v2882
        %v2884 = vrot.slane %v2883, 2
        %v2885 = vmax.f32 %v2883, %v2884
        %v2886 = vrot.slane %v2885, 1
        %v2887 = vmax.f32 %v2885, %v2886
        %v2888 = vsel %vm2536, %v2486, -inf
        %v2889 = vsel %vm2536, %v2487, -inf
        %v2890 = vmax.f32 %v2888, %v2889
        %v2891 = vrot.slane %v2890, 4
        %v2892 = vmax.f32 %v2890, %v2891
        %v2893 = vrot.slane %v2892, 2
        %v2894 = vmax.f32 %v2892, %v2893
        %v2895 = vrot.slane %v2894, 1
        %v2896 = vmax.f32 %v2894, %v2895
        %v2897 = vsel %vm2536, %v2488, -inf
        %v2898 = vsel %vm2536, %v2489, -inf
        %v2899 = vmax.f32 %v2897, %v2898
        %v2900 = vrot.slane %v2899, 4
        %v2901 = vmax.f32 %v2899, %v2900
        %v2902 = vrot.slane %v2901, 2
        %v2903 = vmax.f32 %v2901, %v2902
        %v2904 = vrot.slane %v2903, 1
        %v2905 = vmax.f32 %v2903, %v2904
        %v2906 = vsel %vm2536, %v2490, -inf
        %v2907 = vsel %vm2536, %v2491, -inf
        %v2908 = vmax.f32 %v2906, %v2907
        %v2909 = vrot.slane %v2908, 4
        %v2910 = vmax.f32 %v2908, %v2909
        %v2911 = vrot.slane %v2910, 2
        %v2912 = vmax.f32 %v2910, %v2911
        %v2913 = vrot.slane %v2912, 1
        %v2914 = vmax.f32 %v2912, %v2913
        %v2915 = vsel %vm2536, %v2492, -inf
        %v2916 = vsel %vm2536, %v2493, -inf
        %v2917 = vmax.f32 %v2915, %v2916
        %v2918 = vrot.slane %v2917, 4
        %v2919 = vmax.f32 %v2917, %v2918
        %v2920 = vrot.slane %v2919, 2
        %v2921 = vmax.f32 %v2919, %v2920
        %v2922 = vrot.slane %v2921, 1
        %v2923 = vmax.f32 %v2921, %v2922
        %v2924 = vsel %vm2536, %v2494, -inf
        %v2925 = vsel %vm2536, %v2495, -inf
        %v2926 = vmax.f32 %v2924, %v2925
        %v2927 = vrot.slane %v2926, 4
        %v2928 = vmax.f32 %v2926, %v2927
        %v2929 = vrot.slane %v2928, 2
        %v2930 = vmax.f32 %v2928, %v2929
        %v2931 = vrot.slane %v2930, 1
        %v2932 = vmax.f32 %v2930, %v2931
        %v2933 = vsel %vm2536, %v2496, -inf
        %v2934 = vsel %vm2536, %v2497, -inf
        %v2935 = vmax.f32 %v2933, %v2934
        %v2936 = vrot.slane %v2935, 4
        %v2937 = vmax.f32 %v2935, %v2936
        %v2938 = vrot.slane %v2937, 2
        %v2939 = vmax.f32 %v2937, %v2938
        %v2940 = vrot.slane %v2939, 1
        %v2941 = vmax.f32 %v2939, %v2940
        %v2942 = vsel %vm2536, %v2498, -inf
        %v2943 = vsel %vm2536, %v2499, -inf
        %v2944 = vmax.f32 %v2942, %v2943
        %v2945 = vrot.slane %v2944, 4
        %v2946 = vmax.f32 %v2944, %v2945
        %v2947 = vrot.slane %v2946, 2
        %v2948 = vmax.f32 %v2946, %v2947
        %v2949 = vrot.slane %v2948, 1
        %v2950 = vmax.f32 %v2948, %v2949
        %v2951 = vsel %vm2536, %v2500, -inf
        %v2952 = vsel %vm2536, %v2501, -inf
        %v2953 = vmax.f32 %v2951, %v2952
        %v2954 = vrot.slane %v2953, 4
        %v2955 = vmax.f32 %v2953, %v2954
        %v2956 = vrot.slane %v2955, 2
        %v2957 = vmax.f32 %v2955, %v2956
        %v2958 = vrot.slane %v2957, 1
        %v2959 = vmax.f32 %v2957, %v2958
        %v2960 = vsel %vm2536, %v2502, -inf
        %v2961 = vsel %vm2536, %v2503, -inf
        %v2962 = vmax.f32 %v2960, %v2961
        %v2963 = vrot.slane %v2962, 4
        %v2964 = vmax.f32 %v2962, %v2963
        %v2965 = vrot.slane %v2964, 2
        %v2966 = vmax.f32 %v2964, %v2965
        %v2967 = vrot.slane %v2966, 1
        %v2968 = vmax.f32 %v2966, %v2967
        %v2969 = vsel %vm2536, %v2504, -inf
        %v2970 = vsel %vm2536, %v2505, -inf
        %v2971 = vmax.f32 %v2969, %v2970
        %v2972 = vrot.slane %v2971, 4
        %v2973 = vmax.f32 %v2971, %v2972
        %v2974 = vrot.slane %v2973, 2
        %v2975 = vmax.f32 %v2973, %v2974
        %v2976 = vrot.slane %v2975, 1
        %v2977 = vmax.f32 %v2975, %v2976
        %v2978 = vsel %vm2536, %v2506, -inf
        %v2979 = vsel %vm2536, %v2507, -inf
        %v2980 = vmax.f32 %v2978, %v2979
        %v2981 = vrot.slane %v2980, 4
        %v2982 = vmax.f32 %v2980, %v2981
        %v2983 = vrot.slane %v2982, 2
        %v2984 = vmax.f32 %v2982, %v2983
        %v2985 = vrot.slane %v2984, 1
        %v2986 = vmax.f32 %v2984, %v2985
        %v2987 = vsel %vm2536, %v2508, -inf
        %v2988 = vsel %vm2536, %v2509, -inf
        %v2989 = vmax.f32 %v2987, %v2988
        %v2990 = vrot.slane %v2989, 4
        %v2991 = vmax.f32 %v2989, %v2990
        %v2992 = vrot.slane %v2991, 2
        %v2993 = vmax.f32 %v2991, %v2992
        %v2994 = vrot.slane %v2993, 1
        %v2995 = vmax.f32 %v2993, %v2994
        %v2996 = vsel %vm2536, %v2510, -inf
        %v2997 = vsel %vm2536, %v2511, -inf
        %v2998 = vmax.f32 %v2996, %v2997
        %v2999 = vrot.slane %v2998, 4
        %v3000 = vmax.f32 %v2998, %v2999
        %v3001 = vrot.slane %v3000, 2
        %v3002 = vmax.f32 %v3000, %v3001
        %v3003 = vrot.slane %v3002, 1
        %v3004 = vmax.f32 %v3002, %v3003
        %v3005 = vsel %vm2536, %v2512, -inf
        %v3006 = vsel %vm2536, %v2513, -inf
        %v3007 = vmax.f32 %v3005, %v3006
        %v3008 = vrot.slane %v3007, 4
        %v3009 = vmax.f32 %v3007, %v3008
        %v3010 = vrot.slane %v3009, 2
        %v3011 = vmax.f32 %v3009, %v3010
        %v3012 = vrot.slane %v3011, 1
        %v3013 = vmax.f32 %v3011, %v3012
        %v3014 = vsel %vm2536, %v2514, -inf
        %v3015 = vsel %vm2536, %v2515, -inf
        %v3016 = vmax.f32 %v3014, %v3015
        %v3017 = vrot.slane %v3016, 4
        %v3018 = vmax.f32 %v3016, %v3017
        %v3019 = vrot.slane %v3018, 2
        %v3020 = vmax.f32 %v3018, %v3019
        %v3021 = vrot.slane %v3020, 1
        %v3022 = vmax.f32 %v3020, %v3021
        %v3023 = vsel %vm2536, %v2516, -inf
        %v3024 = vsel %vm2536, %v2517, -inf
        %v3025 = vmax.f32 %v3023, %v3024
        %v3026 = vrot.slane %v3025, 4
        %v3027 = vmax.f32 %v3025, %v3026
        %v3028 = vrot.slane %v3027, 2
        %v3029 = vmax.f32 %v3027, %v3028
        %v3030 = vrot.slane %v3029, 1
        %v3031 = vmax.f32 %v3029, %v3030
        %v3032 = vsel %vm2536, %v2518, -inf
        %v3033 = vsel %vm2536, %v2519, -inf
        %v3034 = vmax.f32 %v3032, %v3033
        %v3035 = vrot.slane %v3034, 4
        %v3036 = vmax.f32 %v3034, %v3035
        %v3037 = vrot.slane %v3036, 2
        %v3038 = vmax.f32 %v3036, %v3037
        %v3039 = vrot.slane %v3038, 1
        %v3040 = vmax.f32 %v3038, %v3039
        %v3041 = vsel %vm2536, %v2520, -inf
        %v3042 = vsel %vm2536, %v2521, -inf
        %v3043 = vmax.f32 %v3041, %v3042
        %v3044 = vrot.slane %v3043, 4
        %v3045 = vmax.f32 %v3043, %v3044
        %v3046 = vrot.slane %v3045, 2
        %v3047 = vmax.f32 %v3045, %v3046
        %v3048 = vrot.slane %v3047, 1
        %v3049 = vmax.f32 %v3047, %v3048
        %v3050 = vsel %vm2536, %v2522, -inf
        %v3051 = vsel %vm2536, %v2523, -inf
        %v3052 = vmax.f32 %v3050, %v3051
        %v3053 = vrot.slane %v3052, 4
        %v3054 = vmax.f32 %v3052, %v3053
        %v3055 = vrot.slane %v3054, 2
        %v3056 = vmax.f32 %v3054, %v3055
        %v3057 = vrot.slane %v3056, 1
        %v3058 = vmax.f32 %v3056, %v3057
        %v3059 = vsel %vm2536, %v2524, -inf
        %v3060 = vsel %vm2536, %v2525, -inf
        %v3061 = vmax.f32 %v3059, %v3060
        %v3062 = vrot.slane %v3061, 4
        %v3063 = vmax.f32 %v3061, %v3062
        %v3064 = vrot.slane %v3063, 2
        %v3065 = vmax.f32 %v3063, %v3064
        %v3066 = vrot.slane %v3065, 1
        %v3067 = vmax.f32 %v3065, %v3066
        %v3068 = vsel %vm2536, %v2526, -inf
        %v3069 = vsel %vm2536, %v2527, -inf
        %v3070 = vmax.f32 %v3068, %v3069
        %v3071 = vrot.slane %v3070, 4
        %v3072 = vmax.f32 %v3070, %v3071
        %v3073 = vrot.slane %v3072, 2
        %v3074 = vmax.f32 %v3072, %v3073
        %v3075 = vrot.slane %v3074, 1
        %v3076 = vmax.f32 %v3074, %v3075
        %v3077 = vsel %vm2536, %v2528, -inf
        %v3078 = vsel %vm2536, %v2529, -inf
        %v3079 = vmax.f32 %v3077, %v3078
        %v3080 = vrot.slane %v3079, 4
        %v3081 = vmax.f32 %v3079, %v3080
        %v3082 = vrot.slane %v3081, 2
        %v3083 = vmax.f32 %v3081, %v3082
        %v3084 = vrot.slane %v3083, 1
        %v3085 = vmax.f32 %v3083, %v3084
        %v3086 = vsel %vm2536, %v2530, -inf
        %v3087 = vsel %vm2536, %v2531, -inf
        %v3088 = vmax.f32 %v3086, %v3087
        %v3089 = vrot.slane %v3088, 4
        %v3090 = vmax.f32 %v3088, %v3089
        %v3091 = vrot.slane %v3090, 2
        %v3092 = vmax.f32 %v3090, %v3091
        %v3093 = vrot.slane %v3092, 1
        %v3094 = vmax.f32 %v3092, %v3093
        %v3095 = vsel %vm2536, %v2532, -inf
        %v3096 = vsel %vm2536, %v2533, -inf
        %v3097 = vmax.f32 %v3095, %v3096
        %v3098 = vrot.slane %v3097, 4
        %v3099 = vmax.f32 %v3097, %v3098
        %v3100 = vrot.slane %v3099, 2
        %v3101 = vmax.f32 %v3099, %v3100
        %v3102 = vrot.slane %v3101, 1
        %v3103 = vmax.f32 %v3101, %v3102
        %v3104 = vsel %vm2536, %v2534, -inf
        %v3105 = vsel %vm2536, %v2535, -inf
        %v3106 = vmax.f32 %v3104, %v3105
        %v3107 = vrot.slane %v3106, 4
        %v3108 = vmax.f32 %v3106, %v3107
        %v3109 = vrot.slane %v3108, 2
        %v3110 = vmax.f32 %v3108, %v3109
        %v3111 = vrot.slane %v3110, 1
        %v3112 = vmax.f32 %v3110, %v3111
        %vm3177 = vcmask 1041409
        %v3178 = vsel %vm3177, %v2554, %v2545
        %vm3179 = vcmask 1042434
        %v3180 = vsel %vm3179, %v2563, %v3178
        %vm3181 = vcmask 1043459
        %v3182 = vsel %vm3181, %v2572, %v3180
        %vm3183 = vcmask 1044484
        %v3184 = vsel %vm3183, %v2581, %v3182
        %vm3185 = vcmask 1045509
        %v3186 = vsel %vm3185, %v2590, %v3184
        %vm3187 = vcmask 1046534
        %v3188 = vsel %vm3187, %v2599, %v3186
        %vm3189 = vcmask 1047559
        %v3190 = vsel %vm3189, %v2608, %v3188
        %v3191 = vsel %vm3177, %v2626, %v2617
        %v3192 = vsel %vm3179, %v2635, %v3191
        %v3193 = vsel %vm3181, %v2644, %v3192
        %v3194 = vsel %vm3183, %v2653, %v3193
        %v3195 = vsel %vm3185, %v2662, %v3194
        %v3196 = vsel %vm3187, %v2671, %v3195
        %v3197 = vsel %vm3189, %v2680, %v3196
        %v3198 = vsel %vm3177, %v2698, %v2689
        %v3199 = vsel %vm3179, %v2707, %v3198
        %v3200 = vsel %vm3181, %v2716, %v3199
        %v3201 = vsel %vm3183, %v2725, %v3200
        %v3202 = vsel %vm3185, %v2734, %v3201
        %v3203 = vsel %vm3187, %v2743, %v3202
        %v3204 = vsel %vm3189, %v2752, %v3203
        %v3205 = vsel %vm3177, %v2770, %v2761
        %v3206 = vsel %vm3179, %v2779, %v3205
        %v3207 = vsel %vm3181, %v2788, %v3206
        %v3208 = vsel %vm3183, %v2797, %v3207
        %v3209 = vsel %vm3185, %v2806, %v3208
        %v3210 = vsel %vm3187, %v2815, %v3209
        %v3211 = vsel %vm3189, %v2824, %v3210
        %v3212 = vsel %vm3177, %v2842, %v2833
        %v3213 = vsel %vm3179, %v2851, %v3212
        %v3214 = vsel %vm3181, %v2860, %v3213
        %v3215 = vsel %vm3183, %v2869, %v3214
        %v3216 = vsel %vm3185, %v2878, %v3215
        %v3217 = vsel %vm3187, %v2887, %v3216
        %v3218 = vsel %vm3189, %v2896, %v3217
        %v3219 = vsel %vm3177, %v2914, %v2905
        %v3220 = vsel %vm3179, %v2923, %v3219
        %v3221 = vsel %vm3181, %v2932, %v3220
        %v3222 = vsel %vm3183, %v2941, %v3221
        %v3223 = vsel %vm3185, %v2950, %v3222
        %v3224 = vsel %vm3187, %v2959, %v3223
        %v3225 = vsel %vm3189, %v2968, %v3224
        %v3226 = vsel %vm3177, %v2986, %v2977
        %v3227 = vsel %vm3179, %v2995, %v3226
        %v3228 = vsel %vm3181, %v3004, %v3227
        %v3229 = vsel %vm3183, %v3013, %v3228
        %v3230 = vsel %vm3185, %v3022, %v3229
        %v3231 = vsel %vm3187, %v3031, %v3230
        %v3232 = vsel %vm3189, %v3040, %v3231
        %v3233 = vsel %vm3177, %v3058, %v3049
        %v3234 = vsel %vm3179, %v3067, %v3233
        %v3235 = vsel %vm3181, %v3076, %v3234
        %v3236 = vsel %vm3183, %v3085, %v3235
        %v3237 = vsel %vm3185, %v3094, %v3236
        %v3238 = vsel %vm3187, %v3103, %v3237
        %v3239 = vsel %vm3189, %v3112, %v3238
        %3248 = vst.msk [vmem:[%s719] sm:$0xff] %vm2536, %v3190
        %3249 = vst.msk [vmem:[%s719 + $0x8] sm:$0xff] %vm2536, %v3197
        %3250 = vst.msk [vmem:[%s719 + $0x10] sm:$0xff] %vm2536, %v3204
        %3251 = vst.msk [vmem:[%s719 + $0x18] sm:$0xff] %vm2536, %v3211
        %3252 = vst.msk [vmem:[%s719 + $0x20] sm:$0xff] %vm2536, %v3218
        %3253 = vst.msk [vmem:[%s719 + $0x28] sm:$0xff] %vm2536, %v3225
        %3254 = vst.msk [vmem:[%s719 + $0x30] sm:$0xff] %vm2536, %v3232
        %3255 = vst.msk [vmem:[%s719 + $0x38] sm:$0xff] %vm2536, %v3239
        %p3256 = scmp.lt.s32.totalorder %s17, 1
        %s3257 = scalar_select %p3256, %s17, 1
        %p3258 = scmp.lt.s32.totalorder %s18, 0
        %s3259 = scalar_select %p3258, %s18, 0
        %s3260 = smul.addr %s3257, 8
        %s3261 = sadd.s32 %s3259, %s3260
        %s3262 = smul.addr %s3261, 8
        %s3263 = scalar_lea.vmem %s2, %s3262
        // Predicated region
        $region70: #{pointnet_set_abstraction_msg.9} parent=64 // pred_check
          %p3264 = pneg %p94
        $region71: #{pointnet_set_abstraction_msg.9} parent=64 // pred_check_branch
          %3266 = sbr.rel (%p3264) target = $region73
        $region72: #{pointnet_set_abstraction_msg.9} parent=64 // pred_region
          _
        $region73: #{pointnet_set_abstraction_msg.9} parent=64 // pred_fallthru
          _
      $region65: #{pointnet_set_abstraction_msg.9} parent=5 // pred_fallthru
        _
      %p3267 = scmp.le.s32.totalorder 2, %s8
      // Predicated region
      $region74: #{pointnet_set_abstraction_msg.9} parent=5 // pred_check
        %p3268 = pneg %p3267
      $region75: #{pointnet_set_abstraction_msg.9} parent=5 // pred_check_branch
        %3270 = sbr.rel (%p3268) target = $region77
      $region76: #{pointnet_set_abstraction_msg.9} parent=5 // pred_region
        %s3271 = ssub.s32 %s8, 2
        // Predicated region
        $region78: #{pointnet_set_abstraction_msg.9} parent=76 // pred_check
          %p3272 = pneg %p100
        $region79: #{pointnet_set_abstraction_msg.9} parent=76 // pred_check_branch
          %3274 = sbr.rel (%p3272) target = $region81
        $region80: #{pointnet_set_abstraction_msg.9} parent=76 // pred_region
          %p3275 = scmp.lt.s32.totalorder %s19, 1
          %s3276 = scalar_select %p3275, %s19, 1
          %p3277 = scmp.lt.s32.totalorder %s20, 0
          %s3278 = scalar_select %p3277, %s20, 0
          %s3279 = smul.addr %s3276, 8
          %s3280 = sadd.s32 %s3278, %s3279
          %s3281 = smul.addr %s3280, 8
          %s3282 = scalar_lea.vmem %s2, %s3281
        $region81: #{pointnet_set_abstraction_msg.9} parent=76 // pred_fallthru
          _
      $region77: #{pointnet_set_abstraction_msg.9} parent=5 // pred_fallthru
        _
    $region6: #{pointnet_set_abstraction_msg.9} parent=1 // loop_footer
      %s12 = sadd.s32 1, %s8
    $region7: #{pointnet_set_abstraction_msg.9} parent=1 // loop_footer_branch
      %7 = sbr.rel target = $region3
    $region8: #{pointnet_set_abstraction_msg.9} parent=1 // loop_exit
      _

</llo_original>
